<compile_context>
chip_gen: v7x
topology: tpu7x:2x2x1
jax: 0.10.0
libtpu: 0.0.40
codegen_flags: <defaults>
</compile_context>

<pallas_src>
import random
from functools import partial

import jax
import jax.numpy as jnp
from jax.experimental import pallas as pl
from jax.experimental.pallas import tpu as pltpu

# ----------------------------- model sizes ---------------------------------
B = 2              # batch
S = 8              # source seq len
T = 8              # target seq len
EMB = 16           # embedding dim (encoder & decoder)
HID = 32           # encoder GRU hidden per direction
DEC_HID = 2 * HID  # decoder GRU hidden (= 2*HID, matches the fwd|bwd hidden concat)
N_LAYERS = 2
EN_VOCAB = 37
CN_VOCAB = 43
VPAD = 128         # padded vocab width -> lane-dense logits (multiple of 128)
NEG = -1e30        # large negative used to mask padded vocab columns


# ===================== single fused forward kernel ==========================
def _make_fused_kernel(tf_flags):
    """Build the fused encoder+decoder kernel, specialized on the static
    teacher-forcing flag tuple (one bool per decode step)."""
    n_steps = len(tf_flags)

    def kernel(x0_ref, tf_emb_ref,
               wih0_ref, bi0_ref, whh0_ref, bhn0_ref,
               wih1_ref, bi1_ref, whh1_ref, bhn1_ref,
               w0_ref, b0_ref, w1_ref, b1_ref,
               fcw_ref, fcb_ref, embp_ref,
               out_ref,
               gif_scr, gib_scr, x1_scr):
        f32 = jnp.float32

        # -------------------- bidirectional GRU encoder ---------------------
        def enc_layer(x_flat, wih_ref, bi_ref, whh_ref, bhn_ref, out_scr):
            # Hoisted input projections (b_ih + b_hh[r,z] folded at prepare time),
            # one matmul per direction, staged in VMEM scratch.
            gif_scr[...] = (jnp.dot(x_flat, wih_ref[0], preferred_element_type=f32)
                            + bi_ref[0])
            gib_scr[...] = (jnp.dot(x_flat, wih_ref[1], preferred_element_type=f32)
                            + bi_ref[1])
            whh_f, whh_b = whh_ref[0], whh_ref[1]
            bhn_f, bhn_b = bhn_ref[0], bhn_ref[1]

            def step(gi_t, h, whh, bhn):
                gh = jnp.dot(h, whh, preferred_element_type=f32)        # (B, 3*HID)
                r = jax.nn.sigmoid(gi_t[:, 0:HID] + gh[:, 0:HID])
                z = jax.nn.sigmoid(gi_t[:, HID:2 * HID] + gh[:, HID:2 * HID])
                n = jnp.tanh(gi_t[:, 2 * HID:3 * HID]
                             + r * (gh[:, 2 * HID:3 * HID] + bhn))
                return (1.0 - z) * n + z * h

            h_f = jnp.zeros((B, HID), f32)
            h_b = jnp.zeros((B, HID), f32)
            for t in range(S):                 # fully unrolled; fwd & bwd chains are
                tb = S - 1 - t                 # independent -> scheduler interleaves
                h_f = step(gif_scr[t * B:(t + 1) * B, :], h_f, whh_f, bhn_f)
                h_b = step(gib_scr[tb * B:(tb + 1) * B, :], h_b, whh_b, bhn_b)
                if out_scr is not None:        # layer output feeds the next layer
                    out_scr[t * B:(t + 1) * B, 0:HID] = h_f
                    out_scr[tb * B:(tb + 1) * B, HID:2 * HID] = h_b
            return jnp.concatenate([h_f, h_b], axis=-1)   # (B, 2*HID) final [fwd|bwd]

        dec_h0 = enc_layer(x0_ref[...], wih0_ref, bi0_ref, whh0_ref, bhn0_ref, x1_scr)
        dec_h1 = enc_layer(x1_scr[...], wih1_ref, bi1_ref, whh1_ref, bhn1_ref, None)
        # NOTE: encoder_outputs (layer-1 sequence) are not materialized: the HW8
        #       baseline decoder (isatt=False) never reads them.

        # -------------------- 2-layer GRU decoder + folded FC ---------------
        H = DEC_HID

        def gru(xh, h, w_ref, b_ref):
            # merged [x | h] @ [W_ih ; W_hh] with gate layout [r | z | n_x | n_h]
            gates = jnp.dot(xh, w_ref[...], preferred_element_type=f32) + b_ref[...]
            r = jax.nn.sigmoid(gates[:, 0:H])
            z = jax.nn.sigmoid(gates[:, H:2 * H])
            n = jnp.tanh(gates[:, 2 * H:3 * H] + r * gates[:, 3 * H:4 * H])
            return (1.0 - z) * n + z * h

        h0, h1 = dec_h0, dec_h1
        prev_emb = None
        for g in range(n_steps):               # fully unrolled decode loop
            x = tf_emb_ref[g] if tf_flags[g] else prev_emb            # (B, EMB)
            h0 = gru(jnp.concatenate([x, h0], axis=-1), h0, w0_ref, b0_ref)
            h1 = gru(jnp.concatenate([h0, h1], axis=-1), h1, w1_ref, b1_ref)
            # embedding2vocab1/2/3 folded into one (DEC_HID, VPAD) weight
            logits = (jnp.dot(h1, fcw_ref[...], preferred_element_type=f32)
                      + fcb_ref[...])
            out_ref[g] = logits                                        # lane-dense (B,128)
            if g + 1 < n_steps and not tf_flags[g + 1]:
                # greedy argmax -> one-hot @ padded embedding; emitted only when the
                # NEXT step actually consumes the prediction (dead under full TF).
                col = jax.lax.broadcasted_iota(jnp.int32, (B, VPAD), 1)
                masked = jnp.where(col < CN_VOCAB, logits, NEG)
                mx = jnp.max(masked, axis=-1, keepdims=True)
                idx = jnp.min(jnp.where(masked == mx, col, VPAD),
                              axis=-1, keepdims=True)
                onehot = (col == idx).astype(f32)
                prev_emb = jnp.dot(onehot, embp_ref[...],
                                   preferred_element_type=f32)         # (B, EMB)

    return kernel


def _fused_forward_call(x0, tf_emb, prep, tf_flags):
    n_steps = tf_emb.shape[0]
    l0, l1 = prep["enc_layers"]
    d = prep["dec"]
    return pl.pallas_call(
        _make_fused_kernel(tf_flags),
        out_shape=jax.ShapeDtypeStruct((n_steps, B, VPAD), jnp.float32),
        # no grid: every operand is a whole-array VMEM resident (total << 1 MiB)
        scratch_shapes=[
            pltpu.VMEM((S * B, 3 * HID), jnp.float32),   # hoisted fwd input projection
            pltpu.VMEM((S * B, 3 * HID), jnp.float32),   # hoisted bwd input projection
            pltpu.VMEM((S * B, 2 * HID), jnp.float32),   # encoder layer-0 output sequence
        ],
    )(x0, tf_emb,
      l0["wih"], l0["bi"], l0["whh"], l0["bhn"],
      l1["wih"], l1["bi"], l1["whh"], l1["bhn"],
      d["w0"], d["b0"], d["w1"], d["b1"], d["fc_w"], d["fc_b"], d["emb_pad"])


# --------------------------- parameter creation -----------------------------
def _gru_params(key, din, hid):
    k1, k2, k3, k4 = jax.random.split(key, 4)
    scale = 0.1
    return dict(
        w_ih=scale * jax.random.normal(k1, (din, 3 * hid), jnp.float32),
        w_hh=scale * jax.random.normal(k2, (hid, 3 * hid), jnp.float32),
        b_ih=scale * jax.random.normal(k3, (1, 3 * hid), jnp.float32),
        b_hh=scale * jax.random.normal(k4, (1, 3 * hid), jnp.float32),
    )


def init_params(seed=0):
    key = jax.random.PRNGKey(seed)
    keys = jax.random.split(key, 16)
    scale = 0.1
    enc = dict(
        embedding=scale * jax.random.normal(keys[0], (EN_VOCAB, EMB), jnp.float32),
        layers=[],
    )
    ki = 1
    for layer in range(N_LAYERS):
        din = EMB if layer == 0 else 2 * HID
        enc["layers"].append(dict(
            fwd=_gru_params(keys[ki], din, HID),
            bwd=_gru_params(keys[ki + 1], din, HID),
        ))
        ki += 2
    dec = dict(
        embedding=scale * jax.random.normal(keys[ki], (CN_VOCAB, EMB), jnp.float32),
        layers=[],
    )
    ki += 1
    for layer in range(N_LAYERS):
        din = EMB if layer == 0 else DEC_HID
        dec["layers"].append(_gru_params(keys[ki], din, DEC_HID))
        ki += 1
    dec["fc1_w"] = scale * jax.random.normal(keys[ki], (DEC_HID, 2 * DEC_HID), jnp.float32)
    dec["fc1_b"] = scale * jax.random.normal(keys[ki + 1], (1, 2 * DEC_HID), jnp.float32)
    dec["fc2_w"] = scale * jax.random.normal(keys[ki + 2], (2 * DEC_HID, 4 * DEC_HID), jnp.float32)
    dec["fc2_b"] = scale * jax.random.normal(keys[ki + 3], (1, 4 * DEC_HID), jnp.float32)
    k_last = jax.random.split(keys[ki + 3], 2)
    dec["fc3_w"] = scale * jax.random.normal(k_last[0], (4 * DEC_HID, CN_VOCAB), jnp.float32)
    dec["fc3_b"] = scale * jax.random.normal(k_last[1], (1, CN_VOCAB), jnp.float32)
    return enc, dec


# ------------------------ fused-weight preparation ---------------------------
def prepare_params(enc, dec):
    # encoder: direction-stacked weights; b_ih + b_hh(r,z) folded into the hoisted
    # input projection; b_hh(n) kept separate (must stay inside r * (.)).
    enc_layers = []
    for layer in range(N_LAYERS):
        f = enc["layers"][layer]["fwd"]
        b = enc["layers"][layer]["bwd"]
        zero = jnp.zeros((1, HID), jnp.float32)
        bi_f = f["b_ih"] + jnp.concatenate([f["b_hh"][:, :2 * HID], zero], axis=1)
        bi_b = b["b_ih"] + jnp.concatenate([b["b_hh"][:, :2 * HID], zero], axis=1)
        enc_layers.append(dict(
            wih=jnp.stack([f["w_ih"], b["w_ih"]], axis=0),               # (2, Din, 3*HID)
            bi=jnp.stack([bi_f, bi_b], axis=0),                          # (2, 1, 3*HID)
            whh=jnp.stack([f["w_hh"], b["w_hh"]], axis=0),               # (2, HID, 3*HID)
            bhn=jnp.stack([f["b_hh"][:, 2 * HID:], b["b_hh"][:, 2 * HID:]], axis=0),
        ))

    # decoder GRU layers: merged [x|h] weights with gate layout [r | z | n_x | n_h]
    def dec_layer(p):
        H = DEC_HID
        din = p["w_ih"].shape[0]
        w_ih_big = jnp.concatenate([p["w_ih"], jnp.zeros((din, H), jnp.float32)], axis=1)
        w_hh_big = jnp.concatenate(
            [p["w_hh"][:, :2 * H], jnp.zeros((H, H), jnp.float32), p["w_hh"][:, 2 * H:]],
            axis=1)
        w_cat = jnp.concatenate([w_ih_big, w_hh_big], axis=0)            # (din + H, 4H)
        b_cat = jnp.concatenate(
            [p["b_ih"][:, :2 * H] + p["b_hh"][:, :2 * H],
             p["b_ih"][:, 2 * H:], p["b_hh"][:, 2 * H:]], axis=1)        # (1, 4H)
        return w_cat, b_cat

    w0, b0 = dec_layer(dec["layers"][0])
    w1, b1 = dec_layer(dec["layers"][1])

    # fold the purely-linear fc1 -> fc2 -> fc3 chain into one (DEC_HID, VPAD) projection
    fc3_w_pad = jnp.zeros((4 * DEC_HID, VPAD), jnp.float32).at[:, :CN_VOCAB].set(dec["fc3_w"])
    fc3_b_pad = jnp.zeros((1, VPAD), jnp.float32).at[:, :CN_VOCAB].set(dec["fc3_b"])
    fc_w = dec["fc1_w"] @ dec["fc2_w"] @ fc3_w_pad
    fc_b = dec["fc1_b"] @ dec["fc2_w"] @ fc3_w_pad + dec["fc2_b"] @ fc3_w_pad + fc3_b_pad
    emb_pad = jnp.zeros((VPAD, EMB), jnp.float32).at[:CN_VOCAB].set(dec["embedding"])

    return dict(
        enc_embedding=enc["embedding"],
        enc_layers=enc_layers,
        dec=dict(embedding=dec["embedding"], emb_pad=emb_pad,
                 w0=w0, b0=b0, w1=w1, b1=b1, fc_w=fc_w, fc_b=fc_b),
    )


# ------------------------------ forward pass ---------------------------------
@partial(jax.jit, static_argnums=(3,))
def seq2seq_forward_jit(inputs, target, prep, tf_flags):
    # embedding gathers stay as two cheap XLA ops; everything else is in the kernel
    x_emb = prep["enc_embedding"][inputs]                               # (B, S, EMB)
    x0 = jnp.transpose(x_emb, (1, 0, 2)).reshape(S * B, EMB)            # time-major rows
    tf_emb = jnp.transpose(prep["dec"]["embedding"][target[:, :T - 1]], (1, 0, 2))
    logits_pad = _fused_forward_call(x0, tf_emb, prep, tf_flags)        # (T-1, B, VPAD)
    logits = jnp.transpose(logits_pad[:, :, :CN_VOCAB], (1, 0, 2))      # (B, T-1, V)
    outputs = jnp.concatenate(
        [jnp.zeros((B, 1, CN_VOCAB), jnp.float32), logits], axis=1)     # t = 0 stays zero
    preds = jnp.argmax(logits, axis=-1).astype(jnp.int32)               # (B, T-1)
    return outputs, preds


def _draw_tf_flags(teacher_forcing_ratio, target_len, py_seed=0):
    """Mirror the HW8 loop: the coin drawn at step t gates the input of step t+1,
    and step 1 always consumes target[:, 0]."""
    random.seed(py_seed)
    flags = [random.random() <= teacher_forcing_ratio for _ in range(1, target_len)]
    return (True,) + tuple(bool(f) for f in flags[:-1])


def seq2seq_forward(inputs, target, teacher_forcing_ratio, prep, py_seed=0):
    tf_flags = _draw_tf_flags(teacher_forcing_ratio, target.shape[1], py_seed)
    return seq2seq_forward_jit(inputs, target, prep, tf_flags)


# ---------------------- pure-JAX reference (unfused) -------------------------
def _reference_forward(inputs, target, tf_flags, enc, dec):
    def gru_cell(x_t, h, p):
        hid = h.shape[-1]
        gi = x_t @ p["w_ih"] + p["b_ih"]
        gh = h @ p["w_hh"] + p["b_hh"]
        r = jax.nn.sigmoid(gi[:, :hid] + gh[:, :hid])
        z = jax.nn.sigmoid(gi[:, hid:2 * hid] + gh[:, hid:2 * hid])
        n = jnp.tanh(gi[:, 2 * hid:] + r * gh[:, 2 * hid:])
        return (1.0 - z) * n + z * h

    layer_in = enc["embedding"][inputs]                                  # (B, S, EMB)
    finals = []
    for lp in enc["layers"]:
        outs_f, outs_b = [], [None] * S
        h_f = jnp.zeros((B, HID), jnp.float32)
        h_b = jnp.zeros((B, HID), jnp.float32)
        for t in range(S):
            h_f = gru_cell(layer_in[:, t], h_f, lp["fwd"])
            outs_f.append(h_f)
        for t in reversed(range(S)):
            h_b = gru_cell(layer_in[:, t], h_b, lp["bwd"])
            outs_b[t] = h_b
        layer_in = jnp.stack(
            [jnp.concatenate([outs_f[t], outs_b[t]], -1) for t in range(S)], axis=1)
        finals.append(jnp.concatenate([h_f, h_b], -1))

    h = list(finals)
    emb = dec["embedding"]
    outputs = [jnp.zeros((B, CN_VOCAB), jnp.float32)]
    preds = []
    prev = None
    for g in range(T - 1):
        tok = target[:, g] if tf_flags[g] else prev
        x = emb[tok]
        h[0] = gru_cell(x, h[0], dec["layers"][0])
        h[1] = gru_cell(h[0], h[1], dec["layers"][1])
        o = h[1] @ dec["fc1_w"] + dec["fc1_b"]
        o = o @ dec["fc2_w"] + dec["fc2_b"]
        logit = o @ dec["fc3_w"] + dec["fc3_b"]
        outputs.append(logit)
        prev = jnp.argmax(logit, axis=-1)
        preds.append(prev)
    return jnp.stack(outputs, axis=1), jnp.stack(preds, axis=1).astype(jnp.int32)


# ---------------------------------- main -------------------------------------
if __name__ == "__main__":
    key = jax.random.PRNGKey(0)
    k_in, k_tgt = jax.random.split(key)
    inputs = jax.random.randint(k_in, (B, S), 0, EN_VOCAB, dtype=jnp.int32)
    target = jax.random.randint(k_tgt, (B, T), 0, CN_VOCAB, dtype=jnp.int32)

    enc_params, dec_params = init_params(seed=0)
    prep = prepare_params(enc_params, dec_params)

    for ratio in (1.0, 0.0):   # exercise both full teacher forcing and greedy feedback
        outputs, preds = seq2seq_forward(inputs, target, ratio, prep, py_seed=0)
        jax.block_until_ready((outputs, preds))

        assert outputs.shape == (B, T, CN_VOCAB), outputs.shape
        assert preds.shape == (B, T - 1), preds.shape
        assert bool(jnp.all(jnp.isfinite(outputs)))

        tf_flags = _draw_tf_flags(ratio, T, py_seed=0)
        out_ref, preds_ref = _reference_forward(inputs, target, tf_flags,
                                                enc_params, dec_params)
        assert bool(jnp.allclose(outputs, out_ref, atol=1e-4, rtol=1e-4)), \
            f"logits mismatch (ratio={ratio})"
        assert bool(jnp.all(preds == preds_ref)), f"pred mismatch (ratio={ratio})"

    print("KERNEL_OK")
</pallas_src>

<mosaic_0001>
module attributes {stable_mosaic.version = 11 : i64} {
  func.func @kernel(%arg0: memref<16x16xf32, #tpu.memory_space<vmem>>, %arg1: memref<7x2x16xf32, #tpu.memory_space<vmem>>, %arg2: memref<2x16x96xf32, #tpu.memory_space<vmem>>, %arg3: memref<2x1x96xf32, #tpu.memory_space<vmem>>, %arg4: memref<2x32x96xf32, #tpu.memory_space<vmem>>, %arg5: memref<2x1x32xf32, #tpu.memory_space<vmem>>, %arg6: memref<2x64x96xf32, #tpu.memory_space<vmem>>, %arg7: memref<2x1x96xf32, #tpu.memory_space<vmem>>, %arg8: memref<2x32x96xf32, #tpu.memory_space<vmem>>, %arg9: memref<2x1x32xf32, #tpu.memory_space<vmem>>, %arg10: memref<80x256xf32, #tpu.memory_space<vmem>>, %arg11: memref<1x256xf32, #tpu.memory_space<vmem>>, %arg12: memref<128x256xf32, #tpu.memory_space<vmem>>, %arg13: memref<1x256xf32, #tpu.memory_space<vmem>>, %arg14: memref<64x128xf32, #tpu.memory_space<vmem>>, %arg15: memref<1x128xf32, #tpu.memory_space<vmem>>, %arg16: memref<128x16xf32, #tpu.memory_space<vmem>>, %arg17: memref<7x2x128xf32, #tpu.memory_space<vmem>>, %arg18: memref<16x96xf32, #tpu.memory_space<vmem>>, %arg19: memref<16x96xf32, #tpu.memory_space<vmem>>, %arg20: memref<16x64xf32, #tpu.memory_space<vmem>>) attributes {dimension_semantics = [], scalar_prefetch = 0 : i64, scratch_operands = 3 : i64, tpu.core_type = #tpu.core_type<tc>} {
    %c0 = arith.constant 0 : index
    %c0_0 = arith.constant 0 : index
    %0 = vector.load %arg0[%c0, %c0_0] : memref<16x16xf32, #tpu.memory_space<vmem>>, vector<16x16xf32>
    %c0_1 = arith.constant 0 : index
    %c0_2 = arith.constant 0 : index
    %c0_3 = arith.constant 0 : index
    %1 = vector.load %arg2[%c0_1, %c0_2, %c0_3] : memref<2x16x96xf32, #tpu.memory_space<vmem>>, vector<1x16x96xf32>
    %2 = vector.shape_cast %1 : vector<1x16x96xf32> to vector<16x96xf32>
    %cst = arith.constant dense<0.000000e+00> : vector<16x96xf32>
    %3 = tpu.matmul %0, %2, %cst {dimension_numbers = #tpu.dot_dimension_numbers<[1], [0], [0], [1], [0, 0, 1, 1], [], []>} : vector<16x16xf32>, vector<16x96xf32>, vector<16x96xf32> -> vector<16x96xf32>
    %c0_4 = arith.constant 0 : index
    %c0_5 = arith.constant 0 : index
    %c0_6 = arith.constant 0 : index
    %4 = vector.load %arg3[%c0_4, %c0_5, %c0_6] : memref<2x1x96xf32, #tpu.memory_space<vmem>>, vector<1x1x96xf32>
    %5 = vector.shape_cast %4 : vector<1x1x96xf32> to vector<1x96xf32>
    %6 = vector.broadcast %5 : vector<1x96xf32> to vector<16x96xf32>
    %7 = arith.addf %3, %6 : vector<16x96xf32>
    %c0_7 = arith.constant 0 : index
    %c0_8 = arith.constant 0 : index
    %8 = vector.load %arg18[%c0_7, %c0_8] : memref<16x96xf32, #tpu.memory_space<vmem>>, vector<16x96xf32>
    tpu.vector_store %arg18[%c0_7, %c0_8], %7 {strides = array<i32>} : memref<16x96xf32, #tpu.memory_space<vmem>>, vector<16x96xf32>,
    %c1 = arith.constant 1 : index
    %c0_9 = arith.constant 0 : index
    %c0_10 = arith.constant 0 : index
    %9 = vector.load %arg2[%c1, %c0_9, %c0_10] : memref<2x16x96xf32, #tpu.memory_space<vmem>>, vector<1x16x96xf32>
    %10 = vector.shape_cast %9 : vector<1x16x96xf32> to vector<16x96xf32>
    %cst_11 = arith.constant dense<0.000000e+00> : vector<16x96xf32>
    %11 = tpu.matmul %0, %10, %cst_11 {dimension_numbers = #tpu.dot_dimension_numbers<[1], [0], [0], [1], [0, 0, 1, 1], [], []>} : vector<16x16xf32>, vector<16x96xf32>, vector<16x96xf32> -> vector<16x96xf32>
    %c1_12 = arith.constant 1 : index
    %c0_13 = arith.constant 0 : index
    %c0_14 = arith.constant 0 : index
    %12 = vector.load %arg3[%c1_12, %c0_13, %c0_14] : memref<2x1x96xf32, #tpu.memory_space<vmem>>, vector<1x1x96xf32>
    %13 = vector.shape_cast %12 : vector<1x1x96xf32> to vector<1x96xf32>
    %14 = vector.broadcast %13 : vector<1x96xf32> to vector<16x96xf32>
    %15 = arith.addf %11, %14 : vector<16x96xf32>
    %c0_15 = arith.constant 0 : index
    %c0_16 = arith.constant 0 : index
    %16 = vector.load %arg19[%c0_15, %c0_16] : memref<16x96xf32, #tpu.memory_space<vmem>>, vector<16x96xf32>
    tpu.vector_store %arg19[%c0_15, %c0_16], %15 {strides = array<i32>} : memref<16x96xf32, #tpu.memory_space<vmem>>, vector<16x96xf32>,
    %c0_17 = arith.constant 0 : index
    %c0_18 = arith.constant 0 : index
    %c0_19 = arith.constant 0 : index
    %17 = vector.load %arg4[%c0_17, %c0_18, %c0_19] : memref<2x32x96xf32, #tpu.memory_space<vmem>>, vector<1x32x96xf32>
    %18 = vector.shape_cast %17 : vector<1x32x96xf32> to vector<32x96xf32>
    %c1_20 = arith.constant 1 : index
    %c0_21 = arith.constant 0 : index
    %c0_22 = arith.constant 0 : index
    %19 = vector.load %arg4[%c1_20, %c0_21, %c0_22] : memref<2x32x96xf32, #tpu.memory_space<vmem>>, vector<1x32x96xf32>
    %20 = vector.shape_cast %19 : vector<1x32x96xf32> to vector<32x96xf32>
    %c0_23 = arith.constant 0 : index
    %c0_24 = arith.constant 0 : index
    %c0_25 = arith.constant 0 : index
    %21 = vector.load %arg5[%c0_23, %c0_24, %c0_25] : memref<2x1x32xf32, #tpu.memory_space<vmem>>, vector<1x1x32xf32>
    %22 = vector.shape_cast %21 : vector<1x1x32xf32> to vector<1x32xf32>
    %c1_26 = arith.constant 1 : index
    %c0_27 = arith.constant 0 : index
    %c0_28 = arith.constant 0 : index
    %23 = vector.load %arg5[%c1_26, %c0_27, %c0_28] : memref<2x1x32xf32, #tpu.memory_space<vmem>>, vector<1x1x32xf32>
    %24 = vector.shape_cast %23 : vector<1x1x32xf32> to vector<1x32xf32>
    %cst_29 = arith.constant 0.000000e+00 : f32
    %25 = vector.broadcast %cst_29 : f32 to vector<2x32xf32>
    %cst_30 = arith.constant 0.000000e+00 : f32
    %26 = vector.broadcast %cst_30 : f32 to vector<2x32xf32>
    %c0_31 = arith.constant 0 : index
    %c0_32 = arith.constant 0 : index
    %27 = vector.load %arg18[%c0_31, %c0_32] : memref<16x96xf32, #tpu.memory_space<vmem>>, vector<2x96xf32>
    %cst_33 = arith.constant dense<0.000000e+00> : vector<2x96xf32>
    %28 = tpu.matmul %25, %18, %cst_33 {dimension_numbers = #tpu.dot_dimension_numbers<[1], [0], [0], [1], [0, 0, 1, 1], [], []>} : vector<2x32xf32>, vector<32x96xf32>, vector<2x96xf32> -> vector<2x96xf32>
    %29 = vector.extract_strided_slice %27 {offsets = [0, 0], sizes = [2, 32], strides = [1, 1]} : vector<2x96xf32> to vector<2x32xf32>
    %30 = vector.extract_strided_slice %28 {offsets = [0, 0], sizes = [2, 32], strides = [1, 1]} : vector<2x96xf32> to vector<2x32xf32>
    %31 = arith.addf %29, %30 : vector<2x32xf32>
    %32 = arith.negf %31 : vector<2x32xf32>
    %33 = math.exp %32 : vector<2x32xf32>
    %cst_34 = arith.constant 1.000000e+00 : f32
    %34 = vector.broadcast %cst_34 : f32 to vector<2x32xf32>
    %35 = arith.addf %34, %33 : vector<2x32xf32>
    %36 = arith.divf %34, %35 : vector<2x32xf32>
    %37 = vector.extract_strided_slice %27 {offsets = [0, 32], sizes = [2, 32], strides = [1, 1]} : vector<2x96xf32> to vector<2x32xf32>
    %38 = vector.extract_strided_slice %28 {offsets = [0, 32], sizes = [2, 32], strides = [1, 1]} : vector<2x96xf32> to vector<2x32xf32>
    %39 = arith.addf %37, %38 : vector<2x32xf32>
    %40 = arith.negf %39 : vector<2x32xf32>
    %41 = math.exp %40 : vector<2x32xf32>
    %cst_35 = arith.constant 1.000000e+00 : f32
    %42 = vector.broadcast %cst_35 : f32 to vector<2x32xf32>
    %43 = arith.addf %42, %41 : vector<2x32xf32>
    %44 = arith.divf %42, %43 : vector<2x32xf32>
    %45 = vector.extract_strided_slice %27 {offsets = [0, 64], sizes = [2, 32], strides = [1, 1]} : vector<2x96xf32> to vector<2x32xf32>
    %46 = vector.extract_strided_slice %28 {offsets = [0, 64], sizes = [2, 32], strides = [1, 1]} : vector<2x96xf32> to vector<2x32xf32>
    %47 = vector.broadcast %22 : vector<1x32xf32> to vector<2x32xf32>
    %48 = arith.addf %46, %47 : vector<2x32xf32>
    %49 = arith.mulf %36, %48 : vector<2x32xf32>
    %50 = arith.addf %45, %49 : vector<2x32xf32>
    %51 = math.tanh %50 : vector<2x32xf32>
    %cst_36 = arith.constant 1.000000e+00 : f32
    %52 = vector.broadcast %cst_36 : f32 to vector<2x32xf32>
    %53 = arith.subf %52, %44 : vector<2x32xf32>
    %54 = arith.mulf %53, %51 : vector<2x32xf32>
    %55 = arith.mulf %44, %25 : vector<2x32xf32>
    %56 = arith.addf %54, %55 : vector<2x32xf32>
    %c14 = arith.constant 14 : index
    %c0_37 = arith.constant 0 : index
    %57 = vector.load %arg19[%c14, %c0_37] : memref<16x96xf32, #tpu.memory_space<vmem>>, vector<2x96xf32>
    %cst_38 = arith.constant dense<0.000000e+00> : vector<2x96xf32>
    %58 = tpu.matmul %26, %20, %cst_38 {dimension_numbers = #tpu.dot_dimension_numbers<[1], [0], [0], [1], [0, 0, 1, 1], [], []>} : vector<2x32xf32>, vector<32x96xf32>, vector<2x96xf32> -> vector<2x96xf32>
    %59 = vector.extract_strided_slice %57 {offsets = [0, 0], sizes = [2, 32], strides = [1, 1]} : vector<2x96xf32> to vector<2x32xf32>
    %60 = vector.extract_strided_slice %58 {offsets = [0, 0], sizes = [2, 32], strides = [1, 1]} : vector<2x96xf32> to vector<2x32xf32>
    %61 = arith.addf %59, %60 : vector<2x32xf32>
    %62 = arith.negf %61 : vector<2x32xf32>
    %63 = math.exp %62 : vector<2x32xf32>
    %cst_39 = arith.constant 1.000000e+00 : f32
    %64 = vector.broadcast %cst_39 : f32 to vector<2x32xf32>
    %65 = arith.addf %64, %63 : vector<2x32xf32>
    %66 = arith.divf %64, %65 : vector<2x32xf32>
    %67 = vector.extract_strided_slice %57 {offsets = [0, 32], sizes = [2, 32], strides = [1, 1]} : vector<2x96xf32> to vector<2x32xf32>
    %68 = vector.extract_strided_slice %58 {offsets = [0, 32], sizes = [2, 32], strides = [1, 1]} : vector<2x96xf32> to vector<2x32xf32>
    %69 = arith.addf %67, %68 : vector<2x32xf32>
    %70 = arith.negf %69 : vector<2x32xf32>
    %71 = math.exp %70 : vector<2x32xf32>
    %cst_40 = arith.constant 1.000000e+00 : f32
    %72 = vector.broadcast %cst_40 : f32 to vector<2x32xf32>
    %73 = arith.addf %72, %71 : vector<2x32xf32>
    %74 = arith.divf %72, %73 : vector<2x32xf32>
    %75 = vector.extract_strided_slice %57 {offsets = [0, 64], sizes = [2, 32], strides = [1, 1]} : vector<2x96xf32> to vector<2x32xf32>
    %76 = vector.extract_strided_slice %58 {offsets = [0, 64], sizes = [2, 32], strides = [1, 1]} : vector<2x96xf32> to vector<2x32xf32>
    %77 = vector.broadcast %24 : vector<1x32xf32> to vector<2x32xf32>
    %78 = arith.addf %76, %77 : vector<2x32xf32>
    %79 = arith.mulf %66, %78 : vector<2x32xf32>
    %80 = arith.addf %75, %79 : vector<2x32xf32>
    %81 = math.tanh %80 : vector<2x32xf32>
    %cst_41 = arith.constant 1.000000e+00 : f32
    %82 = vector.broadcast %cst_41 : f32 to vector<2x32xf32>
    %83 = arith.subf %82, %74 : vector<2x32xf32>
    %84 = arith.mulf %83, %81 : vector<2x32xf32>
    %85 = arith.mulf %74, %26 : vector<2x32xf32>
    %86 = arith.addf %84, %85 : vector<2x32xf32>
    %c0_42 = arith.constant 0 : index
    %c0_43 = arith.constant 0 : index
    %87 = vector.load %arg20[%c0_42, %c0_43] : memref<16x64xf32, #tpu.memory_space<vmem>>, vector<2x32xf32>
    tpu.vector_store %arg20[%c0_42, %c0_43], %56 {strides = array<i32>} : memref<16x64xf32, #tpu.memory_space<vmem>>, vector<2x32xf32>,
    %c14_44 = arith.constant 14 : index
    %c32 = arith.constant 32 : index
    %88 = vector.load %arg20[%c14_44, %c32] : memref<16x64xf32, #tpu.memory_space<vmem>>, vector<2x32xf32>
    tpu.vector_store %arg20[%c14_44, %c32], %86 {strides = array<i32>} : memref<16x64xf32, #tpu.memory_space<vmem>>, vector<2x32xf32>,
    %c2 = arith.constant 2 : index
    %c0_45 = arith.constant 0 : index
    %89 = vector.load %arg18[%c2, %c0_45] : memref<16x96xf32, #tpu.memory_space<vmem>>, vector<2x96xf32>
    %cst_46 = arith.constant dense<0.000000e+00> : vector<2x96xf32>
    %90 = tpu.matmul %56, %18, %cst_46 {dimension_numbers = #tpu.dot_dimension_numbers<[1], [0], [0], [1], [0, 0, 1, 1], [], []>} : vector<2x32xf32>, vector<32x96xf32>, vector<2x96xf32> -> vector<2x96xf32>
    %91 = vector.extract_strided_slice %89 {offsets = [0, 0], sizes = [2, 32], strides = [1, 1]} : vector<2x96xf32> to vector<2x32xf32>
    %92 = vector.extract_strided_slice %90 {offsets = [0, 0], sizes = [2, 32], strides = [1, 1]} : vector<2x96xf32> to vector<2x32xf32>
    %93 = arith.addf %91, %92 : vector<2x32xf32>
    %94 = arith.negf %93 : vector<2x32xf32>
    %95 = math.exp %94 : vector<2x32xf32>
    %cst_47 = arith.constant 1.000000e+00 : f32
    %96 = vector.broadcast %cst_47 : f32 to vector<2x32xf32>
    %97 = arith.addf %96, %95 : vector<2x32xf32>
    %98 = arith.divf %96, %97 : vector<2x32xf32>
    %99 = vector.extract_strided_slice %89 {offsets = [0, 32], sizes = [2, 32], strides = [1, 1]} : vector<2x96xf32> to vector<2x32xf32>
    %100 = vector.extract_strided_slice %90 {offsets = [0, 32], sizes = [2, 32], strides = [1, 1]} : vector<2x96xf32> to vector<2x32xf32>
    %101 = arith.addf %99, %100 : vector<2x32xf32>
    %102 = arith.negf %101 : vector<2x32xf32>
    %103 = math.exp %102 : vector<2x32xf32>
    %cst_48 = arith.constant 1.000000e+00 : f32
    %104 = vector.broadcast %cst_48 : f32 to vector<2x32xf32>
    %105 = arith.addf %104, %103 : vector<2x32xf32>
    %106 = arith.divf %104, %105 : vector<2x32xf32>
    %107 = vector.extract_strided_slice %89 {offsets = [0, 64], sizes = [2, 32], strides = [1, 1]} : vector<2x96xf32> to vector<2x32xf32>
    %108 = vector.extract_strided_slice %90 {offsets = [0, 64], sizes = [2, 32], strides = [1, 1]} : vector<2x96xf32> to vector<2x32xf32>
    %109 = vector.broadcast %22 : vector<1x32xf32> to vector<2x32xf32>
    %110 = arith.addf %108, %109 : vector<2x32xf32>
    %111 = arith.mulf %98, %110 : vector<2x32xf32>
    %112 = arith.addf %107, %111 : vector<2x32xf32>
    %113 = math.tanh %112 : vector<2x32xf32>
    %cst_49 = arith.constant 1.000000e+00 : f32
    %114 = vector.broadcast %cst_49 : f32 to vector<2x32xf32>
    %115 = arith.subf %114, %106 : vector<2x32xf32>
    %116 = arith.mulf %115, %113 : vector<2x32xf32>
    %117 = arith.mulf %106, %56 : vector<2x32xf32>
    %118 = arith.addf %116, %117 : vector<2x32xf32>
    %c12 = arith.constant 12 : index
    %c0_50 = arith.constant 0 : index
    %119 = vector.load %arg19[%c12, %c0_50] : memref<16x96xf32, #tpu.memory_space<vmem>>, vector<2x96xf32>
    %cst_51 = arith.constant dense<0.000000e+00> : vector<2x96xf32>
    %120 = tpu.matmul %86, %20, %cst_51 {dimension_numbers = #tpu.dot_dimension_numbers<[1], [0], [0], [1], [0, 0, 1, 1], [], []>} : vector<2x32xf32>, vector<32x96xf32>, vector<2x96xf32> -> vector<2x96xf32>
    %121 = vector.extract_strided_slice %119 {offsets = [0, 0], sizes = [2, 32], strides = [1, 1]} : vector<2x96xf32> to vector<2x32xf32>
    %122 = vector.extract_strided_slice %120 {offsets = [0, 0], sizes = [2, 32], strides = [1, 1]} : vector<2x96xf32> to vector<2x32xf32>
    %123 = arith.addf %121, %122 : vector<2x32xf32>
    %124 = arith.negf %123 : vector<2x32xf32>
    %125 = math.exp %124 : vector<2x32xf32>
    %cst_52 = arith.constant 1.000000e+00 : f32
    %126 = vector.broadcast %cst_52 : f32 to vector<2x32xf32>
    %127 = arith.addf %126, %125 : vector<2x32xf32>
    %128 = arith.divf %126, %127 : vector<2x32xf32>
    %129 = vector.extract_strided_slice %119 {offsets = [0, 32], sizes = [2, 32], strides = [1, 1]} : vector<2x96xf32> to vector<2x32xf32>
    %130 = vector.extract_strided_slice %120 {offsets = [0, 32], sizes = [2, 32], strides = [1, 1]} : vector<2x96xf32> to vector<2x32xf32>
    %131 = arith.addf %129, %130 : vector<2x32xf32>
    %132 = arith.negf %131 : vector<2x32xf32>
    %133 = math.exp %132 : vector<2x32xf32>
    %cst_53 = arith.constant 1.000000e+00 : f32
    %134 = vector.broadcast %cst_53 : f32 to vector<2x32xf32>
    %135 = arith.addf %134, %133 : vector<2x32xf32>
    %136 = arith.divf %134, %135 : vector<2x32xf32>
    %137 = vector.extract_strided_slice %119 {offsets = [0, 64], sizes = [2, 32], strides = [1, 1]} : vector<2x96xf32> to vector<2x32xf32>
    %138 = vector.extract_strided_slice %120 {offsets = [0, 64], sizes = [2, 32], strides = [1, 1]} : vector<2x96xf32> to vector<2x32xf32>
    %139 = vector.broadcast %24 : vector<1x32xf32> to vector<2x32xf32>
    %140 = arith.addf %138, %139 : vector<2x32xf32>
    %141 = arith.mulf %128, %140 : vector<2x32xf32>
    %142 = arith.addf %137, %141 : vector<2x32xf32>
    %143 = math.tanh %142 : vector<2x32xf32>
    %cst_54 = arith.constant 1.000000e+00 : f32
    %144 = vector.broadcast %cst_54 : f32 to vector<2x32xf32>
    %145 = arith.subf %144, %136 : vector<2x32xf32>
    %146 = arith.mulf %145, %143 : vector<2x32xf32>
    %147 = arith.mulf %136, %86 : vector<2x32xf32>
    %148 = arith.addf %146, %147 : vector<2x32xf32>
    %c2_55 = arith.constant 2 : index
    %c0_56 = arith.constant 0 : index
    %149 = vector.load %arg20[%c2_55, %c0_56] : memref<16x64xf32, #tpu.memory_space<vmem>>, vector<2x32xf32>
    tpu.vector_store %arg20[%c2_55, %c0_56], %118 {strides = array<i32>} : memref<16x64xf32, #tpu.memory_space<vmem>>, vector<2x32xf32>,
    %c12_57 = arith.constant 12 : index
    %c32_58 = arith.constant 32 : index
    %150 = vector.load %arg20[%c12_57, %c32_58] : memref<16x64xf32, #tpu.memory_space<vmem>>, vector<2x32xf32>
    tpu.vector_store %arg20[%c12_57, %c32_58], %148 {strides = array<i32>} : memref<16x64xf32, #tpu.memory_space<vmem>>, vector<2x32xf32>,
    %c4 = arith.constant 4 : index
    %c0_59 = arith.constant 0 : index
    %151 = vector.load %arg18[%c4, %c0_59] : memref<16x96xf32, #tpu.memory_space<vmem>>, vector<2x96xf32>
    %cst_60 = arith.constant dense<0.000000e+00> : vector<2x96xf32>
    %152 = tpu.matmul %118, %18, %cst_60 {dimension_numbers = #tpu.dot_dimension_numbers<[1], [0], [0], [1], [0, 0, 1, 1], [], []>} : vector<2x32xf32>, vector<32x96xf32>, vector<2x96xf32> -> vector<2x96xf32>
    %153 = vector.extract_strided_slice %151 {offsets = [0, 0], sizes = [2, 32], strides = [1, 1]} : vector<2x96xf32> to vector<2x32xf32>
    %154 = vector.extract_strided_slice %152 {offsets = [0, 0], sizes = [2, 32], strides = [1, 1]} : vector<2x96xf32> to vector<2x32xf32>
    %155 = arith.addf %153, %154 : vector<2x32xf32>
    %156 = arith.negf %155 : vector<2x32xf32>
    %157 = math.exp %156 : vector<2x32xf32>
    %cst_61 = arith.constant 1.000000e+00 : f32
    %158 = vector.broadcast %cst_61 : f32 to vector<2x32xf32>
    %159 = arith.addf %158, %157 : vector<2x32xf32>
    %160 = arith.divf %158, %159 : vector<2x32xf32>
    %161 = vector.extract_strided_slice %151 {offsets = [0, 32], sizes = [2, 32], strides = [1, 1]} : vector<2x96xf32> to vector<2x32xf32>
    %162 = vector.extract_strided_slice %152 {offsets = [0, 32], sizes = [2, 32], strides = [1, 1]} : vector<2x96xf32> to vector<2x32xf32>
    %163 = arith.addf %161, %162 : vector<2x32xf32>
    %164 = arith.negf %163 : vector<2x32xf32>
    %165 = math.exp %164 : vector<2x32xf32>
    %cst_62 = arith.constant 1.000000e+00 : f32
    %166 = vector.broadcast %cst_62 : f32 to vector<2x32xf32>
    %167 = arith.addf %166, %165 : vector<2x32xf32>
    %168 = arith.divf %166, %167 : vector<2x32xf32>
    %169 = vector.extract_strided_slice %151 {offsets = [0, 64], sizes = [2, 32], strides = [1, 1]} : vector<2x96xf32> to vector<2x32xf32>
    %170 = vector.extract_strided_slice %152 {offsets = [0, 64], sizes = [2, 32], strides = [1, 1]} : vector<2x96xf32> to vector<2x32xf32>
    %171 = vector.broadcast %22 : vector<1x32xf32> to vector<2x32xf32>
    %172 = arith.addf %170, %171 : vector<2x32xf32>
    %173 = arith.mulf %160, %172 : vector<2x32xf32>
    %174 = arith.addf %169, %173 : vector<2x32xf32>
    %175 = math.tanh %174 : vector<2x32xf32>
    %cst_63 = arith.constant 1.000000e+00 : f32
    %176 = vector.broadcast %cst_63 : f32 to vector<2x32xf32>
    %177 = arith.subf %176, %168 : vector<2x32xf32>
    %178 = arith.mulf %177, %175 : vector<2x32xf32>
    %179 = arith.mulf %168, %118 : vector<2x32xf32>
    %180 = arith.addf %178, %179 : vector<2x32xf32>
    %c10 = arith.constant 10 : index
    %c0_64 = arith.constant 0 : index
    %181 = vector.load %arg19[%c10, %c0_64] : memref<16x96xf32, #tpu.memory_space<vmem>>, vector<2x96xf32>
    %cst_65 = arith.constant dense<0.000000e+00> : vector<2x96xf32>
    %182 = tpu.matmul %148, %20, %cst_65 {dimension_numbers = #tpu.dot_dimension_numbers<[1], [0], [0], [1], [0, 0, 1, 1], [], []>} : vector<2x32xf32>, vector<32x96xf32>, vector<2x96xf32> -> vector<2x96xf32>
    %183 = vector.extract_strided_slice %181 {offsets = [0, 0], sizes = [2, 32], strides = [1, 1]} : vector<2x96xf32> to vector<2x32xf32>
    %184 = vector.extract_strided_slice %182 {offsets = [0, 0], sizes = [2, 32], strides = [1, 1]} : vector<2x96xf32> to vector<2x32xf32>
    %185 = arith.addf %183, %184 : vector<2x32xf32>
    %186 = arith.negf %185 : vector<2x32xf32>
    %187 = math.exp %186 : vector<2x32xf32>
    %cst_66 = arith.constant 1.000000e+00 : f32
    %188 = vector.broadcast %cst_66 : f32 to vector<2x32xf32>
    %189 = arith.addf %188, %187 : vector<2x32xf32>
    %190 = arith.divf %188, %189 : vector<2x32xf32>
    %191 = vector.extract_strided_slice %181 {offsets = [0, 32], sizes = [2, 32], strides = [1, 1]} : vector<2x96xf32> to vector<2x32xf32>
    %192 = vector.extract_strided_slice %182 {offsets = [0, 32], sizes = [2, 32], strides = [1, 1]} : vector<2x96xf32> to vector<2x32xf32>
    %193 = arith.addf %191, %192 : vector<2x32xf32>
    %194 = arith.negf %193 : vector<2x32xf32>
    %195 = math.exp %194 : vector<2x32xf32>
    %cst_67 = arith.constant 1.000000e+00 : f32
    %196 = vector.broadcast %cst_67 : f32 to vector<2x32xf32>
    %197 = arith.addf %196, %195 : vector<2x32xf32>
    %198 = arith.divf %196, %197 : vector<2x32xf32>
    %199 = vector.extract_strided_slice %181 {offsets = [0, 64], sizes = [2, 32], strides = [1, 1]} : vector<2x96xf32> to vector<2x32xf32>
    %200 = vector.extract_strided_slice %182 {offsets = [0, 64], sizes = [2, 32], strides = [1, 1]} : vector<2x96xf32> to vector<2x32xf32>
    %201 = vector.broadcast %24 : vector<1x32xf32> to vector<2x32xf32>
    %202 = arith.addf %200, %201 : vector<2x32xf32>
    %203 = arith.mulf %190, %202 : vector<2x32xf32>
    %204 = arith.addf %199, %203 : vector<2x32xf32>
    %205 = math.tanh %204 : vector<2x32xf32>
    %cst_68 = arith.constant 1.000000e+00 : f32
    %206 = vector.broadcast %cst_68 : f32 to vector<2x32xf32>
    %207 = arith.subf %206, %198 : vector<2x32xf32>
    %208 = arith.mulf %207, %205 : vector<2x32xf32>
    %209 = arith.mulf %198, %148 : vector<2x32xf32>
    %210 = arith.addf %208, %209 : vector<2x32xf32>
    %c4_69 = arith.constant 4 : index
    %c0_70 = arith.constant 0 : index
    %211 = vector.load %arg20[%c4_69, %c0_70] : memref<16x64xf32, #tpu.memory_space<vmem>>, vector<2x32xf32>
    tpu.vector_store %arg20[%c4_69, %c0_70], %180 {strides = array<i32>} : memref<16x64xf32, #tpu.memory_space<vmem>>, vector<2x32xf32>,
    %c10_71 = arith.constant 10 : index
    %c32_72 = arith.constant 32 : index
    %212 = vector.load %arg20[%c10_71, %c32_72] : memref<16x64xf32, #tpu.memory_space<vmem>>, vector<2x32xf32>
    tpu.vector_store %arg20[%c10_71, %c32_72], %210 {strides = array<i32>} : memref<16x64xf32, #tpu.memory_space<vmem>>, vector<2x32xf32>,
    %c6 = arith.constant 6 : index
    %c0_73 = arith.constant 0 : index
    %213 = vector.load %arg18[%c6, %c0_73] : memref<16x96xf32, #tpu.memory_space<vmem>>, vector<2x96xf32>
    %cst_74 = arith.constant dense<0.000000e+00> : vector<2x96xf32>
    %214 = tpu.matmul %180, %18, %cst_74 {dimension_numbers = #tpu.dot_dimension_numbers<[1], [0], [0], [1], [0, 0, 1, 1], [], []>} : vector<2x32xf32>, vector<32x96xf32>, vector<2x96xf32> -> vector<2x96xf32>
    %215 = vector.extract_strided_slice %213 {offsets = [0, 0], sizes = [2, 32], strides = [1, 1]} : vector<2x96xf32> to vector<2x32xf32>
    %216 = vector.extract_strided_slice %214 {offsets = [0, 0], sizes = [2, 32], strides = [1, 1]} : vector<2x96xf32> to vector<2x32xf32>
    %217 = arith.addf %215, %216 : vector<2x32xf32>
    %218 = arith.negf %217 : vector<2x32xf32>
    %219 = math.exp %218 : vector<2x32xf32>
    %cst_75 = arith.constant 1.000000e+00 : f32
    %220 = vector.broadcast %cst_75 : f32 to vector<2x32xf32>
    %221 = arith.addf %220, %219 : vector<2x32xf32>
    %222 = arith.divf %220, %221 : vector<2x32xf32>
    %223 = vector.extract_strided_slice %213 {offsets = [0, 32], sizes = [2, 32], strides = [1, 1]} : vector<2x96xf32> to vector<2x32xf32>
    %224 = vector.extract_strided_slice %214 {offsets = [0, 32], sizes = [2, 32], strides = [1, 1]} : vector<2x96xf32> to vector<2x32xf32>
    %225 = arith.addf %223, %224 : vector<2x32xf32>
    %226 = arith.negf %225 : vector<2x32xf32>
    %227 = math.exp %226 : vector<2x32xf32>
    %cst_76 = arith.constant 1.000000e+00 : f32
    %228 = vector.broadcast %cst_76 : f32 to vector<2x32xf32>
    %229 = arith.addf %228, %227 : vector<2x32xf32>
    %230 = arith.divf %228, %229 : vector<2x32xf32>
    %231 = vector.extract_strided_slice %213 {offsets = [0, 64], sizes = [2, 32], strides = [1, 1]} : vector<2x96xf32> to vector<2x32xf32>
    %232 = vector.extract_strided_slice %214 {offsets = [0, 64], sizes = [2, 32], strides = [1, 1]} : vector<2x96xf32> to vector<2x32xf32>
    %233 = vector.broadcast %22 : vector<1x32xf32> to vector<2x32xf32>
    %234 = arith.addf %232, %233 : vector<2x32xf32>
    %235 = arith.mulf %222, %234 : vector<2x32xf32>
    %236 = arith.addf %231, %235 : vector<2x32xf32>
    %237 = math.tanh %236 : vector<2x32xf32>
    %cst_77 = arith.constant 1.000000e+00 : f32
    %238 = vector.broadcast %cst_77 : f32 to vector<2x32xf32>
    %239 = arith.subf %238, %230 : vector<2x32xf32>
    %240 = arith.mulf %239, %237 : vector<2x32xf32>
    %241 = arith.mulf %230, %180 : vector<2x32xf32>
    %242 = arith.addf %240, %241 : vector<2x32xf32>
    %c8 = arith.constant 8 : index
    %c0_78 = arith.constant 0 : index
    %243 = vector.load %arg19[%c8, %c0_78] : memref<16x96xf32, #tpu.memory_space<vmem>>, vector<2x96xf32>
    %cst_79 = arith.constant dense<0.000000e+00> : vector<2x96xf32>
    %244 = tpu.matmul %210, %20, %cst_79 {dimension_numbers = #tpu.dot_dimension_numbers<[1], [0], [0], [1], [0, 0, 1, 1], [], []>} : vector<2x32xf32>, vector<32x96xf32>, vector<2x96xf32> -> vector<2x96xf32>
    %245 = vector.extract_strided_slice %243 {offsets = [0, 0], sizes = [2, 32], strides = [1, 1]} : vector<2x96xf32> to vector<2x32xf32>
    %246 = vector.extract_strided_slice %244 {offsets = [0, 0], sizes = [2, 32], strides = [1, 1]} : vector<2x96xf32> to vector<2x32xf32>
    %247 = arith.addf %245, %246 : vector<2x32xf32>
    %248 = arith.negf %247 : vector<2x32xf32>
    %249 = math.exp %248 : vector<2x32xf32>
    %cst_80 = arith.constant 1.000000e+00 : f32
    %250 = vector.broadcast %cst_80 : f32 to vector<2x32xf32>
    %251 = arith.addf %250, %249 : vector<2x32xf32>
    %252 = arith.divf %250, %251 : vector<2x32xf32>
    %253 = vector.extract_strided_slice %243 {offsets = [0, 32], sizes = [2, 32], strides = [1, 1]} : vector<2x96xf32> to vector<2x32xf32>
    %254 = vector.extract_strided_slice %244 {offsets = [0, 32], sizes = [2, 32], strides = [1, 1]} : vector<2x96xf32> to vector<2x32xf32>
    %255 = arith.addf %253, %254 : vector<2x32xf32>
    %256 = arith.negf %255 : vector<2x32xf32>
    %257 = math.exp %256 : vector<2x32xf32>
    %cst_81 = arith.constant 1.000000e+00 : f32
    %258 = vector.broadcast %cst_81 : f32 to vector<2x32xf32>
    %259 = arith.addf %258, %257 : vector<2x32xf32>
    %260 = arith.divf %258, %259 : vector<2x32xf32>
    %261 = vector.extract_strided_slice %243 {offsets = [0, 64], sizes = [2, 32], strides = [1, 1]} : vector<2x96xf32> to vector<2x32xf32>
    %262 = vector.extract_strided_slice %244 {offsets = [0, 64], sizes = [2, 32], strides = [1, 1]} : vector<2x96xf32> to vector<2x32xf32>
    %263 = vector.broadcast %24 : vector<1x32xf32> to vector<2x32xf32>
    %264 = arith.addf %262, %263 : vector<2x32xf32>
    %265 = arith.mulf %252, %264 : vector<2x32xf32>
    %266 = arith.addf %261, %265 : vector<2x32xf32>
    %267 = math.tanh %266 : vector<2x32xf32>
    %cst_82 = arith.constant 1.000000e+00 : f32
    %268 = vector.broadcast %cst_82 : f32 to vector<2x32xf32>
    %269 = arith.subf %268, %260 : vector<2x32xf32>
    %270 = arith.mulf %269, %267 : vector<2x32xf32>
    %271 = arith.mulf %260, %210 : vector<2x32xf32>
    %272 = arith.addf %270, %271 : vector<2x32xf32>
    %c6_83 = arith.constant 6 : index
    %c0_84 = arith.constant 0 : index
    %273 = vector.load %arg20[%c6_83, %c0_84] : memref<16x64xf32, #tpu.memory_space<vmem>>, vector<2x32xf32>
    tpu.vector_store %arg20[%c6_83, %c0_84], %242 {strides = array<i32>} : memref<16x64xf32, #tpu.memory_space<vmem>>, vector<2x32xf32>,
    %c8_85 = arith.constant 8 : index
    %c32_86 = arith.constant 32 : index
    %274 = vector.load %arg20[%c8_85, %c32_86] : memref<16x64xf32, #tpu.memory_space<vmem>>, vector<2x32xf32>
    tpu.vector_store %arg20[%c8_85, %c32_86], %272 {strides = array<i32>} : memref<16x64xf32, #tpu.memory_space<vmem>>, vector<2x32xf32>,
    %c8_87 = arith.constant 8 : index
    %c0_88 = arith.constant 0 : index
    %275 = vector.load %arg18[%c8_87, %c0_88] : memref<16x96xf32, #tpu.memory_space<vmem>>, vector<2x96xf32>
    %cst_89 = arith.constant dense<0.000000e+00> : vector<2x96xf32>
    %276 = tpu.matmul %242, %18, %cst_89 {dimension_numbers = #tpu.dot_dimension_numbers<[1], [0], [0], [1], [0, 0, 1, 1], [], []>} : vector<2x32xf32>, vector<32x96xf32>, vector<2x96xf32> -> vector<2x96xf32>
    %277 = vector.extract_strided_slice %275 {offsets = [0, 0], sizes = [2, 32], strides = [1, 1]} : vector<2x96xf32> to vector<2x32xf32>
    %278 = vector.extract_strided_slice %276 {offsets = [0, 0], sizes = [2, 32], strides = [1, 1]} : vector<2x96xf32> to vector<2x32xf32>
    %279 = arith.addf %277, %278 : vector<2x32xf32>
    %280 = arith.negf %279 : vector<2x32xf32>
    %281 = math.exp %280 : vector<2x32xf32>
    %cst_90 = arith.constant 1.000000e+00 : f32
    %282 = vector.broadcast %cst_90 : f32 to vector<2x32xf32>
    %283 = arith.addf %282, %281 : vector<2x32xf32>
    %284 = arith.divf %282, %283 : vector<2x32xf32>
    %285 = vector.extract_strided_slice %275 {offsets = [0, 32], sizes = [2, 32], strides = [1, 1]} : vector<2x96xf32> to vector<2x32xf32>
    %286 = vector.extract_strided_slice %276 {offsets = [0, 32], sizes = [2, 32], strides = [1, 1]} : vector<2x96xf32> to vector<2x32xf32>
    %287 = arith.addf %285, %286 : vector<2x32xf32>
    %288 = arith.negf %287 : vector<2x32xf32>
    %289 = math.exp %288 : vector<2x32xf32>
    %cst_91 = arith.constant 1.000000e+00 : f32
    %290 = vector.broadcast %cst_91 : f32 to vector<2x32xf32>
    %291 = arith.addf %290, %289 : vector<2x32xf32>
    %292 = arith.divf %290, %291 : vector<2x32xf32>
    %293 = vector.extract_strided_slice %275 {offsets = [0, 64], sizes = [2, 32], strides = [1, 1]} : vector<2x96xf32> to vector<2x32xf32>
    %294 = vector.extract_strided_slice %276 {offsets = [0, 64], sizes = [2, 32], strides = [1, 1]} : vector<2x96xf32> to vector<2x32xf32>
    %295 = vector.broadcast %22 : vector<1x32xf32> to vector<2x32xf32>
    %296 = arith.addf %294, %295 : vector<2x32xf32>
    %297 = arith.mulf %284, %296 : vector<2x32xf32>
    %298 = arith.addf %293, %297 : vector<2x32xf32>
    %299 = math.tanh %298 : vector<2x32xf32>
    %cst_92 = arith.constant 1.000000e+00 : f32
    %300 = vector.broadcast %cst_92 : f32 to vector<2x32xf32>
    %301 = arith.subf %300, %292 : vector<2x32xf32>
    %302 = arith.mulf %301, %299 : vector<2x32xf32>
    %303 = arith.mulf %292, %242 : vector<2x32xf32>
    %304 = arith.addf %302, %303 : vector<2x32xf32>
    %c6_93 = arith.constant 6 : index
    %c0_94 = arith.constant 0 : index
    %305 = vector.load %arg19[%c6_93, %c0_94] : memref<16x96xf32, #tpu.memory_space<vmem>>, vector<2x96xf32>
    %cst_95 = arith.constant dense<0.000000e+00> : vector<2x96xf32>
    %306 = tpu.matmul %272, %20, %cst_95 {dimension_numbers = #tpu.dot_dimension_numbers<[1], [0], [0], [1], [0, 0, 1, 1], [], []>} : vector<2x32xf32>, vector<32x96xf32>, vector<2x96xf32> -> vector<2x96xf32>
    %307 = vector.extract_strided_slice %305 {offsets = [0, 0], sizes = [2, 32], strides = [1, 1]} : vector<2x96xf32> to vector<2x32xf32>
    %308 = vector.extract_strided_slice %306 {offsets = [0, 0], sizes = [2, 32], strides = [1, 1]} : vector<2x96xf32> to vector<2x32xf32>
    %309 = arith.addf %307, %308 : vector<2x32xf32>
    %310 = arith.negf %309 : vector<2x32xf32>
    %311 = math.exp %310 : vector<2x32xf32>
    %cst_96 = arith.constant 1.000000e+00 : f32
    %312 = vector.broadcast %cst_96 : f32 to vector<2x32xf32>
    %313 = arith.addf %312, %311 : vector<2x32xf32>
    %314 = arith.divf %312, %313 : vector<2x32xf32>
    %315 = vector.extract_strided_slice %305 {offsets = [0, 32], sizes = [2, 32], strides = [1, 1]} : vector<2x96xf32> to vector<2x32xf32>
    %316 = vector.extract_strided_slice %306 {offsets = [0, 32], sizes = [2, 32], strides = [1, 1]} : vector<2x96xf32> to vector<2x32xf32>
    %317 = arith.addf %315, %316 : vector<2x32xf32>
    %318 = arith.negf %317 : vector<2x32xf32>
    %319 = math.exp %318 : vector<2x32xf32>
    %cst_97 = arith.constant 1.000000e+00 : f32
    %320 = vector.broadcast %cst_97 : f32 to vector<2x32xf32>
    %321 = arith.addf %320, %319 : vector<2x32xf32>
    %322 = arith.divf %320, %321 : vector<2x32xf32>
    %323 = vector.extract_strided_slice %305 {offsets = [0, 64], sizes = [2, 32], strides = [1, 1]} : vector<2x96xf32> to vector<2x32xf32>
    %324 = vector.extract_strided_slice %306 {offsets = [0, 64], sizes = [2, 32], strides = [1, 1]} : vector<2x96xf32> to vector<2x32xf32>
    %325 = vector.broadcast %24 : vector<1x32xf32> to vector<2x32xf32>
    %326 = arith.addf %324, %325 : vector<2x32xf32>
    %327 = arith.mulf %314, %326 : vector<2x32xf32>
    %328 = arith.addf %323, %327 : vector<2x32xf32>
    %329 = math.tanh %328 : vector<2x32xf32>
    %cst_98 = arith.constant 1.000000e+00 : f32
    %330 = vector.broadcast %cst_98 : f32 to vector<2x32xf32>
    %331 = arith.subf %330, %322 : vector<2x32xf32>
    %332 = arith.mulf %331, %329 : vector<2x32xf32>
    %333 = arith.mulf %322, %272 : vector<2x32xf32>
    %334 = arith.addf %332, %333 : vector<2x32xf32>
    %c8_99 = arith.constant 8 : index
    %c0_100 = arith.constant 0 : index
    %335 = vector.load %arg20[%c8_99, %c0_100] : memref<16x64xf32, #tpu.memory_space<vmem>>, vector<2x32xf32>
    tpu.vector_store %arg20[%c8_99, %c0_100], %304 {strides = array<i32>} : memref<16x64xf32, #tpu.memory_space<vmem>>, vector<2x32xf32>,
    %c6_101 = arith.constant 6 : index
    %c32_102 = arith.constant 32 : index
    %336 = vector.load %arg20[%c6_101, %c32_102] : memref<16x64xf32, #tpu.memory_space<vmem>>, vector<2x32xf32>
    tpu.vector_store %arg20[%c6_101, %c32_102], %334 {strides = array<i32>} : memref<16x64xf32, #tpu.memory_space<vmem>>, vector<2x32xf32>,
    %c10_103 = arith.constant 10 : index
    %c0_104 = arith.constant 0 : index
    %337 = vector.load %arg18[%c10_103, %c0_104] : memref<16x96xf32, #tpu.memory_space<vmem>>, vector<2x96xf32>
    %cst_105 = arith.constant dense<0.000000e+00> : vector<2x96xf32>
    %338 = tpu.matmul %304, %18, %cst_105 {dimension_numbers = #tpu.dot_dimension_numbers<[1], [0], [0], [1], [0, 0, 1, 1], [], []>} : vector<2x32xf32>, vector<32x96xf32>, vector<2x96xf32> -> vector<2x96xf32>
    %339 = vector.extract_strided_slice %337 {offsets = [0, 0], sizes = [2, 32], strides = [1, 1]} : vector<2x96xf32> to vector<2x32xf32>
    %340 = vector.extract_strided_slice %338 {offsets = [0, 0], sizes = [2, 32], strides = [1, 1]} : vector<2x96xf32> to vector<2x32xf32>
    %341 = arith.addf %339, %340 : vector<2x32xf32>
    %342 = arith.negf %341 : vector<2x32xf32>
    %343 = math.exp %342 : vector<2x32xf32>
    %cst_106 = arith.constant 1.000000e+00 : f32
    %344 = vector.broadcast %cst_106 : f32 to vector<2x32xf32>
    %345 = arith.addf %344, %343 : vector<2x32xf32>
    %346 = arith.divf %344, %345 : vector<2x32xf32>
    %347 = vector.extract_strided_slice %337 {offsets = [0, 32], sizes = [2, 32], strides = [1, 1]} : vector<2x96xf32> to vector<2x32xf32>
    %348 = vector.extract_strided_slice %338 {offsets = [0, 32], sizes = [2, 32], strides = [1, 1]} : vector<2x96xf32> to vector<2x32xf32>
    %349 = arith.addf %347, %348 : vector<2x32xf32>
    %350 = arith.negf %349 : vector<2x32xf32>
    %351 = math.exp %350 : vector<2x32xf32>
    %cst_107 = arith.constant 1.000000e+00 : f32
    %352 = vector.broadcast %cst_107 : f32 to vector<2x32xf32>
    %353 = arith.addf %352, %351 : vector<2x32xf32>
    %354 = arith.divf %352, %353 : vector<2x32xf32>
    %355 = vector.extract_strided_slice %337 {offsets = [0, 64], sizes = [2, 32], strides = [1, 1]} : vector<2x96xf32> to vector<2x32xf32>
    %356 = vector.extract_strided_slice %338 {offsets = [0, 64], sizes = [2, 32], strides = [1, 1]} : vector<2x96xf32> to vector<2x32xf32>
    %357 = vector.broadcast %22 : vector<1x32xf32> to vector<2x32xf32>
    %358 = arith.addf %356, %357 : vector<2x32xf32>
    %359 = arith.mulf %346, %358 : vector<2x32xf32>
    %360 = arith.addf %355, %359 : vector<2x32xf32>
    %361 = math.tanh %360 : vector<2x32xf32>
    %cst_108 = arith.constant 1.000000e+00 : f32
    %362 = vector.broadcast %cst_108 : f32 to vector<2x32xf32>
    %363 = arith.subf %362, %354 : vector<2x32xf32>
    %364 = arith.mulf %363, %361 : vector<2x32xf32>
    %365 = arith.mulf %354, %304 : vector<2x32xf32>
    %366 = arith.addf %364, %365 : vector<2x32xf32>
    %c4_109 = arith.constant 4 : index
    %c0_110 = arith.constant 0 : index
    %367 = vector.load %arg19[%c4_109, %c0_110] : memref<16x96xf32, #tpu.memory_space<vmem>>, vector<2x96xf32>
    %cst_111 = arith.constant dense<0.000000e+00> : vector<2x96xf32>
    %368 = tpu.matmul %334, %20, %cst_111 {dimension_numbers = #tpu.dot_dimension_numbers<[1], [0], [0], [1], [0, 0, 1, 1], [], []>} : vector<2x32xf32>, vector<32x96xf32>, vector<2x96xf32> -> vector<2x96xf32>
    %369 = vector.extract_strided_slice %367 {offsets = [0, 0], sizes = [2, 32], strides = [1, 1]} : vector<2x96xf32> to vector<2x32xf32>
    %370 = vector.extract_strided_slice %368 {offsets = [0, 0], sizes = [2, 32], strides = [1, 1]} : vector<2x96xf32> to vector<2x32xf32>
    %371 = arith.addf %369, %370 : vector<2x32xf32>
    %372 = arith.negf %371 : vector<2x32xf32>
    %373 = math.exp %372 : vector<2x32xf32>
    %cst_112 = arith.constant 1.000000e+00 : f32
    %374 = vector.broadcast %cst_112 : f32 to vector<2x32xf32>
    %375 = arith.addf %374, %373 : vector<2x32xf32>
    %376 = arith.divf %374, %375 : vector<2x32xf32>
    %377 = vector.extract_strided_slice %367 {offsets = [0, 32], sizes = [2, 32], strides = [1, 1]} : vector<2x96xf32> to vector<2x32xf32>
    %378 = vector.extract_strided_slice %368 {offsets = [0, 32], sizes = [2, 32], strides = [1, 1]} : vector<2x96xf32> to vector<2x32xf32>
    %379 = arith.addf %377, %378 : vector<2x32xf32>
    %380 = arith.negf %379 : vector<2x32xf32>
    %381 = math.exp %380 : vector<2x32xf32>
    %cst_113 = arith.constant 1.000000e+00 : f32
    %382 = vector.broadcast %cst_113 : f32 to vector<2x32xf32>
    %383 = arith.addf %382, %381 : vector<2x32xf32>
    %384 = arith.divf %382, %383 : vector<2x32xf32>
    %385 = vector.extract_strided_slice %367 {offsets = [0, 64], sizes = [2, 32], strides = [1, 1]} : vector<2x96xf32> to vector<2x32xf32>
    %386 = vector.extract_strided_slice %368 {offsets = [0, 64], sizes = [2, 32], strides = [1, 1]} : vector<2x96xf32> to vector<2x32xf32>
    %387 = vector.broadcast %24 : vector<1x32xf32> to vector<2x32xf32>
    %388 = arith.addf %386, %387 : vector<2x32xf32>
    %389 = arith.mulf %376, %388 : vector<2x32xf32>
    %390 = arith.addf %385, %389 : vector<2x32xf32>
    %391 = math.tanh %390 : vector<2x32xf32>
    %cst_114 = arith.constant 1.000000e+00 : f32
    %392 = vector.broadcast %cst_114 : f32 to vector<2x32xf32>
    %393 = arith.subf %392, %384 : vector<2x32xf32>
    %394 = arith.mulf %393, %391 : vector<2x32xf32>
    %395 = arith.mulf %384, %334 : vector<2x32xf32>
    %396 = arith.addf %394, %395 : vector<2x32xf32>
    %c10_115 = arith.constant 10 : index
    %c0_116 = arith.constant 0 : index
    %397 = vector.load %arg20[%c10_115, %c0_116] : memref<16x64xf32, #tpu.memory_space<vmem>>, vector<2x32xf32>
    tpu.vector_store %arg20[%c10_115, %c0_116], %366 {strides = array<i32>} : memref<16x64xf32, #tpu.memory_space<vmem>>, vector<2x32xf32>,
    %c4_117 = arith.constant 4 : index
    %c32_118 = arith.constant 32 : index
    %398 = vector.load %arg20[%c4_117, %c32_118] : memref<16x64xf32, #tpu.memory_space<vmem>>, vector<2x32xf32>
    tpu.vector_store %arg20[%c4_117, %c32_118], %396 {strides = array<i32>} : memref<16x64xf32, #tpu.memory_space<vmem>>, vector<2x32xf32>,
    %c12_119 = arith.constant 12 : index
    %c0_120 = arith.constant 0 : index
    %399 = vector.load %arg18[%c12_119, %c0_120] : memref<16x96xf32, #tpu.memory_space<vmem>>, vector<2x96xf32>
    %cst_121 = arith.constant dense<0.000000e+00> : vector<2x96xf32>
    %400 = tpu.matmul %366, %18, %cst_121 {dimension_numbers = #tpu.dot_dimension_numbers<[1], [0], [0], [1], [0, 0, 1, 1], [], []>} : vector<2x32xf32>, vector<32x96xf32>, vector<2x96xf32> -> vector<2x96xf32>
    %401 = vector.extract_strided_slice %399 {offsets = [0, 0], sizes = [2, 32], strides = [1, 1]} : vector<2x96xf32> to vector<2x32xf32>
    %402 = vector.extract_strided_slice %400 {offsets = [0, 0], sizes = [2, 32], strides = [1, 1]} : vector<2x96xf32> to vector<2x32xf32>
    %403 = arith.addf %401, %402 : vector<2x32xf32>
    %404 = arith.negf %403 : vector<2x32xf32>
    %405 = math.exp %404 : vector<2x32xf32>
    %cst_122 = arith.constant 1.000000e+00 : f32
    %406 = vector.broadcast %cst_122 : f32 to vector<2x32xf32>
    %407 = arith.addf %406, %405 : vector<2x32xf32>
    %408 = arith.divf %406, %407 : vector<2x32xf32>
    %409 = vector.extract_strided_slice %399 {offsets = [0, 32], sizes = [2, 32], strides = [1, 1]} : vector<2x96xf32> to vector<2x32xf32>
    %410 = vector.extract_strided_slice %400 {offsets = [0, 32], sizes = [2, 32], strides = [1, 1]} : vector<2x96xf32> to vector<2x32xf32>
    %411 = arith.addf %409, %410 : vector<2x32xf32>
    %412 = arith.negf %411 : vector<2x32xf32>
    %413 = math.exp %412 : vector<2x32xf32>
    %cst_123 = arith.constant 1.000000e+00 : f32
    %414 = vector.broadcast %cst_123 : f32 to vector<2x32xf32>
    %415 = arith.addf %414, %413 : vector<2x32xf32>
    %416 = arith.divf %414, %415 : vector<2x32xf32>
    %417 = vector.extract_strided_slice %399 {offsets = [0, 64], sizes = [2, 32], strides = [1, 1]} : vector<2x96xf32> to vector<2x32xf32>
    %418 = vector.extract_strided_slice %400 {offsets = [0, 64], sizes = [2, 32], strides = [1, 1]} : vector<2x96xf32> to vector<2x32xf32>
    %419 = vector.broadcast %22 : vector<1x32xf32> to vector<2x32xf32>
    %420 = arith.addf %418, %419 : vector<2x32xf32>
    %421 = arith.mulf %408, %420 : vector<2x32xf32>
    %422 = arith.addf %417, %421 : vector<2x32xf32>
    %423 = math.tanh %422 : vector<2x32xf32>
    %cst_124 = arith.constant 1.000000e+00 : f32
    %424 = vector.broadcast %cst_124 : f32 to vector<2x32xf32>
    %425 = arith.subf %424, %416 : vector<2x32xf32>
    %426 = arith.mulf %425, %423 : vector<2x32xf32>
    %427 = arith.mulf %416, %366 : vector<2x32xf32>
    %428 = arith.addf %426, %427 : vector<2x32xf32>
    %c2_125 = arith.constant 2 : index
    %c0_126 = arith.constant 0 : index
    %429 = vector.load %arg19[%c2_125, %c0_126] : memref<16x96xf32, #tpu.memory_space<vmem>>, vector<2x96xf32>
    %cst_127 = arith.constant dense<0.000000e+00> : vector<2x96xf32>
    %430 = tpu.matmul %396, %20, %cst_127 {dimension_numbers = #tpu.dot_dimension_numbers<[1], [0], [0], [1], [0, 0, 1, 1], [], []>} : vector<2x32xf32>, vector<32x96xf32>, vector<2x96xf32> -> vector<2x96xf32>
    %431 = vector.extract_strided_slice %429 {offsets = [0, 0], sizes = [2, 32], strides = [1, 1]} : vector<2x96xf32> to vector<2x32xf32>
    %432 = vector.extract_strided_slice %430 {offsets = [0, 0], sizes = [2, 32], strides = [1, 1]} : vector<2x96xf32> to vector<2x32xf32>
    %433 = arith.addf %431, %432 : vector<2x32xf32>
    %434 = arith.negf %433 : vector<2x32xf32>
    %435 = math.exp %434 : vector<2x32xf32>
    %cst_128 = arith.constant 1.000000e+00 : f32
    %436 = vector.broadcast %cst_128 : f32 to vector<2x32xf32>
    %437 = arith.addf %436, %435 : vector<2x32xf32>
    %438 = arith.divf %436, %437 : vector<2x32xf32>
    %439 = vector.extract_strided_slice %429 {offsets = [0, 32], sizes = [2, 32], strides = [1, 1]} : vector<2x96xf32> to vector<2x32xf32>
    %440 = vector.extract_strided_slice %430 {offsets = [0, 32], sizes = [2, 32], strides = [1, 1]} : vector<2x96xf32> to vector<2x32xf32>
    %441 = arith.addf %439, %440 : vector<2x32xf32>
    %442 = arith.negf %441 : vector<2x32xf32>
    %443 = math.exp %442 : vector<2x32xf32>
    %cst_129 = arith.constant 1.000000e+00 : f32
    %444 = vector.broadcast %cst_129 : f32 to vector<2x32xf32>
    %445 = arith.addf %444, %443 : vector<2x32xf32>
    %446 = arith.divf %444, %445 : vector<2x32xf32>
    %447 = vector.extract_strided_slice %429 {offsets = [0, 64], sizes = [2, 32], strides = [1, 1]} : vector<2x96xf32> to vector<2x32xf32>
    %448 = vector.extract_strided_slice %430 {offsets = [0, 64], sizes = [2, 32], strides = [1, 1]} : vector<2x96xf32> to vector<2x32xf32>
    %449 = vector.broadcast %24 : vector<1x32xf32> to vector<2x32xf32>
    %450 = arith.addf %448, %449 : vector<2x32xf32>
    %451 = arith.mulf %438, %450 : vector<2x32xf32>
    %452 = arith.addf %447, %451 : vector<2x32xf32>
    %453 = math.tanh %452 : vector<2x32xf32>
    %cst_130 = arith.constant 1.000000e+00 : f32
    %454 = vector.broadcast %cst_130 : f32 to vector<2x32xf32>
    %455 = arith.subf %454, %446 : vector<2x32xf32>
    %456 = arith.mulf %455, %453 : vector<2x32xf32>
    %457 = arith.mulf %446, %396 : vector<2x32xf32>
    %458 = arith.addf %456, %457 : vector<2x32xf32>
    %c12_131 = arith.constant 12 : index
    %c0_132 = arith.constant 0 : index
    %459 = vector.load %arg20[%c12_131, %c0_132] : memref<16x64xf32, #tpu.memory_space<vmem>>, vector<2x32xf32>
    tpu.vector_store %arg20[%c12_131, %c0_132], %428 {strides = array<i32>} : memref<16x64xf32, #tpu.memory_space<vmem>>, vector<2x32xf32>,
    %c2_133 = arith.constant 2 : index
    %c32_134 = arith.constant 32 : index
    %460 = vector.load %arg20[%c2_133, %c32_134] : memref<16x64xf32, #tpu.memory_space<vmem>>, vector<2x32xf32>
    tpu.vector_store %arg20[%c2_133, %c32_134], %458 {strides = array<i32>} : memref<16x64xf32, #tpu.memory_space<vmem>>, vector<2x32xf32>,
    %c14_135 = arith.constant 14 : index
    %c0_136 = arith.constant 0 : index
    %461 = vector.load %arg18[%c14_135, %c0_136] : memref<16x96xf32, #tpu.memory_space<vmem>>, vector<2x96xf32>
    %cst_137 = arith.constant dense<0.000000e+00> : vector<2x96xf32>
    %462 = tpu.matmul %428, %18, %cst_137 {dimension_numbers = #tpu.dot_dimension_numbers<[1], [0], [0], [1], [0, 0, 1, 1], [], []>} : vector<2x32xf32>, vector<32x96xf32>, vector<2x96xf32> -> vector<2x96xf32>
    %463 = vector.extract_strided_slice %461 {offsets = [0, 0], sizes = [2, 32], strides = [1, 1]} : vector<2x96xf32> to vector<2x32xf32>
    %464 = vector.extract_strided_slice %462 {offsets = [0, 0], sizes = [2, 32], strides = [1, 1]} : vector<2x96xf32> to vector<2x32xf32>
    %465 = arith.addf %463, %464 : vector<2x32xf32>
    %466 = arith.negf %465 : vector<2x32xf32>
    %467 = math.exp %466 : vector<2x32xf32>
    %cst_138 = arith.constant 1.000000e+00 : f32
    %468 = vector.broadcast %cst_138 : f32 to vector<2x32xf32>
    %469 = arith.addf %468, %467 : vector<2x32xf32>
    %470 = arith.divf %468, %469 : vector<2x32xf32>
    %471 = vector.extract_strided_slice %461 {offsets = [0, 32], sizes = [2, 32], strides = [1, 1]} : vector<2x96xf32> to vector<2x32xf32>
    %472 = vector.extract_strided_slice %462 {offsets = [0, 32], sizes = [2, 32], strides = [1, 1]} : vector<2x96xf32> to vector<2x32xf32>
    %473 = arith.addf %471, %472 : vector<2x32xf32>
    %474 = arith.negf %473 : vector<2x32xf32>
    %475 = math.exp %474 : vector<2x32xf32>
    %cst_139 = arith.constant 1.000000e+00 : f32
    %476 = vector.broadcast %cst_139 : f32 to vector<2x32xf32>
    %477 = arith.addf %476, %475 : vector<2x32xf32>
    %478 = arith.divf %476, %477 : vector<2x32xf32>
    %479 = vector.extract_strided_slice %461 {offsets = [0, 64], sizes = [2, 32], strides = [1, 1]} : vector<2x96xf32> to vector<2x32xf32>
    %480 = vector.extract_strided_slice %462 {offsets = [0, 64], sizes = [2, 32], strides = [1, 1]} : vector<2x96xf32> to vector<2x32xf32>
    %481 = vector.broadcast %22 : vector<1x32xf32> to vector<2x32xf32>
    %482 = arith.addf %480, %481 : vector<2x32xf32>
    %483 = arith.mulf %470, %482 : vector<2x32xf32>
    %484 = arith.addf %479, %483 : vector<2x32xf32>
    %485 = math.tanh %484 : vector<2x32xf32>
    %cst_140 = arith.constant 1.000000e+00 : f32
    %486 = vector.broadcast %cst_140 : f32 to vector<2x32xf32>
    %487 = arith.subf %486, %478 : vector<2x32xf32>
    %488 = arith.mulf %487, %485 : vector<2x32xf32>
    %489 = arith.mulf %478, %428 : vector<2x32xf32>
    %490 = arith.addf %488, %489 : vector<2x32xf32>
    %c0_141 = arith.constant 0 : index
    %c0_142 = arith.constant 0 : index
    %491 = vector.load %arg19[%c0_141, %c0_142] : memref<16x96xf32, #tpu.memory_space<vmem>>, vector<2x96xf32>
    %cst_143 = arith.constant dense<0.000000e+00> : vector<2x96xf32>
    %492 = tpu.matmul %458, %20, %cst_143 {dimension_numbers = #tpu.dot_dimension_numbers<[1], [0], [0], [1], [0, 0, 1, 1], [], []>} : vector<2x32xf32>, vector<32x96xf32>, vector<2x96xf32> -> vector<2x96xf32>
    %493 = vector.extract_strided_slice %491 {offsets = [0, 0], sizes = [2, 32], strides = [1, 1]} : vector<2x96xf32> to vector<2x32xf32>
    %494 = vector.extract_strided_slice %492 {offsets = [0, 0], sizes = [2, 32], strides = [1, 1]} : vector<2x96xf32> to vector<2x32xf32>
    %495 = arith.addf %493, %494 : vector<2x32xf32>
    %496 = arith.negf %495 : vector<2x32xf32>
    %497 = math.exp %496 : vector<2x32xf32>
    %cst_144 = arith.constant 1.000000e+00 : f32
    %498 = vector.broadcast %cst_144 : f32 to vector<2x32xf32>
    %499 = arith.addf %498, %497 : vector<2x32xf32>
    %500 = arith.divf %498, %499 : vector<2x32xf32>
    %501 = vector.extract_strided_slice %491 {offsets = [0, 32], sizes = [2, 32], strides = [1, 1]} : vector<2x96xf32> to vector<2x32xf32>
    %502 = vector.extract_strided_slice %492 {offsets = [0, 32], sizes = [2, 32], strides = [1, 1]} : vector<2x96xf32> to vector<2x32xf32>
    %503 = arith.addf %501, %502 : vector<2x32xf32>
    %504 = arith.negf %503 : vector<2x32xf32>
    %505 = math.exp %504 : vector<2x32xf32>
    %cst_145 = arith.constant 1.000000e+00 : f32
    %506 = vector.broadcast %cst_145 : f32 to vector<2x32xf32>
    %507 = arith.addf %506, %505 : vector<2x32xf32>
    %508 = arith.divf %506, %507 : vector<2x32xf32>
    %509 = vector.extract_strided_slice %491 {offsets = [0, 64], sizes = [2, 32], strides = [1, 1]} : vector<2x96xf32> to vector<2x32xf32>
    %510 = vector.extract_strided_slice %492 {offsets = [0, 64], sizes = [2, 32], strides = [1, 1]} : vector<2x96xf32> to vector<2x32xf32>
    %511 = vector.broadcast %24 : vector<1x32xf32> to vector<2x32xf32>
    %512 = arith.addf %510, %511 : vector<2x32xf32>
    %513 = arith.mulf %500, %512 : vector<2x32xf32>
    %514 = arith.addf %509, %513 : vector<2x32xf32>
    %515 = math.tanh %514 : vector<2x32xf32>
    %cst_146 = arith.constant 1.000000e+00 : f32
    %516 = vector.broadcast %cst_146 : f32 to vector<2x32xf32>
    %517 = arith.subf %516, %508 : vector<2x32xf32>
    %518 = arith.mulf %517, %515 : vector<2x32xf32>
    %519 = arith.mulf %508, %458 : vector<2x32xf32>
    %520 = arith.addf %518, %519 : vector<2x32xf32>
    %c14_147 = arith.constant 14 : index
    %c0_148 = arith.constant 0 : index
    %521 = vector.load %arg20[%c14_147, %c0_148] : memref<16x64xf32, #tpu.memory_space<vmem>>, vector<2x32xf32>
    tpu.vector_store %arg20[%c14_147, %c0_148], %490 {strides = array<i32>} : memref<16x64xf32, #tpu.memory_space<vmem>>, vector<2x32xf32>,
    %c0_149 = arith.constant 0 : index
    %c32_150 = arith.constant 32 : index
    %522 = vector.load %arg20[%c0_149, %c32_150] : memref<16x64xf32, #tpu.memory_space<vmem>>, vector<2x32xf32>
    tpu.vector_store %arg20[%c0_149, %c32_150], %520 {strides = array<i32>} : memref<16x64xf32, #tpu.memory_space<vmem>>, vector<2x32xf32>,
    %523 = tpu.concatenate %490, %520 in 1 : vector<2x32xf32>, vector<2x32xf32> -> vector<2x64xf32>
    %c0_151 = arith.constant 0 : index
    %c0_152 = arith.constant 0 : index
    %524 = vector.load %arg20[%c0_151, %c0_152] : memref<16x64xf32, #tpu.memory_space<vmem>>, vector<16x64xf32>
    %c0_153 = arith.constant 0 : index
    %c0_154 = arith.constant 0 : index
    %c0_155 = arith.constant 0 : index
    %525 = vector.load %arg6[%c0_153, %c0_154, %c0_155] : memref<2x64x96xf32, #tpu.memory_space<vmem>>, vector<1x64x96xf32>
    %526 = vector.shape_cast %525 : vector<1x64x96xf32> to vector<64x96xf32>
    %cst_156 = arith.constant dense<0.000000e+00> : vector<16x96xf32>
    %527 = tpu.matmul %524, %526, %cst_156 {dimension_numbers = #tpu.dot_dimension_numbers<[1], [0], [0], [1], [0, 0, 1, 1], [], []>} : vector<16x64xf32>, vector<64x96xf32>, vector<16x96xf32> -> vector<16x96xf32>
    %c0_157 = arith.constant 0 : index
    %c0_158 = arith.constant 0 : index
    %c0_159 = arith.constant 0 : index
    %528 = vector.load %arg7[%c0_157, %c0_158, %c0_159] : memref<2x1x96xf32, #tpu.memory_space<vmem>>, vector<1x1x96xf32>
    %529 = vector.shape_cast %528 : vector<1x1x96xf32> to vector<1x96xf32>
    %530 = vector.broadcast %529 : vector<1x96xf32> to vector<16x96xf32>
    %531 = arith.addf %527, %530 : vector<16x96xf32>
    %c0_160 = arith.constant 0 : index
    %c0_161 = arith.constant 0 : index
    %532 = vector.load %arg18[%c0_160, %c0_161] : memref<16x96xf32, #tpu.memory_space<vmem>>, vector<16x96xf32>
    tpu.vector_store %arg18[%c0_160, %c0_161], %531 {strides = array<i32>} : memref<16x96xf32, #tpu.memory_space<vmem>>, vector<16x96xf32>,
    %c1_162 = arith.constant 1 : index
    %c0_163 = arith.constant 0 : index
    %c0_164 = arith.constant 0 : index
    %533 = vector.load %arg6[%c1_162, %c0_163, %c0_164] : memref<2x64x96xf32, #tpu.memory_space<vmem>>, vector<1x64x96xf32>
    %534 = vector.shape_cast %533 : vector<1x64x96xf32> to vector<64x96xf32>
    %cst_165 = arith.constant dense<0.000000e+00> : vector<16x96xf32>
    %535 = tpu.matmul %524, %534, %cst_165 {dimension_numbers = #tpu.dot_dimension_numbers<[1], [0], [0], [1], [0, 0, 1, 1], [], []>} : vector<16x64xf32>, vector<64x96xf32>, vector<16x96xf32> -> vector<16x96xf32>
    %c1_166 = arith.constant 1 : index
    %c0_167 = arith.constant 0 : index
    %c0_168 = arith.constant 0 : index
    %536 = vector.load %arg7[%c1_166, %c0_167, %c0_168] : memref<2x1x96xf32, #tpu.memory_space<vmem>>, vector<1x1x96xf32>
    %537 = vector.shape_cast %536 : vector<1x1x96xf32> to vector<1x96xf32>
    %538 = vector.broadcast %537 : vector<1x96xf32> to vector<16x96xf32>
    %539 = arith.addf %535, %538 : vector<16x96xf32>
    %c0_169 = arith.constant 0 : index
    %c0_170 = arith.constant 0 : index
    %540 = vector.load %arg19[%c0_169, %c0_170] : memref<16x96xf32, #tpu.memory_space<vmem>>, vector<16x96xf32>
    tpu.vector_store %arg19[%c0_169, %c0_170], %539 {strides = array<i32>} : memref<16x96xf32, #tpu.memory_space<vmem>>, vector<16x96xf32>,
    %c0_171 = arith.constant 0 : index
    %c0_172 = arith.constant 0 : index
    %c0_173 = arith.constant 0 : index
    %541 = vector.load %arg8[%c0_171, %c0_172, %c0_173] : memref<2x32x96xf32, #tpu.memory_space<vmem>>, vector<1x32x96xf32>
    %542 = vector.shape_cast %541 : vector<1x32x96xf32> to vector<32x96xf32>
    %c1_174 = arith.constant 1 : index
    %c0_175 = arith.constant 0 : index
    %c0_176 = arith.constant 0 : index
    %543 = vector.load %arg8[%c1_174, %c0_175, %c0_176] : memref<2x32x96xf32, #tpu.memory_space<vmem>>, vector<1x32x96xf32>
    %544 = vector.shape_cast %543 : vector<1x32x96xf32> to vector<32x96xf32>
    %c0_177 = arith.constant 0 : index
    %c0_178 = arith.constant 0 : index
    %c0_179 = arith.constant 0 : index
    %545 = vector.load %arg9[%c0_177, %c0_178, %c0_179] : memref<2x1x32xf32, #tpu.memory_space<vmem>>, vector<1x1x32xf32>
    %546 = vector.shape_cast %545 : vector<1x1x32xf32> to vector<1x32xf32>
    %c1_180 = arith.constant 1 : index
    %c0_181 = arith.constant 0 : index
    %c0_182 = arith.constant 0 : index
    %547 = vector.load %arg9[%c1_180, %c0_181, %c0_182] : memref<2x1x32xf32, #tpu.memory_space<vmem>>, vector<1x1x32xf32>
    %548 = vector.shape_cast %547 : vector<1x1x32xf32> to vector<1x32xf32>
    %cst_183 = arith.constant 0.000000e+00 : f32
    %549 = vector.broadcast %cst_183 : f32 to vector<2x32xf32>
    %cst_184 = arith.constant 0.000000e+00 : f32
    %550 = vector.broadcast %cst_184 : f32 to vector<2x32xf32>
    %c0_185 = arith.constant 0 : index
    %c0_186 = arith.constant 0 : index
    %551 = vector.load %arg18[%c0_185, %c0_186] : memref<16x96xf32, #tpu.memory_space<vmem>>, vector<2x96xf32>
    %cst_187 = arith.constant dense<0.000000e+00> : vector<2x96xf32>
    %552 = tpu.matmul %549, %542, %cst_187 {dimension_numbers = #tpu.dot_dimension_numbers<[1], [0], [0], [1], [0, 0, 1, 1], [], []>} : vector<2x32xf32>, vector<32x96xf32>, vector<2x96xf32> -> vector<2x96xf32>
    %553 = vector.extract_strided_slice %551 {offsets = [0, 0], sizes = [2, 32], strides = [1, 1]} : vector<2x96xf32> to vector<2x32xf32>
    %554 = vector.extract_strided_slice %552 {offsets = [0, 0], sizes = [2, 32], strides = [1, 1]} : vector<2x96xf32> to vector<2x32xf32>
    %555 = arith.addf %553, %554 : vector<2x32xf32>
    %556 = arith.negf %555 : vector<2x32xf32>
    %557 = math.exp %556 : vector<2x32xf32>
    %cst_188 = arith.constant 1.000000e+00 : f32
    %558 = vector.broadcast %cst_188 : f32 to vector<2x32xf32>
    %559 = arith.addf %558, %557 : vector<2x32xf32>
    %560 = arith.divf %558, %559 : vector<2x32xf32>
    %561 = vector.extract_strided_slice %551 {offsets = [0, 32], sizes = [2, 32], strides = [1, 1]} : vector<2x96xf32> to vector<2x32xf32>
    %562 = vector.extract_strided_slice %552 {offsets = [0, 32], sizes = [2, 32], strides = [1, 1]} : vector<2x96xf32> to vector<2x32xf32>
    %563 = arith.addf %561, %562 : vector<2x32xf32>
    %564 = arith.negf %563 : vector<2x32xf32>
    %565 = math.exp %564 : vector<2x32xf32>
    %cst_189 = arith.constant 1.000000e+00 : f32
    %566 = vector.broadcast %cst_189 : f32 to vector<2x32xf32>
    %567 = arith.addf %566, %565 : vector<2x32xf32>
    %568 = arith.divf %566, %567 : vector<2x32xf32>
    %569 = vector.extract_strided_slice %551 {offsets = [0, 64], sizes = [2, 32], strides = [1, 1]} : vector<2x96xf32> to vector<2x32xf32>
    %570 = vector.extract_strided_slice %552 {offsets = [0, 64], sizes = [2, 32], strides = [1, 1]} : vector<2x96xf32> to vector<2x32xf32>
    %571 = vector.broadcast %546 : vector<1x32xf32> to vector<2x32xf32>
    %572 = arith.addf %570, %571 : vector<2x32xf32>
    %573 = arith.mulf %560, %572 : vector<2x32xf32>
    %574 = arith.addf %569, %573 : vector<2x32xf32>
    %575 = math.tanh %574 : vector<2x32xf32>
    %cst_190 = arith.constant 1.000000e+00 : f32
    %576 = vector.broadcast %cst_190 : f32 to vector<2x32xf32>
    %577 = arith.subf %576, %568 : vector<2x32xf32>
    %578 = arith.mulf %577, %575 : vector<2x32xf32>
    %579 = arith.mulf %568, %549 : vector<2x32xf32>
    %580 = arith.addf %578, %579 : vector<2x32xf32>
    %c14_191 = arith.constant 14 : index
    %c0_192 = arith.constant 0 : index
    %581 = vector.load %arg19[%c14_191, %c0_192] : memref<16x96xf32, #tpu.memory_space<vmem>>, vector<2x96xf32>
    %cst_193 = arith.constant dense<0.000000e+00> : vector<2x96xf32>
    %582 = tpu.matmul %550, %544, %cst_193 {dimension_numbers = #tpu.dot_dimension_numbers<[1], [0], [0], [1], [0, 0, 1, 1], [], []>} : vector<2x32xf32>, vector<32x96xf32>, vector<2x96xf32> -> vector<2x96xf32>
    %583 = vector.extract_strided_slice %581 {offsets = [0, 0], sizes = [2, 32], strides = [1, 1]} : vector<2x96xf32> to vector<2x32xf32>
    %584 = vector.extract_strided_slice %582 {offsets = [0, 0], sizes = [2, 32], strides = [1, 1]} : vector<2x96xf32> to vector<2x32xf32>
    %585 = arith.addf %583, %584 : vector<2x32xf32>
    %586 = arith.negf %585 : vector<2x32xf32>
    %587 = math.exp %586 : vector<2x32xf32>
    %cst_194 = arith.constant 1.000000e+00 : f32
    %588 = vector.broadcast %cst_194 : f32 to vector<2x32xf32>
    %589 = arith.addf %588, %587 : vector<2x32xf32>
    %590 = arith.divf %588, %589 : vector<2x32xf32>
    %591 = vector.extract_strided_slice %581 {offsets = [0, 32], sizes = [2, 32], strides = [1, 1]} : vector<2x96xf32> to vector<2x32xf32>
    %592 = vector.extract_strided_slice %582 {offsets = [0, 32], sizes = [2, 32], strides = [1, 1]} : vector<2x96xf32> to vector<2x32xf32>
    %593 = arith.addf %591, %592 : vector<2x32xf32>
    %594 = arith.negf %593 : vector<2x32xf32>
    %595 = math.exp %594 : vector<2x32xf32>
    %cst_195 = arith.constant 1.000000e+00 : f32
    %596 = vector.broadcast %cst_195 : f32 to vector<2x32xf32>
    %597 = arith.addf %596, %595 : vector<2x32xf32>
    %598 = arith.divf %596, %597 : vector<2x32xf32>
    %599 = vector.extract_strided_slice %581 {offsets = [0, 64], sizes = [2, 32], strides = [1, 1]} : vector<2x96xf32> to vector<2x32xf32>
    %600 = vector.extract_strided_slice %582 {offsets = [0, 64], sizes = [2, 32], strides = [1, 1]} : vector<2x96xf32> to vector<2x32xf32>
    %601 = vector.broadcast %548 : vector<1x32xf32> to vector<2x32xf32>
    %602 = arith.addf %600, %601 : vector<2x32xf32>
    %603 = arith.mulf %590, %602 : vector<2x32xf32>
    %604 = arith.addf %599, %603 : vector<2x32xf32>
    %605 = math.tanh %604 : vector<2x32xf32>
    %cst_196 = arith.constant 1.000000e+00 : f32
    %606 = vector.broadcast %cst_196 : f32 to vector<2x32xf32>
    %607 = arith.subf %606, %598 : vector<2x32xf32>
    %608 = arith.mulf %607, %605 : vector<2x32xf32>
    %609 = arith.mulf %598, %550 : vector<2x32xf32>
    %610 = arith.addf %608, %609 : vector<2x32xf32>
    %c2_197 = arith.constant 2 : index
    %c0_198 = arith.constant 0 : index
    %611 = vector.load %arg18[%c2_197, %c0_198] : memref<16x96xf32, #tpu.memory_space<vmem>>, vector<2x96xf32>
    %cst_199 = arith.constant dense<0.000000e+00> : vector<2x96xf32>
    %612 = tpu.matmul %580, %542, %cst_199 {dimension_numbers = #tpu.dot_dimension_numbers<[1], [0], [0], [1], [0, 0, 1, 1], [], []>} : vector<2x32xf32>, vector<32x96xf32>, vector<2x96xf32> -> vector<2x96xf32>
    %613 = vector.extract_strided_slice %611 {offsets = [0, 0], sizes = [2, 32], strides = [1, 1]} : vector<2x96xf32> to vector<2x32xf32>
    %614 = vector.extract_strided_slice %612 {offsets = [0, 0], sizes = [2, 32], strides = [1, 1]} : vector<2x96xf32> to vector<2x32xf32>
    %615 = arith.addf %613, %614 : vector<2x32xf32>
    %616 = arith.negf %615 : vector<2x32xf32>
    %617 = math.exp %616 : vector<2x32xf32>
    %cst_200 = arith.constant 1.000000e+00 : f32
    %618 = vector.broadcast %cst_200 : f32 to vector<2x32xf32>
    %619 = arith.addf %618, %617 : vector<2x32xf32>
    %620 = arith.divf %618, %619 : vector<2x32xf32>
    %621 = vector.extract_strided_slice %611 {offsets = [0, 32], sizes = [2, 32], strides = [1, 1]} : vector<2x96xf32> to vector<2x32xf32>
    %622 = vector.extract_strided_slice %612 {offsets = [0, 32], sizes = [2, 32], strides = [1, 1]} : vector<2x96xf32> to vector<2x32xf32>
    %623 = arith.addf %621, %622 : vector<2x32xf32>
    %624 = arith.negf %623 : vector<2x32xf32>
    %625 = math.exp %624 : vector<2x32xf32>
    %cst_201 = arith.constant 1.000000e+00 : f32
    %626 = vector.broadcast %cst_201 : f32 to vector<2x32xf32>
    %627 = arith.addf %626, %625 : vector<2x32xf32>
    %628 = arith.divf %626, %627 : vector<2x32xf32>
    %629 = vector.extract_strided_slice %611 {offsets = [0, 64], sizes = [2, 32], strides = [1, 1]} : vector<2x96xf32> to vector<2x32xf32>
    %630 = vector.extract_strided_slice %612 {offsets = [0, 64], sizes = [2, 32], strides = [1, 1]} : vector<2x96xf32> to vector<2x32xf32>
    %631 = vector.broadcast %546 : vector<1x32xf32> to vector<2x32xf32>
    %632 = arith.addf %630, %631 : vector<2x32xf32>
    %633 = arith.mulf %620, %632 : vector<2x32xf32>
    %634 = arith.addf %629, %633 : vector<2x32xf32>
    %635 = math.tanh %634 : vector<2x32xf32>
    %cst_202 = arith.constant 1.000000e+00 : f32
    %636 = vector.broadcast %cst_202 : f32 to vector<2x32xf32>
    %637 = arith.subf %636, %628 : vector<2x32xf32>
    %638 = arith.mulf %637, %635 : vector<2x32xf32>
    %639 = arith.mulf %628, %580 : vector<2x32xf32>
    %640 = arith.addf %638, %639 : vector<2x32xf32>
    %c12_203 = arith.constant 12 : index
    %c0_204 = arith.constant 0 : index
    %641 = vector.load %arg19[%c12_203, %c0_204] : memref<16x96xf32, #tpu.memory_space<vmem>>, vector<2x96xf32>
    %cst_205 = arith.constant dense<0.000000e+00> : vector<2x96xf32>
    %642 = tpu.matmul %610, %544, %cst_205 {dimension_numbers = #tpu.dot_dimension_numbers<[1], [0], [0], [1], [0, 0, 1, 1], [], []>} : vector<2x32xf32>, vector<32x96xf32>, vector<2x96xf32> -> vector<2x96xf32>
    %643 = vector.extract_strided_slice %641 {offsets = [0, 0], sizes = [2, 32], strides = [1, 1]} : vector<2x96xf32> to vector<2x32xf32>
    %644 = vector.extract_strided_slice %642 {offsets = [0, 0], sizes = [2, 32], strides = [1, 1]} : vector<2x96xf32> to vector<2x32xf32>
    %645 = arith.addf %643, %644 : vector<2x32xf32>
    %646 = arith.negf %645 : vector<2x32xf32>
    %647 = math.exp %646 : vector<2x32xf32>
    %cst_206 = arith.constant 1.000000e+00 : f32
    %648 = vector.broadcast %cst_206 : f32 to vector<2x32xf32>
    %649 = arith.addf %648, %647 : vector<2x32xf32>
    %650 = arith.divf %648, %649 : vector<2x32xf32>
    %651 = vector.extract_strided_slice %641 {offsets = [0, 32], sizes = [2, 32], strides = [1, 1]} : vector<2x96xf32> to vector<2x32xf32>
    %652 = vector.extract_strided_slice %642 {offsets = [0, 32], sizes = [2, 32], strides = [1, 1]} : vector<2x96xf32> to vector<2x32xf32>
    %653 = arith.addf %651, %652 : vector<2x32xf32>
    %654 = arith.negf %653 : vector<2x32xf32>
    %655 = math.exp %654 : vector<2x32xf32>
    %cst_207 = arith.constant 1.000000e+00 : f32
    %656 = vector.broadcast %cst_207 : f32 to vector<2x32xf32>
    %657 = arith.addf %656, %655 : vector<2x32xf32>
    %658 = arith.divf %656, %657 : vector<2x32xf32>
    %659 = vector.extract_strided_slice %641 {offsets = [0, 64], sizes = [2, 32], strides = [1, 1]} : vector<2x96xf32> to vector<2x32xf32>
    %660 = vector.extract_strided_slice %642 {offsets = [0, 64], sizes = [2, 32], strides = [1, 1]} : vector<2x96xf32> to vector<2x32xf32>
    %661 = vector.broadcast %548 : vector<1x32xf32> to vector<2x32xf32>
    %662 = arith.addf %660, %661 : vector<2x32xf32>
    %663 = arith.mulf %650, %662 : vector<2x32xf32>
    %664 = arith.addf %659, %663 : vector<2x32xf32>
    %665 = math.tanh %664 : vector<2x32xf32>
    %cst_208 = arith.constant 1.000000e+00 : f32
    %666 = vector.broadcast %cst_208 : f32 to vector<2x32xf32>
    %667 = arith.subf %666, %658 : vector<2x32xf32>
    %668 = arith.mulf %667, %665 : vector<2x32xf32>
    %669 = arith.mulf %658, %610 : vector<2x32xf32>
    %670 = arith.addf %668, %669 : vector<2x32xf32>
    %c4_209 = arith.constant 4 : index
    %c0_210 = arith.constant 0 : index
    %671 = vector.load %arg18[%c4_209, %c0_210] : memref<16x96xf32, #tpu.memory_space<vmem>>, vector<2x96xf32>
    %cst_211 = arith.constant dense<0.000000e+00> : vector<2x96xf32>
    %672 = tpu.matmul %640, %542, %cst_211 {dimension_numbers = #tpu.dot_dimension_numbers<[1], [0], [0], [1], [0, 0, 1, 1], [], []>} : vector<2x32xf32>, vector<32x96xf32>, vector<2x96xf32> -> vector<2x96xf32>
    %673 = vector.extract_strided_slice %671 {offsets = [0, 0], sizes = [2, 32], strides = [1, 1]} : vector<2x96xf32> to vector<2x32xf32>
    %674 = vector.extract_strided_slice %672 {offsets = [0, 0], sizes = [2, 32], strides = [1, 1]} : vector<2x96xf32> to vector<2x32xf32>
    %675 = arith.addf %673, %674 : vector<2x32xf32>
    %676 = arith.negf %675 : vector<2x32xf32>
    %677 = math.exp %676 : vector<2x32xf32>
    %cst_212 = arith.constant 1.000000e+00 : f32
    %678 = vector.broadcast %cst_212 : f32 to vector<2x32xf32>
    %679 = arith.addf %678, %677 : vector<2x32xf32>
    %680 = arith.divf %678, %679 : vector<2x32xf32>
    %681 = vector.extract_strided_slice %671 {offsets = [0, 32], sizes = [2, 32], strides = [1, 1]} : vector<2x96xf32> to vector<2x32xf32>
    %682 = vector.extract_strided_slice %672 {offsets = [0, 32], sizes = [2, 32], strides = [1, 1]} : vector<2x96xf32> to vector<2x32xf32>
    %683 = arith.addf %681, %682 : vector<2x32xf32>
    %684 = arith.negf %683 : vector<2x32xf32>
    %685 = math.exp %684 : vector<2x32xf32>
    %cst_213 = arith.constant 1.000000e+00 : f32
    %686 = vector.broadcast %cst_213 : f32 to vector<2x32xf32>
    %687 = arith.addf %686, %685 : vector<2x32xf32>
    %688 = arith.divf %686, %687 : vector<2x32xf32>
    %689 = vector.extract_strided_slice %671 {offsets = [0, 64], sizes = [2, 32], strides = [1, 1]} : vector<2x96xf32> to vector<2x32xf32>
    %690 = vector.extract_strided_slice %672 {offsets = [0, 64], sizes = [2, 32], strides = [1, 1]} : vector<2x96xf32> to vector<2x32xf32>
    %691 = vector.broadcast %546 : vector<1x32xf32> to vector<2x32xf32>
    %692 = arith.addf %690, %691 : vector<2x32xf32>
    %693 = arith.mulf %680, %692 : vector<2x32xf32>
    %694 = arith.addf %689, %693 : vector<2x32xf32>
    %695 = math.tanh %694 : vector<2x32xf32>
    %cst_214 = arith.constant 1.000000e+00 : f32
    %696 = vector.broadcast %cst_214 : f32 to vector<2x32xf32>
    %697 = arith.subf %696, %688 : vector<2x32xf32>
    %698 = arith.mulf %697, %695 : vector<2x32xf32>
    %699 = arith.mulf %688, %640 : vector<2x32xf32>
    %700 = arith.addf %698, %699 : vector<2x32xf32>
    %c10_215 = arith.constant 10 : index
    %c0_216 = arith.constant 0 : index
    %701 = vector.load %arg19[%c10_215, %c0_216] : memref<16x96xf32, #tpu.memory_space<vmem>>, vector<2x96xf32>
    %cst_217 = arith.constant dense<0.000000e+00> : vector<2x96xf32>
    %702 = tpu.matmul %670, %544, %cst_217 {dimension_numbers = #tpu.dot_dimension_numbers<[1], [0], [0], [1], [0, 0, 1, 1], [], []>} : vector<2x32xf32>, vector<32x96xf32>, vector<2x96xf32> -> vector<2x96xf32>
    %703 = vector.extract_strided_slice %701 {offsets = [0, 0], sizes = [2, 32], strides = [1, 1]} : vector<2x96xf32> to vector<2x32xf32>
    %704 = vector.extract_strided_slice %702 {offsets = [0, 0], sizes = [2, 32], strides = [1, 1]} : vector<2x96xf32> to vector<2x32xf32>
    %705 = arith.addf %703, %704 : vector<2x32xf32>
    %706 = arith.negf %705 : vector<2x32xf32>
    %707 = math.exp %706 : vector<2x32xf32>
    %cst_218 = arith.constant 1.000000e+00 : f32
    %708 = vector.broadcast %cst_218 : f32 to vector<2x32xf32>
    %709 = arith.addf %708, %707 : vector<2x32xf32>
    %710 = arith.divf %708, %709 : vector<2x32xf32>
    %711 = vector.extract_strided_slice %701 {offsets = [0, 32], sizes = [2, 32], strides = [1, 1]} : vector<2x96xf32> to vector<2x32xf32>
    %712 = vector.extract_strided_slice %702 {offsets = [0, 32], sizes = [2, 32], strides = [1, 1]} : vector<2x96xf32> to vector<2x32xf32>
    %713 = arith.addf %711, %712 : vector<2x32xf32>
    %714 = arith.negf %713 : vector<2x32xf32>
    %715 = math.exp %714 : vector<2x32xf32>
    %cst_219 = arith.constant 1.000000e+00 : f32
    %716 = vector.broadcast %cst_219 : f32 to vector<2x32xf32>
    %717 = arith.addf %716, %715 : vector<2x32xf32>
    %718 = arith.divf %716, %717 : vector<2x32xf32>
    %719 = vector.extract_strided_slice %701 {offsets = [0, 64], sizes = [2, 32], strides = [1, 1]} : vector<2x96xf32> to vector<2x32xf32>
    %720 = vector.extract_strided_slice %702 {offsets = [0, 64], sizes = [2, 32], strides = [1, 1]} : vector<2x96xf32> to vector<2x32xf32>
    %721 = vector.broadcast %548 : vector<1x32xf32> to vector<2x32xf32>
    %722 = arith.addf %720, %721 : vector<2x32xf32>
    %723 = arith.mulf %710, %722 : vector<2x32xf32>
    %724 = arith.addf %719, %723 : vector<2x32xf32>
    %725 = math.tanh %724 : vector<2x32xf32>
    %cst_220 = arith.constant 1.000000e+00 : f32
    %726 = vector.broadcast %cst_220 : f32 to vector<2x32xf32>
    %727 = arith.subf %726, %718 : vector<2x32xf32>
    %728 = arith.mulf %727, %725 : vector<2x32xf32>
    %729 = arith.mulf %718, %670 : vector<2x32xf32>
    %730 = arith.addf %728, %729 : vector<2x32xf32>
    %c6_221 = arith.constant 6 : index
    %c0_222 = arith.constant 0 : index
    %731 = vector.load %arg18[%c6_221, %c0_222] : memref<16x96xf32, #tpu.memory_space<vmem>>, vector<2x96xf32>
    %cst_223 = arith.constant dense<0.000000e+00> : vector<2x96xf32>
    %732 = tpu.matmul %700, %542, %cst_223 {dimension_numbers = #tpu.dot_dimension_numbers<[1], [0], [0], [1], [0, 0, 1, 1], [], []>} : vector<2x32xf32>, vector<32x96xf32>, vector<2x96xf32> -> vector<2x96xf32>
    %733 = vector.extract_strided_slice %731 {offsets = [0, 0], sizes = [2, 32], strides = [1, 1]} : vector<2x96xf32> to vector<2x32xf32>
    %734 = vector.extract_strided_slice %732 {offsets = [0, 0], sizes = [2, 32], strides = [1, 1]} : vector<2x96xf32> to vector<2x32xf32>
    %735 = arith.addf %733, %734 : vector<2x32xf32>
    %736 = arith.negf %735 : vector<2x32xf32>
    %737 = math.exp %736 : vector<2x32xf32>
    %cst_224 = arith.constant 1.000000e+00 : f32
    %738 = vector.broadcast %cst_224 : f32 to vector<2x32xf32>
    %739 = arith.addf %738, %737 : vector<2x32xf32>
    %740 = arith.divf %738, %739 : vector<2x32xf32>
    %741 = vector.extract_strided_slice %731 {offsets = [0, 32], sizes = [2, 32], strides = [1, 1]} : vector<2x96xf32> to vector<2x32xf32>
    %742 = vector.extract_strided_slice %732 {offsets = [0, 32], sizes = [2, 32], strides = [1, 1]} : vector<2x96xf32> to vector<2x32xf32>
    %743 = arith.addf %741, %742 : vector<2x32xf32>
    %744 = arith.negf %743 : vector<2x32xf32>
    %745 = math.exp %744 : vector<2x32xf32>
    %cst_225 = arith.constant 1.000000e+00 : f32
    %746 = vector.broadcast %cst_225 : f32 to vector<2x32xf32>
    %747 = arith.addf %746, %745 : vector<2x32xf32>
    %748 = arith.divf %746, %747 : vector<2x32xf32>
    %749 = vector.extract_strided_slice %731 {offsets = [0, 64], sizes = [2, 32], strides = [1, 1]} : vector<2x96xf32> to vector<2x32xf32>
    %750 = vector.extract_strided_slice %732 {offsets = [0, 64], sizes = [2, 32], strides = [1, 1]} : vector<2x96xf32> to vector<2x32xf32>
    %751 = vector.broadcast %546 : vector<1x32xf32> to vector<2x32xf32>
    %752 = arith.addf %750, %751 : vector<2x32xf32>
    %753 = arith.mulf %740, %752 : vector<2x32xf32>
    %754 = arith.addf %749, %753 : vector<2x32xf32>
    %755 = math.tanh %754 : vector<2x32xf32>
    %cst_226 = arith.constant 1.000000e+00 : f32
    %756 = vector.broadcast %cst_226 : f32 to vector<2x32xf32>
    %757 = arith.subf %756, %748 : vector<2x32xf32>
    %758 = arith.mulf %757, %755 : vector<2x32xf32>
    %759 = arith.mulf %748, %700 : vector<2x32xf32>
    %760 = arith.addf %758, %759 : vector<2x32xf32>
    %c8_227 = arith.constant 8 : index
    %c0_228 = arith.constant 0 : index
    %761 = vector.load %arg19[%c8_227, %c0_228] : memref<16x96xf32, #tpu.memory_space<vmem>>, vector<2x96xf32>
    %cst_229 = arith.constant dense<0.000000e+00> : vector<2x96xf32>
    %762 = tpu.matmul %730, %544, %cst_229 {dimension_numbers = #tpu.dot_dimension_numbers<[1], [0], [0], [1], [0, 0, 1, 1], [], []>} : vector<2x32xf32>, vector<32x96xf32>, vector<2x96xf32> -> vector<2x96xf32>
    %763 = vector.extract_strided_slice %761 {offsets = [0, 0], sizes = [2, 32], strides = [1, 1]} : vector<2x96xf32> to vector<2x32xf32>
    %764 = vector.extract_strided_slice %762 {offsets = [0, 0], sizes = [2, 32], strides = [1, 1]} : vector<2x96xf32> to vector<2x32xf32>
    %765 = arith.addf %763, %764 : vector<2x32xf32>
    %766 = arith.negf %765 : vector<2x32xf32>
    %767 = math.exp %766 : vector<2x32xf32>
    %cst_230 = arith.constant 1.000000e+00 : f32
    %768 = vector.broadcast %cst_230 : f32 to vector<2x32xf32>
    %769 = arith.addf %768, %767 : vector<2x32xf32>
    %770 = arith.divf %768, %769 : vector<2x32xf32>
    %771 = vector.extract_strided_slice %761 {offsets = [0, 32], sizes = [2, 32], strides = [1, 1]} : vector<2x96xf32> to vector<2x32xf32>
    %772 = vector.extract_strided_slice %762 {offsets = [0, 32], sizes = [2, 32], strides = [1, 1]} : vector<2x96xf32> to vector<2x32xf32>
    %773 = arith.addf %771, %772 : vector<2x32xf32>
    %774 = arith.negf %773 : vector<2x32xf32>
    %775 = math.exp %774 : vector<2x32xf32>
    %cst_231 = arith.constant 1.000000e+00 : f32
    %776 = vector.broadcast %cst_231 : f32 to vector<2x32xf32>
    %777 = arith.addf %776, %775 : vector<2x32xf32>
    %778 = arith.divf %776, %777 : vector<2x32xf32>
    %779 = vector.extract_strided_slice %761 {offsets = [0, 64], sizes = [2, 32], strides = [1, 1]} : vector<2x96xf32> to vector<2x32xf32>
    %780 = vector.extract_strided_slice %762 {offsets = [0, 64], sizes = [2, 32], strides = [1, 1]} : vector<2x96xf32> to vector<2x32xf32>
    %781 = vector.broadcast %548 : vector<1x32xf32> to vector<2x32xf32>
    %782 = arith.addf %780, %781 : vector<2x32xf32>
    %783 = arith.mulf %770, %782 : vector<2x32xf32>
    %784 = arith.addf %779, %783 : vector<2x32xf32>
    %785 = math.tanh %784 : vector<2x32xf32>
    %cst_232 = arith.constant 1.000000e+00 : f32
    %786 = vector.broadcast %cst_232 : f32 to vector<2x32xf32>
    %787 = arith.subf %786, %778 : vector<2x32xf32>
    %788 = arith.mulf %787, %785 : vector<2x32xf32>
    %789 = arith.mulf %778, %730 : vector<2x32xf32>
    %790 = arith.addf %788, %789 : vector<2x32xf32>
    %c8_233 = arith.constant 8 : index
    %c0_234 = arith.constant 0 : index
    %791 = vector.load %arg18[%c8_233, %c0_234] : memref<16x96xf32, #tpu.memory_space<vmem>>, vector<2x96xf32>
    %cst_235 = arith.constant dense<0.000000e+00> : vector<2x96xf32>
    %792 = tpu.matmul %760, %542, %cst_235 {dimension_numbers = #tpu.dot_dimension_numbers<[1], [0], [0], [1], [0, 0, 1, 1], [], []>} : vector<2x32xf32>, vector<32x96xf32>, vector<2x96xf32> -> vector<2x96xf32>
    %793 = vector.extract_strided_slice %791 {offsets = [0, 0], sizes = [2, 32], strides = [1, 1]} : vector<2x96xf32> to vector<2x32xf32>
    %794 = vector.extract_strided_slice %792 {offsets = [0, 0], sizes = [2, 32], strides = [1, 1]} : vector<2x96xf32> to vector<2x32xf32>
    %795 = arith.addf %793, %794 : vector<2x32xf32>
    %796 = arith.negf %795 : vector<2x32xf32>
    %797 = math.exp %796 : vector<2x32xf32>
    %cst_236 = arith.constant 1.000000e+00 : f32
    %798 = vector.broadcast %cst_236 : f32 to vector<2x32xf32>
    %799 = arith.addf %798, %797 : vector<2x32xf32>
    %800 = arith.divf %798, %799 : vector<2x32xf32>
    %801 = vector.extract_strided_slice %791 {offsets = [0, 32], sizes = [2, 32], strides = [1, 1]} : vector<2x96xf32> to vector<2x32xf32>
    %802 = vector.extract_strided_slice %792 {offsets = [0, 32], sizes = [2, 32], strides = [1, 1]} : vector<2x96xf32> to vector<2x32xf32>
    %803 = arith.addf %801, %802 : vector<2x32xf32>
    %804 = arith.negf %803 : vector<2x32xf32>
    %805 = math.exp %804 : vector<2x32xf32>
    %cst_237 = arith.constant 1.000000e+00 : f32
    %806 = vector.broadcast %cst_237 : f32 to vector<2x32xf32>
    %807 = arith.addf %806, %805 : vector<2x32xf32>
    %808 = arith.divf %806, %807 : vector<2x32xf32>
    %809 = vector.extract_strided_slice %791 {offsets = [0, 64], sizes = [2, 32], strides = [1, 1]} : vector<2x96xf32> to vector<2x32xf32>
    %810 = vector.extract_strided_slice %792 {offsets = [0, 64], sizes = [2, 32], strides = [1, 1]} : vector<2x96xf32> to vector<2x32xf32>
    %811 = vector.broadcast %546 : vector<1x32xf32> to vector<2x32xf32>
    %812 = arith.addf %810, %811 : vector<2x32xf32>
    %813 = arith.mulf %800, %812 : vector<2x32xf32>
    %814 = arith.addf %809, %813 : vector<2x32xf32>
    %815 = math.tanh %814 : vector<2x32xf32>
    %cst_238 = arith.constant 1.000000e+00 : f32
    %816 = vector.broadcast %cst_238 : f32 to vector<2x32xf32>
    %817 = arith.subf %816, %808 : vector<2x32xf32>
    %818 = arith.mulf %817, %815 : vector<2x32xf32>
    %819 = arith.mulf %808, %760 : vector<2x32xf32>
    %820 = arith.addf %818, %819 : vector<2x32xf32>
    %c6_239 = arith.constant 6 : index
    %c0_240 = arith.constant 0 : index
    %821 = vector.load %arg19[%c6_239, %c0_240] : memref<16x96xf32, #tpu.memory_space<vmem>>, vector<2x96xf32>
    %cst_241 = arith.constant dense<0.000000e+00> : vector<2x96xf32>
    %822 = tpu.matmul %790, %544, %cst_241 {dimension_numbers = #tpu.dot_dimension_numbers<[1], [0], [0], [1], [0, 0, 1, 1], [], []>} : vector<2x32xf32>, vector<32x96xf32>, vector<2x96xf32> -> vector<2x96xf32>
    %823 = vector.extract_strided_slice %821 {offsets = [0, 0], sizes = [2, 32], strides = [1, 1]} : vector<2x96xf32> to vector<2x32xf32>
    %824 = vector.extract_strided_slice %822 {offsets = [0, 0], sizes = [2, 32], strides = [1, 1]} : vector<2x96xf32> to vector<2x32xf32>
    %825 = arith.addf %823, %824 : vector<2x32xf32>
    %826 = arith.negf %825 : vector<2x32xf32>
    %827 = math.exp %826 : vector<2x32xf32>
    %cst_242 = arith.constant 1.000000e+00 : f32
    %828 = vector.broadcast %cst_242 : f32 to vector<2x32xf32>
    %829 = arith.addf %828, %827 : vector<2x32xf32>
    %830 = arith.divf %828, %829 : vector<2x32xf32>
    %831 = vector.extract_strided_slice %821 {offsets = [0, 32], sizes = [2, 32], strides = [1, 1]} : vector<2x96xf32> to vector<2x32xf32>
    %832 = vector.extract_strided_slice %822 {offsets = [0, 32], sizes = [2, 32], strides = [1, 1]} : vector<2x96xf32> to vector<2x32xf32>
    %833 = arith.addf %831, %832 : vector<2x32xf32>
    %834 = arith.negf %833 : vector<2x32xf32>
    %835 = math.exp %834 : vector<2x32xf32>
    %cst_243 = arith.constant 1.000000e+00 : f32
    %836 = vector.broadcast %cst_243 : f32 to vector<2x32xf32>
    %837 = arith.addf %836, %835 : vector<2x32xf32>
    %838 = arith.divf %836, %837 : vector<2x32xf32>
    %839 = vector.extract_strided_slice %821 {offsets = [0, 64], sizes = [2, 32], strides = [1, 1]} : vector<2x96xf32> to vector<2x32xf32>
    %840 = vector.extract_strided_slice %822 {offsets = [0, 64], sizes = [2, 32], strides = [1, 1]} : vector<2x96xf32> to vector<2x32xf32>
    %841 = vector.broadcast %548 : vector<1x32xf32> to vector<2x32xf32>
    %842 = arith.addf %840, %841 : vector<2x32xf32>
    %843 = arith.mulf %830, %842 : vector<2x32xf32>
    %844 = arith.addf %839, %843 : vector<2x32xf32>
    %845 = math.tanh %844 : vector<2x32xf32>
    %cst_244 = arith.constant 1.000000e+00 : f32
    %846 = vector.broadcast %cst_244 : f32 to vector<2x32xf32>
    %847 = arith.subf %846, %838 : vector<2x32xf32>
    %848 = arith.mulf %847, %845 : vector<2x32xf32>
    %849 = arith.mulf %838, %790 : vector<2x32xf32>
    %850 = arith.addf %848, %849 : vector<2x32xf32>
    %c10_245 = arith.constant 10 : index
    %c0_246 = arith.constant 0 : index
    %851 = vector.load %arg18[%c10_245, %c0_246] : memref<16x96xf32, #tpu.memory_space<vmem>>, vector<2x96xf32>
    %cst_247 = arith.constant dense<0.000000e+00> : vector<2x96xf32>
    %852 = tpu.matmul %820, %542, %cst_247 {dimension_numbers = #tpu.dot_dimension_numbers<[1], [0], [0], [1], [0, 0, 1, 1], [], []>} : vector<2x32xf32>, vector<32x96xf32>, vector<2x96xf32> -> vector<2x96xf32>
    %853 = vector.extract_strided_slice %851 {offsets = [0, 0], sizes = [2, 32], strides = [1, 1]} : vector<2x96xf32> to vector<2x32xf32>
    %854 = vector.extract_strided_slice %852 {offsets = [0, 0], sizes = [2, 32], strides = [1, 1]} : vector<2x96xf32> to vector<2x32xf32>
    %855 = arith.addf %853, %854 : vector<2x32xf32>
    %856 = arith.negf %855 : vector<2x32xf32>
    %857 = math.exp %856 : vector<2x32xf32>
    %cst_248 = arith.constant 1.000000e+00 : f32
    %858 = vector.broadcast %cst_248 : f32 to vector<2x32xf32>
    %859 = arith.addf %858, %857 : vector<2x32xf32>
    %860 = arith.divf %858, %859 : vector<2x32xf32>
    %861 = vector.extract_strided_slice %851 {offsets = [0, 32], sizes = [2, 32], strides = [1, 1]} : vector<2x96xf32> to vector<2x32xf32>
    %862 = vector.extract_strided_slice %852 {offsets = [0, 32], sizes = [2, 32], strides = [1, 1]} : vector<2x96xf32> to vector<2x32xf32>
    %863 = arith.addf %861, %862 : vector<2x32xf32>
    %864 = arith.negf %863 : vector<2x32xf32>
    %865 = math.exp %864 : vector<2x32xf32>
    %cst_249 = arith.constant 1.000000e+00 : f32
    %866 = vector.broadcast %cst_249 : f32 to vector<2x32xf32>
    %867 = arith.addf %866, %865 : vector<2x32xf32>
    %868 = arith.divf %866, %867 : vector<2x32xf32>
    %869 = vector.extract_strided_slice %851 {offsets = [0, 64], sizes = [2, 32], strides = [1, 1]} : vector<2x96xf32> to vector<2x32xf32>
    %870 = vector.extract_strided_slice %852 {offsets = [0, 64], sizes = [2, 32], strides = [1, 1]} : vector<2x96xf32> to vector<2x32xf32>
    %871 = vector.broadcast %546 : vector<1x32xf32> to vector<2x32xf32>
    %872 = arith.addf %870, %871 : vector<2x32xf32>
    %873 = arith.mulf %860, %872 : vector<2x32xf32>
    %874 = arith.addf %869, %873 : vector<2x32xf32>
    %875 = math.tanh %874 : vector<2x32xf32>
    %cst_250 = arith.constant 1.000000e+00 : f32
    %876 = vector.broadcast %cst_250 : f32 to vector<2x32xf32>
    %877 = arith.subf %876, %868 : vector<2x32xf32>
    %878 = arith.mulf %877, %875 : vector<2x32xf32>
    %879 = arith.mulf %868, %820 : vector<2x32xf32>
    %880 = arith.addf %878, %879 : vector<2x32xf32>
    %c4_251 = arith.constant 4 : index
    %c0_252 = arith.constant 0 : index
    %881 = vector.load %arg19[%c4_251, %c0_252] : memref<16x96xf32, #tpu.memory_space<vmem>>, vector<2x96xf32>
    %cst_253 = arith.constant dense<0.000000e+00> : vector<2x96xf32>
    %882 = tpu.matmul %850, %544, %cst_253 {dimension_numbers = #tpu.dot_dimension_numbers<[1], [0], [0], [1], [0, 0, 1, 1], [], []>} : vector<2x32xf32>, vector<32x96xf32>, vector<2x96xf32> -> vector<2x96xf32>
    %883 = vector.extract_strided_slice %881 {offsets = [0, 0], sizes = [2, 32], strides = [1, 1]} : vector<2x96xf32> to vector<2x32xf32>
    %884 = vector.extract_strided_slice %882 {offsets = [0, 0], sizes = [2, 32], strides = [1, 1]} : vector<2x96xf32> to vector<2x32xf32>
    %885 = arith.addf %883, %884 : vector<2x32xf32>
    %886 = arith.negf %885 : vector<2x32xf32>
    %887 = math.exp %886 : vector<2x32xf32>
    %cst_254 = arith.constant 1.000000e+00 : f32
    %888 = vector.broadcast %cst_254 : f32 to vector<2x32xf32>
    %889 = arith.addf %888, %887 : vector<2x32xf32>
    %890 = arith.divf %888, %889 : vector<2x32xf32>
    %891 = vector.extract_strided_slice %881 {offsets = [0, 32], sizes = [2, 32], strides = [1, 1]} : vector<2x96xf32> to vector<2x32xf32>
    %892 = vector.extract_strided_slice %882 {offsets = [0, 32], sizes = [2, 32], strides = [1, 1]} : vector<2x96xf32> to vector<2x32xf32>
    %893 = arith.addf %891, %892 : vector<2x32xf32>
    %894 = arith.negf %893 : vector<2x32xf32>
    %895 = math.exp %894 : vector<2x32xf32>
    %cst_255 = arith.constant 1.000000e+00 : f32
    %896 = vector.broadcast %cst_255 : f32 to vector<2x32xf32>
    %897 = arith.addf %896, %895 : vector<2x32xf32>
    %898 = arith.divf %896, %897 : vector<2x32xf32>
    %899 = vector.extract_strided_slice %881 {offsets = [0, 64], sizes = [2, 32], strides = [1, 1]} : vector<2x96xf32> to vector<2x32xf32>
    %900 = vector.extract_strided_slice %882 {offsets = [0, 64], sizes = [2, 32], strides = [1, 1]} : vector<2x96xf32> to vector<2x32xf32>
    %901 = vector.broadcast %548 : vector<1x32xf32> to vector<2x32xf32>
    %902 = arith.addf %900, %901 : vector<2x32xf32>
    %903 = arith.mulf %890, %902 : vector<2x32xf32>
    %904 = arith.addf %899, %903 : vector<2x32xf32>
    %905 = math.tanh %904 : vector<2x32xf32>
    %cst_256 = arith.constant 1.000000e+00 : f32
    %906 = vector.broadcast %cst_256 : f32 to vector<2x32xf32>
    %907 = arith.subf %906, %898 : vector<2x32xf32>
    %908 = arith.mulf %907, %905 : vector<2x32xf32>
    %909 = arith.mulf %898, %850 : vector<2x32xf32>
    %910 = arith.addf %908, %909 : vector<2x32xf32>
    %c12_257 = arith.constant 12 : index
    %c0_258 = arith.constant 0 : index
    %911 = vector.load %arg18[%c12_257, %c0_258] : memref<16x96xf32, #tpu.memory_space<vmem>>, vector<2x96xf32>
    %cst_259 = arith.constant dense<0.000000e+00> : vector<2x96xf32>
    %912 = tpu.matmul %880, %542, %cst_259 {dimension_numbers = #tpu.dot_dimension_numbers<[1], [0], [0], [1], [0, 0, 1, 1], [], []>} : vector<2x32xf32>, vector<32x96xf32>, vector<2x96xf32> -> vector<2x96xf32>
    %913 = vector.extract_strided_slice %911 {offsets = [0, 0], sizes = [2, 32], strides = [1, 1]} : vector<2x96xf32> to vector<2x32xf32>
    %914 = vector.extract_strided_slice %912 {offsets = [0, 0], sizes = [2, 32], strides = [1, 1]} : vector<2x96xf32> to vector<2x32xf32>
    %915 = arith.addf %913, %914 : vector<2x32xf32>
    %916 = arith.negf %915 : vector<2x32xf32>
    %917 = math.exp %916 : vector<2x32xf32>
    %cst_260 = arith.constant 1.000000e+00 : f32
    %918 = vector.broadcast %cst_260 : f32 to vector<2x32xf32>
    %919 = arith.addf %918, %917 : vector<2x32xf32>
    %920 = arith.divf %918, %919 : vector<2x32xf32>
    %921 = vector.extract_strided_slice %911 {offsets = [0, 32], sizes = [2, 32], strides = [1, 1]} : vector<2x96xf32> to vector<2x32xf32>
    %922 = vector.extract_strided_slice %912 {offsets = [0, 32], sizes = [2, 32], strides = [1, 1]} : vector<2x96xf32> to vector<2x32xf32>
    %923 = arith.addf %921, %922 : vector<2x32xf32>
    %924 = arith.negf %923 : vector<2x32xf32>
    %925 = math.exp %924 : vector<2x32xf32>
    %cst_261 = arith.constant 1.000000e+00 : f32
    %926 = vector.broadcast %cst_261 : f32 to vector<2x32xf32>
    %927 = arith.addf %926, %925 : vector<2x32xf32>
    %928 = arith.divf %926, %927 : vector<2x32xf32>
    %929 = vector.extract_strided_slice %911 {offsets = [0, 64], sizes = [2, 32], strides = [1, 1]} : vector<2x96xf32> to vector<2x32xf32>
    %930 = vector.extract_strided_slice %912 {offsets = [0, 64], sizes = [2, 32], strides = [1, 1]} : vector<2x96xf32> to vector<2x32xf32>
    %931 = vector.broadcast %546 : vector<1x32xf32> to vector<2x32xf32>
    %932 = arith.addf %930, %931 : vector<2x32xf32>
    %933 = arith.mulf %920, %932 : vector<2x32xf32>
    %934 = arith.addf %929, %933 : vector<2x32xf32>
    %935 = math.tanh %934 : vector<2x32xf32>
    %cst_262 = arith.constant 1.000000e+00 : f32
    %936 = vector.broadcast %cst_262 : f32 to vector<2x32xf32>
    %937 = arith.subf %936, %928 : vector<2x32xf32>
    %938 = arith.mulf %937, %935 : vector<2x32xf32>
    %939 = arith.mulf %928, %880 : vector<2x32xf32>
    %940 = arith.addf %938, %939 : vector<2x32xf32>
    %c2_263 = arith.constant 2 : index
    %c0_264 = arith.constant 0 : index
    %941 = vector.load %arg19[%c2_263, %c0_264] : memref<16x96xf32, #tpu.memory_space<vmem>>, vector<2x96xf32>
    %cst_265 = arith.constant dense<0.000000e+00> : vector<2x96xf32>
    %942 = tpu.matmul %910, %544, %cst_265 {dimension_numbers = #tpu.dot_dimension_numbers<[1], [0], [0], [1], [0, 0, 1, 1], [], []>} : vector<2x32xf32>, vector<32x96xf32>, vector<2x96xf32> -> vector<2x96xf32>
    %943 = vector.extract_strided_slice %941 {offsets = [0, 0], sizes = [2, 32], strides = [1, 1]} : vector<2x96xf32> to vector<2x32xf32>
    %944 = vector.extract_strided_slice %942 {offsets = [0, 0], sizes = [2, 32], strides = [1, 1]} : vector<2x96xf32> to vector<2x32xf32>
    %945 = arith.addf %943, %944 : vector<2x32xf32>
    %946 = arith.negf %945 : vector<2x32xf32>
    %947 = math.exp %946 : vector<2x32xf32>
    %cst_266 = arith.constant 1.000000e+00 : f32
    %948 = vector.broadcast %cst_266 : f32 to vector<2x32xf32>
    %949 = arith.addf %948, %947 : vector<2x32xf32>
    %950 = arith.divf %948, %949 : vector<2x32xf32>
    %951 = vector.extract_strided_slice %941 {offsets = [0, 32], sizes = [2, 32], strides = [1, 1]} : vector<2x96xf32> to vector<2x32xf32>
    %952 = vector.extract_strided_slice %942 {offsets = [0, 32], sizes = [2, 32], strides = [1, 1]} : vector<2x96xf32> to vector<2x32xf32>
    %953 = arith.addf %951, %952 : vector<2x32xf32>
    %954 = arith.negf %953 : vector<2x32xf32>
    %955 = math.exp %954 : vector<2x32xf32>
    %cst_267 = arith.constant 1.000000e+00 : f32
    %956 = vector.broadcast %cst_267 : f32 to vector<2x32xf32>
    %957 = arith.addf %956, %955 : vector<2x32xf32>
    %958 = arith.divf %956, %957 : vector<2x32xf32>
    %959 = vector.extract_strided_slice %941 {offsets = [0, 64], sizes = [2, 32], strides = [1, 1]} : vector<2x96xf32> to vector<2x32xf32>
    %960 = vector.extract_strided_slice %942 {offsets = [0, 64], sizes = [2, 32], strides = [1, 1]} : vector<2x96xf32> to vector<2x32xf32>
    %961 = vector.broadcast %548 : vector<1x32xf32> to vector<2x32xf32>
    %962 = arith.addf %960, %961 : vector<2x32xf32>
    %963 = arith.mulf %950, %962 : vector<2x32xf32>
    %964 = arith.addf %959, %963 : vector<2x32xf32>
    %965 = math.tanh %964 : vector<2x32xf32>
    %cst_268 = arith.constant 1.000000e+00 : f32
    %966 = vector.broadcast %cst_268 : f32 to vector<2x32xf32>
    %967 = arith.subf %966, %958 : vector<2x32xf32>
    %968 = arith.mulf %967, %965 : vector<2x32xf32>
    %969 = arith.mulf %958, %910 : vector<2x32xf32>
    %970 = arith.addf %968, %969 : vector<2x32xf32>
    %c14_269 = arith.constant 14 : index
    %c0_270 = arith.constant 0 : index
    %971 = vector.load %arg18[%c14_269, %c0_270] : memref<16x96xf32, #tpu.memory_space<vmem>>, vector<2x96xf32>
    %cst_271 = arith.constant dense<0.000000e+00> : vector<2x96xf32>
    %972 = tpu.matmul %940, %542, %cst_271 {dimension_numbers = #tpu.dot_dimension_numbers<[1], [0], [0], [1], [0, 0, 1, 1], [], []>} : vector<2x32xf32>, vector<32x96xf32>, vector<2x96xf32> -> vector<2x96xf32>
    %973 = vector.extract_strided_slice %971 {offsets = [0, 0], sizes = [2, 32], strides = [1, 1]} : vector<2x96xf32> to vector<2x32xf32>
    %974 = vector.extract_strided_slice %972 {offsets = [0, 0], sizes = [2, 32], strides = [1, 1]} : vector<2x96xf32> to vector<2x32xf32>
    %975 = arith.addf %973, %974 : vector<2x32xf32>
    %976 = arith.negf %975 : vector<2x32xf32>
    %977 = math.exp %976 : vector<2x32xf32>
    %cst_272 = arith.constant 1.000000e+00 : f32
    %978 = vector.broadcast %cst_272 : f32 to vector<2x32xf32>
    %979 = arith.addf %978, %977 : vector<2x32xf32>
    %980 = arith.divf %978, %979 : vector<2x32xf32>
    %981 = vector.extract_strided_slice %971 {offsets = [0, 32], sizes = [2, 32], strides = [1, 1]} : vector<2x96xf32> to vector<2x32xf32>
    %982 = vector.extract_strided_slice %972 {offsets = [0, 32], sizes = [2, 32], strides = [1, 1]} : vector<2x96xf32> to vector<2x32xf32>
    %983 = arith.addf %981, %982 : vector<2x32xf32>
    %984 = arith.negf %983 : vector<2x32xf32>
    %985 = math.exp %984 : vector<2x32xf32>
    %cst_273 = arith.constant 1.000000e+00 : f32
    %986 = vector.broadcast %cst_273 : f32 to vector<2x32xf32>
    %987 = arith.addf %986, %985 : vector<2x32xf32>
    %988 = arith.divf %986, %987 : vector<2x32xf32>
    %989 = vector.extract_strided_slice %971 {offsets = [0, 64], sizes = [2, 32], strides = [1, 1]} : vector<2x96xf32> to vector<2x32xf32>
    %990 = vector.extract_strided_slice %972 {offsets = [0, 64], sizes = [2, 32], strides = [1, 1]} : vector<2x96xf32> to vector<2x32xf32>
    %991 = vector.broadcast %546 : vector<1x32xf32> to vector<2x32xf32>
    %992 = arith.addf %990, %991 : vector<2x32xf32>
    %993 = arith.mulf %980, %992 : vector<2x32xf32>
    %994 = arith.addf %989, %993 : vector<2x32xf32>
    %995 = math.tanh %994 : vector<2x32xf32>
    %cst_274 = arith.constant 1.000000e+00 : f32
    %996 = vector.broadcast %cst_274 : f32 to vector<2x32xf32>
    %997 = arith.subf %996, %988 : vector<2x32xf32>
    %998 = arith.mulf %997, %995 : vector<2x32xf32>
    %999 = arith.mulf %988, %940 : vector<2x32xf32>
    %1000 = arith.addf %998, %999 : vector<2x32xf32>
    %c0_275 = arith.constant 0 : index
    %c0_276 = arith.constant 0 : index
    %1001 = vector.load %arg19[%c0_275, %c0_276] : memref<16x96xf32, #tpu.memory_space<vmem>>, vector<2x96xf32>
    %cst_277 = arith.constant dense<0.000000e+00> : vector<2x96xf32>
    %1002 = tpu.matmul %970, %544, %cst_277 {dimension_numbers = #tpu.dot_dimension_numbers<[1], [0], [0], [1], [0, 0, 1, 1], [], []>} : vector<2x32xf32>, vector<32x96xf32>, vector<2x96xf32> -> vector<2x96xf32>
    %1003 = vector.extract_strided_slice %1001 {offsets = [0, 0], sizes = [2, 32], strides = [1, 1]} : vector<2x96xf32> to vector<2x32xf32>
    %1004 = vector.extract_strided_slice %1002 {offsets = [0, 0], sizes = [2, 32], strides = [1, 1]} : vector<2x96xf32> to vector<2x32xf32>
    %1005 = arith.addf %1003, %1004 : vector<2x32xf32>
    %1006 = arith.negf %1005 : vector<2x32xf32>
    %1007 = math.exp %1006 : vector<2x32xf32>
    %cst_278 = arith.constant 1.000000e+00 : f32
    %1008 = vector.broadcast %cst_278 : f32 to vector<2x32xf32>
    %1009 = arith.addf %1008, %1007 : vector<2x32xf32>
    %1010 = arith.divf %1008, %1009 : vector<2x32xf32>
    %1011 = vector.extract_strided_slice %1001 {offsets = [0, 32], sizes = [2, 32], strides = [1, 1]} : vector<2x96xf32> to vector<2x32xf32>
    %1012 = vector.extract_strided_slice %1002 {offsets = [0, 32], sizes = [2, 32], strides = [1, 1]} : vector<2x96xf32> to vector<2x32xf32>
    %1013 = arith.addf %1011, %1012 : vector<2x32xf32>
    %1014 = arith.negf %1013 : vector<2x32xf32>
    %1015 = math.exp %1014 : vector<2x32xf32>
    %cst_279 = arith.constant 1.000000e+00 : f32
    %1016 = vector.broadcast %cst_279 : f32 to vector<2x32xf32>
    %1017 = arith.addf %1016, %1015 : vector<2x32xf32>
    %1018 = arith.divf %1016, %1017 : vector<2x32xf32>
    %1019 = vector.extract_strided_slice %1001 {offsets = [0, 64], sizes = [2, 32], strides = [1, 1]} : vector<2x96xf32> to vector<2x32xf32>
    %1020 = vector.extract_strided_slice %1002 {offsets = [0, 64], sizes = [2, 32], strides = [1, 1]} : vector<2x96xf32> to vector<2x32xf32>
    %1021 = vector.broadcast %548 : vector<1x32xf32> to vector<2x32xf32>
    %1022 = arith.addf %1020, %1021 : vector<2x32xf32>
    %1023 = arith.mulf %1010, %1022 : vector<2x32xf32>
    %1024 = arith.addf %1019, %1023 : vector<2x32xf32>
    %1025 = math.tanh %1024 : vector<2x32xf32>
    %cst_280 = arith.constant 1.000000e+00 : f32
    %1026 = vector.broadcast %cst_280 : f32 to vector<2x32xf32>
    %1027 = arith.subf %1026, %1018 : vector<2x32xf32>
    %1028 = arith.mulf %1027, %1025 : vector<2x32xf32>
    %1029 = arith.mulf %1018, %970 : vector<2x32xf32>
    %1030 = arith.addf %1028, %1029 : vector<2x32xf32>
    %1031 = tpu.concatenate %1000, %1030 in 1 : vector<2x32xf32>, vector<2x32xf32> -> vector<2x64xf32>
    %c0_281 = arith.constant 0 : index
    %c0_282 = arith.constant 0 : index
    %c0_283 = arith.constant 0 : index
    %1032 = vector.load %arg1[%c0_281, %c0_282, %c0_283] : memref<7x2x16xf32, #tpu.memory_space<vmem>>, vector<1x2x16xf32>
    %1033 = vector.shape_cast %1032 : vector<1x2x16xf32> to vector<2x16xf32>
    %1034 = tpu.concatenate %1033, %523 in 1 : vector<2x16xf32>, vector<2x64xf32> -> vector<2x80xf32>
    %c0_284 = arith.constant 0 : index
    %c0_285 = arith.constant 0 : index
    %1035 = vector.load %arg10[%c0_284, %c0_285] : memref<80x256xf32, #tpu.memory_space<vmem>>, vector<80x256xf32>
    %cst_286 = arith.constant dense<0.000000e+00> : vector<2x256xf32>
    %1036 = tpu.matmul %1034, %1035, %cst_286 {dimension_numbers = #tpu.dot_dimension_numbers<[1], [0], [0], [1], [0, 0, 1, 1], [], []>} : vector<2x80xf32>, vector<80x256xf32>, vector<2x256xf32> -> vector<2x256xf32>
    %c0_287 = arith.constant 0 : index
    %c0_288 = arith.constant 0 : index
    %1037 = vector.load %arg11[%c0_287, %c0_288] : memref<1x256xf32, #tpu.memory_space<vmem>>, vector<1x256xf32>
    %1038 = vector.broadcast %1037 : vector<1x256xf32> to vector<2x256xf32>
    %1039 = arith.addf %1036, %1038 : vector<2x256xf32>
    %1040 = vector.extract_strided_slice %1039 {offsets = [0, 0], sizes = [2, 64], strides = [1, 1]} : vector<2x256xf32> to vector<2x64xf32>
    %1041 = arith.negf %1040 : vector<2x64xf32>
    %1042 = math.exp %1041 : vector<2x64xf32>
    %cst_289 = arith.constant 1.000000e+00 : f32
    %1043 = vector.broadcast %cst_289 : f32 to vector<2x64xf32>
    %1044 = arith.addf %1043, %1042 : vector<2x64xf32>
    %1045 = arith.divf %1043, %1044 : vector<2x64xf32>
    %1046 = vector.extract_strided_slice %1039 {offsets = [0, 64], sizes = [2, 64], strides = [1, 1]} : vector<2x256xf32> to vector<2x64xf32>
    %1047 = arith.negf %1046 : vector<2x64xf32>
    %1048 = math.exp %1047 : vector<2x64xf32>
    %cst_290 = arith.constant 1.000000e+00 : f32
    %1049 = vector.broadcast %cst_290 : f32 to vector<2x64xf32>
    %1050 = arith.addf %1049, %1048 : vector<2x64xf32>
    %1051 = arith.divf %1049, %1050 : vector<2x64xf32>
    %1052 = vector.extract_strided_slice %1039 {offsets = [0, 128], sizes = [2, 64], strides = [1, 1]} : vector<2x256xf32> to vector<2x64xf32>
    %1053 = vector.extract_strided_slice %1039 {offsets = [0, 192], sizes = [2, 64], strides = [1, 1]} : vector<2x256xf32> to vector<2x64xf32>
    %1054 = arith.mulf %1045, %1053 : vector<2x64xf32>
    %1055 = arith.addf %1052, %1054 : vector<2x64xf32>
    %1056 = math.tanh %1055 : vector<2x64xf32>
    %cst_291 = arith.constant 1.000000e+00 : f32
    %1057 = vector.broadcast %cst_291 : f32 to vector<2x64xf32>
    %1058 = arith.subf %1057, %1051 : vector<2x64xf32>
    %1059 = arith.mulf %1058, %1056 : vector<2x64xf32>
    %1060 = arith.mulf %1051, %523 : vector<2x64xf32>
    %1061 = arith.addf %1059, %1060 : vector<2x64xf32>
    %1062 = tpu.concatenate %1061, %1031 in 1 : vector<2x64xf32>, vector<2x64xf32> -> vector<2x128xf32>
    %c0_292 = arith.constant 0 : index
    %c0_293 = arith.constant 0 : index
    %1063 = vector.load %arg12[%c0_292, %c0_293] : memref<128x256xf32, #tpu.memory_space<vmem>>, vector<128x256xf32>
    %cst_294 = arith.constant dense<0.000000e+00> : vector<2x256xf32>
    %1064 = tpu.matmul %1062, %1063, %cst_294 {dimension_numbers = #tpu.dot_dimension_numbers<[1], [0], [0], [1], [0, 0, 1, 1], [], []>} : vector<2x128xf32>, vector<128x256xf32>, vector<2x256xf32> -> vector<2x256xf32>
    %c0_295 = arith.constant 0 : index
    %c0_296 = arith.constant 0 : index
    %1065 = vector.load %arg13[%c0_295, %c0_296] : memref<1x256xf32, #tpu.memory_space<vmem>>, vector<1x256xf32>
    %1066 = vector.broadcast %1065 : vector<1x256xf32> to vector<2x256xf32>
    %1067 = arith.addf %1064, %1066 : vector<2x256xf32>
    %1068 = vector.extract_strided_slice %1067 {offsets = [0, 0], sizes = [2, 64], strides = [1, 1]} : vector<2x256xf32> to vector<2x64xf32>
    %1069 = arith.negf %1068 : vector<2x64xf32>
    %1070 = math.exp %1069 : vector<2x64xf32>
    %cst_297 = arith.constant 1.000000e+00 : f32
    %1071 = vector.broadcast %cst_297 : f32 to vector<2x64xf32>
    %1072 = arith.addf %1071, %1070 : vector<2x64xf32>
    %1073 = arith.divf %1071, %1072 : vector<2x64xf32>
    %1074 = vector.extract_strided_slice %1067 {offsets = [0, 64], sizes = [2, 64], strides = [1, 1]} : vector<2x256xf32> to vector<2x64xf32>
    %1075 = arith.negf %1074 : vector<2x64xf32>
    %1076 = math.exp %1075 : vector<2x64xf32>
    %cst_298 = arith.constant 1.000000e+00 : f32
    %1077 = vector.broadcast %cst_298 : f32 to vector<2x64xf32>
    %1078 = arith.addf %1077, %1076 : vector<2x64xf32>
    %1079 = arith.divf %1077, %1078 : vector<2x64xf32>
    %1080 = vector.extract_strided_slice %1067 {offsets = [0, 128], sizes = [2, 64], strides = [1, 1]} : vector<2x256xf32> to vector<2x64xf32>
    %1081 = vector.extract_strided_slice %1067 {offsets = [0, 192], sizes = [2, 64], strides = [1, 1]} : vector<2x256xf32> to vector<2x64xf32>
    %1082 = arith.mulf %1073, %1081 : vector<2x64xf32>
    %1083 = arith.addf %1080, %1082 : vector<2x64xf32>
    %1084 = math.tanh %1083 : vector<2x64xf32>
    %cst_299 = arith.constant 1.000000e+00 : f32
    %1085 = vector.broadcast %cst_299 : f32 to vector<2x64xf32>
    %1086 = arith.subf %1085, %1079 : vector<2x64xf32>
    %1087 = arith.mulf %1086, %1084 : vector<2x64xf32>
    %1088 = arith.mulf %1079, %1031 : vector<2x64xf32>
    %1089 = arith.addf %1087, %1088 : vector<2x64xf32>
    %c0_300 = arith.constant 0 : index
    %c0_301 = arith.constant 0 : index
    %1090 = vector.load %arg14[%c0_300, %c0_301] : memref<64x128xf32, #tpu.memory_space<vmem>>, vector<64x128xf32>
    %cst_302 = arith.constant dense<0.000000e+00> : vector<2x128xf32>
    %1091 = tpu.matmul %1089, %1090, %cst_302 {dimension_numbers = #tpu.dot_dimension_numbers<[1], [0], [0], [1], [0, 0, 1, 1], [], []>} : vector<2x64xf32>, vector<64x128xf32>, vector<2x128xf32> -> vector<2x128xf32>
    %c0_303 = arith.constant 0 : index
    %c0_304 = arith.constant 0 : index
    %1092 = vector.load %arg15[%c0_303, %c0_304] : memref<1x128xf32, #tpu.memory_space<vmem>>, vector<1x128xf32>
    %1093 = vector.broadcast %1092 : vector<1x128xf32> to vector<2x128xf32>
    %1094 = arith.addf %1091, %1093 : vector<2x128xf32>
    %c0_305 = arith.constant 0 : index
    %c0_306 = arith.constant 0 : index
    %c0_307 = arith.constant 0 : index
    %1095 = vector.load %arg17[%c0_305, %c0_306, %c0_307] : memref<7x2x128xf32, #tpu.memory_space<vmem>>, vector<1x2x128xf32>
    %1096 = vector.shape_cast %1095 : vector<1x2x128xf32> to vector<2x128xf32>
    %1097 = vector.shape_cast %1094 : vector<2x128xf32> to vector<1x2x128xf32>
    tpu.vector_store %arg17[%c0_305, %c0_306, %c0_307], %1097 {strides = array<i32>} : memref<7x2x128xf32, #tpu.memory_space<vmem>>, vector<1x2x128xf32>,
    %c1_308 = arith.constant 1 : index
    %c0_309 = arith.constant 0 : index
    %c0_310 = arith.constant 0 : index
    %1098 = vector.load %arg1[%c1_308, %c0_309, %c0_310] : memref<7x2x16xf32, #tpu.memory_space<vmem>>, vector<1x2x16xf32>
    %1099 = vector.shape_cast %1098 : vector<1x2x16xf32> to vector<2x16xf32>
    %1100 = tpu.concatenate %1099, %1061 in 1 : vector<2x16xf32>, vector<2x64xf32> -> vector<2x80xf32>
    %c0_311 = arith.constant 0 : index
    %c0_312 = arith.constant 0 : index
    %1101 = vector.load %arg10[%c0_311, %c0_312] : memref<80x256xf32, #tpu.memory_space<vmem>>, vector<80x256xf32>
    %cst_313 = arith.constant dense<0.000000e+00> : vector<2x256xf32>
    %1102 = tpu.matmul %1100, %1101, %cst_313 {dimension_numbers = #tpu.dot_dimension_numbers<[1], [0], [0], [1], [0, 0, 1, 1], [], []>} : vector<2x80xf32>, vector<80x256xf32>, vector<2x256xf32> -> vector<2x256xf32>
    %c0_314 = arith.constant 0 : index
    %c0_315 = arith.constant 0 : index
    %1103 = vector.load %arg11[%c0_314, %c0_315] : memref<1x256xf32, #tpu.memory_space<vmem>>, vector<1x256xf32>
    %1104 = vector.broadcast %1103 : vector<1x256xf32> to vector<2x256xf32>
    %1105 = arith.addf %1102, %1104 : vector<2x256xf32>
    %1106 = vector.extract_strided_slice %1105 {offsets = [0, 0], sizes = [2, 64], strides = [1, 1]} : vector<2x256xf32> to vector<2x64xf32>
    %1107 = arith.negf %1106 : vector<2x64xf32>
    %1108 = math.exp %1107 : vector<2x64xf32>
    %cst_316 = arith.constant 1.000000e+00 : f32
    %1109 = vector.broadcast %cst_316 : f32 to vector<2x64xf32>
    %1110 = arith.addf %1109, %1108 : vector<2x64xf32>
    %1111 = arith.divf %1109, %1110 : vector<2x64xf32>
    %1112 = vector.extract_strided_slice %1105 {offsets = [0, 64], sizes = [2, 64], strides = [1, 1]} : vector<2x256xf32> to vector<2x64xf32>
    %1113 = arith.negf %1112 : vector<2x64xf32>
    %1114 = math.exp %1113 : vector<2x64xf32>
    %cst_317 = arith.constant 1.000000e+00 : f32
    %1115 = vector.broadcast %cst_317 : f32 to vector<2x64xf32>
    %1116 = arith.addf %1115, %1114 : vector<2x64xf32>
    %1117 = arith.divf %1115, %1116 : vector<2x64xf32>
    %1118 = vector.extract_strided_slice %1105 {offsets = [0, 128], sizes = [2, 64], strides = [1, 1]} : vector<2x256xf32> to vector<2x64xf32>
    %1119 = vector.extract_strided_slice %1105 {offsets = [0, 192], sizes = [2, 64], strides = [1, 1]} : vector<2x256xf32> to vector<2x64xf32>
    %1120 = arith.mulf %1111, %1119 : vector<2x64xf32>
    %1121 = arith.addf %1118, %1120 : vector<2x64xf32>
    %1122 = math.tanh %1121 : vector<2x64xf32>
    %cst_318 = arith.constant 1.000000e+00 : f32
    %1123 = vector.broadcast %cst_318 : f32 to vector<2x64xf32>
    %1124 = arith.subf %1123, %1117 : vector<2x64xf32>
    %1125 = arith.mulf %1124, %1122 : vector<2x64xf32>
    %1126 = arith.mulf %1117, %1061 : vector<2x64xf32>
    %1127 = arith.addf %1125, %1126 : vector<2x64xf32>
    %1128 = tpu.concatenate %1127, %1089 in 1 : vector<2x64xf32>, vector<2x64xf32> -> vector<2x128xf32>
    %c0_319 = arith.constant 0 : index
    %c0_320 = arith.constant 0 : index
    %1129 = vector.load %arg12[%c0_319, %c0_320] : memref<128x256xf32, #tpu.memory_space<vmem>>, vector<128x256xf32>
    %cst_321 = arith.constant dense<0.000000e+00> : vector<2x256xf32>
    %1130 = tpu.matmul %1128, %1129, %cst_321 {dimension_numbers = #tpu.dot_dimension_numbers<[1], [0], [0], [1], [0, 0, 1, 1], [], []>} : vector<2x128xf32>, vector<128x256xf32>, vector<2x256xf32> -> vector<2x256xf32>
    %c0_322 = arith.constant 0 : index
    %c0_323 = arith.constant 0 : index
    %1131 = vector.load %arg13[%c0_322, %c0_323] : memref<1x256xf32, #tpu.memory_space<vmem>>, vector<1x256xf32>
    %1132 = vector.broadcast %1131 : vector<1x256xf32> to vector<2x256xf32>
    %1133 = arith.addf %1130, %1132 : vector<2x256xf32>
    %1134 = vector.extract_strided_slice %1133 {offsets = [0, 0], sizes = [2, 64], strides = [1, 1]} : vector<2x256xf32> to vector<2x64xf32>
    %1135 = arith.negf %1134 : vector<2x64xf32>
    %1136 = math.exp %1135 : vector<2x64xf32>
    %cst_324 = arith.constant 1.000000e+00 : f32
    %1137 = vector.broadcast %cst_324 : f32 to vector<2x64xf32>
    %1138 = arith.addf %1137, %1136 : vector<2x64xf32>
    %1139 = arith.divf %1137, %1138 : vector<2x64xf32>
    %1140 = vector.extract_strided_slice %1133 {offsets = [0, 64], sizes = [2, 64], strides = [1, 1]} : vector<2x256xf32> to vector<2x64xf32>
    %1141 = arith.negf %1140 : vector<2x64xf32>
    %1142 = math.exp %1141 : vector<2x64xf32>
    %cst_325 = arith.constant 1.000000e+00 : f32
    %1143 = vector.broadcast %cst_325 : f32 to vector<2x64xf32>
    %1144 = arith.addf %1143, %1142 : vector<2x64xf32>
    %1145 = arith.divf %1143, %1144 : vector<2x64xf32>
    %1146 = vector.extract_strided_slice %1133 {offsets = [0, 128], sizes = [2, 64], strides = [1, 1]} : vector<2x256xf32> to vector<2x64xf32>
    %1147 = vector.extract_strided_slice %1133 {offsets = [0, 192], sizes = [2, 64], strides = [1, 1]} : vector<2x256xf32> to vector<2x64xf32>
    %1148 = arith.mulf %1139, %1147 : vector<2x64xf32>
    %1149 = arith.addf %1146, %1148 : vector<2x64xf32>
    %1150 = math.tanh %1149 : vector<2x64xf32>
    %cst_326 = arith.constant 1.000000e+00 : f32
    %1151 = vector.broadcast %cst_326 : f32 to vector<2x64xf32>
    %1152 = arith.subf %1151, %1145 : vector<2x64xf32>
    %1153 = arith.mulf %1152, %1150 : vector<2x64xf32>
    %1154 = arith.mulf %1145, %1089 : vector<2x64xf32>
    %1155 = arith.addf %1153, %1154 : vector<2x64xf32>
    %c0_327 = arith.constant 0 : index
    %c0_328 = arith.constant 0 : index
    %1156 = vector.load %arg14[%c0_327, %c0_328] : memref<64x128xf32, #tpu.memory_space<vmem>>, vector<64x128xf32>
    %cst_329 = arith.constant dense<0.000000e+00> : vector<2x128xf32>
    %1157 = tpu.matmul %1155, %1156, %cst_329 {dimension_numbers = #tpu.dot_dimension_numbers<[1], [0], [0], [1], [0, 0, 1, 1], [], []>} : vector<2x64xf32>, vector<64x128xf32>, vector<2x128xf32> -> vector<2x128xf32>
    %c0_330 = arith.constant 0 : index
    %c0_331 = arith.constant 0 : index
    %1158 = vector.load %arg15[%c0_330, %c0_331] : memref<1x128xf32, #tpu.memory_space<vmem>>, vector<1x128xf32>
    %1159 = vector.broadcast %1158 : vector<1x128xf32> to vector<2x128xf32>
    %1160 = arith.addf %1157, %1159 : vector<2x128xf32>
    %c1_332 = arith.constant 1 : index
    %c0_333 = arith.constant 0 : index
    %c0_334 = arith.constant 0 : index
    %1161 = vector.load %arg17[%c1_332, %c0_333, %c0_334] : memref<7x2x128xf32, #tpu.memory_space<vmem>>, vector<1x2x128xf32>
    %1162 = vector.shape_cast %1161 : vector<1x2x128xf32> to vector<2x128xf32>
    %1163 = vector.shape_cast %1160 : vector<2x128xf32> to vector<1x2x128xf32>
    tpu.vector_store %arg17[%c1_332, %c0_333, %c0_334], %1163 {strides = array<i32>} : memref<7x2x128xf32, #tpu.memory_space<vmem>>, vector<1x2x128xf32>,
    %c2_335 = arith.constant 2 : index
    %c0_336 = arith.constant 0 : index
    %c0_337 = arith.constant 0 : index
    %1164 = vector.load %arg1[%c2_335, %c0_336, %c0_337] : memref<7x2x16xf32, #tpu.memory_space<vmem>>, vector<1x2x16xf32>
    %1165 = vector.shape_cast %1164 : vector<1x2x16xf32> to vector<2x16xf32>
    %1166 = tpu.concatenate %1165, %1127 in 1 : vector<2x16xf32>, vector<2x64xf32> -> vector<2x80xf32>
    %c0_338 = arith.constant 0 : index
    %c0_339 = arith.constant 0 : index
    %1167 = vector.load %arg10[%c0_338, %c0_339] : memref<80x256xf32, #tpu.memory_space<vmem>>, vector<80x256xf32>
    %cst_340 = arith.constant dense<0.000000e+00> : vector<2x256xf32>
    %1168 = tpu.matmul %1166, %1167, %cst_340 {dimension_numbers = #tpu.dot_dimension_numbers<[1], [0], [0], [1], [0, 0, 1, 1], [], []>} : vector<2x80xf32>, vector<80x256xf32>, vector<2x256xf32> -> vector<2x256xf32>
    %c0_341 = arith.constant 0 : index
    %c0_342 = arith.constant 0 : index
    %1169 = vector.load %arg11[%c0_341, %c0_342] : memref<1x256xf32, #tpu.memory_space<vmem>>, vector<1x256xf32>
    %1170 = vector.broadcast %1169 : vector<1x256xf32> to vector<2x256xf32>
    %1171 = arith.addf %1168, %1170 : vector<2x256xf32>
    %1172 = vector.extract_strided_slice %1171 {offsets = [0, 0], sizes = [2, 64], strides = [1, 1]} : vector<2x256xf32> to vector<2x64xf32>
    %1173 = arith.negf %1172 : vector<2x64xf32>
    %1174 = math.exp %1173 : vector<2x64xf32>
    %cst_343 = arith.constant 1.000000e+00 : f32
    %1175 = vector.broadcast %cst_343 : f32 to vector<2x64xf32>
    %1176 = arith.addf %1175, %1174 : vector<2x64xf32>
    %1177 = arith.divf %1175, %1176 : vector<2x64xf32>
    %1178 = vector.extract_strided_slice %1171 {offsets = [0, 64], sizes = [2, 64], strides = [1, 1]} : vector<2x256xf32> to vector<2x64xf32>
    %1179 = arith.negf %1178 : vector<2x64xf32>
    %1180 = math.exp %1179 : vector<2x64xf32>
    %cst_344 = arith.constant 1.000000e+00 : f32
    %1181 = vector.broadcast %cst_344 : f32 to vector<2x64xf32>
    %1182 = arith.addf %1181, %1180 : vector<2x64xf32>
    %1183 = arith.divf %1181, %1182 : vector<2x64xf32>
    %1184 = vector.extract_strided_slice %1171 {offsets = [0, 128], sizes = [2, 64], strides = [1, 1]} : vector<2x256xf32> to vector<2x64xf32>
    %1185 = vector.extract_strided_slice %1171 {offsets = [0, 192], sizes = [2, 64], strides = [1, 1]} : vector<2x256xf32> to vector<2x64xf32>
    %1186 = arith.mulf %1177, %1185 : vector<2x64xf32>
    %1187 = arith.addf %1184, %1186 : vector<2x64xf32>
    %1188 = math.tanh %1187 : vector<2x64xf32>
    %cst_345 = arith.constant 1.000000e+00 : f32
    %1189 = vector.broadcast %cst_345 : f32 to vector<2x64xf32>
    %1190 = arith.subf %1189, %1183 : vector<2x64xf32>
    %1191 = arith.mulf %1190, %1188 : vector<2x64xf32>
    %1192 = arith.mulf %1183, %1127 : vector<2x64xf32>
    %1193 = arith.addf %1191, %1192 : vector<2x64xf32>
    %1194 = tpu.concatenate %1193, %1155 in 1 : vector<2x64xf32>, vector<2x64xf32> -> vector<2x128xf32>
    %c0_346 = arith.constant 0 : index
    %c0_347 = arith.constant 0 : index
    %1195 = vector.load %arg12[%c0_346, %c0_347] : memref<128x256xf32, #tpu.memory_space<vmem>>, vector<128x256xf32>
    %cst_348 = arith.constant dense<0.000000e+00> : vector<2x256xf32>
    %1196 = tpu.matmul %1194, %1195, %cst_348 {dimension_numbers = #tpu.dot_dimension_numbers<[1], [0], [0], [1], [0, 0, 1, 1], [], []>} : vector<2x128xf32>, vector<128x256xf32>, vector<2x256xf32> -> vector<2x256xf32>
    %c0_349 = arith.constant 0 : index
    %c0_350 = arith.constant 0 : index
    %1197 = vector.load %arg13[%c0_349, %c0_350] : memref<1x256xf32, #tpu.memory_space<vmem>>, vector<1x256xf32>
    %1198 = vector.broadcast %1197 : vector<1x256xf32> to vector<2x256xf32>
    %1199 = arith.addf %1196, %1198 : vector<2x256xf32>
    %1200 = vector.extract_strided_slice %1199 {offsets = [0, 0], sizes = [2, 64], strides = [1, 1]} : vector<2x256xf32> to vector<2x64xf32>
    %1201 = arith.negf %1200 : vector<2x64xf32>
    %1202 = math.exp %1201 : vector<2x64xf32>
    %cst_351 = arith.constant 1.000000e+00 : f32
    %1203 = vector.broadcast %cst_351 : f32 to vector<2x64xf32>
    %1204 = arith.addf %1203, %1202 : vector<2x64xf32>
    %1205 = arith.divf %1203, %1204 : vector<2x64xf32>
    %1206 = vector.extract_strided_slice %1199 {offsets = [0, 64], sizes = [2, 64], strides = [1, 1]} : vector<2x256xf32> to vector<2x64xf32>
    %1207 = arith.negf %1206 : vector<2x64xf32>
    %1208 = math.exp %1207 : vector<2x64xf32>
    %cst_352 = arith.constant 1.000000e+00 : f32
    %1209 = vector.broadcast %cst_352 : f32 to vector<2x64xf32>
    %1210 = arith.addf %1209, %1208 : vector<2x64xf32>
    %1211 = arith.divf %1209, %1210 : vector<2x64xf32>
    %1212 = vector.extract_strided_slice %1199 {offsets = [0, 128], sizes = [2, 64], strides = [1, 1]} : vector<2x256xf32> to vector<2x64xf32>
    %1213 = vector.extract_strided_slice %1199 {offsets = [0, 192], sizes = [2, 64], strides = [1, 1]} : vector<2x256xf32> to vector<2x64xf32>
    %1214 = arith.mulf %1205, %1213 : vector<2x64xf32>
    %1215 = arith.addf %1212, %1214 : vector<2x64xf32>
    %1216 = math.tanh %1215 : vector<2x64xf32>
    %cst_353 = arith.constant 1.000000e+00 : f32
    %1217 = vector.broadcast %cst_353 : f32 to vector<2x64xf32>
    %1218 = arith.subf %1217, %1211 : vector<2x64xf32>
    %1219 = arith.mulf %1218, %1216 : vector<2x64xf32>
    %1220 = arith.mulf %1211, %1155 : vector<2x64xf32>
    %1221 = arith.addf %1219, %1220 : vector<2x64xf32>
    %c0_354 = arith.constant 0 : index
    %c0_355 = arith.constant 0 : index
    %1222 = vector.load %arg14[%c0_354, %c0_355] : memref<64x128xf32, #tpu.memory_space<vmem>>, vector<64x128xf32>
    %cst_356 = arith.constant dense<0.000000e+00> : vector<2x128xf32>
    %1223 = tpu.matmul %1221, %1222, %cst_356 {dimension_numbers = #tpu.dot_dimension_numbers<[1], [0], [0], [1], [0, 0, 1, 1], [], []>} : vector<2x64xf32>, vector<64x128xf32>, vector<2x128xf32> -> vector<2x128xf32>
    %c0_357 = arith.constant 0 : index
    %c0_358 = arith.constant 0 : index
    %1224 = vector.load %arg15[%c0_357, %c0_358] : memref<1x128xf32, #tpu.memory_space<vmem>>, vector<1x128xf32>
    %1225 = vector.broadcast %1224 : vector<1x128xf32> to vector<2x128xf32>
    %1226 = arith.addf %1223, %1225 : vector<2x128xf32>
    %c2_359 = arith.constant 2 : index
    %c0_360 = arith.constant 0 : index
    %c0_361 = arith.constant 0 : index
    %1227 = vector.load %arg17[%c2_359, %c0_360, %c0_361] : memref<7x2x128xf32, #tpu.memory_space<vmem>>, vector<1x2x128xf32>
    %1228 = vector.shape_cast %1227 : vector<1x2x128xf32> to vector<2x128xf32>
    %1229 = vector.shape_cast %1226 : vector<2x128xf32> to vector<1x2x128xf32>
    tpu.vector_store %arg17[%c2_359, %c0_360, %c0_361], %1229 {strides = array<i32>} : memref<7x2x128xf32, #tpu.memory_space<vmem>>, vector<1x2x128xf32>,
    %c3 = arith.constant 3 : index
    %c0_362 = arith.constant 0 : index
    %c0_363 = arith.constant 0 : index
    %1230 = vector.load %arg1[%c3, %c0_362, %c0_363] : memref<7x2x16xf32, #tpu.memory_space<vmem>>, vector<1x2x16xf32>
    %1231 = vector.shape_cast %1230 : vector<1x2x16xf32> to vector<2x16xf32>
    %1232 = tpu.concatenate %1231, %1193 in 1 : vector<2x16xf32>, vector<2x64xf32> -> vector<2x80xf32>
    %c0_364 = arith.constant 0 : index
    %c0_365 = arith.constant 0 : index
    %1233 = vector.load %arg10[%c0_364, %c0_365] : memref<80x256xf32, #tpu.memory_space<vmem>>, vector<80x256xf32>
    %cst_366 = arith.constant dense<0.000000e+00> : vector<2x256xf32>
    %1234 = tpu.matmul %1232, %1233, %cst_366 {dimension_numbers = #tpu.dot_dimension_numbers<[1], [0], [0], [1], [0, 0, 1, 1], [], []>} : vector<2x80xf32>, vector<80x256xf32>, vector<2x256xf32> -> vector<2x256xf32>
    %c0_367 = arith.constant 0 : index
    %c0_368 = arith.constant 0 : index
    %1235 = vector.load %arg11[%c0_367, %c0_368] : memref<1x256xf32, #tpu.memory_space<vmem>>, vector<1x256xf32>
    %1236 = vector.broadcast %1235 : vector<1x256xf32> to vector<2x256xf32>
    %1237 = arith.addf %1234, %1236 : vector<2x256xf32>
    %1238 = vector.extract_strided_slice %1237 {offsets = [0, 0], sizes = [2, 64], strides = [1, 1]} : vector<2x256xf32> to vector<2x64xf32>
    %1239 = arith.negf %1238 : vector<2x64xf32>
    %1240 = math.exp %1239 : vector<2x64xf32>
    %cst_369 = arith.constant 1.000000e+00 : f32
    %1241 = vector.broadcast %cst_369 : f32 to vector<2x64xf32>
    %1242 = arith.addf %1241, %1240 : vector<2x64xf32>
    %1243 = arith.divf %1241, %1242 : vector<2x64xf32>
    %1244 = vector.extract_strided_slice %1237 {offsets = [0, 64], sizes = [2, 64], strides = [1, 1]} : vector<2x256xf32> to vector<2x64xf32>
    %1245 = arith.negf %1244 : vector<2x64xf32>
    %1246 = math.exp %1245 : vector<2x64xf32>
    %cst_370 = arith.constant 1.000000e+00 : f32
    %1247 = vector.broadcast %cst_370 : f32 to vector<2x64xf32>
    %1248 = arith.addf %1247, %1246 : vector<2x64xf32>
    %1249 = arith.divf %1247, %1248 : vector<2x64xf32>
    %1250 = vector.extract_strided_slice %1237 {offsets = [0, 128], sizes = [2, 64], strides = [1, 1]} : vector<2x256xf32> to vector<2x64xf32>
    %1251 = vector.extract_strided_slice %1237 {offsets = [0, 192], sizes = [2, 64], strides = [1, 1]} : vector<2x256xf32> to vector<2x64xf32>
    %1252 = arith.mulf %1243, %1251 : vector<2x64xf32>
    %1253 = arith.addf %1250, %1252 : vector<2x64xf32>
    %1254 = math.tanh %1253 : vector<2x64xf32>
    %cst_371 = arith.constant 1.000000e+00 : f32
    %1255 = vector.broadcast %cst_371 : f32 to vector<2x64xf32>
    %1256 = arith.subf %1255, %1249 : vector<2x64xf32>
    %1257 = arith.mulf %1256, %1254 : vector<2x64xf32>
    %1258 = arith.mulf %1249, %1193 : vector<2x64xf32>
    %1259 = arith.addf %1257, %1258 : vector<2x64xf32>
    %1260 = tpu.concatenate %1259, %1221 in 1 : vector<2x64xf32>, vector<2x64xf32> -> vector<2x128xf32>
    %c0_372 = arith.constant 0 : index
    %c0_373 = arith.constant 0 : index
    %1261 = vector.load %arg12[%c0_372, %c0_373] : memref<128x256xf32, #tpu.memory_space<vmem>>, vector<128x256xf32>
    %cst_374 = arith.constant dense<0.000000e+00> : vector<2x256xf32>
    %1262 = tpu.matmul %1260, %1261, %cst_374 {dimension_numbers = #tpu.dot_dimension_numbers<[1], [0], [0], [1], [0, 0, 1, 1], [], []>} : vector<2x128xf32>, vector<128x256xf32>, vector<2x256xf32> -> vector<2x256xf32>
    %c0_375 = arith.constant 0 : index
    %c0_376 = arith.constant 0 : index
    %1263 = vector.load %arg13[%c0_375, %c0_376] : memref<1x256xf32, #tpu.memory_space<vmem>>, vector<1x256xf32>
    %1264 = vector.broadcast %1263 : vector<1x256xf32> to vector<2x256xf32>
    %1265 = arith.addf %1262, %1264 : vector<2x256xf32>
    %1266 = vector.extract_strided_slice %1265 {offsets = [0, 0], sizes = [2, 64], strides = [1, 1]} : vector<2x256xf32> to vector<2x64xf32>
    %1267 = arith.negf %1266 : vector<2x64xf32>
    %1268 = math.exp %1267 : vector<2x64xf32>
    %cst_377 = arith.constant 1.000000e+00 : f32
    %1269 = vector.broadcast %cst_377 : f32 to vector<2x64xf32>
    %1270 = arith.addf %1269, %1268 : vector<2x64xf32>
    %1271 = arith.divf %1269, %1270 : vector<2x64xf32>
    %1272 = vector.extract_strided_slice %1265 {offsets = [0, 64], sizes = [2, 64], strides = [1, 1]} : vector<2x256xf32> to vector<2x64xf32>
    %1273 = arith.negf %1272 : vector<2x64xf32>
    %1274 = math.exp %1273 : vector<2x64xf32>
    %cst_378 = arith.constant 1.000000e+00 : f32
    %1275 = vector.broadcast %cst_378 : f32 to vector<2x64xf32>
    %1276 = arith.addf %1275, %1274 : vector<2x64xf32>
    %1277 = arith.divf %1275, %1276 : vector<2x64xf32>
    %1278 = vector.extract_strided_slice %1265 {offsets = [0, 128], sizes = [2, 64], strides = [1, 1]} : vector<2x256xf32> to vector<2x64xf32>
    %1279 = vector.extract_strided_slice %1265 {offsets = [0, 192], sizes = [2, 64], strides = [1, 1]} : vector<2x256xf32> to vector<2x64xf32>
    %1280 = arith.mulf %1271, %1279 : vector<2x64xf32>
    %1281 = arith.addf %1278, %1280 : vector<2x64xf32>
    %1282 = math.tanh %1281 : vector<2x64xf32>
    %cst_379 = arith.constant 1.000000e+00 : f32
    %1283 = vector.broadcast %cst_379 : f32 to vector<2x64xf32>
    %1284 = arith.subf %1283, %1277 : vector<2x64xf32>
    %1285 = arith.mulf %1284, %1282 : vector<2x64xf32>
    %1286 = arith.mulf %1277, %1221 : vector<2x64xf32>
    %1287 = arith.addf %1285, %1286 : vector<2x64xf32>
    %c0_380 = arith.constant 0 : index
    %c0_381 = arith.constant 0 : index
    %1288 = vector.load %arg14[%c0_380, %c0_381] : memref<64x128xf32, #tpu.memory_space<vmem>>, vector<64x128xf32>
    %cst_382 = arith.constant dense<0.000000e+00> : vector<2x128xf32>
    %1289 = tpu.matmul %1287, %1288, %cst_382 {dimension_numbers = #tpu.dot_dimension_numbers<[1], [0], [0], [1], [0, 0, 1, 1], [], []>} : vector<2x64xf32>, vector<64x128xf32>, vector<2x128xf32> -> vector<2x128xf32>
    %c0_383 = arith.constant 0 : index
    %c0_384 = arith.constant 0 : index
    %1290 = vector.load %arg15[%c0_383, %c0_384] : memref<1x128xf32, #tpu.memory_space<vmem>>, vector<1x128xf32>
    %1291 = vector.broadcast %1290 : vector<1x128xf32> to vector<2x128xf32>
    %1292 = arith.addf %1289, %1291 : vector<2x128xf32>
    %c3_385 = arith.constant 3 : index
    %c0_386 = arith.constant 0 : index
    %c0_387 = arith.constant 0 : index
    %1293 = vector.load %arg17[%c3_385, %c0_386, %c0_387] : memref<7x2x128xf32, #tpu.memory_space<vmem>>, vector<1x2x128xf32>
    %1294 = vector.shape_cast %1293 : vector<1x2x128xf32> to vector<2x128xf32>
    %1295 = vector.shape_cast %1292 : vector<2x128xf32> to vector<1x2x128xf32>
    tpu.vector_store %arg17[%c3_385, %c0_386, %c0_387], %1295 {strides = array<i32>} : memref<7x2x128xf32, #tpu.memory_space<vmem>>, vector<1x2x128xf32>,
    %c4_388 = arith.constant 4 : index
    %c0_389 = arith.constant 0 : index
    %c0_390 = arith.constant 0 : index
    %1296 = vector.load %arg1[%c4_388, %c0_389, %c0_390] : memref<7x2x16xf32, #tpu.memory_space<vmem>>, vector<1x2x16xf32>
    %1297 = vector.shape_cast %1296 : vector<1x2x16xf32> to vector<2x16xf32>
    %1298 = tpu.concatenate %1297, %1259 in 1 : vector<2x16xf32>, vector<2x64xf32> -> vector<2x80xf32>
    %c0_391 = arith.constant 0 : index
    %c0_392 = arith.constant 0 : index
    %1299 = vector.load %arg10[%c0_391, %c0_392] : memref<80x256xf32, #tpu.memory_space<vmem>>, vector<80x256xf32>
    %cst_393 = arith.constant dense<0.000000e+00> : vector<2x256xf32>
    %1300 = tpu.matmul %1298, %1299, %cst_393 {dimension_numbers = #tpu.dot_dimension_numbers<[1], [0], [0], [1], [0, 0, 1, 1], [], []>} : vector<2x80xf32>, vector<80x256xf32>, vector<2x256xf32> -> vector<2x256xf32>
    %c0_394 = arith.constant 0 : index
    %c0_395 = arith.constant 0 : index
    %1301 = vector.load %arg11[%c0_394, %c0_395] : memref<1x256xf32, #tpu.memory_space<vmem>>, vector<1x256xf32>
    %1302 = vector.broadcast %1301 : vector<1x256xf32> to vector<2x256xf32>
    %1303 = arith.addf %1300, %1302 : vector<2x256xf32>
    %1304 = vector.extract_strided_slice %1303 {offsets = [0, 0], sizes = [2, 64], strides = [1, 1]} : vector<2x256xf32> to vector<2x64xf32>
    %1305 = arith.negf %1304 : vector<2x64xf32>
    %1306 = math.exp %1305 : vector<2x64xf32>
    %cst_396 = arith.constant 1.000000e+00 : f32
    %1307 = vector.broadcast %cst_396 : f32 to vector<2x64xf32>
    %1308 = arith.addf %1307, %1306 : vector<2x64xf32>
    %1309 = arith.divf %1307, %1308 : vector<2x64xf32>
    %1310 = vector.extract_strided_slice %1303 {offsets = [0, 64], sizes = [2, 64], strides = [1, 1]} : vector<2x256xf32> to vector<2x64xf32>
    %1311 = arith.negf %1310 : vector<2x64xf32>
    %1312 = math.exp %1311 : vector<2x64xf32>
    %cst_397 = arith.constant 1.000000e+00 : f32
    %1313 = vector.broadcast %cst_397 : f32 to vector<2x64xf32>
    %1314 = arith.addf %1313, %1312 : vector<2x64xf32>
    %1315 = arith.divf %1313, %1314 : vector<2x64xf32>
    %1316 = vector.extract_strided_slice %1303 {offsets = [0, 128], sizes = [2, 64], strides = [1, 1]} : vector<2x256xf32> to vector<2x64xf32>
    %1317 = vector.extract_strided_slice %1303 {offsets = [0, 192], sizes = [2, 64], strides = [1, 1]} : vector<2x256xf32> to vector<2x64xf32>
    %1318 = arith.mulf %1309, %1317 : vector<2x64xf32>
    %1319 = arith.addf %1316, %1318 : vector<2x64xf32>
    %1320 = math.tanh %1319 : vector<2x64xf32>
    %cst_398 = arith.constant 1.000000e+00 : f32
    %1321 = vector.broadcast %cst_398 : f32 to vector<2x64xf32>
    %1322 = arith.subf %1321, %1315 : vector<2x64xf32>
    %1323 = arith.mulf %1322, %1320 : vector<2x64xf32>
    %1324 = arith.mulf %1315, %1259 : vector<2x64xf32>
    %1325 = arith.addf %1323, %1324 : vector<2x64xf32>
    %1326 = tpu.concatenate %1325, %1287 in 1 : vector<2x64xf32>, vector<2x64xf32> -> vector<2x128xf32>
    %c0_399 = arith.constant 0 : index
    %c0_400 = arith.constant 0 : index
    %1327 = vector.load %arg12[%c0_399, %c0_400] : memref<128x256xf32, #tpu.memory_space<vmem>>, vector<128x256xf32>
    %cst_401 = arith.constant dense<0.000000e+00> : vector<2x256xf32>
    %1328 = tpu.matmul %1326, %1327, %cst_401 {dimension_numbers = #tpu.dot_dimension_numbers<[1], [0], [0], [1], [0, 0, 1, 1], [], []>} : vector<2x128xf32>, vector<128x256xf32>, vector<2x256xf32> -> vector<2x256xf32>
    %c0_402 = arith.constant 0 : index
    %c0_403 = arith.constant 0 : index
    %1329 = vector.load %arg13[%c0_402, %c0_403] : memref<1x256xf32, #tpu.memory_space<vmem>>, vector<1x256xf32>
    %1330 = vector.broadcast %1329 : vector<1x256xf32> to vector<2x256xf32>
    %1331 = arith.addf %1328, %1330 : vector<2x256xf32>
    %1332 = vector.extract_strided_slice %1331 {offsets = [0, 0], sizes = [2, 64], strides = [1, 1]} : vector<2x256xf32> to vector<2x64xf32>
    %1333 = arith.negf %1332 : vector<2x64xf32>
    %1334 = math.exp %1333 : vector<2x64xf32>
    %cst_404 = arith.constant 1.000000e+00 : f32
    %1335 = vector.broadcast %cst_404 : f32 to vector<2x64xf32>
    %1336 = arith.addf %1335, %1334 : vector<2x64xf32>
    %1337 = arith.divf %1335, %1336 : vector<2x64xf32>
    %1338 = vector.extract_strided_slice %1331 {offsets = [0, 64], sizes = [2, 64], strides = [1, 1]} : vector<2x256xf32> to vector<2x64xf32>
    %1339 = arith.negf %1338 : vector<2x64xf32>
    %1340 = math.exp %1339 : vector<2x64xf32>
    %cst_405 = arith.constant 1.000000e+00 : f32
    %1341 = vector.broadcast %cst_405 : f32 to vector<2x64xf32>
    %1342 = arith.addf %1341, %1340 : vector<2x64xf32>
    %1343 = arith.divf %1341, %1342 : vector<2x64xf32>
    %1344 = vector.extract_strided_slice %1331 {offsets = [0, 128], sizes = [2, 64], strides = [1, 1]} : vector<2x256xf32> to vector<2x64xf32>
    %1345 = vector.extract_strided_slice %1331 {offsets = [0, 192], sizes = [2, 64], strides = [1, 1]} : vector<2x256xf32> to vector<2x64xf32>
    %1346 = arith.mulf %1337, %1345 : vector<2x64xf32>
    %1347 = arith.addf %1344, %1346 : vector<2x64xf32>
    %1348 = math.tanh %1347 : vector<2x64xf32>
    %cst_406 = arith.constant 1.000000e+00 : f32
    %1349 = vector.broadcast %cst_406 : f32 to vector<2x64xf32>
    %1350 = arith.subf %1349, %1343 : vector<2x64xf32>
    %1351 = arith.mulf %1350, %1348 : vector<2x64xf32>
    %1352 = arith.mulf %1343, %1287 : vector<2x64xf32>
    %1353 = arith.addf %1351, %1352 : vector<2x64xf32>
    %c0_407 = arith.constant 0 : index
    %c0_408 = arith.constant 0 : index
    %1354 = vector.load %arg14[%c0_407, %c0_408] : memref<64x128xf32, #tpu.memory_space<vmem>>, vector<64x128xf32>
    %cst_409 = arith.constant dense<0.000000e+00> : vector<2x128xf32>
    %1355 = tpu.matmul %1353, %1354, %cst_409 {dimension_numbers = #tpu.dot_dimension_numbers<[1], [0], [0], [1], [0, 0, 1, 1], [], []>} : vector<2x64xf32>, vector<64x128xf32>, vector<2x128xf32> -> vector<2x128xf32>
    %c0_410 = arith.constant 0 : index
    %c0_411 = arith.constant 0 : index
    %1356 = vector.load %arg15[%c0_410, %c0_411] : memref<1x128xf32, #tpu.memory_space<vmem>>, vector<1x128xf32>
    %1357 = vector.broadcast %1356 : vector<1x128xf32> to vector<2x128xf32>
    %1358 = arith.addf %1355, %1357 : vector<2x128xf32>
    %c4_412 = arith.constant 4 : index
    %c0_413 = arith.constant 0 : index
    %c0_414 = arith.constant 0 : index
    %1359 = vector.load %arg17[%c4_412, %c0_413, %c0_414] : memref<7x2x128xf32, #tpu.memory_space<vmem>>, vector<1x2x128xf32>
    %1360 = vector.shape_cast %1359 : vector<1x2x128xf32> to vector<2x128xf32>
    %1361 = vector.shape_cast %1358 : vector<2x128xf32> to vector<1x2x128xf32>
    tpu.vector_store %arg17[%c4_412, %c0_413, %c0_414], %1361 {strides = array<i32>} : memref<7x2x128xf32, #tpu.memory_space<vmem>>, vector<1x2x128xf32>,
    %c5 = arith.constant 5 : index
    %c0_415 = arith.constant 0 : index
    %c0_416 = arith.constant 0 : index
    %1362 = vector.load %arg1[%c5, %c0_415, %c0_416] : memref<7x2x16xf32, #tpu.memory_space<vmem>>, vector<1x2x16xf32>
    %1363 = vector.shape_cast %1362 : vector<1x2x16xf32> to vector<2x16xf32>
    %1364 = tpu.concatenate %1363, %1325 in 1 : vector<2x16xf32>, vector<2x64xf32> -> vector<2x80xf32>
    %c0_417 = arith.constant 0 : index
    %c0_418 = arith.constant 0 : index
    %1365 = vector.load %arg10[%c0_417, %c0_418] : memref<80x256xf32, #tpu.memory_space<vmem>>, vector<80x256xf32>
    %cst_419 = arith.constant dense<0.000000e+00> : vector<2x256xf32>
    %1366 = tpu.matmul %1364, %1365, %cst_419 {dimension_numbers = #tpu.dot_dimension_numbers<[1], [0], [0], [1], [0, 0, 1, 1], [], []>} : vector<2x80xf32>, vector<80x256xf32>, vector<2x256xf32> -> vector<2x256xf32>
    %c0_420 = arith.constant 0 : index
    %c0_421 = arith.constant 0 : index
    %1367 = vector.load %arg11[%c0_420, %c0_421] : memref<1x256xf32, #tpu.memory_space<vmem>>, vector<1x256xf32>
    %1368 = vector.broadcast %1367 : vector<1x256xf32> to vector<2x256xf32>
    %1369 = arith.addf %1366, %1368 : vector<2x256xf32>
    %1370 = vector.extract_strided_slice %1369 {offsets = [0, 0], sizes = [2, 64], strides = [1, 1]} : vector<2x256xf32> to vector<2x64xf32>
    %1371 = arith.negf %1370 : vector<2x64xf32>
    %1372 = math.exp %1371 : vector<2x64xf32>
    %cst_422 = arith.constant 1.000000e+00 : f32
    %1373 = vector.broadcast %cst_422 : f32 to vector<2x64xf32>
    %1374 = arith.addf %1373, %1372 : vector<2x64xf32>
    %1375 = arith.divf %1373, %1374 : vector<2x64xf32>
    %1376 = vector.extract_strided_slice %1369 {offsets = [0, 64], sizes = [2, 64], strides = [1, 1]} : vector<2x256xf32> to vector<2x64xf32>
    %1377 = arith.negf %1376 : vector<2x64xf32>
    %1378 = math.exp %1377 : vector<2x64xf32>
    %cst_423 = arith.constant 1.000000e+00 : f32
    %1379 = vector.broadcast %cst_423 : f32 to vector<2x64xf32>
    %1380 = arith.addf %1379, %1378 : vector<2x64xf32>
    %1381 = arith.divf %1379, %1380 : vector<2x64xf32>
    %1382 = vector.extract_strided_slice %1369 {offsets = [0, 128], sizes = [2, 64], strides = [1, 1]} : vector<2x256xf32> to vector<2x64xf32>
    %1383 = vector.extract_strided_slice %1369 {offsets = [0, 192], sizes = [2, 64], strides = [1, 1]} : vector<2x256xf32> to vector<2x64xf32>
    %1384 = arith.mulf %1375, %1383 : vector<2x64xf32>
    %1385 = arith.addf %1382, %1384 : vector<2x64xf32>
    %1386 = math.tanh %1385 : vector<2x64xf32>
    %cst_424 = arith.constant 1.000000e+00 : f32
    %1387 = vector.broadcast %cst_424 : f32 to vector<2x64xf32>
    %1388 = arith.subf %1387, %1381 : vector<2x64xf32>
    %1389 = arith.mulf %1388, %1386 : vector<2x64xf32>
    %1390 = arith.mulf %1381, %1325 : vector<2x64xf32>
    %1391 = arith.addf %1389, %1390 : vector<2x64xf32>
    %1392 = tpu.concatenate %1391, %1353 in 1 : vector<2x64xf32>, vector<2x64xf32> -> vector<2x128xf32>
    %c0_425 = arith.constant 0 : index
    %c0_426 = arith.constant 0 : index
    %1393 = vector.load %arg12[%c0_425, %c0_426] : memref<128x256xf32, #tpu.memory_space<vmem>>, vector<128x256xf32>
    %cst_427 = arith.constant dense<0.000000e+00> : vector<2x256xf32>
    %1394 = tpu.matmul %1392, %1393, %cst_427 {dimension_numbers = #tpu.dot_dimension_numbers<[1], [0], [0], [1], [0, 0, 1, 1], [], []>} : vector<2x128xf32>, vector<128x256xf32>, vector<2x256xf32> -> vector<2x256xf32>
    %c0_428 = arith.constant 0 : index
    %c0_429 = arith.constant 0 : index
    %1395 = vector.load %arg13[%c0_428, %c0_429] : memref<1x256xf32, #tpu.memory_space<vmem>>, vector<1x256xf32>
    %1396 = vector.broadcast %1395 : vector<1x256xf32> to vector<2x256xf32>
    %1397 = arith.addf %1394, %1396 : vector<2x256xf32>
    %1398 = vector.extract_strided_slice %1397 {offsets = [0, 0], sizes = [2, 64], strides = [1, 1]} : vector<2x256xf32> to vector<2x64xf32>
    %1399 = arith.negf %1398 : vector<2x64xf32>
    %1400 = math.exp %1399 : vector<2x64xf32>
    %cst_430 = arith.constant 1.000000e+00 : f32
    %1401 = vector.broadcast %cst_430 : f32 to vector<2x64xf32>
    %1402 = arith.addf %1401, %1400 : vector<2x64xf32>
    %1403 = arith.divf %1401, %1402 : vector<2x64xf32>
    %1404 = vector.extract_strided_slice %1397 {offsets = [0, 64], sizes = [2, 64], strides = [1, 1]} : vector<2x256xf32> to vector<2x64xf32>
    %1405 = arith.negf %1404 : vector<2x64xf32>
    %1406 = math.exp %1405 : vector<2x64xf32>
    %cst_431 = arith.constant 1.000000e+00 : f32
    %1407 = vector.broadcast %cst_431 : f32 to vector<2x64xf32>
    %1408 = arith.addf %1407, %1406 : vector<2x64xf32>
    %1409 = arith.divf %1407, %1408 : vector<2x64xf32>
    %1410 = vector.extract_strided_slice %1397 {offsets = [0, 128], sizes = [2, 64], strides = [1, 1]} : vector<2x256xf32> to vector<2x64xf32>
    %1411 = vector.extract_strided_slice %1397 {offsets = [0, 192], sizes = [2, 64], strides = [1, 1]} : vector<2x256xf32> to vector<2x64xf32>
    %1412 = arith.mulf %1403, %1411 : vector<2x64xf32>
    %1413 = arith.addf %1410, %1412 : vector<2x64xf32>
    %1414 = math.tanh %1413 : vector<2x64xf32>
    %cst_432 = arith.constant 1.000000e+00 : f32
    %1415 = vector.broadcast %cst_432 : f32 to vector<2x64xf32>
    %1416 = arith.subf %1415, %1409 : vector<2x64xf32>
    %1417 = arith.mulf %1416, %1414 : vector<2x64xf32>
    %1418 = arith.mulf %1409, %1353 : vector<2x64xf32>
    %1419 = arith.addf %1417, %1418 : vector<2x64xf32>
    %c0_433 = arith.constant 0 : index
    %c0_434 = arith.constant 0 : index
    %1420 = vector.load %arg14[%c0_433, %c0_434] : memref<64x128xf32, #tpu.memory_space<vmem>>, vector<64x128xf32>
    %cst_435 = arith.constant dense<0.000000e+00> : vector<2x128xf32>
    %1421 = tpu.matmul %1419, %1420, %cst_435 {dimension_numbers = #tpu.dot_dimension_numbers<[1], [0], [0], [1], [0, 0, 1, 1], [], []>} : vector<2x64xf32>, vector<64x128xf32>, vector<2x128xf32> -> vector<2x128xf32>
    %c0_436 = arith.constant 0 : index
    %c0_437 = arith.constant 0 : index
    %1422 = vector.load %arg15[%c0_436, %c0_437] : memref<1x128xf32, #tpu.memory_space<vmem>>, vector<1x128xf32>
    %1423 = vector.broadcast %1422 : vector<1x128xf32> to vector<2x128xf32>
    %1424 = arith.addf %1421, %1423 : vector<2x128xf32>
    %c5_438 = arith.constant 5 : index
    %c0_439 = arith.constant 0 : index
    %c0_440 = arith.constant 0 : index
    %1425 = vector.load %arg17[%c5_438, %c0_439, %c0_440] : memref<7x2x128xf32, #tpu.memory_space<vmem>>, vector<1x2x128xf32>
    %1426 = vector.shape_cast %1425 : vector<1x2x128xf32> to vector<2x128xf32>
    %1427 = vector.shape_cast %1424 : vector<2x128xf32> to vector<1x2x128xf32>
    tpu.vector_store %arg17[%c5_438, %c0_439, %c0_440], %1427 {strides = array<i32>} : memref<7x2x128xf32, #tpu.memory_space<vmem>>, vector<1x2x128xf32>,
    %c6_441 = arith.constant 6 : index
    %c0_442 = arith.constant 0 : index
    %c0_443 = arith.constant 0 : index
    %1428 = vector.load %arg1[%c6_441, %c0_442, %c0_443] : memref<7x2x16xf32, #tpu.memory_space<vmem>>, vector<1x2x16xf32>
    %1429 = vector.shape_cast %1428 : vector<1x2x16xf32> to vector<2x16xf32>
    %1430 = tpu.concatenate %1429, %1391 in 1 : vector<2x16xf32>, vector<2x64xf32> -> vector<2x80xf32>
    %c0_444 = arith.constant 0 : index
    %c0_445 = arith.constant 0 : index
    %1431 = vector.load %arg10[%c0_444, %c0_445] : memref<80x256xf32, #tpu.memory_space<vmem>>, vector<80x256xf32>
    %cst_446 = arith.constant dense<0.000000e+00> : vector<2x256xf32>
    %1432 = tpu.matmul %1430, %1431, %cst_446 {dimension_numbers = #tpu.dot_dimension_numbers<[1], [0], [0], [1], [0, 0, 1, 1], [], []>} : vector<2x80xf32>, vector<80x256xf32>, vector<2x256xf32> -> vector<2x256xf32>
    %c0_447 = arith.constant 0 : index
    %c0_448 = arith.constant 0 : index
    %1433 = vector.load %arg11[%c0_447, %c0_448] : memref<1x256xf32, #tpu.memory_space<vmem>>, vector<1x256xf32>
    %1434 = vector.broadcast %1433 : vector<1x256xf32> to vector<2x256xf32>
    %1435 = arith.addf %1432, %1434 : vector<2x256xf32>
    %1436 = vector.extract_strided_slice %1435 {offsets = [0, 0], sizes = [2, 64], strides = [1, 1]} : vector<2x256xf32> to vector<2x64xf32>
    %1437 = arith.negf %1436 : vector<2x64xf32>
    %1438 = math.exp %1437 : vector<2x64xf32>
    %cst_449 = arith.constant 1.000000e+00 : f32
    %1439 = vector.broadcast %cst_449 : f32 to vector<2x64xf32>
    %1440 = arith.addf %1439, %1438 : vector<2x64xf32>
    %1441 = arith.divf %1439, %1440 : vector<2x64xf32>
    %1442 = vector.extract_strided_slice %1435 {offsets = [0, 64], sizes = [2, 64], strides = [1, 1]} : vector<2x256xf32> to vector<2x64xf32>
    %1443 = arith.negf %1442 : vector<2x64xf32>
    %1444 = math.exp %1443 : vector<2x64xf32>
    %cst_450 = arith.constant 1.000000e+00 : f32
    %1445 = vector.broadcast %cst_450 : f32 to vector<2x64xf32>
    %1446 = arith.addf %1445, %1444 : vector<2x64xf32>
    %1447 = arith.divf %1445, %1446 : vector<2x64xf32>
    %1448 = vector.extract_strided_slice %1435 {offsets = [0, 128], sizes = [2, 64], strides = [1, 1]} : vector<2x256xf32> to vector<2x64xf32>
    %1449 = vector.extract_strided_slice %1435 {offsets = [0, 192], sizes = [2, 64], strides = [1, 1]} : vector<2x256xf32> to vector<2x64xf32>
    %1450 = arith.mulf %1441, %1449 : vector<2x64xf32>
    %1451 = arith.addf %1448, %1450 : vector<2x64xf32>
    %1452 = math.tanh %1451 : vector<2x64xf32>
    %cst_451 = arith.constant 1.000000e+00 : f32
    %1453 = vector.broadcast %cst_451 : f32 to vector<2x64xf32>
    %1454 = arith.subf %1453, %1447 : vector<2x64xf32>
    %1455 = arith.mulf %1454, %1452 : vector<2x64xf32>
    %1456 = arith.mulf %1447, %1391 : vector<2x64xf32>
    %1457 = arith.addf %1455, %1456 : vector<2x64xf32>
    %1458 = tpu.concatenate %1457, %1419 in 1 : vector<2x64xf32>, vector<2x64xf32> -> vector<2x128xf32>
    %c0_452 = arith.constant 0 : index
    %c0_453 = arith.constant 0 : index
    %1459 = vector.load %arg12[%c0_452, %c0_453] : memref<128x256xf32, #tpu.memory_space<vmem>>, vector<128x256xf32>
    %cst_454 = arith.constant dense<0.000000e+00> : vector<2x256xf32>
    %1460 = tpu.matmul %1458, %1459, %cst_454 {dimension_numbers = #tpu.dot_dimension_numbers<[1], [0], [0], [1], [0, 0, 1, 1], [], []>} : vector<2x128xf32>, vector<128x256xf32>, vector<2x256xf32> -> vector<2x256xf32>
    %c0_455 = arith.constant 0 : index
    %c0_456 = arith.constant 0 : index
    %1461 = vector.load %arg13[%c0_455, %c0_456] : memref<1x256xf32, #tpu.memory_space<vmem>>, vector<1x256xf32>
    %1462 = vector.broadcast %1461 : vector<1x256xf32> to vector<2x256xf32>
    %1463 = arith.addf %1460, %1462 : vector<2x256xf32>
    %1464 = vector.extract_strided_slice %1463 {offsets = [0, 0], sizes = [2, 64], strides = [1, 1]} : vector<2x256xf32> to vector<2x64xf32>
    %1465 = arith.negf %1464 : vector<2x64xf32>
    %1466 = math.exp %1465 : vector<2x64xf32>
    %cst_457 = arith.constant 1.000000e+00 : f32
    %1467 = vector.broadcast %cst_457 : f32 to vector<2x64xf32>
    %1468 = arith.addf %1467, %1466 : vector<2x64xf32>
    %1469 = arith.divf %1467, %1468 : vector<2x64xf32>
    %1470 = vector.extract_strided_slice %1463 {offsets = [0, 64], sizes = [2, 64], strides = [1, 1]} : vector<2x256xf32> to vector<2x64xf32>
    %1471 = arith.negf %1470 : vector<2x64xf32>
    %1472 = math.exp %1471 : vector<2x64xf32>
    %cst_458 = arith.constant 1.000000e+00 : f32
    %1473 = vector.broadcast %cst_458 : f32 to vector<2x64xf32>
    %1474 = arith.addf %1473, %1472 : vector<2x64xf32>
    %1475 = arith.divf %1473, %1474 : vector<2x64xf32>
    %1476 = vector.extract_strided_slice %1463 {offsets = [0, 128], sizes = [2, 64], strides = [1, 1]} : vector<2x256xf32> to vector<2x64xf32>
    %1477 = vector.extract_strided_slice %1463 {offsets = [0, 192], sizes = [2, 64], strides = [1, 1]} : vector<2x256xf32> to vector<2x64xf32>
    %1478 = arith.mulf %1469, %1477 : vector<2x64xf32>
    %1479 = arith.addf %1476, %1478 : vector<2x64xf32>
    %1480 = math.tanh %1479 : vector<2x64xf32>
    %cst_459 = arith.constant 1.000000e+00 : f32
    %1481 = vector.broadcast %cst_459 : f32 to vector<2x64xf32>
    %1482 = arith.subf %1481, %1475 : vector<2x64xf32>
    %1483 = arith.mulf %1482, %1480 : vector<2x64xf32>
    %1484 = arith.mulf %1475, %1419 : vector<2x64xf32>
    %1485 = arith.addf %1483, %1484 : vector<2x64xf32>
    %c0_460 = arith.constant 0 : index
    %c0_461 = arith.constant 0 : index
    %1486 = vector.load %arg14[%c0_460, %c0_461] : memref<64x128xf32, #tpu.memory_space<vmem>>, vector<64x128xf32>
    %cst_462 = arith.constant dense<0.000000e+00> : vector<2x128xf32>
    %1487 = tpu.matmul %1485, %1486, %cst_462 {dimension_numbers = #tpu.dot_dimension_numbers<[1], [0], [0], [1], [0, 0, 1, 1], [], []>} : vector<2x64xf32>, vector<64x128xf32>, vector<2x128xf32> -> vector<2x128xf32>
    %c0_463 = arith.constant 0 : index
    %c0_464 = arith.constant 0 : index
    %1488 = vector.load %arg15[%c0_463, %c0_464] : memref<1x128xf32, #tpu.memory_space<vmem>>, vector<1x128xf32>
    %1489 = vector.broadcast %1488 : vector<1x128xf32> to vector<2x128xf32>
    %1490 = arith.addf %1487, %1489 : vector<2x128xf32>
    %c6_465 = arith.constant 6 : index
    %c0_466 = arith.constant 0 : index
    %c0_467 = arith.constant 0 : index
    %1491 = vector.load %arg17[%c6_465, %c0_466, %c0_467] : memref<7x2x128xf32, #tpu.memory_space<vmem>>, vector<1x2x128xf32>
    %1492 = vector.shape_cast %1491 : vector<1x2x128xf32> to vector<2x128xf32>
    %1493 = vector.shape_cast %1490 : vector<2x128xf32> to vector<1x2x128xf32>
    tpu.vector_store %arg17[%c6_465, %c0_466, %c0_467], %1493 {strides = array<i32>} : memref<7x2x128xf32, #tpu.memory_space<vmem>>, vector<1x2x128xf32>,
    return
  }
}

</mosaic_0001>

<llo_original>
// kernel: seq2seq_forward_jit.1
$region0: #{seq2seq_forward_jit.1}
  #allocation0 [shape = 'u32[]', space=smem, size = 0x4, offset = 0x4, fixed_abs, tag = 'smem constant byte address 0x4 - core index']
  #allocation1 [shape = 'u32[144,128]{1,0:T(1,128)}', space=vmem, size = 0x12000, scoped, tag = 'internal scratch']
  #allocation2 [shape = 'f32[16,96]{1,0:T(8,128)}', space=vmem, size = 0x2000, scoped, tag = 'scratch operand']
  #allocation3 [shape = 'f32[16,96]{1,0:T(8,128)}', space=vmem, size = 0x2000, scoped, tag = 'scratch operand']
  #allocation4 [shape = 'f32[16,64]{1,0:T(8,128)}', space=vmem, size = 0x2000, scoped, tag = 'scratch operand']
  %s0 = inlined_call_operand.vmem [shape: f32[16,16], index: 0, kind: input, shape index: {}]
  %s1 = inlined_call_operand.vmem [shape: f32[7,2,16], index: 1, kind: input, shape index: {}]
  %s2 = inlined_call_operand.vmem [shape: f32[2,16,96], index: 2, kind: input, shape index: {}]
  %s3 = inlined_call_operand.vmem [shape: f32[2,1,96], index: 3, kind: input, shape index: {}]
  %s4 = inlined_call_operand.vmem [shape: f32[2,32,96], index: 4, kind: input, shape index: {}]
  %s5 = inlined_call_operand.vmem [shape: f32[2,1,32], index: 5, kind: input, shape index: {}]
  %s6 = inlined_call_operand.vmem [shape: f32[2,64,96], index: 6, kind: input, shape index: {}]
  %s7 = inlined_call_operand.vmem [shape: f32[2,1,96], index: 7, kind: input, shape index: {}]
  %s8 = inlined_call_operand.vmem [shape: f32[2,32,96], index: 8, kind: input, shape index: {}]
  %s9 = inlined_call_operand.vmem [shape: f32[2,1,32], index: 9, kind: input, shape index: {}]
  %s10 = inlined_call_operand.vmem [shape: f32[80,256], index: 10, kind: input, shape index: {}]
  %s11 = inlined_call_operand.hbm [shape: f32[1,256], index: 11, kind: input, shape index: {}]
  %s12 = inlined_call_operand.vmem [shape: f32[128,256], index: 12, kind: input, shape index: {}]
  %s13 = inlined_call_operand.hbm [shape: f32[1,256], index: 13, kind: input, shape index: {}]
  %s14 = inlined_call_operand.hbm [shape: f32[64,128], index: 14, kind: input, shape index: {}]
  %s15 = inlined_call_operand.hbm [shape: f32[1,128], index: 15, kind: input, shape index: {}]
  %s16 = inlined_call_operand.vmem [shape: f32[128,16], index: 16, kind: input, shape index: {}]
  %s17 = inlined_call_operand.vmem [shape: f32[7,2,128], index: 17, kind: output, shape index: {}]
  %s18 = sld [smem:[#allocation0]]
  $region94: #{seq2seq_forward_jit.1} parent=0
    _
  %s20 = ssub.s32 1, %s18
  %s21 = scalar_select 0, %s20, %s18
  $region1: #{seq2seq_forward_jit.1} parent=0
    #allocation5 [shape = 'u8[1024]{0}', space=vmem, size = 0x400, scoped, tag = 'input window, operand 11, single buffered']
    #allocation6 [shape = 's32[1]{0}', space=sflag, size = 0x4, scoped, tag = 'scoped memory for seq2seq_forward_jit.1']
    #allocation7 [shape = 'u8[1024]{0}', space=vmem, size = 0x400, scoped, tag = 'input window, operand 13, single buffered']
    #allocation8 [shape = 's32[1]{0}', space=sflag, size = 0x4, scoped, tag = 'scoped memory for seq2seq_forward_jit.1']
    #allocation9 [shape = 'u8[32768]{0}', space=vmem, size = 0x8000, scoped, tag = 'input window, operand 14, single buffered']
    #allocation10 [shape = 'u8[512]{0}', space=vmem, size = 0x400, scoped, tag = 'input window, operand 15, single buffered']
    #allocation11 [shape = 's32[1]{0}', space=sflag, size = 0x4, scoped, tag = 'scoped memory for seq2seq_forward_jit.1']
    %22 = vsyncpa [#allocation6], 0
    %23 = vsyncpa [#allocation8], 0
    %24 = vsyncpa [#allocation11], 0
    // Predicated region
    $region2: #{seq2seq_forward_jit.1} parent=1 // pred_check
      _
    $region3: #{seq2seq_forward_jit.1} parent=1 // pred_check_branch
      %26 = sbr.rel (0) target = $region5
    $region4: #{seq2seq_forward_jit.1} parent=1 // pred_region
      _
    $region5: #{seq2seq_forward_jit.1} parent=1 // pred_fallthru
      _
    // Predicated region
    $region6: #{seq2seq_forward_jit.1} parent=1 // pred_check
      _
    $region7: #{seq2seq_forward_jit.1} parent=1 // pred_check_branch
      %28 = sbr.rel (0) target = $region9
    $region8: #{seq2seq_forward_jit.1} parent=1 // pred_region
      _
    $region9: #{seq2seq_forward_jit.1} parent=1 // pred_fallthru
      _
    // Predicated region
    $region10: #{seq2seq_forward_jit.1} parent=1 // pred_check
      _
    $region11: #{seq2seq_forward_jit.1} parent=1 // pred_check_branch
      %30 = sbr.rel (0) target = $region13
    $region12: #{seq2seq_forward_jit.1} parent=1 // pred_region
      _
    $region13: #{seq2seq_forward_jit.1} parent=1 // pred_fallthru
      _
    // Predicated region
    $region14: #{seq2seq_forward_jit.1} parent=1 // pred_check
      _
    $region15: #{seq2seq_forward_jit.1} parent=1 // pred_check_branch
      %32 = sbr.rel (0) target = $region17
    $region16: #{seq2seq_forward_jit.1} parent=1 // pred_region
      _
    $region17: #{seq2seq_forward_jit.1} parent=1 // pred_fallthru
      _
    // Predicated region
    $region18: #{seq2seq_forward_jit.1} parent=1 // pred_check
      _
    $region19: #{seq2seq_forward_jit.1} parent=1 // pred_check_branch
      %34 = sbr.rel (0) target = $region21
    $region20: #{seq2seq_forward_jit.1} parent=1 // pred_region
      _
    $region21: #{seq2seq_forward_jit.1} parent=1 // pred_fallthru
      _
    // Predicated region
    $region22: #{seq2seq_forward_jit.1} parent=1 // pred_check
      _
    $region23: #{seq2seq_forward_jit.1} parent=1 // pred_check_branch
      %36 = sbr.rel (0) target = $region25
    $region24: #{seq2seq_forward_jit.1} parent=1 // pred_region
      _
    $region25: #{seq2seq_forward_jit.1} parent=1 // pred_fallthru
      _
    // Predicated region
    $region26: #{seq2seq_forward_jit.1} parent=1 // pred_check
      _
    $region27: #{seq2seq_forward_jit.1} parent=1 // pred_check_branch
      %38 = sbr.rel (0) target = $region29
    $region28: #{seq2seq_forward_jit.1} parent=1 // pred_region
      _
    $region29: #{seq2seq_forward_jit.1} parent=1 // pred_fallthru
      _
    // Predicated region
    $region30: #{seq2seq_forward_jit.1} parent=1 // pred_check
      _
    $region31: #{seq2seq_forward_jit.1} parent=1 // pred_check_branch
      %40 = sbr.rel (0) target = $region33
    $region32: #{seq2seq_forward_jit.1} parent=1 // pred_region
      _
    $region33: #{seq2seq_forward_jit.1} parent=1 // pred_fallthru
      _
    // Predicated region
    $region34: #{seq2seq_forward_jit.1} parent=1 // pred_check
      _
    $region35: #{seq2seq_forward_jit.1} parent=1 // pred_check_branch
      %42 = sbr.rel (0) target = $region37
    $region36: #{seq2seq_forward_jit.1} parent=1 // pred_region
      _
    $region37: #{seq2seq_forward_jit.1} parent=1 // pred_fallthru
      _
    // Predicated region
    $region38: #{seq2seq_forward_jit.1} parent=1 // pred_check
      _
    $region39: #{seq2seq_forward_jit.1} parent=1 // pred_check_branch
      %44 = sbr.rel (0) target = $region41
    $region40: #{seq2seq_forward_jit.1} parent=1 // pred_region
      _
    $region41: #{seq2seq_forward_jit.1} parent=1 // pred_fallthru
      _
    // Predicated region
    $region42: #{seq2seq_forward_jit.1} parent=1 // pred_check
      _
    $region43: #{seq2seq_forward_jit.1} parent=1 // pred_check_branch
      %46 = sbr.rel (0) target = $region45
    $region44: #{seq2seq_forward_jit.1} parent=1 // pred_region
      _
    $region45: #{seq2seq_forward_jit.1} parent=1 // pred_fallthru
      _
    // Predicated region
    $region46: #{seq2seq_forward_jit.1} parent=1 // pred_check
      _
    $region47: #{seq2seq_forward_jit.1} parent=1 // pred_check_branch
      %48 = sbr.rel (0) target = $region49
    $region48: #{seq2seq_forward_jit.1} parent=1 // pred_region
      %s50 = ssub.s32 32, 32
      %51 = vsyncadd [#allocation6], %s50
      %s53 = sshll.u32 [#allocation5], 4
      %s54 = int_to_ptr.vmem [resolvable:$true] %s53
      %56 = dma.hbm_to_vmem [thread:$0]  %s11, 32, %s54, [#allocation6]
    $region49: #{seq2seq_forward_jit.1} parent=1 // pred_fallthru
      _
    // Predicated region
    $region50: #{seq2seq_forward_jit.1} parent=1 // pred_check
      _
    $region51: #{seq2seq_forward_jit.1} parent=1 // pred_check_branch
      %58 = sbr.rel (0) target = $region53
    $region52: #{seq2seq_forward_jit.1} parent=1 // pred_region
      _
    $region53: #{seq2seq_forward_jit.1} parent=1 // pred_fallthru
      _
    // Predicated region
    $region54: #{seq2seq_forward_jit.1} parent=1 // pred_check
      _
    $region55: #{seq2seq_forward_jit.1} parent=1 // pred_check_branch
      %60 = sbr.rel (0) target = $region57
    $region56: #{seq2seq_forward_jit.1} parent=1 // pred_region
      %s62 = ssub.s32 32, 32
      %63 = vsyncadd [#allocation8], %s62
      %s65 = sshll.u32 [#allocation7], 4
      %s66 = int_to_ptr.vmem [resolvable:$true] %s65
      %68 = dma.hbm_to_vmem [thread:$0]  %s13, 32, %s66, [#allocation8]
    $region57: #{seq2seq_forward_jit.1} parent=1 // pred_fallthru
      _
    // Predicated region
    $region58: #{seq2seq_forward_jit.1} parent=1 // pred_check
      _
    $region59: #{seq2seq_forward_jit.1} parent=1 // pred_check_branch
      %70 = sbr.rel (0) target = $region61
    $region60: #{seq2seq_forward_jit.1} parent=1 // pred_region
      %s72 = ssub.s32 1024, 1024
      %73 = vsyncadd [#allocation8], %s72
      %s74 = sshll.u32 [#allocation9], 4
      %s75 = int_to_ptr.vmem [resolvable:$true] %s74
      %80 = dma.hbm_to_vmem [thread:$0]  %s14, 1024, %s75, [#allocation8], 128, 128, 8
    $region61: #{seq2seq_forward_jit.1} parent=1 // pred_fallthru
      _
    // Predicated region
    $region62: #{seq2seq_forward_jit.1} parent=1 // pred_check
      _
    $region63: #{seq2seq_forward_jit.1} parent=1 // pred_check_branch
      %82 = sbr.rel (0) target = $region65
    $region64: #{seq2seq_forward_jit.1} parent=1 // pred_region
      %s84 = ssub.s32 16, 16
      %85 = vsyncadd [#allocation11], %s84
      %s87 = sshll.u32 [#allocation10], 4
      %s88 = int_to_ptr.vmem [resolvable:$true] %s87
      %90 = dma.hbm_to_vmem [thread:$0]  %s15, 16, %s88, [#allocation11]
    $region65: #{seq2seq_forward_jit.1} parent=1 // pred_fallthru
      _
    // Predicated region
    $region66: #{seq2seq_forward_jit.1} parent=1 // pred_check
      _
    $region67: #{seq2seq_forward_jit.1} parent=1 // pred_check_branch
      %92 = sbr.rel (0) target = $region69
    $region68: #{seq2seq_forward_jit.1} parent=1 // pred_region
      _
    $region69: #{seq2seq_forward_jit.1} parent=1 // pred_fallthru
      _
    // Predicated region
    $region70: #{seq2seq_forward_jit.1} parent=1 // pred_check
      _
    $region71: #{seq2seq_forward_jit.1} parent=1 // pred_check_branch
      %94 = sbr.rel (0) target = $region73
    $region72: #{seq2seq_forward_jit.1} parent=1 // pred_region
      %95 = dma.done [#allocation6], 32
    $region73: #{seq2seq_forward_jit.1} parent=1 // pred_fallthru
      _
    // Predicated region
    $region74: #{seq2seq_forward_jit.1} parent=1 // pred_check
      _
    $region75: #{seq2seq_forward_jit.1} parent=1 // pred_check_branch
      %97 = sbr.rel (0) target = $region77
    $region76: #{seq2seq_forward_jit.1} parent=1 // pred_region
      %98 = dma.done [#allocation8], 32
    $region77: #{seq2seq_forward_jit.1} parent=1 // pred_fallthru
      _
    // Predicated region
    $region78: #{seq2seq_forward_jit.1} parent=1 // pred_check
      _
    $region79: #{seq2seq_forward_jit.1} parent=1 // pred_check_branch
      %100 = sbr.rel (0) target = $region81
    $region80: #{seq2seq_forward_jit.1} parent=1 // pred_region
      %101 = dma.done [#allocation8], 1024
    $region81: #{seq2seq_forward_jit.1} parent=1 // pred_fallthru
      _
    // Predicated region
    $region82: #{seq2seq_forward_jit.1} parent=1 // pred_check
      _
    $region83: #{seq2seq_forward_jit.1} parent=1 // pred_check_branch
      %103 = sbr.rel (0) target = $region85
    $region84: #{seq2seq_forward_jit.1} parent=1 // pred_region
      %104 = dma.done [#allocation11], 16
    $region85: #{seq2seq_forward_jit.1} parent=1 // pred_fallthru
      _
    %v105 = vld [vmem:[%s0] sm:$0xff]
    %v106 = vld [vmem:[%s0 + $0x8] sm:$0xff]
    %v107 = vld [vmem:[%s2] sm:$0xff]
    %v108 = vld [vmem:[%s2 + $0x8] sm:$0xff]
    %v109 = vld [vmem:[%s3] sm:$0x1]
    %v111 = vlaneseq
    %v112 = vshrl.u32 %v111, 7
    %v113 = vsub.s32 0, %v112
    %v114 = vrot.slane %v109, %v113
    %vm116 = vcmask 130048
    %v118 = vsel %vm116, %v105, 0
    %v121 = vsel %vm116, %v106, 0
    %123 = vmatprep.subr.mxu0 0.0
    %124 = vmatpush1.msra.mxu0 %v107
    %125 = vmatprep.subr.mxu0 0.0
    %126 = vmatpush1.msra.mxu0 %v108
    %127 = vmatprep.subr.mxu0 0.0
    %128 = vmatpush1.msra.mxu0 0.0
    %129 = vmatprep.subr.mxu0 0.0
    %130 = vmatpush1.msra.mxu0 0.0
    %131 = vmatprep.subr.mxu0 0.0
    %132 = vmatpush1.msra.mxu0 0.0
    %133 = vmatprep.subr.mxu0 0.0
    %134 = vmatpush1.msra.mxu0 0.0
    %135 = vmatprep.subr.mxu0 0.0
    %136 = vmatpush1.msra.mxu0 0.0
    %137 = vmatprep.subr.mxu0 0.0
    %138 = vmatpush1.msra.mxu0 0.0
    %139 = vmatprep.subr.mxu0 0.0
    %140 = vmatpush1.msra.mxu0 0.0
    %141 = vmatprep.subr.mxu0 0.0
    %142 = vmatpush1.msra.mxu0 0.0
    %143 = vmatprep.subr.mxu0 0.0
    %144 = vmatpush1.msra.mxu0 0.0
    %145 = vmatprep.subr.mxu0 0.0
    %146 = vmatpush1.msra.mxu0 0.0
    %147 = vmatprep.subr.mxu0 0.0
    %148 = vmatpush1.msra.mxu0 0.0
    %149 = vmatprep.subr.mxu0 0.0
    %150 = vmatpush1.msra.mxu0 0.0
    %151 = vmatprep.subr.mxu0 0.0
    %152 = vmatpush1.msra.mxu0 0.0
    %153 = vmatprep.subr.mxu0 0.0
    %154 = vmatpush1.msra.mxu0 0.0
    %155 = vmatprep.subr.mxu0 0.0
    %156 = vmatpush1.msra.mxu0 0.0
    %157 = vmatprep.subr.mxu0 0.0
    %158 = vmatpush1.msra.mxu0 0.0
    %159 = vmatprep.subr.mxu0 0.0
    %160 = vmatpush1.msra.mxu0 0.0
    %161 = vmatprep.subr.mxu0 0.0
    %162 = vmatpush1.msra.mxu0 0.0
    %163 = vmatprep.subr.mxu0 0.0
    %164 = vmatpush1.msra.mxu0 0.0
    %165 = vmatprep.subr.mxu0 0.0
    %166 = vmatpush1.msra.mxu0 0.0
    %167 = vmatprep.subr.mxu0 0.0
    %168 = vmatpush1.msra.mxu0 0.0
    %169 = vmatprep.subr.mxu0 0.0
    %170 = vmatpush1.msra.mxu0 0.0
    %171 = vmatprep.subr.mxu0 0.0
    %172 = vmatpush1.msra.mxu0 0.0
    %173 = vmatprep.subr.mxu0 0.0
    %174 = vmatpush1.msra.mxu0 0.0
    %175 = vmatprep.subr.mxu0 0.0
    %176 = vmatpush1.msra.mxu0 0.0
    %177 = vmatprep.subr.mxu0 0.0
    %178 = vmatpush1.msra.mxu0 0.0
    %179 = vmatprep.subr.mxu0 0.0
    %180 = vmatpush1.msra.mxu0 0.0
    %181 = vmatprep.subr.mxu0 0.0
    %182 = vmatpush1.msra.mxu0 0.0
    %183 = vmatprep.subr.mxu0 0.0
    %184 = vmatpush1.msra.mxu0 0.0
    %185 = vmatprep.subr.mxu0 0.0
    %186 = vmatpush1.msra.mxu0 0.0
    %187 = vmatprep.mubr.f32.mxu0 0.0
    %188 = vmatmul.mubr.f32.gmra.mrb[0].mxu0 %v118
    %v189 = vpop.f32.mrb[0].mxu0
    %v190 = vadd.f32 %v114, %v189
    %v191 = vpop.f32.mrb[0].mxu0
    %192 = vmatprep.mubr.f32.mxu0 0.0
    %193 = vmatmul.mubr.f32.gmra.mrb[0].mxu0 %v121
    %v194 = vpop.f32.mrb[0].mxu0
    %v195 = vadd.f32 %v114, %v194
    %v196 = vpop.f32.mrb[0].mxu0
    %197 = vdwg.mxu0
    %vm198 = vcmask 785408
    %199 = vst.msk [vmem:[#allocation2] sm:$0xff] %vm198, %v190
    %200 = vst.msk [vmem:[#allocation2 + $0x8] sm:$0xff] %vm198, %v195
    %s201 = scalar_lea.vmem %s2, 16
    %v202 = vld [vmem:[%s201] sm:$0xff]
    %v203 = vld [vmem:[%s201 + $0x8] sm:$0xff]
    %s204 = scalar_lea.vmem %s3, 1
    %v205 = vld [vmem:[%s204] sm:$0x1]
    %v207 = vlaneseq
    %v208 = vshrl.u32 %v207, 7
    %v209 = vsub.s32 0, %v208
    %v210 = vrot.slane %v205, %v209
    %212 = vmatprep.subr.mxu0 0.0
    %213 = vmatpush1.msra.mxu0 %v202
    %214 = vmatprep.subr.mxu0 0.0
    %215 = vmatpush1.msra.mxu0 %v203
    %216 = vmatprep.subr.mxu0 0.0
    %217 = vmatpush1.msra.mxu0 0.0
    %218 = vmatprep.subr.mxu0 0.0
    %219 = vmatpush1.msra.mxu0 0.0
    %220 = vmatprep.subr.mxu0 0.0
    %221 = vmatpush1.msra.mxu0 0.0
    %222 = vmatprep.subr.mxu0 0.0
    %223 = vmatpush1.msra.mxu0 0.0
    %224 = vmatprep.subr.mxu0 0.0
    %225 = vmatpush1.msra.mxu0 0.0
    %226 = vmatprep.subr.mxu0 0.0
    %227 = vmatpush1.msra.mxu0 0.0
    %228 = vmatprep.subr.mxu0 0.0
    %229 = vmatpush1.msra.mxu0 0.0
    %230 = vmatprep.subr.mxu0 0.0
    %231 = vmatpush1.msra.mxu0 0.0
    %232 = vmatprep.subr.mxu0 0.0
    %233 = vmatpush1.msra.mxu0 0.0
    %234 = vmatprep.subr.mxu0 0.0
    %235 = vmatpush1.msra.mxu0 0.0
    %236 = vmatprep.subr.mxu0 0.0
    %237 = vmatpush1.msra.mxu0 0.0
    %238 = vmatprep.subr.mxu0 0.0
    %239 = vmatpush1.msra.mxu0 0.0
    %240 = vmatprep.subr.mxu0 0.0
    %241 = vmatpush1.msra.mxu0 0.0
    %242 = vmatprep.subr.mxu0 0.0
    %243 = vmatpush1.msra.mxu0 0.0
    %244 = vmatprep.subr.mxu0 0.0
    %245 = vmatpush1.msra.mxu0 0.0
    %246 = vmatprep.subr.mxu0 0.0
    %247 = vmatpush1.msra.mxu0 0.0
    %248 = vmatprep.subr.mxu0 0.0
    %249 = vmatpush1.msra.mxu0 0.0
    %250 = vmatprep.subr.mxu0 0.0
    %251 = vmatpush1.msra.mxu0 0.0
    %252 = vmatprep.subr.mxu0 0.0
    %253 = vmatpush1.msra.mxu0 0.0
    %254 = vmatprep.subr.mxu0 0.0
    %255 = vmatpush1.msra.mxu0 0.0
    %256 = vmatprep.subr.mxu0 0.0
    %257 = vmatpush1.msra.mxu0 0.0
    %258 = vmatprep.subr.mxu0 0.0
    %259 = vmatpush1.msra.mxu0 0.0
    %260 = vmatprep.subr.mxu0 0.0
    %261 = vmatpush1.msra.mxu0 0.0
    %262 = vmatprep.subr.mxu0 0.0
    %263 = vmatpush1.msra.mxu0 0.0
    %264 = vmatprep.subr.mxu0 0.0
    %265 = vmatpush1.msra.mxu0 0.0
    %266 = vmatprep.subr.mxu0 0.0
    %267 = vmatpush1.msra.mxu0 0.0
    %268 = vmatprep.subr.mxu0 0.0
    %269 = vmatpush1.msra.mxu0 0.0
    %270 = vmatprep.subr.mxu0 0.0
    %271 = vmatpush1.msra.mxu0 0.0
    %272 = vmatprep.subr.mxu0 0.0
    %273 = vmatpush1.msra.mxu0 0.0
    %274 = vmatprep.subr.mxu0 0.0
    %275 = vmatpush1.msra.mxu0 0.0
    %276 = vmatprep.mubr.f32.mxu0 0.0
    %277 = vmatmul.mubr.f32.gmra.mrb[0].mxu0 %v118
    %v278 = vpop.f32.mrb[0].mxu0
    %v279 = vadd.f32 %v210, %v278
    %v280 = vpop.f32.mrb[0].mxu0
    %281 = vmatprep.mubr.f32.mxu0 0.0
    %282 = vmatmul.mubr.f32.gmra.mrb[0].mxu0 %v121
    %v283 = vpop.f32.mrb[0].mxu0
    %v284 = vadd.f32 %v210, %v283
    %v285 = vpop.f32.mrb[0].mxu0
    %286 = vdwg.mxu0
    %287 = vst.msk [vmem:[#allocation3] sm:$0xff] %vm198, %v279
    %288 = vst.msk [vmem:[#allocation3 + $0x8] sm:$0xff] %vm198, %v284
    %v289 = vld [vmem:[%s4] sm:$0xff]
    %v290 = vld [vmem:[%s4 + $0x8] sm:$0xff]
    %v291 = vld [vmem:[%s4 + $0x10] sm:$0xff]
    %v292 = vld [vmem:[%s4 + $0x18] sm:$0xff]
    %s293 = scalar_lea.vmem %s4, 32
    %v294 = vld [vmem:[%s293] sm:$0xff]
    %v295 = vld [vmem:[%s293 + $0x8] sm:$0xff]
    %v296 = vld [vmem:[%s293 + $0x10] sm:$0xff]
    %v297 = vld [vmem:[%s293 + $0x18] sm:$0xff]
    %v298 = vld [vmem:[%s5] sm:$0x1]
    %s299 = scalar_lea.vmem %s5, 1
    %v300 = vld [vmem:[%s299] sm:$0x1]
    %v301 = vld [vmem:[#allocation2] sm:$0x3]
    %vm302 = vcmask 261120
    %v304 = vsel %vm302, 0.0, 0
    %306 = vmatprep.subr.mxu0 0.0
    %307 = vmatpush1.msra.mxu0 %v289
    %308 = vmatprep.subr.mxu0 0.0
    %309 = vmatpush1.msra.mxu0 %v290
    %310 = vmatprep.subr.mxu0 0.0
    %311 = vmatpush1.msra.mxu0 %v291
    %312 = vmatprep.subr.mxu0 0.0
    %313 = vmatpush1.msra.mxu0 %v292
    %314 = vmatprep.subr.mxu0 0.0
    %315 = vmatpush1.msra.mxu0 0.0
    %316 = vmatprep.subr.mxu0 0.0
    %317 = vmatpush1.msra.mxu0 0.0
    %318 = vmatprep.subr.mxu0 0.0
    %319 = vmatpush1.msra.mxu0 0.0
    %320 = vmatprep.subr.mxu0 0.0
    %321 = vmatpush1.msra.mxu0 0.0
    %322 = vmatprep.subr.mxu0 0.0
    %323 = vmatpush1.msra.mxu0 0.0
    %324 = vmatprep.subr.mxu0 0.0
    %325 = vmatpush1.msra.mxu0 0.0
    %326 = vmatprep.subr.mxu0 0.0
    %327 = vmatpush1.msra.mxu0 0.0
    %328 = vmatprep.subr.mxu0 0.0
    %329 = vmatpush1.msra.mxu0 0.0
    %330 = vmatprep.subr.mxu0 0.0
    %331 = vmatpush1.msra.mxu0 0.0
    %332 = vmatprep.subr.mxu0 0.0
    %333 = vmatpush1.msra.mxu0 0.0
    %334 = vmatprep.subr.mxu0 0.0
    %335 = vmatpush1.msra.mxu0 0.0
    %336 = vmatprep.subr.mxu0 0.0
    %337 = vmatpush1.msra.mxu0 0.0
    %338 = vmatprep.subr.mxu0 0.0
    %339 = vmatpush1.msra.mxu0 0.0
    %340 = vmatprep.subr.mxu0 0.0
    %341 = vmatpush1.msra.mxu0 0.0
    %342 = vmatprep.subr.mxu0 0.0
    %343 = vmatpush1.msra.mxu0 0.0
    %344 = vmatprep.subr.mxu0 0.0
    %345 = vmatpush1.msra.mxu0 0.0
    %346 = vmatprep.subr.mxu0 0.0
    %347 = vmatpush1.msra.mxu0 0.0
    %348 = vmatprep.subr.mxu0 0.0
    %349 = vmatpush1.msra.mxu0 0.0
    %350 = vmatprep.subr.mxu0 0.0
    %351 = vmatpush1.msra.mxu0 0.0
    %352 = vmatprep.subr.mxu0 0.0
    %353 = vmatpush1.msra.mxu0 0.0
    %354 = vmatprep.subr.mxu0 0.0
    %355 = vmatpush1.msra.mxu0 0.0
    %356 = vmatprep.subr.mxu0 0.0
    %357 = vmatpush1.msra.mxu0 0.0
    %358 = vmatprep.subr.mxu0 0.0
    %359 = vmatpush1.msra.mxu0 0.0
    %360 = vmatprep.subr.mxu0 0.0
    %361 = vmatpush1.msra.mxu0 0.0
    %362 = vmatprep.subr.mxu0 0.0
    %363 = vmatpush1.msra.mxu0 0.0
    %364 = vmatprep.subr.mxu0 0.0
    %365 = vmatpush1.msra.mxu0 0.0
    %366 = vmatprep.subr.mxu0 0.0
    %367 = vmatpush1.msra.mxu0 0.0
    %368 = vmatprep.subr.mxu0 0.0
    %369 = vmatpush1.msra.mxu0 0.0
    %370 = vmatprep.mubr.f32.mxu0 0.0
    %371 = vmatmul.mubr.f32.gmra.mrb[0].mxu0 %v304
    %v372 = vpop.f32.mrb[0].mxu0
    %v373 = vadd.f32 0.0, %v372
    %v374 = vpop.f32.mrb[0].mxu0
    %375 = vdwg.mxu0
    %v376 = vadd.f32 %v301, %v373
    %v377 = vxor.u32 %v376, 2147483648
    %v378 = vmul.f32 %v377, 1.442695
    %v379 = vpow.pop %v378
    %v380 = vadd.f32 %v379, 1.0
    %v381 = vrcp.pop %v380
    %v382 = vmul.f32 1.0, %v381
    %v384 = vlaneseq
    %v385 = vshrl.u32 %v384, 7
    %v386 = vsub.s32 0, %v385
    %v387 = vrot.slane %v298, %v386
    %388 = vrot.lane.b32.xlu0 %v387, 64
    %v389 = vpop.permute.xlu0 %388
    %v391 = vadd.f32 %v373, %v389
    %393 = vrot.lane.b32.xlu0 %v391, 64
    %v394 = vpop.permute.xlu0 %393
    %v396 = vmul.f32 %v382, %v394
    %398 = vrot.lane.b32.xlu0 %v396, 64
    %v399 = vpop.permute.xlu0 %398
    %v401 = vadd.f32 %v301, %v399
    %v402 = vtanh.pop %v401
    %v403 = vsub.f32 1.0, %v382
    %405 = vrot.lane.b32.xlu0 %v402, 96
    %v406 = vpop.permute.xlu0 %405
    %v408 = vmul.f32 %v403, %v406
    %v409 = vmul.f32 %v382, 0.0
    %v410 = vadd.f32 %v408, %v409
    %v411 = vld [vmem:[#allocation3 + $0xe] sm:$0x3]
    %412 = vmatprep.subr.mxu0 0.0
    %413 = vmatpush1.msra.mxu0 %v294
    %414 = vmatprep.subr.mxu0 0.0
    %415 = vmatpush1.msra.mxu0 %v295
    %416 = vmatprep.subr.mxu0 0.0
    %417 = vmatpush1.msra.mxu0 %v296
    %418 = vmatprep.subr.mxu0 0.0
    %419 = vmatpush1.msra.mxu0 %v297
    %420 = vmatprep.subr.mxu0 0.0
    %421 = vmatpush1.msra.mxu0 0.0
    %422 = vmatprep.subr.mxu0 0.0
    %423 = vmatpush1.msra.mxu0 0.0
    %424 = vmatprep.subr.mxu0 0.0
    %425 = vmatpush1.msra.mxu0 0.0
    %426 = vmatprep.subr.mxu0 0.0
    %427 = vmatpush1.msra.mxu0 0.0
    %428 = vmatprep.subr.mxu0 0.0
    %429 = vmatpush1.msra.mxu0 0.0
    %430 = vmatprep.subr.mxu0 0.0
    %431 = vmatpush1.msra.mxu0 0.0
    %432 = vmatprep.subr.mxu0 0.0
    %433 = vmatpush1.msra.mxu0 0.0
    %434 = vmatprep.subr.mxu0 0.0
    %435 = vmatpush1.msra.mxu0 0.0
    %436 = vmatprep.subr.mxu0 0.0
    %437 = vmatpush1.msra.mxu0 0.0
    %438 = vmatprep.subr.mxu0 0.0
    %439 = vmatpush1.msra.mxu0 0.0
    %440 = vmatprep.subr.mxu0 0.0
    %441 = vmatpush1.msra.mxu0 0.0
    %442 = vmatprep.subr.mxu0 0.0
    %443 = vmatpush1.msra.mxu0 0.0
    %444 = vmatprep.subr.mxu0 0.0
    %445 = vmatpush1.msra.mxu0 0.0
    %446 = vmatprep.subr.mxu0 0.0
    %447 = vmatpush1.msra.mxu0 0.0
    %448 = vmatprep.subr.mxu0 0.0
    %449 = vmatpush1.msra.mxu0 0.0
    %450 = vmatprep.subr.mxu0 0.0
    %451 = vmatpush1.msra.mxu0 0.0
    %452 = vmatprep.subr.mxu0 0.0
    %453 = vmatpush1.msra.mxu0 0.0
    %454 = vmatprep.subr.mxu0 0.0
    %455 = vmatpush1.msra.mxu0 0.0
    %456 = vmatprep.subr.mxu0 0.0
    %457 = vmatpush1.msra.mxu0 0.0
    %458 = vmatprep.subr.mxu0 0.0
    %459 = vmatpush1.msra.mxu0 0.0
    %460 = vmatprep.subr.mxu0 0.0
    %461 = vmatpush1.msra.mxu0 0.0
    %462 = vmatprep.subr.mxu0 0.0
    %463 = vmatpush1.msra.mxu0 0.0
    %464 = vmatprep.subr.mxu0 0.0
    %465 = vmatpush1.msra.mxu0 0.0
    %466 = vmatprep.subr.mxu0 0.0
    %467 = vmatpush1.msra.mxu0 0.0
    %468 = vmatprep.subr.mxu0 0.0
    %469 = vmatpush1.msra.mxu0 0.0
    %470 = vmatprep.subr.mxu0 0.0
    %471 = vmatpush1.msra.mxu0 0.0
    %472 = vmatprep.subr.mxu0 0.0
    %473 = vmatpush1.msra.mxu0 0.0
    %474 = vmatprep.subr.mxu0 0.0
    %475 = vmatpush1.msra.mxu0 0.0
    %476 = vmatprep.mubr.f32.mxu0 0.0
    %477 = vmatmul.mubr.f32.gmra.mrb[0].mxu0 %v304
    %v478 = vpop.f32.mrb[0].mxu0
    %v479 = vadd.f32 0.0, %v478
    %v480 = vpop.f32.mrb[0].mxu0
    %481 = vdwg.mxu0
    %v482 = vadd.f32 %v411, %v479
    %v483 = vxor.u32 %v482, 2147483648
    %v484 = vmul.f32 %v483, 1.442695
    %v485 = vpow.pop %v484
    %v486 = vadd.f32 %v485, 1.0
    %v487 = vrcp.pop %v486
    %v488 = vmul.f32 1.0, %v487
    %v490 = vlaneseq
    %v491 = vshrl.u32 %v490, 7
    %v492 = vsub.s32 0, %v491
    %v493 = vrot.slane %v300, %v492
    %494 = vrot.lane.b32.xlu0 %v493, 64
    %v495 = vpop.permute.xlu0 %494
    %v497 = vadd.f32 %v479, %v495
    %499 = vrot.lane.b32.xlu0 %v497, 64
    %v500 = vpop.permute.xlu0 %499
    %v502 = vmul.f32 %v488, %v500
    %504 = vrot.lane.b32.xlu0 %v502, 64
    %v505 = vpop.permute.xlu0 %504
    %v507 = vadd.f32 %v411, %v505
    %v508 = vtanh.pop %v507
    %v509 = vsub.f32 1.0, %v488
    %511 = vrot.lane.b32.xlu0 %v508, 96
    %v512 = vpop.permute.xlu0 %511
    %v514 = vmul.f32 %v509, %v512
    %v515 = vmul.f32 %v488, 0.0
    %v516 = vadd.f32 %v514, %v515
    %518 = vrot.lane.b32.xlu0 %v410, 96
    %v519 = vpop.permute.xlu0 %518
    %vm521 = vcmask 254976
    %522 = vst.msk [vmem:[#allocation4] sm:$0x3] %vm521, %v519
    %vm523 = vcmask 517376
    %524 = vst.msk [vmem:[#allocation4 + $0xe] sm:$0x3] %vm523, %v516
    %v525 = vld [vmem:[#allocation2 + $0x2] sm:$0x3]
    %v526 = vsel %vm302, %v519, 0
    %528 = vmatprep.subr.mxu0 0.0
    %529 = vmatpush1.msra.mxu0 %v289
    %530 = vmatprep.subr.mxu0 0.0
    %531 = vmatpush1.msra.mxu0 %v290
    %532 = vmatprep.subr.mxu0 0.0
    %533 = vmatpush1.msra.mxu0 %v291
    %534 = vmatprep.subr.mxu0 0.0
    %535 = vmatpush1.msra.mxu0 %v292
    %536 = vmatprep.subr.mxu0 0.0
    %537 = vmatpush1.msra.mxu0 0.0
    %538 = vmatprep.subr.mxu0 0.0
    %539 = vmatpush1.msra.mxu0 0.0
    %540 = vmatprep.subr.mxu0 0.0
    %541 = vmatpush1.msra.mxu0 0.0
    %542 = vmatprep.subr.mxu0 0.0
    %543 = vmatpush1.msra.mxu0 0.0
    %544 = vmatprep.subr.mxu0 0.0
    %545 = vmatpush1.msra.mxu0 0.0
    %546 = vmatprep.subr.mxu0 0.0
    %547 = vmatpush1.msra.mxu0 0.0
    %548 = vmatprep.subr.mxu0 0.0
    %549 = vmatpush1.msra.mxu0 0.0
    %550 = vmatprep.subr.mxu0 0.0
    %551 = vmatpush1.msra.mxu0 0.0
    %552 = vmatprep.subr.mxu0 0.0
    %553 = vmatpush1.msra.mxu0 0.0
    %554 = vmatprep.subr.mxu0 0.0
    %555 = vmatpush1.msra.mxu0 0.0
    %556 = vmatprep.subr.mxu0 0.0
    %557 = vmatpush1.msra.mxu0 0.0
    %558 = vmatprep.subr.mxu0 0.0
    %559 = vmatpush1.msra.mxu0 0.0
    %560 = vmatprep.subr.mxu0 0.0
    %561 = vmatpush1.msra.mxu0 0.0
    %562 = vmatprep.subr.mxu0 0.0
    %563 = vmatpush1.msra.mxu0 0.0
    %564 = vmatprep.subr.mxu0 0.0
    %565 = vmatpush1.msra.mxu0 0.0
    %566 = vmatprep.subr.mxu0 0.0
    %567 = vmatpush1.msra.mxu0 0.0
    %568 = vmatprep.subr.mxu0 0.0
    %569 = vmatpush1.msra.mxu0 0.0
    %570 = vmatprep.subr.mxu0 0.0
    %571 = vmatpush1.msra.mxu0 0.0
    %572 = vmatprep.subr.mxu0 0.0
    %573 = vmatpush1.msra.mxu0 0.0
    %574 = vmatprep.subr.mxu0 0.0
    %575 = vmatpush1.msra.mxu0 0.0
    %576 = vmatprep.subr.mxu0 0.0
    %577 = vmatpush1.msra.mxu0 0.0
    %578 = vmatprep.subr.mxu0 0.0
    %579 = vmatpush1.msra.mxu0 0.0
    %580 = vmatprep.subr.mxu0 0.0
    %581 = vmatpush1.msra.mxu0 0.0
    %582 = vmatprep.subr.mxu0 0.0
    %583 = vmatpush1.msra.mxu0 0.0
    %584 = vmatprep.subr.mxu0 0.0
    %585 = vmatpush1.msra.mxu0 0.0
    %586 = vmatprep.subr.mxu0 0.0
    %587 = vmatpush1.msra.mxu0 0.0
    %588 = vmatprep.subr.mxu0 0.0
    %589 = vmatpush1.msra.mxu0 0.0
    %590 = vmatprep.subr.mxu0 0.0
    %591 = vmatpush1.msra.mxu0 0.0
    %592 = vmatprep.mubr.f32.mxu0 0.0
    %593 = vmatmul.mubr.f32.gmra.mrb[0].mxu0 %v526
    %v594 = vpop.f32.mrb[0].mxu0
    %v595 = vadd.f32 0.0, %v594
    %v596 = vpop.f32.mrb[0].mxu0
    %597 = vdwg.mxu0
    %v598 = vadd.f32 %v525, %v595
    %v599 = vxor.u32 %v598, 2147483648
    %v600 = vmul.f32 %v599, 1.442695
    %v601 = vpow.pop %v600
    %v602 = vadd.f32 %v601, 1.0
    %v603 = vrcp.pop %v602
    %v604 = vmul.f32 1.0, %v603
    %v605 = vadd.f32 %v595, %v389
    %607 = vrot.lane.b32.xlu0 %v605, 64
    %v608 = vpop.permute.xlu0 %607
    %v610 = vmul.f32 %v604, %v608
    %612 = vrot.lane.b32.xlu0 %v610, 64
    %v613 = vpop.permute.xlu0 %612
    %v615 = vadd.f32 %v525, %v613
    %v616 = vtanh.pop %v615
    %v617 = vsub.f32 1.0, %v604
    %619 = vrot.lane.b32.xlu0 %v616, 96
    %v620 = vpop.permute.xlu0 %619
    %v622 = vmul.f32 %v617, %v620
    %v623 = vmul.f32 %v604, %v410
    %v624 = vadd.f32 %v622, %v623
    %v625 = vld [vmem:[#allocation3 + $0xc] sm:$0x3]
    %627 = vrot.lane.b32.xlu0 %v516, 96
    %v628 = vpop.permute.xlu0 %627
    %v629 = vsel %vm302, %v628, 0
    %631 = vmatprep.subr.mxu0 0.0
    %632 = vmatpush1.msra.mxu0 %v294
    %633 = vmatprep.subr.mxu0 0.0
    %634 = vmatpush1.msra.mxu0 %v295
    %635 = vmatprep.subr.mxu0 0.0
    %636 = vmatpush1.msra.mxu0 %v296
    %637 = vmatprep.subr.mxu0 0.0
    %638 = vmatpush1.msra.mxu0 %v297
    %639 = vmatprep.subr.mxu0 0.0
    %640 = vmatpush1.msra.mxu0 0.0
    %641 = vmatprep.subr.mxu0 0.0
    %642 = vmatpush1.msra.mxu0 0.0
    %643 = vmatprep.subr.mxu0 0.0
    %644 = vmatpush1.msra.mxu0 0.0
    %645 = vmatprep.subr.mxu0 0.0
    %646 = vmatpush1.msra.mxu0 0.0
    %647 = vmatprep.subr.mxu0 0.0
    %648 = vmatpush1.msra.mxu0 0.0
    %649 = vmatprep.subr.mxu0 0.0
    %650 = vmatpush1.msra.mxu0 0.0
    %651 = vmatprep.subr.mxu0 0.0
    %652 = vmatpush1.msra.mxu0 0.0
    %653 = vmatprep.subr.mxu0 0.0
    %654 = vmatpush1.msra.mxu0 0.0
    %655 = vmatprep.subr.mxu0 0.0
    %656 = vmatpush1.msra.mxu0 0.0
    %657 = vmatprep.subr.mxu0 0.0
    %658 = vmatpush1.msra.mxu0 0.0
    %659 = vmatprep.subr.mxu0 0.0
    %660 = vmatpush1.msra.mxu0 0.0
    %661 = vmatprep.subr.mxu0 0.0
    %662 = vmatpush1.msra.mxu0 0.0
    %663 = vmatprep.subr.mxu0 0.0
    %664 = vmatpush1.msra.mxu0 0.0
    %665 = vmatprep.subr.mxu0 0.0
    %666 = vmatpush1.msra.mxu0 0.0
    %667 = vmatprep.subr.mxu0 0.0
    %668 = vmatpush1.msra.mxu0 0.0
    %669 = vmatprep.subr.mxu0 0.0
    %670 = vmatpush1.msra.mxu0 0.0
    %671 = vmatprep.subr.mxu0 0.0
    %672 = vmatpush1.msra.mxu0 0.0
    %673 = vmatprep.subr.mxu0 0.0
    %674 = vmatpush1.msra.mxu0 0.0
    %675 = vmatprep.subr.mxu0 0.0
    %676 = vmatpush1.msra.mxu0 0.0
    %677 = vmatprep.subr.mxu0 0.0
    %678 = vmatpush1.msra.mxu0 0.0
    %679 = vmatprep.subr.mxu0 0.0
    %680 = vmatpush1.msra.mxu0 0.0
    %681 = vmatprep.subr.mxu0 0.0
    %682 = vmatpush1.msra.mxu0 0.0
    %683 = vmatprep.subr.mxu0 0.0
    %684 = vmatpush1.msra.mxu0 0.0
    %685 = vmatprep.subr.mxu0 0.0
    %686 = vmatpush1.msra.mxu0 0.0
    %687 = vmatprep.subr.mxu0 0.0
    %688 = vmatpush1.msra.mxu0 0.0
    %689 = vmatprep.subr.mxu0 0.0
    %690 = vmatpush1.msra.mxu0 0.0
    %691 = vmatprep.subr.mxu0 0.0
    %692 = vmatpush1.msra.mxu0 0.0
    %693 = vmatprep.subr.mxu0 0.0
    %694 = vmatpush1.msra.mxu0 0.0
    %695 = vmatprep.mubr.f32.mxu0 0.0
    %696 = vmatmul.mubr.f32.gmra.mrb[0].mxu0 %v629
    %v697 = vpop.f32.mrb[0].mxu0
    %v698 = vadd.f32 0.0, %v697
    %v699 = vpop.f32.mrb[0].mxu0
    %700 = vdwg.mxu0
    %v701 = vadd.f32 %v625, %v698
    %v702 = vxor.u32 %v701, 2147483648
    %v703 = vmul.f32 %v702, 1.442695
    %v704 = vpow.pop %v703
    %v705 = vadd.f32 %v704, 1.0
    %v706 = vrcp.pop %v705
    %v707 = vmul.f32 1.0, %v706
    %v708 = vadd.f32 %v698, %v495
    %710 = vrot.lane.b32.xlu0 %v708, 64
    %v711 = vpop.permute.xlu0 %710
    %v713 = vmul.f32 %v707, %v711
    %715 = vrot.lane.b32.xlu0 %v713, 64
    %v716 = vpop.permute.xlu0 %715
    %v718 = vadd.f32 %v625, %v716
    %v719 = vtanh.pop %v718
    %v720 = vsub.f32 1.0, %v707
    %722 = vrot.lane.b32.xlu0 %v719, 96
    %v723 = vpop.permute.xlu0 %722
    %v725 = vmul.f32 %v720, %v723
    %v726 = vmul.f32 %v707, %v516
    %v727 = vadd.f32 %v725, %v726
    %729 = vrot.lane.b32.xlu0 %v624, 96
    %v730 = vpop.permute.xlu0 %729
    %732 = vst.msk [vmem:[#allocation4 + $0x2] sm:$0x3] %vm521, %v730
    %733 = vst.msk [vmem:[#allocation4 + $0xc] sm:$0x3] %vm523, %v727
    %v734 = vld [vmem:[#allocation2 + $0x4] sm:$0x3]
    %v735 = vsel %vm302, %v730, 0
    %737 = vmatprep.subr.mxu0 0.0
    %738 = vmatpush1.msra.mxu0 %v289
    %739 = vmatprep.subr.mxu0 0.0
    %740 = vmatpush1.msra.mxu0 %v290
    %741 = vmatprep.subr.mxu0 0.0
    %742 = vmatpush1.msra.mxu0 %v291
    %743 = vmatprep.subr.mxu0 0.0
    %744 = vmatpush1.msra.mxu0 %v292
    %745 = vmatprep.subr.mxu0 0.0
    %746 = vmatpush1.msra.mxu0 0.0
    %747 = vmatprep.subr.mxu0 0.0
    %748 = vmatpush1.msra.mxu0 0.0
    %749 = vmatprep.subr.mxu0 0.0
    %750 = vmatpush1.msra.mxu0 0.0
    %751 = vmatprep.subr.mxu0 0.0
    %752 = vmatpush1.msra.mxu0 0.0
    %753 = vmatprep.subr.mxu0 0.0
    %754 = vmatpush1.msra.mxu0 0.0
    %755 = vmatprep.subr.mxu0 0.0
    %756 = vmatpush1.msra.mxu0 0.0
    %757 = vmatprep.subr.mxu0 0.0
    %758 = vmatpush1.msra.mxu0 0.0
    %759 = vmatprep.subr.mxu0 0.0
    %760 = vmatpush1.msra.mxu0 0.0
    %761 = vmatprep.subr.mxu0 0.0
    %762 = vmatpush1.msra.mxu0 0.0
    %763 = vmatprep.subr.mxu0 0.0
    %764 = vmatpush1.msra.mxu0 0.0
    %765 = vmatprep.subr.mxu0 0.0
    %766 = vmatpush1.msra.mxu0 0.0
    %767 = vmatprep.subr.mxu0 0.0
    %768 = vmatpush1.msra.mxu0 0.0
    %769 = vmatprep.subr.mxu0 0.0
    %770 = vmatpush1.msra.mxu0 0.0
    %771 = vmatprep.subr.mxu0 0.0
    %772 = vmatpush1.msra.mxu0 0.0
    %773 = vmatprep.subr.mxu0 0.0
    %774 = vmatpush1.msra.mxu0 0.0
    %775 = vmatprep.subr.mxu0 0.0
    %776 = vmatpush1.msra.mxu0 0.0
    %777 = vmatprep.subr.mxu0 0.0
    %778 = vmatpush1.msra.mxu0 0.0
    %779 = vmatprep.subr.mxu0 0.0
    %780 = vmatpush1.msra.mxu0 0.0
    %781 = vmatprep.subr.mxu0 0.0
    %782 = vmatpush1.msra.mxu0 0.0
    %783 = vmatprep.subr.mxu0 0.0
    %784 = vmatpush1.msra.mxu0 0.0
    %785 = vmatprep.subr.mxu0 0.0
    %786 = vmatpush1.msra.mxu0 0.0
    %787 = vmatprep.subr.mxu0 0.0
    %788 = vmatpush1.msra.mxu0 0.0
    %789 = vmatprep.subr.mxu0 0.0
    %790 = vmatpush1.msra.mxu0 0.0
    %791 = vmatprep.subr.mxu0 0.0
    %792 = vmatpush1.msra.mxu0 0.0
    %793 = vmatprep.subr.mxu0 0.0
    %794 = vmatpush1.msra.mxu0 0.0
    %795 = vmatprep.subr.mxu0 0.0
    %796 = vmatpush1.msra.mxu0 0.0
    %797 = vmatprep.subr.mxu0 0.0
    %798 = vmatpush1.msra.mxu0 0.0
    %799 = vmatprep.subr.mxu0 0.0
    %800 = vmatpush1.msra.mxu0 0.0
    %801 = vmatprep.mubr.f32.mxu0 0.0
    %802 = vmatmul.mubr.f32.gmra.mrb[0].mxu0 %v735
    %v803 = vpop.f32.mrb[0].mxu0
    %v804 = vadd.f32 0.0, %v803
    %v805 = vpop.f32.mrb[0].mxu0
    %806 = vdwg.mxu0
    %v807 = vadd.f32 %v734, %v804
    %v808 = vxor.u32 %v807, 2147483648
    %v809 = vmul.f32 %v808, 1.442695
    %v810 = vpow.pop %v809
    %v811 = vadd.f32 %v810, 1.0
    %v812 = vrcp.pop %v811
    %v813 = vmul.f32 1.0, %v812
    %v814 = vadd.f32 %v804, %v389
    %816 = vrot.lane.b32.xlu0 %v814, 64
    %v817 = vpop.permute.xlu0 %816
    %v819 = vmul.f32 %v813, %v817
    %821 = vrot.lane.b32.xlu0 %v819, 64
    %v822 = vpop.permute.xlu0 %821
    %v824 = vadd.f32 %v734, %v822
    %v825 = vtanh.pop %v824
    %v826 = vsub.f32 1.0, %v813
    %828 = vrot.lane.b32.xlu0 %v825, 96
    %v829 = vpop.permute.xlu0 %828
    %v831 = vmul.f32 %v826, %v829
    %v832 = vmul.f32 %v813, %v624
    %v833 = vadd.f32 %v831, %v832
    %v834 = vld [vmem:[#allocation3 + $0xa] sm:$0x3]
    %836 = vrot.lane.b32.xlu0 %v727, 96
    %v837 = vpop.permute.xlu0 %836
    %v838 = vsel %vm302, %v837, 0
    %840 = vmatprep.subr.mxu0 0.0
    %841 = vmatpush1.msra.mxu0 %v294
    %842 = vmatprep.subr.mxu0 0.0
    %843 = vmatpush1.msra.mxu0 %v295
    %844 = vmatprep.subr.mxu0 0.0
    %845 = vmatpush1.msra.mxu0 %v296
    %846 = vmatprep.subr.mxu0 0.0
    %847 = vmatpush1.msra.mxu0 %v297
    %848 = vmatprep.subr.mxu0 0.0
    %849 = vmatpush1.msra.mxu0 0.0
    %850 = vmatprep.subr.mxu0 0.0
    %851 = vmatpush1.msra.mxu0 0.0
    %852 = vmatprep.subr.mxu0 0.0
    %853 = vmatpush1.msra.mxu0 0.0
    %854 = vmatprep.subr.mxu0 0.0
    %855 = vmatpush1.msra.mxu0 0.0
    %856 = vmatprep.subr.mxu0 0.0
    %857 = vmatpush1.msra.mxu0 0.0
    %858 = vmatprep.subr.mxu0 0.0
    %859 = vmatpush1.msra.mxu0 0.0
    %860 = vmatprep.subr.mxu0 0.0
    %861 = vmatpush1.msra.mxu0 0.0
    %862 = vmatprep.subr.mxu0 0.0
    %863 = vmatpush1.msra.mxu0 0.0
    %864 = vmatprep.subr.mxu0 0.0
    %865 = vmatpush1.msra.mxu0 0.0
    %866 = vmatprep.subr.mxu0 0.0
    %867 = vmatpush1.msra.mxu0 0.0
    %868 = vmatprep.subr.mxu0 0.0
    %869 = vmatpush1.msra.mxu0 0.0
    %870 = vmatprep.subr.mxu0 0.0
    %871 = vmatpush1.msra.mxu0 0.0
    %872 = vmatprep.subr.mxu0 0.0
    %873 = vmatpush1.msra.mxu0 0.0
    %874 = vmatprep.subr.mxu0 0.0
    %875 = vmatpush1.msra.mxu0 0.0
    %876 = vmatprep.subr.mxu0 0.0
    %877 = vmatpush1.msra.mxu0 0.0
    %878 = vmatprep.subr.mxu0 0.0
    %879 = vmatpush1.msra.mxu0 0.0
    %880 = vmatprep.subr.mxu0 0.0
    %881 = vmatpush1.msra.mxu0 0.0
    %882 = vmatprep.subr.mxu0 0.0
    %883 = vmatpush1.msra.mxu0 0.0
    %884 = vmatprep.subr.mxu0 0.0
    %885 = vmatpush1.msra.mxu0 0.0
    %886 = vmatprep.subr.mxu0 0.0
    %887 = vmatpush1.msra.mxu0 0.0
    %888 = vmatprep.subr.mxu0 0.0
    %889 = vmatpush1.msra.mxu0 0.0
    %890 = vmatprep.subr.mxu0 0.0
    %891 = vmatpush1.msra.mxu0 0.0
    %892 = vmatprep.subr.mxu0 0.0
    %893 = vmatpush1.msra.mxu0 0.0
    %894 = vmatprep.subr.mxu0 0.0
    %895 = vmatpush1.msra.mxu0 0.0
    %896 = vmatprep.subr.mxu0 0.0
    %897 = vmatpush1.msra.mxu0 0.0
    %898 = vmatprep.subr.mxu0 0.0
    %899 = vmatpush1.msra.mxu0 0.0
    %900 = vmatprep.subr.mxu0 0.0
    %901 = vmatpush1.msra.mxu0 0.0
    %902 = vmatprep.subr.mxu0 0.0
    %903 = vmatpush1.msra.mxu0 0.0
    %904 = vmatprep.mubr.f32.mxu0 0.0
    %905 = vmatmul.mubr.f32.gmra.mrb[0].mxu0 %v838
    %v906 = vpop.f32.mrb[0].mxu0
    %v907 = vadd.f32 0.0, %v906
    %v908 = vpop.f32.mrb[0].mxu0
    %909 = vdwg.mxu0
    %v910 = vadd.f32 %v834, %v907
    %v911 = vxor.u32 %v910, 2147483648
    %v912 = vmul.f32 %v911, 1.442695
    %v913 = vpow.pop %v912
    %v914 = vadd.f32 %v913, 1.0
    %v915 = vrcp.pop %v914
    %v916 = vmul.f32 1.0, %v915
    %v917 = vadd.f32 %v907, %v495
    %919 = vrot.lane.b32.xlu0 %v917, 64
    %v920 = vpop.permute.xlu0 %919
    %v922 = vmul.f32 %v916, %v920
    %924 = vrot.lane.b32.xlu0 %v922, 64
    %v925 = vpop.permute.xlu0 %924
    %v927 = vadd.f32 %v834, %v925
    %v928 = vtanh.pop %v927
    %v929 = vsub.f32 1.0, %v916
    %931 = vrot.lane.b32.xlu0 %v928, 96
    %v932 = vpop.permute.xlu0 %931
    %v934 = vmul.f32 %v929, %v932
    %v935 = vmul.f32 %v916, %v727
    %v936 = vadd.f32 %v934, %v935
    %938 = vrot.lane.b32.xlu0 %v833, 96
    %v939 = vpop.permute.xlu0 %938
    %941 = vst.msk [vmem:[#allocation4 + $0x4] sm:$0x3] %vm521, %v939
    %942 = vst.msk [vmem:[#allocation4 + $0xa] sm:$0x3] %vm523, %v936
    %v943 = vld [vmem:[#allocation2 + $0x6] sm:$0x3]
    %v944 = vsel %vm302, %v939, 0
    %946 = vmatprep.subr.mxu0 0.0
    %947 = vmatpush1.msra.mxu0 %v289
    %948 = vmatprep.subr.mxu0 0.0
    %949 = vmatpush1.msra.mxu0 %v290
    %950 = vmatprep.subr.mxu0 0.0
    %951 = vmatpush1.msra.mxu0 %v291
    %952 = vmatprep.subr.mxu0 0.0
    %953 = vmatpush1.msra.mxu0 %v292
    %954 = vmatprep.subr.mxu0 0.0
    %955 = vmatpush1.msra.mxu0 0.0
    %956 = vmatprep.subr.mxu0 0.0
    %957 = vmatpush1.msra.mxu0 0.0
    %958 = vmatprep.subr.mxu0 0.0
    %959 = vmatpush1.msra.mxu0 0.0
    %960 = vmatprep.subr.mxu0 0.0
    %961 = vmatpush1.msra.mxu0 0.0
    %962 = vmatprep.subr.mxu0 0.0
    %963 = vmatpush1.msra.mxu0 0.0
    %964 = vmatprep.subr.mxu0 0.0
    %965 = vmatpush1.msra.mxu0 0.0
    %966 = vmatprep.subr.mxu0 0.0
    %967 = vmatpush1.msra.mxu0 0.0
    %968 = vmatprep.subr.mxu0 0.0
    %969 = vmatpush1.msra.mxu0 0.0
    %970 = vmatprep.subr.mxu0 0.0
    %971 = vmatpush1.msra.mxu0 0.0
    %972 = vmatprep.subr.mxu0 0.0
    %973 = vmatpush1.msra.mxu0 0.0
    %974 = vmatprep.subr.mxu0 0.0
    %975 = vmatpush1.msra.mxu0 0.0
    %976 = vmatprep.subr.mxu0 0.0
    %977 = vmatpush1.msra.mxu0 0.0
    %978 = vmatprep.subr.mxu0 0.0
    %979 = vmatpush1.msra.mxu0 0.0
    %980 = vmatprep.subr.mxu0 0.0
    %981 = vmatpush1.msra.mxu0 0.0
    %982 = vmatprep.subr.mxu0 0.0
    %983 = vmatpush1.msra.mxu0 0.0
    %984 = vmatprep.subr.mxu0 0.0
    %985 = vmatpush1.msra.mxu0 0.0
    %986 = vmatprep.subr.mxu0 0.0
    %987 = vmatpush1.msra.mxu0 0.0
    %988 = vmatprep.subr.mxu0 0.0
    %989 = vmatpush1.msra.mxu0 0.0
    %990 = vmatprep.subr.mxu0 0.0
    %991 = vmatpush1.msra.mxu0 0.0
    %992 = vmatprep.subr.mxu0 0.0
    %993 = vmatpush1.msra.mxu0 0.0
    %994 = vmatprep.subr.mxu0 0.0
    %995 = vmatpush1.msra.mxu0 0.0
    %996 = vmatprep.subr.mxu0 0.0
    %997 = vmatpush1.msra.mxu0 0.0
    %998 = vmatprep.subr.mxu0 0.0
    %999 = vmatpush1.msra.mxu0 0.0
    %1000 = vmatprep.subr.mxu0 0.0
    %1001 = vmatpush1.msra.mxu0 0.0
    %1002 = vmatprep.subr.mxu0 0.0
    %1003 = vmatpush1.msra.mxu0 0.0
    %1004 = vmatprep.subr.mxu0 0.0
    %1005 = vmatpush1.msra.mxu0 0.0
    %1006 = vmatprep.subr.mxu0 0.0
    %1007 = vmatpush1.msra.mxu0 0.0
    %1008 = vmatprep.subr.mxu0 0.0
    %1009 = vmatpush1.msra.mxu0 0.0
    %1010 = vmatprep.mubr.f32.mxu0 0.0
    %1011 = vmatmul.mubr.f32.gmra.mrb[0].mxu0 %v944
    %v1012 = vpop.f32.mrb[0].mxu0
    %v1013 = vadd.f32 0.0, %v1012
    %v1014 = vpop.f32.mrb[0].mxu0
    %1015 = vdwg.mxu0
    %v1016 = vadd.f32 %v943, %v1013
    %v1017 = vxor.u32 %v1016, 2147483648
    %v1018 = vmul.f32 %v1017, 1.442695
    %v1019 = vpow.pop %v1018
    %v1020 = vadd.f32 %v1019, 1.0
    %v1021 = vrcp.pop %v1020
    %v1022 = vmul.f32 1.0, %v1021
    %v1023 = vadd.f32 %v1013, %v389
    %1025 = vrot.lane.b32.xlu0 %v1023, 64
    %v1026 = vpop.permute.xlu0 %1025
    %v1028 = vmul.f32 %v1022, %v1026
    %1030 = vrot.lane.b32.xlu0 %v1028, 64
    %v1031 = vpop.permute.xlu0 %1030
    %v1033 = vadd.f32 %v943, %v1031
    %v1034 = vtanh.pop %v1033
    %v1035 = vsub.f32 1.0, %v1022
    %1037 = vrot.lane.b32.xlu0 %v1034, 96
    %v1038 = vpop.permute.xlu0 %1037
    %v1040 = vmul.f32 %v1035, %v1038
    %v1041 = vmul.f32 %v1022, %v833
    %v1042 = vadd.f32 %v1040, %v1041
    %v1043 = vld [vmem:[#allocation3 + $0x8] sm:$0x3]
    %1045 = vrot.lane.b32.xlu0 %v936, 96
    %v1046 = vpop.permute.xlu0 %1045
    %v1047 = vsel %vm302, %v1046, 0
    %1049 = vmatprep.subr.mxu0 0.0
    %1050 = vmatpush1.msra.mxu0 %v294
    %1051 = vmatprep.subr.mxu0 0.0
    %1052 = vmatpush1.msra.mxu0 %v295
    %1053 = vmatprep.subr.mxu0 0.0
    %1054 = vmatpush1.msra.mxu0 %v296
    %1055 = vmatprep.subr.mxu0 0.0
    %1056 = vmatpush1.msra.mxu0 %v297
    %1057 = vmatprep.subr.mxu0 0.0
    %1058 = vmatpush1.msra.mxu0 0.0
    %1059 = vmatprep.subr.mxu0 0.0
    %1060 = vmatpush1.msra.mxu0 0.0
    %1061 = vmatprep.subr.mxu0 0.0
    %1062 = vmatpush1.msra.mxu0 0.0
    %1063 = vmatprep.subr.mxu0 0.0
    %1064 = vmatpush1.msra.mxu0 0.0
    %1065 = vmatprep.subr.mxu0 0.0
    %1066 = vmatpush1.msra.mxu0 0.0
    %1067 = vmatprep.subr.mxu0 0.0
    %1068 = vmatpush1.msra.mxu0 0.0
    %1069 = vmatprep.subr.mxu0 0.0
    %1070 = vmatpush1.msra.mxu0 0.0
    %1071 = vmatprep.subr.mxu0 0.0
    %1072 = vmatpush1.msra.mxu0 0.0
    %1073 = vmatprep.subr.mxu0 0.0
    %1074 = vmatpush1.msra.mxu0 0.0
    %1075 = vmatprep.subr.mxu0 0.0
    %1076 = vmatpush1.msra.mxu0 0.0
    %1077 = vmatprep.subr.mxu0 0.0
    %1078 = vmatpush1.msra.mxu0 0.0
    %1079 = vmatprep.subr.mxu0 0.0
    %1080 = vmatpush1.msra.mxu0 0.0
    %1081 = vmatprep.subr.mxu0 0.0
    %1082 = vmatpush1.msra.mxu0 0.0
    %1083 = vmatprep.subr.mxu0 0.0
    %1084 = vmatpush1.msra.mxu0 0.0
    %1085 = vmatprep.subr.mxu0 0.0
    %1086 = vmatpush1.msra.mxu0 0.0
    %1087 = vmatprep.subr.mxu0 0.0
    %1088 = vmatpush1.msra.mxu0 0.0
    %1089 = vmatprep.subr.mxu0 0.0
    %1090 = vmatpush1.msra.mxu0 0.0
    %1091 = vmatprep.subr.mxu0 0.0
    %1092 = vmatpush1.msra.mxu0 0.0
    %1093 = vmatprep.subr.mxu0 0.0
    %1094 = vmatpush1.msra.mxu0 0.0
    %1095 = vmatprep.subr.mxu0 0.0
    %1096 = vmatpush1.msra.mxu0 0.0
    %1097 = vmatprep.subr.mxu0 0.0
    %1098 = vmatpush1.msra.mxu0 0.0
    %1099 = vmatprep.subr.mxu0 0.0
    %1100 = vmatpush1.msra.mxu0 0.0
    %1101 = vmatprep.subr.mxu0 0.0
    %1102 = vmatpush1.msra.mxu0 0.0
    %1103 = vmatprep.subr.mxu0 0.0
    %1104 = vmatpush1.msra.mxu0 0.0
    %1105 = vmatprep.subr.mxu0 0.0
    %1106 = vmatpush1.msra.mxu0 0.0
    %1107 = vmatprep.subr.mxu0 0.0
    %1108 = vmatpush1.msra.mxu0 0.0
    %1109 = vmatprep.subr.mxu0 0.0
    %1110 = vmatpush1.msra.mxu0 0.0
    %1111 = vmatprep.subr.mxu0 0.0
    %1112 = vmatpush1.msra.mxu0 0.0
    %1113 = vmatprep.mubr.f32.mxu0 0.0
    %1114 = vmatmul.mubr.f32.gmra.mrb[0].mxu0 %v1047
    %v1115 = vpop.f32.mrb[0].mxu0
    %v1116 = vadd.f32 0.0, %v1115
    %v1117 = vpop.f32.mrb[0].mxu0
    %1118 = vdwg.mxu0
    %v1119 = vadd.f32 %v1043, %v1116
    %v1120 = vxor.u32 %v1119, 2147483648
    %v1121 = vmul.f32 %v1120, 1.442695
    %v1122 = vpow.pop %v1121
    %v1123 = vadd.f32 %v1122, 1.0
    %v1124 = vrcp.pop %v1123
    %v1125 = vmul.f32 1.0, %v1124
    %v1126 = vadd.f32 %v1116, %v495
    %1128 = vrot.lane.b32.xlu0 %v1126, 64
    %v1129 = vpop.permute.xlu0 %1128
    %v1131 = vmul.f32 %v1125, %v1129
    %1133 = vrot.lane.b32.xlu0 %v1131, 64
    %v1134 = vpop.permute.xlu0 %1133
    %v1136 = vadd.f32 %v1043, %v1134
    %v1137 = vtanh.pop %v1136
    %v1138 = vsub.f32 1.0, %v1125
    %1140 = vrot.lane.b32.xlu0 %v1137, 96
    %v1141 = vpop.permute.xlu0 %1140
    %v1143 = vmul.f32 %v1138, %v1141
    %v1144 = vmul.f32 %v1125, %v936
    %v1145 = vadd.f32 %v1143, %v1144
    %1147 = vrot.lane.b32.xlu0 %v1042, 96
    %v1148 = vpop.permute.xlu0 %1147
    %1150 = vst.msk [vmem:[#allocation4 + $0x6] sm:$0x3] %vm521, %v1148
    %1151 = vst.msk [vmem:[#allocation4 + $0x8] sm:$0x3] %vm523, %v1145
    %v1152 = vld [vmem:[#allocation2 + $0x8] sm:$0x3]
    %v1153 = vsel %vm302, %v1148, 0
    %1155 = vmatprep.subr.mxu0 0.0
    %1156 = vmatpush1.msra.mxu0 %v289
    %1157 = vmatprep.subr.mxu0 0.0
    %1158 = vmatpush1.msra.mxu0 %v290
    %1159 = vmatprep.subr.mxu0 0.0
    %1160 = vmatpush1.msra.mxu0 %v291
    %1161 = vmatprep.subr.mxu0 0.0
    %1162 = vmatpush1.msra.mxu0 %v292
    %1163 = vmatprep.subr.mxu0 0.0
    %1164 = vmatpush1.msra.mxu0 0.0
    %1165 = vmatprep.subr.mxu0 0.0
    %1166 = vmatpush1.msra.mxu0 0.0
    %1167 = vmatprep.subr.mxu0 0.0
    %1168 = vmatpush1.msra.mxu0 0.0
    %1169 = vmatprep.subr.mxu0 0.0
    %1170 = vmatpush1.msra.mxu0 0.0
    %1171 = vmatprep.subr.mxu0 0.0
    %1172 = vmatpush1.msra.mxu0 0.0
    %1173 = vmatprep.subr.mxu0 0.0
    %1174 = vmatpush1.msra.mxu0 0.0
    %1175 = vmatprep.subr.mxu0 0.0
    %1176 = vmatpush1.msra.mxu0 0.0
    %1177 = vmatprep.subr.mxu0 0.0
    %1178 = vmatpush1.msra.mxu0 0.0
    %1179 = vmatprep.subr.mxu0 0.0
    %1180 = vmatpush1.msra.mxu0 0.0
    %1181 = vmatprep.subr.mxu0 0.0
    %1182 = vmatpush1.msra.mxu0 0.0
    %1183 = vmatprep.subr.mxu0 0.0
    %1184 = vmatpush1.msra.mxu0 0.0
    %1185 = vmatprep.subr.mxu0 0.0
    %1186 = vmatpush1.msra.mxu0 0.0
    %1187 = vmatprep.subr.mxu0 0.0
    %1188 = vmatpush1.msra.mxu0 0.0
    %1189 = vmatprep.subr.mxu0 0.0
    %1190 = vmatpush1.msra.mxu0 0.0
    %1191 = vmatprep.subr.mxu0 0.0
    %1192 = vmatpush1.msra.mxu0 0.0
    %1193 = vmatprep.subr.mxu0 0.0
    %1194 = vmatpush1.msra.mxu0 0.0
    %1195 = vmatprep.subr.mxu0 0.0
    %1196 = vmatpush1.msra.mxu0 0.0
    %1197 = vmatprep.subr.mxu0 0.0
    %1198 = vmatpush1.msra.mxu0 0.0
    %1199 = vmatprep.subr.mxu0 0.0
    %1200 = vmatpush1.msra.mxu0 0.0
    %1201 = vmatprep.subr.mxu0 0.0
    %1202 = vmatpush1.msra.mxu0 0.0
    %1203 = vmatprep.subr.mxu0 0.0
    %1204 = vmatpush1.msra.mxu0 0.0
    %1205 = vmatprep.subr.mxu0 0.0
    %1206 = vmatpush1.msra.mxu0 0.0
    %1207 = vmatprep.subr.mxu0 0.0
    %1208 = vmatpush1.msra.mxu0 0.0
    %1209 = vmatprep.subr.mxu0 0.0
    %1210 = vmatpush1.msra.mxu0 0.0
    %1211 = vmatprep.subr.mxu0 0.0
    %1212 = vmatpush1.msra.mxu0 0.0
    %1213 = vmatprep.subr.mxu0 0.0
    %1214 = vmatpush1.msra.mxu0 0.0
    %1215 = vmatprep.subr.mxu0 0.0
    %1216 = vmatpush1.msra.mxu0 0.0
    %1217 = vmatprep.subr.mxu0 0.0
    %1218 = vmatpush1.msra.mxu0 0.0
    %1219 = vmatprep.mubr.f32.mxu0 0.0
    %1220 = vmatmul.mubr.f32.gmra.mrb[0].mxu0 %v1153
    %v1221 = vpop.f32.mrb[0].mxu0
    %v1222 = vadd.f32 0.0, %v1221
    %v1223 = vpop.f32.mrb[0].mxu0
    %1224 = vdwg.mxu0
    %v1225 = vadd.f32 %v1152, %v1222
    %v1226 = vxor.u32 %v1225, 2147483648
    %v1227 = vmul.f32 %v1226, 1.442695
    %v1228 = vpow.pop %v1227
    %v1229 = vadd.f32 %v1228, 1.0
    %v1230 = vrcp.pop %v1229
    %v1231 = vmul.f32 1.0, %v1230
    %v1232 = vadd.f32 %v1222, %v389
    %1234 = vrot.lane.b32.xlu0 %v1232, 64
    %v1235 = vpop.permute.xlu0 %1234
    %v1237 = vmul.f32 %v1231, %v1235
    %1239 = vrot.lane.b32.xlu0 %v1237, 64
    %v1240 = vpop.permute.xlu0 %1239
    %v1242 = vadd.f32 %v1152, %v1240
    %v1243 = vtanh.pop %v1242
    %v1244 = vsub.f32 1.0, %v1231
    %1246 = vrot.lane.b32.xlu0 %v1243, 96
    %v1247 = vpop.permute.xlu0 %1246
    %v1249 = vmul.f32 %v1244, %v1247
    %v1250 = vmul.f32 %v1231, %v1042
    %v1251 = vadd.f32 %v1249, %v1250
    %v1252 = vld [vmem:[#allocation3 + $0x6] sm:$0x3]
    %1254 = vrot.lane.b32.xlu0 %v1145, 96
    %v1255 = vpop.permute.xlu0 %1254
    %v1256 = vsel %vm302, %v1255, 0
    %1258 = vmatprep.subr.mxu0 0.0
    %1259 = vmatpush1.msra.mxu0 %v294
    %1260 = vmatprep.subr.mxu0 0.0
    %1261 = vmatpush1.msra.mxu0 %v295
    %1262 = vmatprep.subr.mxu0 0.0
    %1263 = vmatpush1.msra.mxu0 %v296
    %1264 = vmatprep.subr.mxu0 0.0
    %1265 = vmatpush1.msra.mxu0 %v297
    %1266 = vmatprep.subr.mxu0 0.0
    %1267 = vmatpush1.msra.mxu0 0.0
    %1268 = vmatprep.subr.mxu0 0.0
    %1269 = vmatpush1.msra.mxu0 0.0
    %1270 = vmatprep.subr.mxu0 0.0
    %1271 = vmatpush1.msra.mxu0 0.0
    %1272 = vmatprep.subr.mxu0 0.0
    %1273 = vmatpush1.msra.mxu0 0.0
    %1274 = vmatprep.subr.mxu0 0.0
    %1275 = vmatpush1.msra.mxu0 0.0
    %1276 = vmatprep.subr.mxu0 0.0
    %1277 = vmatpush1.msra.mxu0 0.0
    %1278 = vmatprep.subr.mxu0 0.0
    %1279 = vmatpush1.msra.mxu0 0.0
    %1280 = vmatprep.subr.mxu0 0.0
    %1281 = vmatpush1.msra.mxu0 0.0
    %1282 = vmatprep.subr.mxu0 0.0
    %1283 = vmatpush1.msra.mxu0 0.0
    %1284 = vmatprep.subr.mxu0 0.0
    %1285 = vmatpush1.msra.mxu0 0.0
    %1286 = vmatprep.subr.mxu0 0.0
    %1287 = vmatpush1.msra.mxu0 0.0
    %1288 = vmatprep.subr.mxu0 0.0
    %1289 = vmatpush1.msra.mxu0 0.0
    %1290 = vmatprep.subr.mxu0 0.0
    %1291 = vmatpush1.msra.mxu0 0.0
    %1292 = vmatprep.subr.mxu0 0.0
    %1293 = vmatpush1.msra.mxu0 0.0
    %1294 = vmatprep.subr.mxu0 0.0
    %1295 = vmatpush1.msra.mxu0 0.0
    %1296 = vmatprep.subr.mxu0 0.0
    %1297 = vmatpush1.msra.mxu0 0.0
    %1298 = vmatprep.subr.mxu0 0.0
    %1299 = vmatpush1.msra.mxu0 0.0
    %1300 = vmatprep.subr.mxu0 0.0
    %1301 = vmatpush1.msra.mxu0 0.0
    %1302 = vmatprep.subr.mxu0 0.0
    %1303 = vmatpush1.msra.mxu0 0.0
    %1304 = vmatprep.subr.mxu0 0.0
    %1305 = vmatpush1.msra.mxu0 0.0
    %1306 = vmatprep.subr.mxu0 0.0
    %1307 = vmatpush1.msra.mxu0 0.0
    %1308 = vmatprep.subr.mxu0 0.0
    %1309 = vmatpush1.msra.mxu0 0.0
    %1310 = vmatprep.subr.mxu0 0.0
    %1311 = vmatpush1.msra.mxu0 0.0
    %1312 = vmatprep.subr.mxu0 0.0
    %1313 = vmatpush1.msra.mxu0 0.0
    %1314 = vmatprep.subr.mxu0 0.0
    %1315 = vmatpush1.msra.mxu0 0.0
    %1316 = vmatprep.subr.mxu0 0.0
    %1317 = vmatpush1.msra.mxu0 0.0
    %1318 = vmatprep.subr.mxu0 0.0
    %1319 = vmatpush1.msra.mxu0 0.0
    %1320 = vmatprep.subr.mxu0 0.0
    %1321 = vmatpush1.msra.mxu0 0.0
    %1322 = vmatprep.mubr.f32.mxu0 0.0
    %1323 = vmatmul.mubr.f32.gmra.mrb[0].mxu0 %v1256
    %v1324 = vpop.f32.mrb[0].mxu0
    %v1325 = vadd.f32 0.0, %v1324
    %v1326 = vpop.f32.mrb[0].mxu0
    %1327 = vdwg.mxu0
    %v1328 = vadd.f32 %v1252, %v1325
    %v1329 = vxor.u32 %v1328, 2147483648
    %v1330 = vmul.f32 %v1329, 1.442695
    %v1331 = vpow.pop %v1330
    %v1332 = vadd.f32 %v1331, 1.0
    %v1333 = vrcp.pop %v1332
    %v1334 = vmul.f32 1.0, %v1333
    %v1335 = vadd.f32 %v1325, %v495
    %1337 = vrot.lane.b32.xlu0 %v1335, 64
    %v1338 = vpop.permute.xlu0 %1337
    %v1340 = vmul.f32 %v1334, %v1338
    %1342 = vrot.lane.b32.xlu0 %v1340, 64
    %v1343 = vpop.permute.xlu0 %1342
    %v1345 = vadd.f32 %v1252, %v1343
    %v1346 = vtanh.pop %v1345
    %v1347 = vsub.f32 1.0, %v1334
    %1349 = vrot.lane.b32.xlu0 %v1346, 96
    %v1350 = vpop.permute.xlu0 %1349
    %v1352 = vmul.f32 %v1347, %v1350
    %v1353 = vmul.f32 %v1334, %v1145
    %v1354 = vadd.f32 %v1352, %v1353
    %1356 = vrot.lane.b32.xlu0 %v1251, 96
    %v1357 = vpop.permute.xlu0 %1356
    %1359 = vst.msk [vmem:[#allocation4 + $0x8] sm:$0x3] %vm521, %v1357
    %1360 = vst.msk [vmem:[#allocation4 + $0x6] sm:$0x3] %vm523, %v1354
    %v1361 = vld [vmem:[#allocation2 + $0xa] sm:$0x3]
    %v1362 = vsel %vm302, %v1357, 0
    %1364 = vmatprep.subr.mxu0 0.0
    %1365 = vmatpush1.msra.mxu0 %v289
    %1366 = vmatprep.subr.mxu0 0.0
    %1367 = vmatpush1.msra.mxu0 %v290
    %1368 = vmatprep.subr.mxu0 0.0
    %1369 = vmatpush1.msra.mxu0 %v291
    %1370 = vmatprep.subr.mxu0 0.0
    %1371 = vmatpush1.msra.mxu0 %v292
    %1372 = vmatprep.subr.mxu0 0.0
    %1373 = vmatpush1.msra.mxu0 0.0
    %1374 = vmatprep.subr.mxu0 0.0
    %1375 = vmatpush1.msra.mxu0 0.0
    %1376 = vmatprep.subr.mxu0 0.0
    %1377 = vmatpush1.msra.mxu0 0.0
    %1378 = vmatprep.subr.mxu0 0.0
    %1379 = vmatpush1.msra.mxu0 0.0
    %1380 = vmatprep.subr.mxu0 0.0
    %1381 = vmatpush1.msra.mxu0 0.0
    %1382 = vmatprep.subr.mxu0 0.0
    %1383 = vmatpush1.msra.mxu0 0.0
    %1384 = vmatprep.subr.mxu0 0.0
    %1385 = vmatpush1.msra.mxu0 0.0
    %1386 = vmatprep.subr.mxu0 0.0
    %1387 = vmatpush1.msra.mxu0 0.0
    %1388 = vmatprep.subr.mxu0 0.0
    %1389 = vmatpush1.msra.mxu0 0.0
    %1390 = vmatprep.subr.mxu0 0.0
    %1391 = vmatpush1.msra.mxu0 0.0
    %1392 = vmatprep.subr.mxu0 0.0
    %1393 = vmatpush1.msra.mxu0 0.0
    %1394 = vmatprep.subr.mxu0 0.0
    %1395 = vmatpush1.msra.mxu0 0.0
    %1396 = vmatprep.subr.mxu0 0.0
    %1397 = vmatpush1.msra.mxu0 0.0
    %1398 = vmatprep.subr.mxu0 0.0
    %1399 = vmatpush1.msra.mxu0 0.0
    %1400 = vmatprep.subr.mxu0 0.0
    %1401 = vmatpush1.msra.mxu0 0.0
    %1402 = vmatprep.subr.mxu0 0.0
    %1403 = vmatpush1.msra.mxu0 0.0
    %1404 = vmatprep.subr.mxu0 0.0
    %1405 = vmatpush1.msra.mxu0 0.0
    %1406 = vmatprep.subr.mxu0 0.0
    %1407 = vmatpush1.msra.mxu0 0.0
    %1408 = vmatprep.subr.mxu0 0.0
    %1409 = vmatpush1.msra.mxu0 0.0
    %1410 = vmatprep.subr.mxu0 0.0
    %1411 = vmatpush1.msra.mxu0 0.0
    %1412 = vmatprep.subr.mxu0 0.0
    %1413 = vmatpush1.msra.mxu0 0.0
    %1414 = vmatprep.subr.mxu0 0.0
    %1415 = vmatpush1.msra.mxu0 0.0
    %1416 = vmatprep.subr.mxu0 0.0
    %1417 = vmatpush1.msra.mxu0 0.0
    %1418 = vmatprep.subr.mxu0 0.0
    %1419 = vmatpush1.msra.mxu0 0.0
    %1420 = vmatprep.subr.mxu0 0.0
    %1421 = vmatpush1.msra.mxu0 0.0
    %1422 = vmatprep.subr.mxu0 0.0
    %1423 = vmatpush1.msra.mxu0 0.0
    %1424 = vmatprep.subr.mxu0 0.0
    %1425 = vmatpush1.msra.mxu0 0.0
    %1426 = vmatprep.subr.mxu0 0.0
    %1427 = vmatpush1.msra.mxu0 0.0
    %1428 = vmatprep.mubr.f32.mxu0 0.0
    %1429 = vmatmul.mubr.f32.gmra.mrb[0].mxu0 %v1362
    %v1430 = vpop.f32.mrb[0].mxu0
    %v1431 = vadd.f32 0.0, %v1430
    %v1432 = vpop.f32.mrb[0].mxu0
    %1433 = vdwg.mxu0
    %v1434 = vadd.f32 %v1361, %v1431
    %v1435 = vxor.u32 %v1434, 2147483648
    %v1436 = vmul.f32 %v1435, 1.442695
    %v1437 = vpow.pop %v1436
    %v1438 = vadd.f32 %v1437, 1.0
    %v1439 = vrcp.pop %v1438
    %v1440 = vmul.f32 1.0, %v1439
    %v1441 = vadd.f32 %v1431, %v389
    %1443 = vrot.lane.b32.xlu0 %v1441, 64
    %v1444 = vpop.permute.xlu0 %1443
    %v1446 = vmul.f32 %v1440, %v1444
    %1448 = vrot.lane.b32.xlu0 %v1446, 64
    %v1449 = vpop.permute.xlu0 %1448
    %v1451 = vadd.f32 %v1361, %v1449
    %v1452 = vtanh.pop %v1451
    %v1453 = vsub.f32 1.0, %v1440
    %1455 = vrot.lane.b32.xlu0 %v1452, 96
    %v1456 = vpop.permute.xlu0 %1455
    %v1458 = vmul.f32 %v1453, %v1456
    %v1459 = vmul.f32 %v1440, %v1251
    %v1460 = vadd.f32 %v1458, %v1459
    %v1461 = vld [vmem:[#allocation3 + $0x4] sm:$0x3]
    %1463 = vrot.lane.b32.xlu0 %v1354, 96
    %v1464 = vpop.permute.xlu0 %1463
    %v1465 = vsel %vm302, %v1464, 0
    %1467 = vmatprep.subr.mxu0 0.0
    %1468 = vmatpush1.msra.mxu0 %v294
    %1469 = vmatprep.subr.mxu0 0.0
    %1470 = vmatpush1.msra.mxu0 %v295
    %1471 = vmatprep.subr.mxu0 0.0
    %1472 = vmatpush1.msra.mxu0 %v296
    %1473 = vmatprep.subr.mxu0 0.0
    %1474 = vmatpush1.msra.mxu0 %v297
    %1475 = vmatprep.subr.mxu0 0.0
    %1476 = vmatpush1.msra.mxu0 0.0
    %1477 = vmatprep.subr.mxu0 0.0
    %1478 = vmatpush1.msra.mxu0 0.0
    %1479 = vmatprep.subr.mxu0 0.0
    %1480 = vmatpush1.msra.mxu0 0.0
    %1481 = vmatprep.subr.mxu0 0.0
    %1482 = vmatpush1.msra.mxu0 0.0
    %1483 = vmatprep.subr.mxu0 0.0
    %1484 = vmatpush1.msra.mxu0 0.0
    %1485 = vmatprep.subr.mxu0 0.0
    %1486 = vmatpush1.msra.mxu0 0.0
    %1487 = vmatprep.subr.mxu0 0.0
    %1488 = vmatpush1.msra.mxu0 0.0
    %1489 = vmatprep.subr.mxu0 0.0
    %1490 = vmatpush1.msra.mxu0 0.0
    %1491 = vmatprep.subr.mxu0 0.0
    %1492 = vmatpush1.msra.mxu0 0.0
    %1493 = vmatprep.subr.mxu0 0.0
    %1494 = vmatpush1.msra.mxu0 0.0
    %1495 = vmatprep.subr.mxu0 0.0
    %1496 = vmatpush1.msra.mxu0 0.0
    %1497 = vmatprep.subr.mxu0 0.0
    %1498 = vmatpush1.msra.mxu0 0.0
    %1499 = vmatprep.subr.mxu0 0.0
    %1500 = vmatpush1.msra.mxu0 0.0
    %1501 = vmatprep.subr.mxu0 0.0
    %1502 = vmatpush1.msra.mxu0 0.0
    %1503 = vmatprep.subr.mxu0 0.0
    %1504 = vmatpush1.msra.mxu0 0.0
    %1505 = vmatprep.subr.mxu0 0.0
    %1506 = vmatpush1.msra.mxu0 0.0
    %1507 = vmatprep.subr.mxu0 0.0
    %1508 = vmatpush1.msra.mxu0 0.0
    %1509 = vmatprep.subr.mxu0 0.0
    %1510 = vmatpush1.msra.mxu0 0.0
    %1511 = vmatprep.subr.mxu0 0.0
    %1512 = vmatpush1.msra.mxu0 0.0
    %1513 = vmatprep.subr.mxu0 0.0
    %1514 = vmatpush1.msra.mxu0 0.0
    %1515 = vmatprep.subr.mxu0 0.0
    %1516 = vmatpush1.msra.mxu0 0.0
    %1517 = vmatprep.subr.mxu0 0.0
    %1518 = vmatpush1.msra.mxu0 0.0
    %1519 = vmatprep.subr.mxu0 0.0
    %1520 = vmatpush1.msra.mxu0 0.0
    %1521 = vmatprep.subr.mxu0 0.0
    %1522 = vmatpush1.msra.mxu0 0.0
    %1523 = vmatprep.subr.mxu0 0.0
    %1524 = vmatpush1.msra.mxu0 0.0
    %1525 = vmatprep.subr.mxu0 0.0
    %1526 = vmatpush1.msra.mxu0 0.0
    %1527 = vmatprep.subr.mxu0 0.0
    %1528 = vmatpush1.msra.mxu0 0.0
    %1529 = vmatprep.subr.mxu0 0.0
    %1530 = vmatpush1.msra.mxu0 0.0
    %1531 = vmatprep.mubr.f32.mxu0 0.0
    %1532 = vmatmul.mubr.f32.gmra.mrb[0].mxu0 %v1465
    %v1533 = vpop.f32.mrb[0].mxu0
    %v1534 = vadd.f32 0.0, %v1533
    %v1535 = vpop.f32.mrb[0].mxu0
    %1536 = vdwg.mxu0
    %v1537 = vadd.f32 %v1461, %v1534
    %v1538 = vxor.u32 %v1537, 2147483648
    %v1539 = vmul.f32 %v1538, 1.442695
    %v1540 = vpow.pop %v1539
    %v1541 = vadd.f32 %v1540, 1.0
    %v1542 = vrcp.pop %v1541
    %v1543 = vmul.f32 1.0, %v1542
    %v1544 = vadd.f32 %v1534, %v495
    %1546 = vrot.lane.b32.xlu0 %v1544, 64
    %v1547 = vpop.permute.xlu0 %1546
    %v1549 = vmul.f32 %v1543, %v1547
    %1551 = vrot.lane.b32.xlu0 %v1549, 64
    %v1552 = vpop.permute.xlu0 %1551
    %v1554 = vadd.f32 %v1461, %v1552
    %v1555 = vtanh.pop %v1554
    %v1556 = vsub.f32 1.0, %v1543
    %1558 = vrot.lane.b32.xlu0 %v1555, 96
    %v1559 = vpop.permute.xlu0 %1558
    %v1561 = vmul.f32 %v1556, %v1559
    %v1562 = vmul.f32 %v1543, %v1354
    %v1563 = vadd.f32 %v1561, %v1562
    %1565 = vrot.lane.b32.xlu0 %v1460, 96
    %v1566 = vpop.permute.xlu0 %1565
    %1568 = vst.msk [vmem:[#allocation4 + $0xa] sm:$0x3] %vm521, %v1566
    %1569 = vst.msk [vmem:[#allocation4 + $0x4] sm:$0x3] %vm523, %v1563
    %v1570 = vld [vmem:[#allocation2 + $0xc] sm:$0x3]
    %v1571 = vsel %vm302, %v1566, 0
    %1573 = vmatprep.subr.mxu0 0.0
    %1574 = vmatpush1.msra.mxu0 %v289
    %1575 = vmatprep.subr.mxu0 0.0
    %1576 = vmatpush1.msra.mxu0 %v290
    %1577 = vmatprep.subr.mxu0 0.0
    %1578 = vmatpush1.msra.mxu0 %v291
    %1579 = vmatprep.subr.mxu0 0.0
    %1580 = vmatpush1.msra.mxu0 %v292
    %1581 = vmatprep.subr.mxu0 0.0
    %1582 = vmatpush1.msra.mxu0 0.0
    %1583 = vmatprep.subr.mxu0 0.0
    %1584 = vmatpush1.msra.mxu0 0.0
    %1585 = vmatprep.subr.mxu0 0.0
    %1586 = vmatpush1.msra.mxu0 0.0
    %1587 = vmatprep.subr.mxu0 0.0
    %1588 = vmatpush1.msra.mxu0 0.0
    %1589 = vmatprep.subr.mxu0 0.0
    %1590 = vmatpush1.msra.mxu0 0.0
    %1591 = vmatprep.subr.mxu0 0.0
    %1592 = vmatpush1.msra.mxu0 0.0
    %1593 = vmatprep.subr.mxu0 0.0
    %1594 = vmatpush1.msra.mxu0 0.0
    %1595 = vmatprep.subr.mxu0 0.0
    %1596 = vmatpush1.msra.mxu0 0.0
    %1597 = vmatprep.subr.mxu0 0.0
    %1598 = vmatpush1.msra.mxu0 0.0
    %1599 = vmatprep.subr.mxu0 0.0
    %1600 = vmatpush1.msra.mxu0 0.0
    %1601 = vmatprep.subr.mxu0 0.0
    %1602 = vmatpush1.msra.mxu0 0.0
    %1603 = vmatprep.subr.mxu0 0.0
    %1604 = vmatpush1.msra.mxu0 0.0
    %1605 = vmatprep.subr.mxu0 0.0
    %1606 = vmatpush1.msra.mxu0 0.0
    %1607 = vmatprep.subr.mxu0 0.0
    %1608 = vmatpush1.msra.mxu0 0.0
    %1609 = vmatprep.subr.mxu0 0.0
    %1610 = vmatpush1.msra.mxu0 0.0
    %1611 = vmatprep.subr.mxu0 0.0
    %1612 = vmatpush1.msra.mxu0 0.0
    %1613 = vmatprep.subr.mxu0 0.0
    %1614 = vmatpush1.msra.mxu0 0.0
    %1615 = vmatprep.subr.mxu0 0.0
    %1616 = vmatpush1.msra.mxu0 0.0
    %1617 = vmatprep.subr.mxu0 0.0
    %1618 = vmatpush1.msra.mxu0 0.0
    %1619 = vmatprep.subr.mxu0 0.0
    %1620 = vmatpush1.msra.mxu0 0.0
    %1621 = vmatprep.subr.mxu0 0.0
    %1622 = vmatpush1.msra.mxu0 0.0
    %1623 = vmatprep.subr.mxu0 0.0
    %1624 = vmatpush1.msra.mxu0 0.0
    %1625 = vmatprep.subr.mxu0 0.0
    %1626 = vmatpush1.msra.mxu0 0.0
    %1627 = vmatprep.subr.mxu0 0.0
    %1628 = vmatpush1.msra.mxu0 0.0
    %1629 = vmatprep.subr.mxu0 0.0
    %1630 = vmatpush1.msra.mxu0 0.0
    %1631 = vmatprep.subr.mxu0 0.0
    %1632 = vmatpush1.msra.mxu0 0.0
    %1633 = vmatprep.subr.mxu0 0.0
    %1634 = vmatpush1.msra.mxu0 0.0
    %1635 = vmatprep.subr.mxu0 0.0
    %1636 = vmatpush1.msra.mxu0 0.0
    %1637 = vmatprep.mubr.f32.mxu0 0.0
    %1638 = vmatmul.mubr.f32.gmra.mrb[0].mxu0 %v1571
    %v1639 = vpop.f32.mrb[0].mxu0
    %v1640 = vadd.f32 0.0, %v1639
    %v1641 = vpop.f32.mrb[0].mxu0
    %1642 = vdwg.mxu0
    %v1643 = vadd.f32 %v1570, %v1640
    %v1644 = vxor.u32 %v1643, 2147483648
    %v1645 = vmul.f32 %v1644, 1.442695
    %v1646 = vpow.pop %v1645
    %v1647 = vadd.f32 %v1646, 1.0
    %v1648 = vrcp.pop %v1647
    %v1649 = vmul.f32 1.0, %v1648
    %v1650 = vadd.f32 %v1640, %v389
    %1652 = vrot.lane.b32.xlu0 %v1650, 64
    %v1653 = vpop.permute.xlu0 %1652
    %v1655 = vmul.f32 %v1649, %v1653
    %1657 = vrot.lane.b32.xlu0 %v1655, 64
    %v1658 = vpop.permute.xlu0 %1657
    %v1660 = vadd.f32 %v1570, %v1658
    %v1661 = vtanh.pop %v1660
    %v1662 = vsub.f32 1.0, %v1649
    %1664 = vrot.lane.b32.xlu0 %v1661, 96
    %v1665 = vpop.permute.xlu0 %1664
    %v1667 = vmul.f32 %v1662, %v1665
    %v1668 = vmul.f32 %v1649, %v1460
    %v1669 = vadd.f32 %v1667, %v1668
    %v1670 = vld [vmem:[#allocation3 + $0x2] sm:$0x3]
    %1672 = vrot.lane.b32.xlu0 %v1563, 96
    %v1673 = vpop.permute.xlu0 %1672
    %v1674 = vsel %vm302, %v1673, 0
    %1676 = vmatprep.subr.mxu0 0.0
    %1677 = vmatpush1.msra.mxu0 %v294
    %1678 = vmatprep.subr.mxu0 0.0
    %1679 = vmatpush1.msra.mxu0 %v295
    %1680 = vmatprep.subr.mxu0 0.0
    %1681 = vmatpush1.msra.mxu0 %v296
    %1682 = vmatprep.subr.mxu0 0.0
    %1683 = vmatpush1.msra.mxu0 %v297
    %1684 = vmatprep.subr.mxu0 0.0
    %1685 = vmatpush1.msra.mxu0 0.0
    %1686 = vmatprep.subr.mxu0 0.0
    %1687 = vmatpush1.msra.mxu0 0.0
    %1688 = vmatprep.subr.mxu0 0.0
    %1689 = vmatpush1.msra.mxu0 0.0
    %1690 = vmatprep.subr.mxu0 0.0
    %1691 = vmatpush1.msra.mxu0 0.0
    %1692 = vmatprep.subr.mxu0 0.0
    %1693 = vmatpush1.msra.mxu0 0.0
    %1694 = vmatprep.subr.mxu0 0.0
    %1695 = vmatpush1.msra.mxu0 0.0
    %1696 = vmatprep.subr.mxu0 0.0
    %1697 = vmatpush1.msra.mxu0 0.0
    %1698 = vmatprep.subr.mxu0 0.0
    %1699 = vmatpush1.msra.mxu0 0.0
    %1700 = vmatprep.subr.mxu0 0.0
    %1701 = vmatpush1.msra.mxu0 0.0
    %1702 = vmatprep.subr.mxu0 0.0
    %1703 = vmatpush1.msra.mxu0 0.0
    %1704 = vmatprep.subr.mxu0 0.0
    %1705 = vmatpush1.msra.mxu0 0.0
    %1706 = vmatprep.subr.mxu0 0.0
    %1707 = vmatpush1.msra.mxu0 0.0
    %1708 = vmatprep.subr.mxu0 0.0
    %1709 = vmatpush1.msra.mxu0 0.0
    %1710 = vmatprep.subr.mxu0 0.0
    %1711 = vmatpush1.msra.mxu0 0.0
    %1712 = vmatprep.subr.mxu0 0.0
    %1713 = vmatpush1.msra.mxu0 0.0
    %1714 = vmatprep.subr.mxu0 0.0
    %1715 = vmatpush1.msra.mxu0 0.0
    %1716 = vmatprep.subr.mxu0 0.0
    %1717 = vmatpush1.msra.mxu0 0.0
    %1718 = vmatprep.subr.mxu0 0.0
    %1719 = vmatpush1.msra.mxu0 0.0
    %1720 = vmatprep.subr.mxu0 0.0
    %1721 = vmatpush1.msra.mxu0 0.0
    %1722 = vmatprep.subr.mxu0 0.0
    %1723 = vmatpush1.msra.mxu0 0.0
    %1724 = vmatprep.subr.mxu0 0.0
    %1725 = vmatpush1.msra.mxu0 0.0
    %1726 = vmatprep.subr.mxu0 0.0
    %1727 = vmatpush1.msra.mxu0 0.0
    %1728 = vmatprep.subr.mxu0 0.0
    %1729 = vmatpush1.msra.mxu0 0.0
    %1730 = vmatprep.subr.mxu0 0.0
    %1731 = vmatpush1.msra.mxu0 0.0
    %1732 = vmatprep.subr.mxu0 0.0
    %1733 = vmatpush1.msra.mxu0 0.0
    %1734 = vmatprep.subr.mxu0 0.0
    %1735 = vmatpush1.msra.mxu0 0.0
    %1736 = vmatprep.subr.mxu0 0.0
    %1737 = vmatpush1.msra.mxu0 0.0
    %1738 = vmatprep.subr.mxu0 0.0
    %1739 = vmatpush1.msra.mxu0 0.0
    %1740 = vmatprep.mubr.f32.mxu0 0.0
    %1741 = vmatmul.mubr.f32.gmra.mrb[0].mxu0 %v1674
    %v1742 = vpop.f32.mrb[0].mxu0
    %v1743 = vadd.f32 0.0, %v1742
    %v1744 = vpop.f32.mrb[0].mxu0
    %1745 = vdwg.mxu0
    %v1746 = vadd.f32 %v1670, %v1743
    %v1747 = vxor.u32 %v1746, 2147483648
    %v1748 = vmul.f32 %v1747, 1.442695
    %v1749 = vpow.pop %v1748
    %v1750 = vadd.f32 %v1749, 1.0
    %v1751 = vrcp.pop %v1750
    %v1752 = vmul.f32 1.0, %v1751
    %v1753 = vadd.f32 %v1743, %v495
    %1755 = vrot.lane.b32.xlu0 %v1753, 64
    %v1756 = vpop.permute.xlu0 %1755
    %v1758 = vmul.f32 %v1752, %v1756
    %1760 = vrot.lane.b32.xlu0 %v1758, 64
    %v1761 = vpop.permute.xlu0 %1760
    %v1763 = vadd.f32 %v1670, %v1761
    %v1764 = vtanh.pop %v1763
    %v1765 = vsub.f32 1.0, %v1752
    %1767 = vrot.lane.b32.xlu0 %v1764, 96
    %v1768 = vpop.permute.xlu0 %1767
    %v1770 = vmul.f32 %v1765, %v1768
    %v1771 = vmul.f32 %v1752, %v1563
    %v1772 = vadd.f32 %v1770, %v1771
    %1774 = vrot.lane.b32.xlu0 %v1669, 96
    %v1775 = vpop.permute.xlu0 %1774
    %1777 = vst.msk [vmem:[#allocation4 + $0xc] sm:$0x3] %vm521, %v1775
    %1778 = vst.msk [vmem:[#allocation4 + $0x2] sm:$0x3] %vm523, %v1772
    %v1779 = vld [vmem:[#allocation2 + $0xe] sm:$0x3]
    %v1780 = vsel %vm302, %v1775, 0
    %1782 = vmatprep.subr.mxu0 0.0
    %1783 = vmatpush1.msra.mxu0 %v289
    %1784 = vmatprep.subr.mxu0 0.0
    %1785 = vmatpush1.msra.mxu0 %v290
    %1786 = vmatprep.subr.mxu0 0.0
    %1787 = vmatpush1.msra.mxu0 %v291
    %1788 = vmatprep.subr.mxu0 0.0
    %1789 = vmatpush1.msra.mxu0 %v292
    %1790 = vmatprep.subr.mxu0 0.0
    %1791 = vmatpush1.msra.mxu0 0.0
    %1792 = vmatprep.subr.mxu0 0.0
    %1793 = vmatpush1.msra.mxu0 0.0
    %1794 = vmatprep.subr.mxu0 0.0
    %1795 = vmatpush1.msra.mxu0 0.0
    %1796 = vmatprep.subr.mxu0 0.0
    %1797 = vmatpush1.msra.mxu0 0.0
    %1798 = vmatprep.subr.mxu0 0.0
    %1799 = vmatpush1.msra.mxu0 0.0
    %1800 = vmatprep.subr.mxu0 0.0
    %1801 = vmatpush1.msra.mxu0 0.0
    %1802 = vmatprep.subr.mxu0 0.0
    %1803 = vmatpush1.msra.mxu0 0.0
    %1804 = vmatprep.subr.mxu0 0.0
    %1805 = vmatpush1.msra.mxu0 0.0
    %1806 = vmatprep.subr.mxu0 0.0
    %1807 = vmatpush1.msra.mxu0 0.0
    %1808 = vmatprep.subr.mxu0 0.0
    %1809 = vmatpush1.msra.mxu0 0.0
    %1810 = vmatprep.subr.mxu0 0.0
    %1811 = vmatpush1.msra.mxu0 0.0
    %1812 = vmatprep.subr.mxu0 0.0
    %1813 = vmatpush1.msra.mxu0 0.0
    %1814 = vmatprep.subr.mxu0 0.0
    %1815 = vmatpush1.msra.mxu0 0.0
    %1816 = vmatprep.subr.mxu0 0.0
    %1817 = vmatpush1.msra.mxu0 0.0
    %1818 = vmatprep.subr.mxu0 0.0
    %1819 = vmatpush1.msra.mxu0 0.0
    %1820 = vmatprep.subr.mxu0 0.0
    %1821 = vmatpush1.msra.mxu0 0.0
    %1822 = vmatprep.subr.mxu0 0.0
    %1823 = vmatpush1.msra.mxu0 0.0
    %1824 = vmatprep.subr.mxu0 0.0
    %1825 = vmatpush1.msra.mxu0 0.0
    %1826 = vmatprep.subr.mxu0 0.0
    %1827 = vmatpush1.msra.mxu0 0.0
    %1828 = vmatprep.subr.mxu0 0.0
    %1829 = vmatpush1.msra.mxu0 0.0
    %1830 = vmatprep.subr.mxu0 0.0
    %1831 = vmatpush1.msra.mxu0 0.0
    %1832 = vmatprep.subr.mxu0 0.0
    %1833 = vmatpush1.msra.mxu0 0.0
    %1834 = vmatprep.subr.mxu0 0.0
    %1835 = vmatpush1.msra.mxu0 0.0
    %1836 = vmatprep.subr.mxu0 0.0
    %1837 = vmatpush1.msra.mxu0 0.0
    %1838 = vmatprep.subr.mxu0 0.0
    %1839 = vmatpush1.msra.mxu0 0.0
    %1840 = vmatprep.subr.mxu0 0.0
    %1841 = vmatpush1.msra.mxu0 0.0
    %1842 = vmatprep.subr.mxu0 0.0
    %1843 = vmatpush1.msra.mxu0 0.0
    %1844 = vmatprep.subr.mxu0 0.0
    %1845 = vmatpush1.msra.mxu0 0.0
    %1846 = vmatprep.mubr.f32.mxu0 0.0
    %1847 = vmatmul.mubr.f32.gmra.mrb[0].mxu0 %v1780
    %v1848 = vpop.f32.mrb[0].mxu0
    %v1849 = vadd.f32 0.0, %v1848
    %v1850 = vpop.f32.mrb[0].mxu0
    %1851 = vdwg.mxu0
    %v1852 = vadd.f32 %v1779, %v1849
    %v1853 = vxor.u32 %v1852, 2147483648
    %v1854 = vmul.f32 %v1853, 1.442695
    %v1855 = vpow.pop %v1854
    %v1856 = vadd.f32 %v1855, 1.0
    %v1857 = vrcp.pop %v1856
    %v1858 = vmul.f32 1.0, %v1857
    %v1859 = vadd.f32 %v1849, %v389
    %1861 = vrot.lane.b32.xlu0 %v1859, 64
    %v1862 = vpop.permute.xlu0 %1861
    %v1864 = vmul.f32 %v1858, %v1862
    %1866 = vrot.lane.b32.xlu0 %v1864, 64
    %v1867 = vpop.permute.xlu0 %1866
    %v1869 = vadd.f32 %v1779, %v1867
    %v1870 = vtanh.pop %v1869
    %v1871 = vsub.f32 1.0, %v1858
    %1873 = vrot.lane.b32.xlu0 %v1870, 96
    %v1874 = vpop.permute.xlu0 %1873
    %v1876 = vmul.f32 %v1871, %v1874
    %v1877 = vmul.f32 %v1858, %v1669
    %v1878 = vadd.f32 %v1876, %v1877
    %v1879 = vld [vmem:[#allocation3] sm:$0x3]
    %1881 = vrot.lane.b32.xlu0 %v1772, 96
    %v1882 = vpop.permute.xlu0 %1881
    %v1883 = vsel %vm302, %v1882, 0
    %1885 = vmatprep.subr.mxu0 0.0
    %1886 = vmatpush1.msra.mxu0 %v294
    %1887 = vmatprep.subr.mxu0 0.0
    %1888 = vmatpush1.msra.mxu0 %v295
    %1889 = vmatprep.subr.mxu0 0.0
    %1890 = vmatpush1.msra.mxu0 %v296
    %1891 = vmatprep.subr.mxu0 0.0
    %1892 = vmatpush1.msra.mxu0 %v297
    %1893 = vmatprep.subr.mxu0 0.0
    %1894 = vmatpush1.msra.mxu0 0.0
    %1895 = vmatprep.subr.mxu0 0.0
    %1896 = vmatpush1.msra.mxu0 0.0
    %1897 = vmatprep.subr.mxu0 0.0
    %1898 = vmatpush1.msra.mxu0 0.0
    %1899 = vmatprep.subr.mxu0 0.0
    %1900 = vmatpush1.msra.mxu0 0.0
    %1901 = vmatprep.subr.mxu0 0.0
    %1902 = vmatpush1.msra.mxu0 0.0
    %1903 = vmatprep.subr.mxu0 0.0
    %1904 = vmatpush1.msra.mxu0 0.0
    %1905 = vmatprep.subr.mxu0 0.0
    %1906 = vmatpush1.msra.mxu0 0.0
    %1907 = vmatprep.subr.mxu0 0.0
    %1908 = vmatpush1.msra.mxu0 0.0
    %1909 = vmatprep.subr.mxu0 0.0
    %1910 = vmatpush1.msra.mxu0 0.0
    %1911 = vmatprep.subr.mxu0 0.0
    %1912 = vmatpush1.msra.mxu0 0.0
    %1913 = vmatprep.subr.mxu0 0.0
    %1914 = vmatpush1.msra.mxu0 0.0
    %1915 = vmatprep.subr.mxu0 0.0
    %1916 = vmatpush1.msra.mxu0 0.0
    %1917 = vmatprep.subr.mxu0 0.0
    %1918 = vmatpush1.msra.mxu0 0.0
    %1919 = vmatprep.subr.mxu0 0.0
    %1920 = vmatpush1.msra.mxu0 0.0
    %1921 = vmatprep.subr.mxu0 0.0
    %1922 = vmatpush1.msra.mxu0 0.0
    %1923 = vmatprep.subr.mxu0 0.0
    %1924 = vmatpush1.msra.mxu0 0.0
    %1925 = vmatprep.subr.mxu0 0.0
    %1926 = vmatpush1.msra.mxu0 0.0
    %1927 = vmatprep.subr.mxu0 0.0
    %1928 = vmatpush1.msra.mxu0 0.0
    %1929 = vmatprep.subr.mxu0 0.0
    %1930 = vmatpush1.msra.mxu0 0.0
    %1931 = vmatprep.subr.mxu0 0.0
    %1932 = vmatpush1.msra.mxu0 0.0
    %1933 = vmatprep.subr.mxu0 0.0
    %1934 = vmatpush1.msra.mxu0 0.0
    %1935 = vmatprep.subr.mxu0 0.0
    %1936 = vmatpush1.msra.mxu0 0.0
    %1937 = vmatprep.subr.mxu0 0.0
    %1938 = vmatpush1.msra.mxu0 0.0
    %1939 = vmatprep.subr.mxu0 0.0
    %1940 = vmatpush1.msra.mxu0 0.0
    %1941 = vmatprep.subr.mxu0 0.0
    %1942 = vmatpush1.msra.mxu0 0.0
    %1943 = vmatprep.subr.mxu0 0.0
    %1944 = vmatpush1.msra.mxu0 0.0
    %1945 = vmatprep.subr.mxu0 0.0
    %1946 = vmatpush1.msra.mxu0 0.0
    %1947 = vmatprep.subr.mxu0 0.0
    %1948 = vmatpush1.msra.mxu0 0.0
    %1949 = vmatprep.mubr.f32.mxu0 0.0
    %1950 = vmatmul.mubr.f32.gmra.mrb[0].mxu0 %v1883
    %v1951 = vpop.f32.mrb[0].mxu0
    %v1952 = vadd.f32 0.0, %v1951
    %v1953 = vpop.f32.mrb[0].mxu0
    %1954 = vdwg.mxu0
    %v1955 = vadd.f32 %v1879, %v1952
    %v1956 = vxor.u32 %v1955, 2147483648
    %v1957 = vmul.f32 %v1956, 1.442695
    %v1958 = vpow.pop %v1957
    %v1959 = vadd.f32 %v1958, 1.0
    %v1960 = vrcp.pop %v1959
    %v1961 = vmul.f32 1.0, %v1960
    %v1962 = vadd.f32 %v1952, %v495
    %1964 = vrot.lane.b32.xlu0 %v1962, 64
    %v1965 = vpop.permute.xlu0 %1964
    %v1967 = vmul.f32 %v1961, %v1965
    %1969 = vrot.lane.b32.xlu0 %v1967, 64
    %v1970 = vpop.permute.xlu0 %1969
    %v1972 = vadd.f32 %v1879, %v1970
    %v1973 = vtanh.pop %v1972
    %v1974 = vsub.f32 1.0, %v1961
    %1976 = vrot.lane.b32.xlu0 %v1973, 96
    %v1977 = vpop.permute.xlu0 %1976
    %v1979 = vmul.f32 %v1974, %v1977
    %v1980 = vmul.f32 %v1961, %v1772
    %v1981 = vadd.f32 %v1979, %v1980
    %1983 = vrot.lane.b32.xlu0 %v1878, 96
    %v1984 = vpop.permute.xlu0 %1983
    %1986 = vst.msk [vmem:[#allocation4 + $0xe] sm:$0x3] %vm521, %v1984
    %1987 = vst.msk [vmem:[#allocation4] sm:$0x3] %vm523, %v1981
    %v1988 = vsel %vm302, %v1984, %v1981
    %v1989 = vld [vmem:[#allocation4] sm:$0xff]
    %v1990 = vld [vmem:[#allocation4 + $0x8] sm:$0xff]
    %v1991 = vld [vmem:[%s6] sm:$0xff]
    %v1992 = vld [vmem:[%s6 + $0x8] sm:$0xff]
    %v1993 = vld [vmem:[%s6 + $0x10] sm:$0xff]
    %v1994 = vld [vmem:[%s6 + $0x18] sm:$0xff]
    %v1995 = vld [vmem:[%s6 + $0x20] sm:$0xff]
    %v1996 = vld [vmem:[%s6 + $0x28] sm:$0xff]
    %v1997 = vld [vmem:[%s6 + $0x30] sm:$0xff]
    %v1998 = vld [vmem:[%s6 + $0x38] sm:$0xff]
    %v1999 = vld [vmem:[%s7] sm:$0x1]
    %v2001 = vlaneseq
    %v2002 = vshrl.u32 %v2001, 7
    %v2003 = vsub.s32 0, %v2002
    %v2004 = vrot.slane %v1999, %v2003
    %vm2006 = vcmask 523264
    %v2008 = vsel %vm2006, %v1989, 0
    %v2011 = vsel %vm2006, %v1990, 0
    %2013 = vmatprep.subr.mxu0 0.0
    %2014 = vmatpush1.msra.mxu0 %v1991
    %2015 = vmatprep.subr.mxu0 0.0
    %2016 = vmatpush1.msra.mxu0 %v1992
    %2017 = vmatprep.subr.mxu0 0.0
    %2018 = vmatpush1.msra.mxu0 %v1993
    %2019 = vmatprep.subr.mxu0 0.0
    %2020 = vmatpush1.msra.mxu0 %v1994
    %2021 = vmatprep.subr.mxu0 0.0
    %2022 = vmatpush1.msra.mxu0 %v1995
    %2023 = vmatprep.subr.mxu0 0.0
    %2024 = vmatpush1.msra.mxu0 %v1996
    %2025 = vmatprep.subr.mxu0 0.0
    %2026 = vmatpush1.msra.mxu0 %v1997
    %2027 = vmatprep.subr.mxu0 0.0
    %2028 = vmatpush1.msra.mxu0 %v1998
    %2029 = vmatprep.subr.mxu0 0.0
    %2030 = vmatpush1.msra.mxu0 0.0
    %2031 = vmatprep.subr.mxu0 0.0
    %2032 = vmatpush1.msra.mxu0 0.0
    %2033 = vmatprep.subr.mxu0 0.0
    %2034 = vmatpush1.msra.mxu0 0.0
    %2035 = vmatprep.subr.mxu0 0.0
    %2036 = vmatpush1.msra.mxu0 0.0
    %2037 = vmatprep.subr.mxu0 0.0
    %2038 = vmatpush1.msra.mxu0 0.0
    %2039 = vmatprep.subr.mxu0 0.0
    %2040 = vmatpush1.msra.mxu0 0.0
    %2041 = vmatprep.subr.mxu0 0.0
    %2042 = vmatpush1.msra.mxu0 0.0
    %2043 = vmatprep.subr.mxu0 0.0
    %2044 = vmatpush1.msra.mxu0 0.0
    %2045 = vmatprep.subr.mxu0 0.0
    %2046 = vmatpush1.msra.mxu0 0.0
    %2047 = vmatprep.subr.mxu0 0.0
    %2048 = vmatpush1.msra.mxu0 0.0
    %2049 = vmatprep.subr.mxu0 0.0
    %2050 = vmatpush1.msra.mxu0 0.0
    %2051 = vmatprep.subr.mxu0 0.0
    %2052 = vmatpush1.msra.mxu0 0.0
    %2053 = vmatprep.subr.mxu0 0.0
    %2054 = vmatpush1.msra.mxu0 0.0
    %2055 = vmatprep.subr.mxu0 0.0
    %2056 = vmatpush1.msra.mxu0 0.0
    %2057 = vmatprep.subr.mxu0 0.0
    %2058 = vmatpush1.msra.mxu0 0.0
    %2059 = vmatprep.subr.mxu0 0.0
    %2060 = vmatpush1.msra.mxu0 0.0
    %2061 = vmatprep.subr.mxu0 0.0
    %2062 = vmatpush1.msra.mxu0 0.0
    %2063 = vmatprep.subr.mxu0 0.0
    %2064 = vmatpush1.msra.mxu0 0.0
    %2065 = vmatprep.subr.mxu0 0.0
    %2066 = vmatpush1.msra.mxu0 0.0
    %2067 = vmatprep.subr.mxu0 0.0
    %2068 = vmatpush1.msra.mxu0 0.0
    %2069 = vmatprep.subr.mxu0 0.0
    %2070 = vmatpush1.msra.mxu0 0.0
    %2071 = vmatprep.subr.mxu0 0.0
    %2072 = vmatpush1.msra.mxu0 0.0
    %2073 = vmatprep.subr.mxu0 0.0
    %2074 = vmatpush1.msra.mxu0 0.0
    %2075 = vmatprep.subr.mxu0 0.0
    %2076 = vmatpush1.msra.mxu0 0.0
    %2077 = vmatprep.mubr.f32.mxu0 0.0
    %2078 = vmatmul.mubr.f32.gmra.mrb[0].mxu0 %v2008
    %v2079 = vpop.f32.mrb[0].mxu0
    %v2080 = vadd.f32 %v2004, %v2079
    %v2081 = vpop.f32.mrb[0].mxu0
    %2082 = vmatprep.mubr.f32.mxu0 0.0
    %2083 = vmatmul.mubr.f32.gmra.mrb[0].mxu0 %v2011
    %v2084 = vpop.f32.mrb[0].mxu0
    %v2085 = vadd.f32 %v2004, %v2084
    %v2086 = vpop.f32.mrb[0].mxu0
    %2087 = vdwg.mxu0
    %2088 = vst.msk [vmem:[#allocation2] sm:$0xff] %vm198, %v2080
    %2089 = vst.msk [vmem:[#allocation2 + $0x8] sm:$0xff] %vm198, %v2085
    %s2090 = scalar_lea.vmem %s6, 64
    %v2091 = vld [vmem:[%s2090] sm:$0xff]
    %v2092 = vld [vmem:[%s2090 + $0x8] sm:$0xff]
    %v2093 = vld [vmem:[%s2090 + $0x10] sm:$0xff]
    %v2094 = vld [vmem:[%s2090 + $0x18] sm:$0xff]
    %v2095 = vld [vmem:[%s2090 + $0x20] sm:$0xff]
    %v2096 = vld [vmem:[%s2090 + $0x28] sm:$0xff]
    %v2097 = vld [vmem:[%s2090 + $0x30] sm:$0xff]
    %v2098 = vld [vmem:[%s2090 + $0x38] sm:$0xff]
    %s2099 = scalar_lea.vmem %s7, 1
    %v2100 = vld [vmem:[%s2099] sm:$0x1]
    %v2102 = vlaneseq
    %v2103 = vshrl.u32 %v2102, 7
    %v2104 = vsub.s32 0, %v2103
    %v2105 = vrot.slane %v2100, %v2104
    %2107 = vmatprep.subr.mxu0 0.0
    %2108 = vmatpush1.msra.mxu0 %v2091
    %2109 = vmatprep.subr.mxu0 0.0
    %2110 = vmatpush1.msra.mxu0 %v2092
    %2111 = vmatprep.subr.mxu0 0.0
    %2112 = vmatpush1.msra.mxu0 %v2093
    %2113 = vmatprep.subr.mxu0 0.0
    %2114 = vmatpush1.msra.mxu0 %v2094
    %2115 = vmatprep.subr.mxu0 0.0
    %2116 = vmatpush1.msra.mxu0 %v2095
    %2117 = vmatprep.subr.mxu0 0.0
    %2118 = vmatpush1.msra.mxu0 %v2096
    %2119 = vmatprep.subr.mxu0 0.0
    %2120 = vmatpush1.msra.mxu0 %v2097
    %2121 = vmatprep.subr.mxu0 0.0
    %2122 = vmatpush1.msra.mxu0 %v2098
    %2123 = vmatprep.subr.mxu0 0.0
    %2124 = vmatpush1.msra.mxu0 0.0
    %2125 = vmatprep.subr.mxu0 0.0
    %2126 = vmatpush1.msra.mxu0 0.0
    %2127 = vmatprep.subr.mxu0 0.0
    %2128 = vmatpush1.msra.mxu0 0.0
    %2129 = vmatprep.subr.mxu0 0.0
    %2130 = vmatpush1.msra.mxu0 0.0
    %2131 = vmatprep.subr.mxu0 0.0
    %2132 = vmatpush1.msra.mxu0 0.0
    %2133 = vmatprep.subr.mxu0 0.0
    %2134 = vmatpush1.msra.mxu0 0.0
    %2135 = vmatprep.subr.mxu0 0.0
    %2136 = vmatpush1.msra.mxu0 0.0
    %2137 = vmatprep.subr.mxu0 0.0
    %2138 = vmatpush1.msra.mxu0 0.0
    %2139 = vmatprep.subr.mxu0 0.0
    %2140 = vmatpush1.msra.mxu0 0.0
    %2141 = vmatprep.subr.mxu0 0.0
    %2142 = vmatpush1.msra.mxu0 0.0
    %2143 = vmatprep.subr.mxu0 0.0
    %2144 = vmatpush1.msra.mxu0 0.0
    %2145 = vmatprep.subr.mxu0 0.0
    %2146 = vmatpush1.msra.mxu0 0.0
    %2147 = vmatprep.subr.mxu0 0.0
    %2148 = vmatpush1.msra.mxu0 0.0
    %2149 = vmatprep.subr.mxu0 0.0
    %2150 = vmatpush1.msra.mxu0 0.0
    %2151 = vmatprep.subr.mxu0 0.0
    %2152 = vmatpush1.msra.mxu0 0.0
    %2153 = vmatprep.subr.mxu0 0.0
    %2154 = vmatpush1.msra.mxu0 0.0
    %2155 = vmatprep.subr.mxu0 0.0
    %2156 = vmatpush1.msra.mxu0 0.0
    %2157 = vmatprep.subr.mxu0 0.0
    %2158 = vmatpush1.msra.mxu0 0.0
    %2159 = vmatprep.subr.mxu0 0.0
    %2160 = vmatpush1.msra.mxu0 0.0
    %2161 = vmatprep.subr.mxu0 0.0
    %2162 = vmatpush1.msra.mxu0 0.0
    %2163 = vmatprep.subr.mxu0 0.0
    %2164 = vmatpush1.msra.mxu0 0.0
    %2165 = vmatprep.subr.mxu0 0.0
    %2166 = vmatpush1.msra.mxu0 0.0
    %2167 = vmatprep.subr.mxu0 0.0
    %2168 = vmatpush1.msra.mxu0 0.0
    %2169 = vmatprep.subr.mxu0 0.0
    %2170 = vmatpush1.msra.mxu0 0.0
    %2171 = vmatprep.mubr.f32.mxu0 0.0
    %2172 = vmatmul.mubr.f32.gmra.mrb[0].mxu0 %v2008
    %v2173 = vpop.f32.mrb[0].mxu0
    %v2174 = vadd.f32 %v2105, %v2173
    %v2175 = vpop.f32.mrb[0].mxu0
    %2176 = vmatprep.mubr.f32.mxu0 0.0
    %2177 = vmatmul.mubr.f32.gmra.mrb[0].mxu0 %v2011
    %v2178 = vpop.f32.mrb[0].mxu0
    %v2179 = vadd.f32 %v2105, %v2178
    %v2180 = vpop.f32.mrb[0].mxu0
    %2181 = vdwg.mxu0
    %2182 = vst.msk [vmem:[#allocation3] sm:$0xff] %vm198, %v2174
    %2183 = vst.msk [vmem:[#allocation3 + $0x8] sm:$0xff] %vm198, %v2179
    %v2184 = vld [vmem:[%s8] sm:$0xff]
    %v2185 = vld [vmem:[%s8 + $0x8] sm:$0xff]
    %v2186 = vld [vmem:[%s8 + $0x10] sm:$0xff]
    %v2187 = vld [vmem:[%s8 + $0x18] sm:$0xff]
    %s2188 = scalar_lea.vmem %s8, 32
    %v2189 = vld [vmem:[%s2188] sm:$0xff]
    %v2190 = vld [vmem:[%s2188 + $0x8] sm:$0xff]
    %v2191 = vld [vmem:[%s2188 + $0x10] sm:$0xff]
    %v2192 = vld [vmem:[%s2188 + $0x18] sm:$0xff]
    %v2193 = vld [vmem:[%s9] sm:$0x1]
    %s2194 = scalar_lea.vmem %s9, 1
    %v2195 = vld [vmem:[%s2194] sm:$0x1]
    %v2196 = vld [vmem:[#allocation2] sm:$0x3]
    %2197 = vmatprep.subr.mxu0 0.0
    %2198 = vmatpush1.msra.mxu0 %v2184
    %2199 = vmatprep.subr.mxu0 0.0
    %2200 = vmatpush1.msra.mxu0 %v2185
    %2201 = vmatprep.subr.mxu0 0.0
    %2202 = vmatpush1.msra.mxu0 %v2186
    %2203 = vmatprep.subr.mxu0 0.0
    %2204 = vmatpush1.msra.mxu0 %v2187
    %2205 = vmatprep.subr.mxu0 0.0
    %2206 = vmatpush1.msra.mxu0 0.0
    %2207 = vmatprep.subr.mxu0 0.0
    %2208 = vmatpush1.msra.mxu0 0.0
    %2209 = vmatprep.subr.mxu0 0.0
    %2210 = vmatpush1.msra.mxu0 0.0
    %2211 = vmatprep.subr.mxu0 0.0
    %2212 = vmatpush1.msra.mxu0 0.0
    %2213 = vmatprep.subr.mxu0 0.0
    %2214 = vmatpush1.msra.mxu0 0.0
    %2215 = vmatprep.subr.mxu0 0.0
    %2216 = vmatpush1.msra.mxu0 0.0
    %2217 = vmatprep.subr.mxu0 0.0
    %2218 = vmatpush1.msra.mxu0 0.0
    %2219 = vmatprep.subr.mxu0 0.0
    %2220 = vmatpush1.msra.mxu0 0.0
    %2221 = vmatprep.subr.mxu0 0.0
    %2222 = vmatpush1.msra.mxu0 0.0
    %2223 = vmatprep.subr.mxu0 0.0
    %2224 = vmatpush1.msra.mxu0 0.0
    %2225 = vmatprep.subr.mxu0 0.0
    %2226 = vmatpush1.msra.mxu0 0.0
    %2227 = vmatprep.subr.mxu0 0.0
    %2228 = vmatpush1.msra.mxu0 0.0
    %2229 = vmatprep.subr.mxu0 0.0
    %2230 = vmatpush1.msra.mxu0 0.0
    %2231 = vmatprep.subr.mxu0 0.0
    %2232 = vmatpush1.msra.mxu0 0.0
    %2233 = vmatprep.subr.mxu0 0.0
    %2234 = vmatpush1.msra.mxu0 0.0
    %2235 = vmatprep.subr.mxu0 0.0
    %2236 = vmatpush1.msra.mxu0 0.0
    %2237 = vmatprep.subr.mxu0 0.0
    %2238 = vmatpush1.msra.mxu0 0.0
    %2239 = vmatprep.subr.mxu0 0.0
    %2240 = vmatpush1.msra.mxu0 0.0
    %2241 = vmatprep.subr.mxu0 0.0
    %2242 = vmatpush1.msra.mxu0 0.0
    %2243 = vmatprep.subr.mxu0 0.0
    %2244 = vmatpush1.msra.mxu0 0.0
    %2245 = vmatprep.subr.mxu0 0.0
    %2246 = vmatpush1.msra.mxu0 0.0
    %2247 = vmatprep.subr.mxu0 0.0
    %2248 = vmatpush1.msra.mxu0 0.0
    %2249 = vmatprep.subr.mxu0 0.0
    %2250 = vmatpush1.msra.mxu0 0.0
    %2251 = vmatprep.subr.mxu0 0.0
    %2252 = vmatpush1.msra.mxu0 0.0
    %2253 = vmatprep.subr.mxu0 0.0
    %2254 = vmatpush1.msra.mxu0 0.0
    %2255 = vmatprep.subr.mxu0 0.0
    %2256 = vmatpush1.msra.mxu0 0.0
    %2257 = vmatprep.subr.mxu0 0.0
    %2258 = vmatpush1.msra.mxu0 0.0
    %2259 = vmatprep.subr.mxu0 0.0
    %2260 = vmatpush1.msra.mxu0 0.0
    %2261 = vmatprep.mubr.f32.mxu0 0.0
    %2262 = vmatmul.mubr.f32.gmra.mrb[0].mxu0 %v304
    %v2263 = vpop.f32.mrb[0].mxu0
    %v2264 = vadd.f32 0.0, %v2263
    %v2265 = vpop.f32.mrb[0].mxu0
    %2266 = vdwg.mxu0
    %v2267 = vadd.f32 %v2196, %v2264
    %v2268 = vxor.u32 %v2267, 2147483648
    %v2269 = vmul.f32 %v2268, 1.442695
    %v2270 = vpow.pop %v2269
    %v2271 = vadd.f32 %v2270, 1.0
    %v2272 = vrcp.pop %v2271
    %v2273 = vmul.f32 1.0, %v2272
    %v2275 = vlaneseq
    %v2276 = vshrl.u32 %v2275, 7
    %v2277 = vsub.s32 0, %v2276
    %v2278 = vrot.slane %v2193, %v2277
    %2279 = vrot.lane.b32.xlu0 %v2278, 64
    %v2280 = vpop.permute.xlu0 %2279
    %v2282 = vadd.f32 %v2264, %v2280
    %2284 = vrot.lane.b32.xlu0 %v2282, 64
    %v2285 = vpop.permute.xlu0 %2284
    %v2287 = vmul.f32 %v2273, %v2285
    %2289 = vrot.lane.b32.xlu0 %v2287, 64
    %v2290 = vpop.permute.xlu0 %2289
    %v2292 = vadd.f32 %v2196, %v2290
    %v2293 = vtanh.pop %v2292
    %v2294 = vsub.f32 1.0, %v2273
    %2296 = vrot.lane.b32.xlu0 %v2293, 96
    %v2297 = vpop.permute.xlu0 %2296
    %v2299 = vmul.f32 %v2294, %v2297
    %v2300 = vmul.f32 %v2273, 0.0
    %v2301 = vadd.f32 %v2299, %v2300
    %v2302 = vld [vmem:[#allocation3 + $0xe] sm:$0x3]
    %2303 = vmatprep.subr.mxu0 0.0
    %2304 = vmatpush1.msra.mxu0 %v2189
    %2305 = vmatprep.subr.mxu0 0.0
    %2306 = vmatpush1.msra.mxu0 %v2190
    %2307 = vmatprep.subr.mxu0 0.0
    %2308 = vmatpush1.msra.mxu0 %v2191
    %2309 = vmatprep.subr.mxu0 0.0
    %2310 = vmatpush1.msra.mxu0 %v2192
    %2311 = vmatprep.subr.mxu0 0.0
    %2312 = vmatpush1.msra.mxu0 0.0
    %2313 = vmatprep.subr.mxu0 0.0
    %2314 = vmatpush1.msra.mxu0 0.0
    %2315 = vmatprep.subr.mxu0 0.0
    %2316 = vmatpush1.msra.mxu0 0.0
    %2317 = vmatprep.subr.mxu0 0.0
    %2318 = vmatpush1.msra.mxu0 0.0
    %2319 = vmatprep.subr.mxu0 0.0
    %2320 = vmatpush1.msra.mxu0 0.0
    %2321 = vmatprep.subr.mxu0 0.0
    %2322 = vmatpush1.msra.mxu0 0.0
    %2323 = vmatprep.subr.mxu0 0.0
    %2324 = vmatpush1.msra.mxu0 0.0
    %2325 = vmatprep.subr.mxu0 0.0
    %2326 = vmatpush1.msra.mxu0 0.0
    %2327 = vmatprep.subr.mxu0 0.0
    %2328 = vmatpush1.msra.mxu0 0.0
    %2329 = vmatprep.subr.mxu0 0.0
    %2330 = vmatpush1.msra.mxu0 0.0
    %2331 = vmatprep.subr.mxu0 0.0
    %2332 = vmatpush1.msra.mxu0 0.0
    %2333 = vmatprep.subr.mxu0 0.0
    %2334 = vmatpush1.msra.mxu0 0.0
    %2335 = vmatprep.subr.mxu0 0.0
    %2336 = vmatpush1.msra.mxu0 0.0
    %2337 = vmatprep.subr.mxu0 0.0
    %2338 = vmatpush1.msra.mxu0 0.0
    %2339 = vmatprep.subr.mxu0 0.0
    %2340 = vmatpush1.msra.mxu0 0.0
    %2341 = vmatprep.subr.mxu0 0.0
    %2342 = vmatpush1.msra.mxu0 0.0
    %2343 = vmatprep.subr.mxu0 0.0
    %2344 = vmatpush1.msra.mxu0 0.0
    %2345 = vmatprep.subr.mxu0 0.0
    %2346 = vmatpush1.msra.mxu0 0.0
    %2347 = vmatprep.subr.mxu0 0.0
    %2348 = vmatpush1.msra.mxu0 0.0
    %2349 = vmatprep.subr.mxu0 0.0
    %2350 = vmatpush1.msra.mxu0 0.0
    %2351 = vmatprep.subr.mxu0 0.0
    %2352 = vmatpush1.msra.mxu0 0.0
    %2353 = vmatprep.subr.mxu0 0.0
    %2354 = vmatpush1.msra.mxu0 0.0
    %2355 = vmatprep.subr.mxu0 0.0
    %2356 = vmatpush1.msra.mxu0 0.0
    %2357 = vmatprep.subr.mxu0 0.0
    %2358 = vmatpush1.msra.mxu0 0.0
    %2359 = vmatprep.subr.mxu0 0.0
    %2360 = vmatpush1.msra.mxu0 0.0
    %2361 = vmatprep.subr.mxu0 0.0
    %2362 = vmatpush1.msra.mxu0 0.0
    %2363 = vmatprep.subr.mxu0 0.0
    %2364 = vmatpush1.msra.mxu0 0.0
    %2365 = vmatprep.subr.mxu0 0.0
    %2366 = vmatpush1.msra.mxu0 0.0
    %2367 = vmatprep.mubr.f32.mxu0 0.0
    %2368 = vmatmul.mubr.f32.gmra.mrb[0].mxu0 %v304
    %v2369 = vpop.f32.mrb[0].mxu0
    %v2370 = vadd.f32 0.0, %v2369
    %v2371 = vpop.f32.mrb[0].mxu0
    %2372 = vdwg.mxu0
    %v2373 = vadd.f32 %v2302, %v2370
    %v2374 = vxor.u32 %v2373, 2147483648
    %v2375 = vmul.f32 %v2374, 1.442695
    %v2376 = vpow.pop %v2375
    %v2377 = vadd.f32 %v2376, 1.0
    %v2378 = vrcp.pop %v2377
    %v2379 = vmul.f32 1.0, %v2378
    %v2381 = vlaneseq
    %v2382 = vshrl.u32 %v2381, 7
    %v2383 = vsub.s32 0, %v2382
    %v2384 = vrot.slane %v2195, %v2383
    %2385 = vrot.lane.b32.xlu0 %v2384, 64
    %v2386 = vpop.permute.xlu0 %2385
    %v2388 = vadd.f32 %v2370, %v2386
    %2390 = vrot.lane.b32.xlu0 %v2388, 64
    %v2391 = vpop.permute.xlu0 %2390
    %v2393 = vmul.f32 %v2379, %v2391
    %2395 = vrot.lane.b32.xlu0 %v2393, 64
    %v2396 = vpop.permute.xlu0 %2395
    %v2398 = vadd.f32 %v2302, %v2396
    %v2399 = vtanh.pop %v2398
    %v2400 = vsub.f32 1.0, %v2379
    %2402 = vrot.lane.b32.xlu0 %v2399, 96
    %v2403 = vpop.permute.xlu0 %2402
    %v2405 = vmul.f32 %v2400, %v2403
    %v2406 = vmul.f32 %v2379, 0.0
    %v2407 = vadd.f32 %v2405, %v2406
    %v2408 = vld [vmem:[#allocation2 + $0x2] sm:$0x3]
    %2410 = vrot.lane.b32.xlu0 %v2301, 96
    %v2411 = vpop.permute.xlu0 %2410
    %v2412 = vsel %vm302, %v2411, 0
    %2414 = vmatprep.subr.mxu0 0.0
    %2415 = vmatpush1.msra.mxu0 %v2184
    %2416 = vmatprep.subr.mxu0 0.0
    %2417 = vmatpush1.msra.mxu0 %v2185
    %2418 = vmatprep.subr.mxu0 0.0
    %2419 = vmatpush1.msra.mxu0 %v2186
    %2420 = vmatprep.subr.mxu0 0.0
    %2421 = vmatpush1.msra.mxu0 %v2187
    %2422 = vmatprep.subr.mxu0 0.0
    %2423 = vmatpush1.msra.mxu0 0.0
    %2424 = vmatprep.subr.mxu0 0.0
    %2425 = vmatpush1.msra.mxu0 0.0
    %2426 = vmatprep.subr.mxu0 0.0
    %2427 = vmatpush1.msra.mxu0 0.0
    %2428 = vmatprep.subr.mxu0 0.0
    %2429 = vmatpush1.msra.mxu0 0.0
    %2430 = vmatprep.subr.mxu0 0.0
    %2431 = vmatpush1.msra.mxu0 0.0
    %2432 = vmatprep.subr.mxu0 0.0
    %2433 = vmatpush1.msra.mxu0 0.0
    %2434 = vmatprep.subr.mxu0 0.0
    %2435 = vmatpush1.msra.mxu0 0.0
    %2436 = vmatprep.subr.mxu0 0.0
    %2437 = vmatpush1.msra.mxu0 0.0
    %2438 = vmatprep.subr.mxu0 0.0
    %2439 = vmatpush1.msra.mxu0 0.0
    %2440 = vmatprep.subr.mxu0 0.0
    %2441 = vmatpush1.msra.mxu0 0.0
    %2442 = vmatprep.subr.mxu0 0.0
    %2443 = vmatpush1.msra.mxu0 0.0
    %2444 = vmatprep.subr.mxu0 0.0
    %2445 = vmatpush1.msra.mxu0 0.0
    %2446 = vmatprep.subr.mxu0 0.0
    %2447 = vmatpush1.msra.mxu0 0.0
    %2448 = vmatprep.subr.mxu0 0.0
    %2449 = vmatpush1.msra.mxu0 0.0
    %2450 = vmatprep.subr.mxu0 0.0
    %2451 = vmatpush1.msra.mxu0 0.0
    %2452 = vmatprep.subr.mxu0 0.0
    %2453 = vmatpush1.msra.mxu0 0.0
    %2454 = vmatprep.subr.mxu0 0.0
    %2455 = vmatpush1.msra.mxu0 0.0
    %2456 = vmatprep.subr.mxu0 0.0
    %2457 = vmatpush1.msra.mxu0 0.0
    %2458 = vmatprep.subr.mxu0 0.0
    %2459 = vmatpush1.msra.mxu0 0.0
    %2460 = vmatprep.subr.mxu0 0.0
    %2461 = vmatpush1.msra.mxu0 0.0
    %2462 = vmatprep.subr.mxu0 0.0
    %2463 = vmatpush1.msra.mxu0 0.0
    %2464 = vmatprep.subr.mxu0 0.0
    %2465 = vmatpush1.msra.mxu0 0.0
    %2466 = vmatprep.subr.mxu0 0.0
    %2467 = vmatpush1.msra.mxu0 0.0
    %2468 = vmatprep.subr.mxu0 0.0
    %2469 = vmatpush1.msra.mxu0 0.0
    %2470 = vmatprep.subr.mxu0 0.0
    %2471 = vmatpush1.msra.mxu0 0.0
    %2472 = vmatprep.subr.mxu0 0.0
    %2473 = vmatpush1.msra.mxu0 0.0
    %2474 = vmatprep.subr.mxu0 0.0
    %2475 = vmatpush1.msra.mxu0 0.0
    %2476 = vmatprep.subr.mxu0 0.0
    %2477 = vmatpush1.msra.mxu0 0.0
    %2478 = vmatprep.mubr.f32.mxu0 0.0
    %2479 = vmatmul.mubr.f32.gmra.mrb[0].mxu0 %v2412
    %v2480 = vpop.f32.mrb[0].mxu0
    %v2481 = vadd.f32 0.0, %v2480
    %v2482 = vpop.f32.mrb[0].mxu0
    %2483 = vdwg.mxu0
    %v2484 = vadd.f32 %v2408, %v2481
    %v2485 = vxor.u32 %v2484, 2147483648
    %v2486 = vmul.f32 %v2485, 1.442695
    %v2487 = vpow.pop %v2486
    %v2488 = vadd.f32 %v2487, 1.0
    %v2489 = vrcp.pop %v2488
    %v2490 = vmul.f32 1.0, %v2489
    %v2491 = vadd.f32 %v2481, %v2280
    %2493 = vrot.lane.b32.xlu0 %v2491, 64
    %v2494 = vpop.permute.xlu0 %2493
    %v2496 = vmul.f32 %v2490, %v2494
    %2498 = vrot.lane.b32.xlu0 %v2496, 64
    %v2499 = vpop.permute.xlu0 %2498
    %v2501 = vadd.f32 %v2408, %v2499
    %v2502 = vtanh.pop %v2501
    %v2503 = vsub.f32 1.0, %v2490
    %2505 = vrot.lane.b32.xlu0 %v2502, 96
    %v2506 = vpop.permute.xlu0 %2505
    %v2508 = vmul.f32 %v2503, %v2506
    %v2509 = vmul.f32 %v2490, %v2301
    %v2510 = vadd.f32 %v2508, %v2509
    %v2511 = vld [vmem:[#allocation3 + $0xc] sm:$0x3]
    %2513 = vrot.lane.b32.xlu0 %v2407, 96
    %v2514 = vpop.permute.xlu0 %2513
    %v2515 = vsel %vm302, %v2514, 0
    %2517 = vmatprep.subr.mxu0 0.0
    %2518 = vmatpush1.msra.mxu0 %v2189
    %2519 = vmatprep.subr.mxu0 0.0
    %2520 = vmatpush1.msra.mxu0 %v2190
    %2521 = vmatprep.subr.mxu0 0.0
    %2522 = vmatpush1.msra.mxu0 %v2191
    %2523 = vmatprep.subr.mxu0 0.0
    %2524 = vmatpush1.msra.mxu0 %v2192
    %2525 = vmatprep.subr.mxu0 0.0
    %2526 = vmatpush1.msra.mxu0 0.0
    %2527 = vmatprep.subr.mxu0 0.0
    %2528 = vmatpush1.msra.mxu0 0.0
    %2529 = vmatprep.subr.mxu0 0.0
    %2530 = vmatpush1.msra.mxu0 0.0
    %2531 = vmatprep.subr.mxu0 0.0
    %2532 = vmatpush1.msra.mxu0 0.0
    %2533 = vmatprep.subr.mxu0 0.0
    %2534 = vmatpush1.msra.mxu0 0.0
    %2535 = vmatprep.subr.mxu0 0.0
    %2536 = vmatpush1.msra.mxu0 0.0
    %2537 = vmatprep.subr.mxu0 0.0
    %2538 = vmatpush1.msra.mxu0 0.0
    %2539 = vmatprep.subr.mxu0 0.0
    %2540 = vmatpush1.msra.mxu0 0.0
    %2541 = vmatprep.subr.mxu0 0.0
    %2542 = vmatpush1.msra.mxu0 0.0
    %2543 = vmatprep.subr.mxu0 0.0
    %2544 = vmatpush1.msra.mxu0 0.0
    %2545 = vmatprep.subr.mxu0 0.0
    %2546 = vmatpush1.msra.mxu0 0.0
    %2547 = vmatprep.subr.mxu0 0.0
    %2548 = vmatpush1.msra.mxu0 0.0
    %2549 = vmatprep.subr.mxu0 0.0
    %2550 = vmatpush1.msra.mxu0 0.0
    %2551 = vmatprep.subr.mxu0 0.0
    %2552 = vmatpush1.msra.mxu0 0.0
    %2553 = vmatprep.subr.mxu0 0.0
    %2554 = vmatpush1.msra.mxu0 0.0
    %2555 = vmatprep.subr.mxu0 0.0
    %2556 = vmatpush1.msra.mxu0 0.0
    %2557 = vmatprep.subr.mxu0 0.0
    %2558 = vmatpush1.msra.mxu0 0.0
    %2559 = vmatprep.subr.mxu0 0.0
    %2560 = vmatpush1.msra.mxu0 0.0
    %2561 = vmatprep.subr.mxu0 0.0
    %2562 = vmatpush1.msra.mxu0 0.0
    %2563 = vmatprep.subr.mxu0 0.0
    %2564 = vmatpush1.msra.mxu0 0.0
    %2565 = vmatprep.subr.mxu0 0.0
    %2566 = vmatpush1.msra.mxu0 0.0
    %2567 = vmatprep.subr.mxu0 0.0
    %2568 = vmatpush1.msra.mxu0 0.0
    %2569 = vmatprep.subr.mxu0 0.0
    %2570 = vmatpush1.msra.mxu0 0.0
    %2571 = vmatprep.subr.mxu0 0.0
    %2572 = vmatpush1.msra.mxu0 0.0
    %2573 = vmatprep.subr.mxu0 0.0
    %2574 = vmatpush1.msra.mxu0 0.0
    %2575 = vmatprep.subr.mxu0 0.0
    %2576 = vmatpush1.msra.mxu0 0.0
    %2577 = vmatprep.subr.mxu0 0.0
    %2578 = vmatpush1.msra.mxu0 0.0
    %2579 = vmatprep.subr.mxu0 0.0
    %2580 = vmatpush1.msra.mxu0 0.0
    %2581 = vmatprep.mubr.f32.mxu0 0.0
    %2582 = vmatmul.mubr.f32.gmra.mrb[0].mxu0 %v2515
    %v2583 = vpop.f32.mrb[0].mxu0
    %v2584 = vadd.f32 0.0, %v2583
    %v2585 = vpop.f32.mrb[0].mxu0
    %2586 = vdwg.mxu0
    %v2587 = vadd.f32 %v2511, %v2584
    %v2588 = vxor.u32 %v2587, 2147483648
    %v2589 = vmul.f32 %v2588, 1.442695
    %v2590 = vpow.pop %v2589
    %v2591 = vadd.f32 %v2590, 1.0
    %v2592 = vrcp.pop %v2591
    %v2593 = vmul.f32 1.0, %v2592
    %v2594 = vadd.f32 %v2584, %v2386
    %2596 = vrot.lane.b32.xlu0 %v2594, 64
    %v2597 = vpop.permute.xlu0 %2596
    %v2599 = vmul.f32 %v2593, %v2597
    %2601 = vrot.lane.b32.xlu0 %v2599, 64
    %v2602 = vpop.permute.xlu0 %2601
    %v2604 = vadd.f32 %v2511, %v2602
    %v2605 = vtanh.pop %v2604
    %v2606 = vsub.f32 1.0, %v2593
    %2608 = vrot.lane.b32.xlu0 %v2605, 96
    %v2609 = vpop.permute.xlu0 %2608
    %v2611 = vmul.f32 %v2606, %v2609
    %v2612 = vmul.f32 %v2593, %v2407
    %v2613 = vadd.f32 %v2611, %v2612
    %v2614 = vld [vmem:[#allocation2 + $0x4] sm:$0x3]
    %2616 = vrot.lane.b32.xlu0 %v2510, 96
    %v2617 = vpop.permute.xlu0 %2616
    %v2618 = vsel %vm302, %v2617, 0
    %2620 = vmatprep.subr.mxu0 0.0
    %2621 = vmatpush1.msra.mxu0 %v2184
    %2622 = vmatprep.subr.mxu0 0.0
    %2623 = vmatpush1.msra.mxu0 %v2185
    %2624 = vmatprep.subr.mxu0 0.0
    %2625 = vmatpush1.msra.mxu0 %v2186
    %2626 = vmatprep.subr.mxu0 0.0
    %2627 = vmatpush1.msra.mxu0 %v2187
    %2628 = vmatprep.subr.mxu0 0.0
    %2629 = vmatpush1.msra.mxu0 0.0
    %2630 = vmatprep.subr.mxu0 0.0
    %2631 = vmatpush1.msra.mxu0 0.0
    %2632 = vmatprep.subr.mxu0 0.0
    %2633 = vmatpush1.msra.mxu0 0.0
    %2634 = vmatprep.subr.mxu0 0.0
    %2635 = vmatpush1.msra.mxu0 0.0
    %2636 = vmatprep.subr.mxu0 0.0
    %2637 = vmatpush1.msra.mxu0 0.0
    %2638 = vmatprep.subr.mxu0 0.0
    %2639 = vmatpush1.msra.mxu0 0.0
    %2640 = vmatprep.subr.mxu0 0.0
    %2641 = vmatpush1.msra.mxu0 0.0
    %2642 = vmatprep.subr.mxu0 0.0
    %2643 = vmatpush1.msra.mxu0 0.0
    %2644 = vmatprep.subr.mxu0 0.0
    %2645 = vmatpush1.msra.mxu0 0.0
    %2646 = vmatprep.subr.mxu0 0.0
    %2647 = vmatpush1.msra.mxu0 0.0
    %2648 = vmatprep.subr.mxu0 0.0
    %2649 = vmatpush1.msra.mxu0 0.0
    %2650 = vmatprep.subr.mxu0 0.0
    %2651 = vmatpush1.msra.mxu0 0.0
    %2652 = vmatprep.subr.mxu0 0.0
    %2653 = vmatpush1.msra.mxu0 0.0
    %2654 = vmatprep.subr.mxu0 0.0
    %2655 = vmatpush1.msra.mxu0 0.0
    %2656 = vmatprep.subr.mxu0 0.0
    %2657 = vmatpush1.msra.mxu0 0.0
    %2658 = vmatprep.subr.mxu0 0.0
    %2659 = vmatpush1.msra.mxu0 0.0
    %2660 = vmatprep.subr.mxu0 0.0
    %2661 = vmatpush1.msra.mxu0 0.0
    %2662 = vmatprep.subr.mxu0 0.0
    %2663 = vmatpush1.msra.mxu0 0.0
    %2664 = vmatprep.subr.mxu0 0.0
    %2665 = vmatpush1.msra.mxu0 0.0
    %2666 = vmatprep.subr.mxu0 0.0
    %2667 = vmatpush1.msra.mxu0 0.0
    %2668 = vmatprep.subr.mxu0 0.0
    %2669 = vmatpush1.msra.mxu0 0.0
    %2670 = vmatprep.subr.mxu0 0.0
    %2671 = vmatpush1.msra.mxu0 0.0
    %2672 = vmatprep.subr.mxu0 0.0
    %2673 = vmatpush1.msra.mxu0 0.0
    %2674 = vmatprep.subr.mxu0 0.0
    %2675 = vmatpush1.msra.mxu0 0.0
    %2676 = vmatprep.subr.mxu0 0.0
    %2677 = vmatpush1.msra.mxu0 0.0
    %2678 = vmatprep.subr.mxu0 0.0
    %2679 = vmatpush1.msra.mxu0 0.0
    %2680 = vmatprep.subr.mxu0 0.0
    %2681 = vmatpush1.msra.mxu0 0.0
    %2682 = vmatprep.subr.mxu0 0.0
    %2683 = vmatpush1.msra.mxu0 0.0
    %2684 = vmatprep.mubr.f32.mxu0 0.0
    %2685 = vmatmul.mubr.f32.gmra.mrb[0].mxu0 %v2618
    %v2686 = vpop.f32.mrb[0].mxu0
    %v2687 = vadd.f32 0.0, %v2686
    %v2688 = vpop.f32.mrb[0].mxu0
    %2689 = vdwg.mxu0
    %v2690 = vadd.f32 %v2614, %v2687
    %v2691 = vxor.u32 %v2690, 2147483648
    %v2692 = vmul.f32 %v2691, 1.442695
    %v2693 = vpow.pop %v2692
    %v2694 = vadd.f32 %v2693, 1.0
    %v2695 = vrcp.pop %v2694
    %v2696 = vmul.f32 1.0, %v2695
    %v2697 = vadd.f32 %v2687, %v2280
    %2699 = vrot.lane.b32.xlu0 %v2697, 64
    %v2700 = vpop.permute.xlu0 %2699
    %v2702 = vmul.f32 %v2696, %v2700
    %2704 = vrot.lane.b32.xlu0 %v2702, 64
    %v2705 = vpop.permute.xlu0 %2704
    %v2707 = vadd.f32 %v2614, %v2705
    %v2708 = vtanh.pop %v2707
    %v2709 = vsub.f32 1.0, %v2696
    %2711 = vrot.lane.b32.xlu0 %v2708, 96
    %v2712 = vpop.permute.xlu0 %2711
    %v2714 = vmul.f32 %v2709, %v2712
    %v2715 = vmul.f32 %v2696, %v2510
    %v2716 = vadd.f32 %v2714, %v2715
    %v2717 = vld [vmem:[#allocation3 + $0xa] sm:$0x3]
    %2719 = vrot.lane.b32.xlu0 %v2613, 96
    %v2720 = vpop.permute.xlu0 %2719
    %v2721 = vsel %vm302, %v2720, 0
    %2723 = vmatprep.subr.mxu0 0.0
    %2724 = vmatpush1.msra.mxu0 %v2189
    %2725 = vmatprep.subr.mxu0 0.0
    %2726 = vmatpush1.msra.mxu0 %v2190
    %2727 = vmatprep.subr.mxu0 0.0
    %2728 = vmatpush1.msra.mxu0 %v2191
    %2729 = vmatprep.subr.mxu0 0.0
    %2730 = vmatpush1.msra.mxu0 %v2192
    %2731 = vmatprep.subr.mxu0 0.0
    %2732 = vmatpush1.msra.mxu0 0.0
    %2733 = vmatprep.subr.mxu0 0.0
    %2734 = vmatpush1.msra.mxu0 0.0
    %2735 = vmatprep.subr.mxu0 0.0
    %2736 = vmatpush1.msra.mxu0 0.0
    %2737 = vmatprep.subr.mxu0 0.0
    %2738 = vmatpush1.msra.mxu0 0.0
    %2739 = vmatprep.subr.mxu0 0.0
    %2740 = vmatpush1.msra.mxu0 0.0
    %2741 = vmatprep.subr.mxu0 0.0
    %2742 = vmatpush1.msra.mxu0 0.0
    %2743 = vmatprep.subr.mxu0 0.0
    %2744 = vmatpush1.msra.mxu0 0.0
    %2745 = vmatprep.subr.mxu0 0.0
    %2746 = vmatpush1.msra.mxu0 0.0
    %2747 = vmatprep.subr.mxu0 0.0
    %2748 = vmatpush1.msra.mxu0 0.0
    %2749 = vmatprep.subr.mxu0 0.0
    %2750 = vmatpush1.msra.mxu0 0.0
    %2751 = vmatprep.subr.mxu0 0.0
    %2752 = vmatpush1.msra.mxu0 0.0
    %2753 = vmatprep.subr.mxu0 0.0
    %2754 = vmatpush1.msra.mxu0 0.0
    %2755 = vmatprep.subr.mxu0 0.0
    %2756 = vmatpush1.msra.mxu0 0.0
    %2757 = vmatprep.subr.mxu0 0.0
    %2758 = vmatpush1.msra.mxu0 0.0
    %2759 = vmatprep.subr.mxu0 0.0
    %2760 = vmatpush1.msra.mxu0 0.0
    %2761 = vmatprep.subr.mxu0 0.0
    %2762 = vmatpush1.msra.mxu0 0.0
    %2763 = vmatprep.subr.mxu0 0.0
    %2764 = vmatpush1.msra.mxu0 0.0
    %2765 = vmatprep.subr.mxu0 0.0
    %2766 = vmatpush1.msra.mxu0 0.0
    %2767 = vmatprep.subr.mxu0 0.0
    %2768 = vmatpush1.msra.mxu0 0.0
    %2769 = vmatprep.subr.mxu0 0.0
    %2770 = vmatpush1.msra.mxu0 0.0
    %2771 = vmatprep.subr.mxu0 0.0
    %2772 = vmatpush1.msra.mxu0 0.0
    %2773 = vmatprep.subr.mxu0 0.0
    %2774 = vmatpush1.msra.mxu0 0.0
    %2775 = vmatprep.subr.mxu0 0.0
    %2776 = vmatpush1.msra.mxu0 0.0
    %2777 = vmatprep.subr.mxu0 0.0
    %2778 = vmatpush1.msra.mxu0 0.0
    %2779 = vmatprep.subr.mxu0 0.0
    %2780 = vmatpush1.msra.mxu0 0.0
    %2781 = vmatprep.subr.mxu0 0.0
    %2782 = vmatpush1.msra.mxu0 0.0
    %2783 = vmatprep.subr.mxu0 0.0
    %2784 = vmatpush1.msra.mxu0 0.0
    %2785 = vmatprep.subr.mxu0 0.0
    %2786 = vmatpush1.msra.mxu0 0.0
    %2787 = vmatprep.mubr.f32.mxu0 0.0
    %2788 = vmatmul.mubr.f32.gmra.mrb[0].mxu0 %v2721
    %v2789 = vpop.f32.mrb[0].mxu0
    %v2790 = vadd.f32 0.0, %v2789
    %v2791 = vpop.f32.mrb[0].mxu0
    %2792 = vdwg.mxu0
    %v2793 = vadd.f32 %v2717, %v2790
    %v2794 = vxor.u32 %v2793, 2147483648
    %v2795 = vmul.f32 %v2794, 1.442695
    %v2796 = vpow.pop %v2795
    %v2797 = vadd.f32 %v2796, 1.0
    %v2798 = vrcp.pop %v2797
    %v2799 = vmul.f32 1.0, %v2798
    %v2800 = vadd.f32 %v2790, %v2386
    %2802 = vrot.lane.b32.xlu0 %v2800, 64
    %v2803 = vpop.permute.xlu0 %2802
    %v2805 = vmul.f32 %v2799, %v2803
    %2807 = vrot.lane.b32.xlu0 %v2805, 64
    %v2808 = vpop.permute.xlu0 %2807
    %v2810 = vadd.f32 %v2717, %v2808
    %v2811 = vtanh.pop %v2810
    %v2812 = vsub.f32 1.0, %v2799
    %2814 = vrot.lane.b32.xlu0 %v2811, 96
    %v2815 = vpop.permute.xlu0 %2814
    %v2817 = vmul.f32 %v2812, %v2815
    %v2818 = vmul.f32 %v2799, %v2613
    %v2819 = vadd.f32 %v2817, %v2818
    %v2820 = vld [vmem:[#allocation2 + $0x6] sm:$0x3]
    %2822 = vrot.lane.b32.xlu0 %v2716, 96
    %v2823 = vpop.permute.xlu0 %2822
    %v2824 = vsel %vm302, %v2823, 0
    %2826 = vmatprep.subr.mxu0 0.0
    %2827 = vmatpush1.msra.mxu0 %v2184
    %2828 = vmatprep.subr.mxu0 0.0
    %2829 = vmatpush1.msra.mxu0 %v2185
    %2830 = vmatprep.subr.mxu0 0.0
    %2831 = vmatpush1.msra.mxu0 %v2186
    %2832 = vmatprep.subr.mxu0 0.0
    %2833 = vmatpush1.msra.mxu0 %v2187
    %2834 = vmatprep.subr.mxu0 0.0
    %2835 = vmatpush1.msra.mxu0 0.0
    %2836 = vmatprep.subr.mxu0 0.0
    %2837 = vmatpush1.msra.mxu0 0.0
    %2838 = vmatprep.subr.mxu0 0.0
    %2839 = vmatpush1.msra.mxu0 0.0
    %2840 = vmatprep.subr.mxu0 0.0
    %2841 = vmatpush1.msra.mxu0 0.0
    %2842 = vmatprep.subr.mxu0 0.0
    %2843 = vmatpush1.msra.mxu0 0.0
    %2844 = vmatprep.subr.mxu0 0.0
    %2845 = vmatpush1.msra.mxu0 0.0
    %2846 = vmatprep.subr.mxu0 0.0
    %2847 = vmatpush1.msra.mxu0 0.0
    %2848 = vmatprep.subr.mxu0 0.0
    %2849 = vmatpush1.msra.mxu0 0.0
    %2850 = vmatprep.subr.mxu0 0.0
    %2851 = vmatpush1.msra.mxu0 0.0
    %2852 = vmatprep.subr.mxu0 0.0
    %2853 = vmatpush1.msra.mxu0 0.0
    %2854 = vmatprep.subr.mxu0 0.0
    %2855 = vmatpush1.msra.mxu0 0.0
    %2856 = vmatprep.subr.mxu0 0.0
    %2857 = vmatpush1.msra.mxu0 0.0
    %2858 = vmatprep.subr.mxu0 0.0
    %2859 = vmatpush1.msra.mxu0 0.0
    %2860 = vmatprep.subr.mxu0 0.0
    %2861 = vmatpush1.msra.mxu0 0.0
    %2862 = vmatprep.subr.mxu0 0.0
    %2863 = vmatpush1.msra.mxu0 0.0
    %2864 = vmatprep.subr.mxu0 0.0
    %2865 = vmatpush1.msra.mxu0 0.0
    %2866 = vmatprep.subr.mxu0 0.0
    %2867 = vmatpush1.msra.mxu0 0.0
    %2868 = vmatprep.subr.mxu0 0.0
    %2869 = vmatpush1.msra.mxu0 0.0
    %2870 = vmatprep.subr.mxu0 0.0
    %2871 = vmatpush1.msra.mxu0 0.0
    %2872 = vmatprep.subr.mxu0 0.0
    %2873 = vmatpush1.msra.mxu0 0.0
    %2874 = vmatprep.subr.mxu0 0.0
    %2875 = vmatpush1.msra.mxu0 0.0
    %2876 = vmatprep.subr.mxu0 0.0
    %2877 = vmatpush1.msra.mxu0 0.0
    %2878 = vmatprep.subr.mxu0 0.0
    %2879 = vmatpush1.msra.mxu0 0.0
    %2880 = vmatprep.subr.mxu0 0.0
    %2881 = vmatpush1.msra.mxu0 0.0
    %2882 = vmatprep.subr.mxu0 0.0
    %2883 = vmatpush1.msra.mxu0 0.0
    %2884 = vmatprep.subr.mxu0 0.0
    %2885 = vmatpush1.msra.mxu0 0.0
    %2886 = vmatprep.subr.mxu0 0.0
    %2887 = vmatpush1.msra.mxu0 0.0
    %2888 = vmatprep.subr.mxu0 0.0
    %2889 = vmatpush1.msra.mxu0 0.0
    %2890 = vmatprep.mubr.f32.mxu0 0.0
    %2891 = vmatmul.mubr.f32.gmra.mrb[0].mxu0 %v2824
    %v2892 = vpop.f32.mrb[0].mxu0
    %v2893 = vadd.f32 0.0, %v2892
    %v2894 = vpop.f32.mrb[0].mxu0
    %2895 = vdwg.mxu0
    %v2896 = vadd.f32 %v2820, %v2893
    %v2897 = vxor.u32 %v2896, 2147483648
    %v2898 = vmul.f32 %v2897, 1.442695
    %v2899 = vpow.pop %v2898
    %v2900 = vadd.f32 %v2899, 1.0
    %v2901 = vrcp.pop %v2900
    %v2902 = vmul.f32 1.0, %v2901
    %v2903 = vadd.f32 %v2893, %v2280
    %2905 = vrot.lane.b32.xlu0 %v2903, 64
    %v2906 = vpop.permute.xlu0 %2905
    %v2908 = vmul.f32 %v2902, %v2906
    %2910 = vrot.lane.b32.xlu0 %v2908, 64
    %v2911 = vpop.permute.xlu0 %2910
    %v2913 = vadd.f32 %v2820, %v2911
    %v2914 = vtanh.pop %v2913
    %v2915 = vsub.f32 1.0, %v2902
    %2917 = vrot.lane.b32.xlu0 %v2914, 96
    %v2918 = vpop.permute.xlu0 %2917
    %v2920 = vmul.f32 %v2915, %v2918
    %v2921 = vmul.f32 %v2902, %v2716
    %v2922 = vadd.f32 %v2920, %v2921
    %v2923 = vld [vmem:[#allocation3 + $0x8] sm:$0x3]
    %2925 = vrot.lane.b32.xlu0 %v2819, 96
    %v2926 = vpop.permute.xlu0 %2925
    %v2927 = vsel %vm302, %v2926, 0
    %2929 = vmatprep.subr.mxu0 0.0
    %2930 = vmatpush1.msra.mxu0 %v2189
    %2931 = vmatprep.subr.mxu0 0.0
    %2932 = vmatpush1.msra.mxu0 %v2190
    %2933 = vmatprep.subr.mxu0 0.0
    %2934 = vmatpush1.msra.mxu0 %v2191
    %2935 = vmatprep.subr.mxu0 0.0
    %2936 = vmatpush1.msra.mxu0 %v2192
    %2937 = vmatprep.subr.mxu0 0.0
    %2938 = vmatpush1.msra.mxu0 0.0
    %2939 = vmatprep.subr.mxu0 0.0
    %2940 = vmatpush1.msra.mxu0 0.0
    %2941 = vmatprep.subr.mxu0 0.0
    %2942 = vmatpush1.msra.mxu0 0.0
    %2943 = vmatprep.subr.mxu0 0.0
    %2944 = vmatpush1.msra.mxu0 0.0
    %2945 = vmatprep.subr.mxu0 0.0
    %2946 = vmatpush1.msra.mxu0 0.0
    %2947 = vmatprep.subr.mxu0 0.0
    %2948 = vmatpush1.msra.mxu0 0.0
    %2949 = vmatprep.subr.mxu0 0.0
    %2950 = vmatpush1.msra.mxu0 0.0
    %2951 = vmatprep.subr.mxu0 0.0
    %2952 = vmatpush1.msra.mxu0 0.0
    %2953 = vmatprep.subr.mxu0 0.0
    %2954 = vmatpush1.msra.mxu0 0.0
    %2955 = vmatprep.subr.mxu0 0.0
    %2956 = vmatpush1.msra.mxu0 0.0
    %2957 = vmatprep.subr.mxu0 0.0
    %2958 = vmatpush1.msra.mxu0 0.0
    %2959 = vmatprep.subr.mxu0 0.0
    %2960 = vmatpush1.msra.mxu0 0.0
    %2961 = vmatprep.subr.mxu0 0.0
    %2962 = vmatpush1.msra.mxu0 0.0
    %2963 = vmatprep.subr.mxu0 0.0
    %2964 = vmatpush1.msra.mxu0 0.0
    %2965 = vmatprep.subr.mxu0 0.0
    %2966 = vmatpush1.msra.mxu0 0.0
    %2967 = vmatprep.subr.mxu0 0.0
    %2968 = vmatpush1.msra.mxu0 0.0
    %2969 = vmatprep.subr.mxu0 0.0
    %2970 = vmatpush1.msra.mxu0 0.0
    %2971 = vmatprep.subr.mxu0 0.0
    %2972 = vmatpush1.msra.mxu0 0.0
    %2973 = vmatprep.subr.mxu0 0.0
    %2974 = vmatpush1.msra.mxu0 0.0
    %2975 = vmatprep.subr.mxu0 0.0
    %2976 = vmatpush1.msra.mxu0 0.0
    %2977 = vmatprep.subr.mxu0 0.0
    %2978 = vmatpush1.msra.mxu0 0.0
    %2979 = vmatprep.subr.mxu0 0.0
    %2980 = vmatpush1.msra.mxu0 0.0
    %2981 = vmatprep.subr.mxu0 0.0
    %2982 = vmatpush1.msra.mxu0 0.0
    %2983 = vmatprep.subr.mxu0 0.0
    %2984 = vmatpush1.msra.mxu0 0.0
    %2985 = vmatprep.subr.mxu0 0.0
    %2986 = vmatpush1.msra.mxu0 0.0
    %2987 = vmatprep.subr.mxu0 0.0
    %2988 = vmatpush1.msra.mxu0 0.0
    %2989 = vmatprep.subr.mxu0 0.0
    %2990 = vmatpush1.msra.mxu0 0.0
    %2991 = vmatprep.subr.mxu0 0.0
    %2992 = vmatpush1.msra.mxu0 0.0
    %2993 = vmatprep.mubr.f32.mxu0 0.0
    %2994 = vmatmul.mubr.f32.gmra.mrb[0].mxu0 %v2927
    %v2995 = vpop.f32.mrb[0].mxu0
    %v2996 = vadd.f32 0.0, %v2995
    %v2997 = vpop.f32.mrb[0].mxu0
    %2998 = vdwg.mxu0
    %v2999 = vadd.f32 %v2923, %v2996
    %v3000 = vxor.u32 %v2999, 2147483648
    %v3001 = vmul.f32 %v3000, 1.442695
    %v3002 = vpow.pop %v3001
    %v3003 = vadd.f32 %v3002, 1.0
    %v3004 = vrcp.pop %v3003
    %v3005 = vmul.f32 1.0, %v3004
    %v3006 = vadd.f32 %v2996, %v2386
    %3008 = vrot.lane.b32.xlu0 %v3006, 64
    %v3009 = vpop.permute.xlu0 %3008
    %v3011 = vmul.f32 %v3005, %v3009
    %3013 = vrot.lane.b32.xlu0 %v3011, 64
    %v3014 = vpop.permute.xlu0 %3013
    %v3016 = vadd.f32 %v2923, %v3014
    %v3017 = vtanh.pop %v3016
    %v3018 = vsub.f32 1.0, %v3005
    %3020 = vrot.lane.b32.xlu0 %v3017, 96
    %v3021 = vpop.permute.xlu0 %3020
    %v3023 = vmul.f32 %v3018, %v3021
    %v3024 = vmul.f32 %v3005, %v2819
    %v3025 = vadd.f32 %v3023, %v3024
    %v3026 = vld [vmem:[#allocation2 + $0x8] sm:$0x3]
    %3028 = vrot.lane.b32.xlu0 %v2922, 96
    %v3029 = vpop.permute.xlu0 %3028
    %v3030 = vsel %vm302, %v3029, 0
    %3032 = vmatprep.subr.mxu0 0.0
    %3033 = vmatpush1.msra.mxu0 %v2184
    %3034 = vmatprep.subr.mxu0 0.0
    %3035 = vmatpush1.msra.mxu0 %v2185
    %3036 = vmatprep.subr.mxu0 0.0
    %3037 = vmatpush1.msra.mxu0 %v2186
    %3038 = vmatprep.subr.mxu0 0.0
    %3039 = vmatpush1.msra.mxu0 %v2187
    %3040 = vmatprep.subr.mxu0 0.0
    %3041 = vmatpush1.msra.mxu0 0.0
    %3042 = vmatprep.subr.mxu0 0.0
    %3043 = vmatpush1.msra.mxu0 0.0
    %3044 = vmatprep.subr.mxu0 0.0
    %3045 = vmatpush1.msra.mxu0 0.0
    %3046 = vmatprep.subr.mxu0 0.0
    %3047 = vmatpush1.msra.mxu0 0.0
    %3048 = vmatprep.subr.mxu0 0.0
    %3049 = vmatpush1.msra.mxu0 0.0
    %3050 = vmatprep.subr.mxu0 0.0
    %3051 = vmatpush1.msra.mxu0 0.0
    %3052 = vmatprep.subr.mxu0 0.0
    %3053 = vmatpush1.msra.mxu0 0.0
    %3054 = vmatprep.subr.mxu0 0.0
    %3055 = vmatpush1.msra.mxu0 0.0
    %3056 = vmatprep.subr.mxu0 0.0
    %3057 = vmatpush1.msra.mxu0 0.0
    %3058 = vmatprep.subr.mxu0 0.0
    %3059 = vmatpush1.msra.mxu0 0.0
    %3060 = vmatprep.subr.mxu0 0.0
    %3061 = vmatpush1.msra.mxu0 0.0
    %3062 = vmatprep.subr.mxu0 0.0
    %3063 = vmatpush1.msra.mxu0 0.0
    %3064 = vmatprep.subr.mxu0 0.0
    %3065 = vmatpush1.msra.mxu0 0.0
    %3066 = vmatprep.subr.mxu0 0.0
    %3067 = vmatpush1.msra.mxu0 0.0
    %3068 = vmatprep.subr.mxu0 0.0
    %3069 = vmatpush1.msra.mxu0 0.0
    %3070 = vmatprep.subr.mxu0 0.0
    %3071 = vmatpush1.msra.mxu0 0.0
    %3072 = vmatprep.subr.mxu0 0.0
    %3073 = vmatpush1.msra.mxu0 0.0
    %3074 = vmatprep.subr.mxu0 0.0
    %3075 = vmatpush1.msra.mxu0 0.0
    %3076 = vmatprep.subr.mxu0 0.0
    %3077 = vmatpush1.msra.mxu0 0.0
    %3078 = vmatprep.subr.mxu0 0.0
    %3079 = vmatpush1.msra.mxu0 0.0
    %3080 = vmatprep.subr.mxu0 0.0
    %3081 = vmatpush1.msra.mxu0 0.0
    %3082 = vmatprep.subr.mxu0 0.0
    %3083 = vmatpush1.msra.mxu0 0.0
    %3084 = vmatprep.subr.mxu0 0.0
    %3085 = vmatpush1.msra.mxu0 0.0
    %3086 = vmatprep.subr.mxu0 0.0
    %3087 = vmatpush1.msra.mxu0 0.0
    %3088 = vmatprep.subr.mxu0 0.0
    %3089 = vmatpush1.msra.mxu0 0.0
    %3090 = vmatprep.subr.mxu0 0.0
    %3091 = vmatpush1.msra.mxu0 0.0
    %3092 = vmatprep.subr.mxu0 0.0
    %3093 = vmatpush1.msra.mxu0 0.0
    %3094 = vmatprep.subr.mxu0 0.0
    %3095 = vmatpush1.msra.mxu0 0.0
    %3096 = vmatprep.mubr.f32.mxu0 0.0
    %3097 = vmatmul.mubr.f32.gmra.mrb[0].mxu0 %v3030
    %v3098 = vpop.f32.mrb[0].mxu0
    %v3099 = vadd.f32 0.0, %v3098
    %v3100 = vpop.f32.mrb[0].mxu0
    %3101 = vdwg.mxu0
    %v3102 = vadd.f32 %v3026, %v3099
    %v3103 = vxor.u32 %v3102, 2147483648
    %v3104 = vmul.f32 %v3103, 1.442695
    %v3105 = vpow.pop %v3104
    %v3106 = vadd.f32 %v3105, 1.0
    %v3107 = vrcp.pop %v3106
    %v3108 = vmul.f32 1.0, %v3107
    %v3109 = vadd.f32 %v3099, %v2280
    %3111 = vrot.lane.b32.xlu0 %v3109, 64
    %v3112 = vpop.permute.xlu0 %3111
    %v3114 = vmul.f32 %v3108, %v3112
    %3116 = vrot.lane.b32.xlu0 %v3114, 64
    %v3117 = vpop.permute.xlu0 %3116
    %v3119 = vadd.f32 %v3026, %v3117
    %v3120 = vtanh.pop %v3119
    %v3121 = vsub.f32 1.0, %v3108
    %3123 = vrot.lane.b32.xlu0 %v3120, 96
    %v3124 = vpop.permute.xlu0 %3123
    %v3126 = vmul.f32 %v3121, %v3124
    %v3127 = vmul.f32 %v3108, %v2922
    %v3128 = vadd.f32 %v3126, %v3127
    %v3129 = vld [vmem:[#allocation3 + $0x6] sm:$0x3]
    %3131 = vrot.lane.b32.xlu0 %v3025, 96
    %v3132 = vpop.permute.xlu0 %3131
    %v3133 = vsel %vm302, %v3132, 0
    %3135 = vmatprep.subr.mxu0 0.0
    %3136 = vmatpush1.msra.mxu0 %v2189
    %3137 = vmatprep.subr.mxu0 0.0
    %3138 = vmatpush1.msra.mxu0 %v2190
    %3139 = vmatprep.subr.mxu0 0.0
    %3140 = vmatpush1.msra.mxu0 %v2191
    %3141 = vmatprep.subr.mxu0 0.0
    %3142 = vmatpush1.msra.mxu0 %v2192
    %3143 = vmatprep.subr.mxu0 0.0
    %3144 = vmatpush1.msra.mxu0 0.0
    %3145 = vmatprep.subr.mxu0 0.0
    %3146 = vmatpush1.msra.mxu0 0.0
    %3147 = vmatprep.subr.mxu0 0.0
    %3148 = vmatpush1.msra.mxu0 0.0
    %3149 = vmatprep.subr.mxu0 0.0
    %3150 = vmatpush1.msra.mxu0 0.0
    %3151 = vmatprep.subr.mxu0 0.0
    %3152 = vmatpush1.msra.mxu0 0.0
    %3153 = vmatprep.subr.mxu0 0.0
    %3154 = vmatpush1.msra.mxu0 0.0
    %3155 = vmatprep.subr.mxu0 0.0
    %3156 = vmatpush1.msra.mxu0 0.0
    %3157 = vmatprep.subr.mxu0 0.0
    %3158 = vmatpush1.msra.mxu0 0.0
    %3159 = vmatprep.subr.mxu0 0.0
    %3160 = vmatpush1.msra.mxu0 0.0
    %3161 = vmatprep.subr.mxu0 0.0
    %3162 = vmatpush1.msra.mxu0 0.0
    %3163 = vmatprep.subr.mxu0 0.0
    %3164 = vmatpush1.msra.mxu0 0.0
    %3165 = vmatprep.subr.mxu0 0.0
    %3166 = vmatpush1.msra.mxu0 0.0
    %3167 = vmatprep.subr.mxu0 0.0
    %3168 = vmatpush1.msra.mxu0 0.0
    %3169 = vmatprep.subr.mxu0 0.0
    %3170 = vmatpush1.msra.mxu0 0.0
    %3171 = vmatprep.subr.mxu0 0.0
    %3172 = vmatpush1.msra.mxu0 0.0
    %3173 = vmatprep.subr.mxu0 0.0
    %3174 = vmatpush1.msra.mxu0 0.0
    %3175 = vmatprep.subr.mxu0 0.0
    %3176 = vmatpush1.msra.mxu0 0.0
    %3177 = vmatprep.subr.mxu0 0.0
    %3178 = vmatpush1.msra.mxu0 0.0
    %3179 = vmatprep.subr.mxu0 0.0
    %3180 = vmatpush1.msra.mxu0 0.0
    %3181 = vmatprep.subr.mxu0 0.0
    %3182 = vmatpush1.msra.mxu0 0.0
    %3183 = vmatprep.subr.mxu0 0.0
    %3184 = vmatpush1.msra.mxu0 0.0
    %3185 = vmatprep.subr.mxu0 0.0
    %3186 = vmatpush1.msra.mxu0 0.0
    %3187 = vmatprep.subr.mxu0 0.0
    %3188 = vmatpush1.msra.mxu0 0.0
    %3189 = vmatprep.subr.mxu0 0.0
    %3190 = vmatpush1.msra.mxu0 0.0
    %3191 = vmatprep.subr.mxu0 0.0
    %3192 = vmatpush1.msra.mxu0 0.0
    %3193 = vmatprep.subr.mxu0 0.0
    %3194 = vmatpush1.msra.mxu0 0.0
    %3195 = vmatprep.subr.mxu0 0.0
    %3196 = vmatpush1.msra.mxu0 0.0
    %3197 = vmatprep.subr.mxu0 0.0
    %3198 = vmatpush1.msra.mxu0 0.0
    %3199 = vmatprep.mubr.f32.mxu0 0.0
    %3200 = vmatmul.mubr.f32.gmra.mrb[0].mxu0 %v3133
    %v3201 = vpop.f32.mrb[0].mxu0
    %v3202 = vadd.f32 0.0, %v3201
    %v3203 = vpop.f32.mrb[0].mxu0
    %3204 = vdwg.mxu0
    %v3205 = vadd.f32 %v3129, %v3202
    %v3206 = vxor.u32 %v3205, 2147483648
    %v3207 = vmul.f32 %v3206, 1.442695
    %v3208 = vpow.pop %v3207
    %v3209 = vadd.f32 %v3208, 1.0
    %v3210 = vrcp.pop %v3209
    %v3211 = vmul.f32 1.0, %v3210
    %v3212 = vadd.f32 %v3202, %v2386
    %3214 = vrot.lane.b32.xlu0 %v3212, 64
    %v3215 = vpop.permute.xlu0 %3214
    %v3217 = vmul.f32 %v3211, %v3215
    %3219 = vrot.lane.b32.xlu0 %v3217, 64
    %v3220 = vpop.permute.xlu0 %3219
    %v3222 = vadd.f32 %v3129, %v3220
    %v3223 = vtanh.pop %v3222
    %v3224 = vsub.f32 1.0, %v3211
    %3226 = vrot.lane.b32.xlu0 %v3223, 96
    %v3227 = vpop.permute.xlu0 %3226
    %v3229 = vmul.f32 %v3224, %v3227
    %v3230 = vmul.f32 %v3211, %v3025
    %v3231 = vadd.f32 %v3229, %v3230
    %v3232 = vld [vmem:[#allocation2 + $0xa] sm:$0x3]
    %3234 = vrot.lane.b32.xlu0 %v3128, 96
    %v3235 = vpop.permute.xlu0 %3234
    %v3236 = vsel %vm302, %v3235, 0
    %3238 = vmatprep.subr.mxu0 0.0
    %3239 = vmatpush1.msra.mxu0 %v2184
    %3240 = vmatprep.subr.mxu0 0.0
    %3241 = vmatpush1.msra.mxu0 %v2185
    %3242 = vmatprep.subr.mxu0 0.0
    %3243 = vmatpush1.msra.mxu0 %v2186
    %3244 = vmatprep.subr.mxu0 0.0
    %3245 = vmatpush1.msra.mxu0 %v2187
    %3246 = vmatprep.subr.mxu0 0.0
    %3247 = vmatpush1.msra.mxu0 0.0
    %3248 = vmatprep.subr.mxu0 0.0
    %3249 = vmatpush1.msra.mxu0 0.0
    %3250 = vmatprep.subr.mxu0 0.0
    %3251 = vmatpush1.msra.mxu0 0.0
    %3252 = vmatprep.subr.mxu0 0.0
    %3253 = vmatpush1.msra.mxu0 0.0
    %3254 = vmatprep.subr.mxu0 0.0
    %3255 = vmatpush1.msra.mxu0 0.0
    %3256 = vmatprep.subr.mxu0 0.0
    %3257 = vmatpush1.msra.mxu0 0.0
    %3258 = vmatprep.subr.mxu0 0.0
    %3259 = vmatpush1.msra.mxu0 0.0
    %3260 = vmatprep.subr.mxu0 0.0
    %3261 = vmatpush1.msra.mxu0 0.0
    %3262 = vmatprep.subr.mxu0 0.0
    %3263 = vmatpush1.msra.mxu0 0.0
    %3264 = vmatprep.subr.mxu0 0.0
    %3265 = vmatpush1.msra.mxu0 0.0
    %3266 = vmatprep.subr.mxu0 0.0
    %3267 = vmatpush1.msra.mxu0 0.0
    %3268 = vmatprep.subr.mxu0 0.0
    %3269 = vmatpush1.msra.mxu0 0.0
    %3270 = vmatprep.subr.mxu0 0.0
    %3271 = vmatpush1.msra.mxu0 0.0
    %3272 = vmatprep.subr.mxu0 0.0
    %3273 = vmatpush1.msra.mxu0 0.0
    %3274 = vmatprep.subr.mxu0 0.0
    %3275 = vmatpush1.msra.mxu0 0.0
    %3276 = vmatprep.subr.mxu0 0.0
    %3277 = vmatpush1.msra.mxu0 0.0
    %3278 = vmatprep.subr.mxu0 0.0
    %3279 = vmatpush1.msra.mxu0 0.0
    %3280 = vmatprep.subr.mxu0 0.0
    %3281 = vmatpush1.msra.mxu0 0.0
    %3282 = vmatprep.subr.mxu0 0.0
    %3283 = vmatpush1.msra.mxu0 0.0
    %3284 = vmatprep.subr.mxu0 0.0
    %3285 = vmatpush1.msra.mxu0 0.0
    %3286 = vmatprep.subr.mxu0 0.0
    %3287 = vmatpush1.msra.mxu0 0.0
    %3288 = vmatprep.subr.mxu0 0.0
    %3289 = vmatpush1.msra.mxu0 0.0
    %3290 = vmatprep.subr.mxu0 0.0
    %3291 = vmatpush1.msra.mxu0 0.0
    %3292 = vmatprep.subr.mxu0 0.0
    %3293 = vmatpush1.msra.mxu0 0.0
    %3294 = vmatprep.subr.mxu0 0.0
    %3295 = vmatpush1.msra.mxu0 0.0
    %3296 = vmatprep.subr.mxu0 0.0
    %3297 = vmatpush1.msra.mxu0 0.0
    %3298 = vmatprep.subr.mxu0 0.0
    %3299 = vmatpush1.msra.mxu0 0.0
    %3300 = vmatprep.subr.mxu0 0.0
    %3301 = vmatpush1.msra.mxu0 0.0
    %3302 = vmatprep.mubr.f32.mxu0 0.0
    %3303 = vmatmul.mubr.f32.gmra.mrb[0].mxu0 %v3236
    %v3304 = vpop.f32.mrb[0].mxu0
    %v3305 = vadd.f32 0.0, %v3304
    %v3306 = vpop.f32.mrb[0].mxu0
    %3307 = vdwg.mxu0
    %v3308 = vadd.f32 %v3232, %v3305
    %v3309 = vxor.u32 %v3308, 2147483648
    %v3310 = vmul.f32 %v3309, 1.442695
    %v3311 = vpow.pop %v3310
    %v3312 = vadd.f32 %v3311, 1.0
    %v3313 = vrcp.pop %v3312
    %v3314 = vmul.f32 1.0, %v3313
    %v3315 = vadd.f32 %v3305, %v2280
    %3317 = vrot.lane.b32.xlu0 %v3315, 64
    %v3318 = vpop.permute.xlu0 %3317
    %v3320 = vmul.f32 %v3314, %v3318
    %3322 = vrot.lane.b32.xlu0 %v3320, 64
    %v3323 = vpop.permute.xlu0 %3322
    %v3325 = vadd.f32 %v3232, %v3323
    %v3326 = vtanh.pop %v3325
    %v3327 = vsub.f32 1.0, %v3314
    %3329 = vrot.lane.b32.xlu0 %v3326, 96
    %v3330 = vpop.permute.xlu0 %3329
    %v3332 = vmul.f32 %v3327, %v3330
    %v3333 = vmul.f32 %v3314, %v3128
    %v3334 = vadd.f32 %v3332, %v3333
    %v3335 = vld [vmem:[#allocation3 + $0x4] sm:$0x3]
    %3337 = vrot.lane.b32.xlu0 %v3231, 96
    %v3338 = vpop.permute.xlu0 %3337
    %v3339 = vsel %vm302, %v3338, 0
    %3341 = vmatprep.subr.mxu0 0.0
    %3342 = vmatpush1.msra.mxu0 %v2189
    %3343 = vmatprep.subr.mxu0 0.0
    %3344 = vmatpush1.msra.mxu0 %v2190
    %3345 = vmatprep.subr.mxu0 0.0
    %3346 = vmatpush1.msra.mxu0 %v2191
    %3347 = vmatprep.subr.mxu0 0.0
    %3348 = vmatpush1.msra.mxu0 %v2192
    %3349 = vmatprep.subr.mxu0 0.0
    %3350 = vmatpush1.msra.mxu0 0.0
    %3351 = vmatprep.subr.mxu0 0.0
    %3352 = vmatpush1.msra.mxu0 0.0
    %3353 = vmatprep.subr.mxu0 0.0
    %3354 = vmatpush1.msra.mxu0 0.0
    %3355 = vmatprep.subr.mxu0 0.0
    %3356 = vmatpush1.msra.mxu0 0.0
    %3357 = vmatprep.subr.mxu0 0.0
    %3358 = vmatpush1.msra.mxu0 0.0
    %3359 = vmatprep.subr.mxu0 0.0
    %3360 = vmatpush1.msra.mxu0 0.0
    %3361 = vmatprep.subr.mxu0 0.0
    %3362 = vmatpush1.msra.mxu0 0.0
    %3363 = vmatprep.subr.mxu0 0.0
    %3364 = vmatpush1.msra.mxu0 0.0
    %3365 = vmatprep.subr.mxu0 0.0
    %3366 = vmatpush1.msra.mxu0 0.0
    %3367 = vmatprep.subr.mxu0 0.0
    %3368 = vmatpush1.msra.mxu0 0.0
    %3369 = vmatprep.subr.mxu0 0.0
    %3370 = vmatpush1.msra.mxu0 0.0
    %3371 = vmatprep.subr.mxu0 0.0
    %3372 = vmatpush1.msra.mxu0 0.0
    %3373 = vmatprep.subr.mxu0 0.0
    %3374 = vmatpush1.msra.mxu0 0.0
    %3375 = vmatprep.subr.mxu0 0.0
    %3376 = vmatpush1.msra.mxu0 0.0
    %3377 = vmatprep.subr.mxu0 0.0
    %3378 = vmatpush1.msra.mxu0 0.0
    %3379 = vmatprep.subr.mxu0 0.0
    %3380 = vmatpush1.msra.mxu0 0.0
    %3381 = vmatprep.subr.mxu0 0.0
    %3382 = vmatpush1.msra.mxu0 0.0
    %3383 = vmatprep.subr.mxu0 0.0
    %3384 = vmatpush1.msra.mxu0 0.0
    %3385 = vmatprep.subr.mxu0 0.0
    %3386 = vmatpush1.msra.mxu0 0.0
    %3387 = vmatprep.subr.mxu0 0.0
    %3388 = vmatpush1.msra.mxu0 0.0
    %3389 = vmatprep.subr.mxu0 0.0
    %3390 = vmatpush1.msra.mxu0 0.0
    %3391 = vmatprep.subr.mxu0 0.0
    %3392 = vmatpush1.msra.mxu0 0.0
    %3393 = vmatprep.subr.mxu0 0.0
    %3394 = vmatpush1.msra.mxu0 0.0
    %3395 = vmatprep.subr.mxu0 0.0
    %3396 = vmatpush1.msra.mxu0 0.0
    %3397 = vmatprep.subr.mxu0 0.0
    %3398 = vmatpush1.msra.mxu0 0.0
    %3399 = vmatprep.subr.mxu0 0.0
    %3400 = vmatpush1.msra.mxu0 0.0
    %3401 = vmatprep.subr.mxu0 0.0
    %3402 = vmatpush1.msra.mxu0 0.0
    %3403 = vmatprep.subr.mxu0 0.0
    %3404 = vmatpush1.msra.mxu0 0.0
    %3405 = vmatprep.mubr.f32.mxu0 0.0
    %3406 = vmatmul.mubr.f32.gmra.mrb[0].mxu0 %v3339
    %v3407 = vpop.f32.mrb[0].mxu0
    %v3408 = vadd.f32 0.0, %v3407
    %v3409 = vpop.f32.mrb[0].mxu0
    %3410 = vdwg.mxu0
    %v3411 = vadd.f32 %v3335, %v3408
    %v3412 = vxor.u32 %v3411, 2147483648
    %v3413 = vmul.f32 %v3412, 1.442695
    %v3414 = vpow.pop %v3413
    %v3415 = vadd.f32 %v3414, 1.0
    %v3416 = vrcp.pop %v3415
    %v3417 = vmul.f32 1.0, %v3416
    %v3418 = vadd.f32 %v3408, %v2386
    %3420 = vrot.lane.b32.xlu0 %v3418, 64
    %v3421 = vpop.permute.xlu0 %3420
    %v3423 = vmul.f32 %v3417, %v3421
    %3425 = vrot.lane.b32.xlu0 %v3423, 64
    %v3426 = vpop.permute.xlu0 %3425
    %v3428 = vadd.f32 %v3335, %v3426
    %v3429 = vtanh.pop %v3428
    %v3430 = vsub.f32 1.0, %v3417
    %3432 = vrot.lane.b32.xlu0 %v3429, 96
    %v3433 = vpop.permute.xlu0 %3432
    %v3435 = vmul.f32 %v3430, %v3433
    %v3436 = vmul.f32 %v3417, %v3231
    %v3437 = vadd.f32 %v3435, %v3436
    %v3438 = vld [vmem:[#allocation2 + $0xc] sm:$0x3]
    %3440 = vrot.lane.b32.xlu0 %v3334, 96
    %v3441 = vpop.permute.xlu0 %3440
    %v3442 = vsel %vm302, %v3441, 0
    %3444 = vmatprep.subr.mxu0 0.0
    %3445 = vmatpush1.msra.mxu0 %v2184
    %3446 = vmatprep.subr.mxu0 0.0
    %3447 = vmatpush1.msra.mxu0 %v2185
    %3448 = vmatprep.subr.mxu0 0.0
    %3449 = vmatpush1.msra.mxu0 %v2186
    %3450 = vmatprep.subr.mxu0 0.0
    %3451 = vmatpush1.msra.mxu0 %v2187
    %3452 = vmatprep.subr.mxu0 0.0
    %3453 = vmatpush1.msra.mxu0 0.0
    %3454 = vmatprep.subr.mxu0 0.0
    %3455 = vmatpush1.msra.mxu0 0.0
    %3456 = vmatprep.subr.mxu0 0.0
    %3457 = vmatpush1.msra.mxu0 0.0
    %3458 = vmatprep.subr.mxu0 0.0
    %3459 = vmatpush1.msra.mxu0 0.0
    %3460 = vmatprep.subr.mxu0 0.0
    %3461 = vmatpush1.msra.mxu0 0.0
    %3462 = vmatprep.subr.mxu0 0.0
    %3463 = vmatpush1.msra.mxu0 0.0
    %3464 = vmatprep.subr.mxu0 0.0
    %3465 = vmatpush1.msra.mxu0 0.0
    %3466 = vmatprep.subr.mxu0 0.0
    %3467 = vmatpush1.msra.mxu0 0.0
    %3468 = vmatprep.subr.mxu0 0.0
    %3469 = vmatpush1.msra.mxu0 0.0
    %3470 = vmatprep.subr.mxu0 0.0
    %3471 = vmatpush1.msra.mxu0 0.0
    %3472 = vmatprep.subr.mxu0 0.0
    %3473 = vmatpush1.msra.mxu0 0.0
    %3474 = vmatprep.subr.mxu0 0.0
    %3475 = vmatpush1.msra.mxu0 0.0
    %3476 = vmatprep.subr.mxu0 0.0
    %3477 = vmatpush1.msra.mxu0 0.0
    %3478 = vmatprep.subr.mxu0 0.0
    %3479 = vmatpush1.msra.mxu0 0.0
    %3480 = vmatprep.subr.mxu0 0.0
    %3481 = vmatpush1.msra.mxu0 0.0
    %3482 = vmatprep.subr.mxu0 0.0
    %3483 = vmatpush1.msra.mxu0 0.0
    %3484 = vmatprep.subr.mxu0 0.0
    %3485 = vmatpush1.msra.mxu0 0.0
    %3486 = vmatprep.subr.mxu0 0.0
    %3487 = vmatpush1.msra.mxu0 0.0
    %3488 = vmatprep.subr.mxu0 0.0
    %3489 = vmatpush1.msra.mxu0 0.0
    %3490 = vmatprep.subr.mxu0 0.0
    %3491 = vmatpush1.msra.mxu0 0.0
    %3492 = vmatprep.subr.mxu0 0.0
    %3493 = vmatpush1.msra.mxu0 0.0
    %3494 = vmatprep.subr.mxu0 0.0
    %3495 = vmatpush1.msra.mxu0 0.0
    %3496 = vmatprep.subr.mxu0 0.0
    %3497 = vmatpush1.msra.mxu0 0.0
    %3498 = vmatprep.subr.mxu0 0.0
    %3499 = vmatpush1.msra.mxu0 0.0
    %3500 = vmatprep.subr.mxu0 0.0
    %3501 = vmatpush1.msra.mxu0 0.0
    %3502 = vmatprep.subr.mxu0 0.0
    %3503 = vmatpush1.msra.mxu0 0.0
    %3504 = vmatprep.subr.mxu0 0.0
    %3505 = vmatpush1.msra.mxu0 0.0
    %3506 = vmatprep.subr.mxu0 0.0
    %3507 = vmatpush1.msra.mxu0 0.0
    %3508 = vmatprep.mubr.f32.mxu0 0.0
    %3509 = vmatmul.mubr.f32.gmra.mrb[0].mxu0 %v3442
    %v3510 = vpop.f32.mrb[0].mxu0
    %v3511 = vadd.f32 0.0, %v3510
    %v3512 = vpop.f32.mrb[0].mxu0
    %3513 = vdwg.mxu0
    %v3514 = vadd.f32 %v3438, %v3511
    %v3515 = vxor.u32 %v3514, 2147483648
    %v3516 = vmul.f32 %v3515, 1.442695
    %v3517 = vpow.pop %v3516
    %v3518 = vadd.f32 %v3517, 1.0
    %v3519 = vrcp.pop %v3518
    %v3520 = vmul.f32 1.0, %v3519
    %v3521 = vadd.f32 %v3511, %v2280
    %3523 = vrot.lane.b32.xlu0 %v3521, 64
    %v3524 = vpop.permute.xlu0 %3523
    %v3526 = vmul.f32 %v3520, %v3524
    %3528 = vrot.lane.b32.xlu0 %v3526, 64
    %v3529 = vpop.permute.xlu0 %3528
    %v3531 = vadd.f32 %v3438, %v3529
    %v3532 = vtanh.pop %v3531
    %v3533 = vsub.f32 1.0, %v3520
    %3535 = vrot.lane.b32.xlu0 %v3532, 96
    %v3536 = vpop.permute.xlu0 %3535
    %v3538 = vmul.f32 %v3533, %v3536
    %v3539 = vmul.f32 %v3520, %v3334
    %v3540 = vadd.f32 %v3538, %v3539
    %v3541 = vld [vmem:[#allocation3 + $0x2] sm:$0x3]
    %3543 = vrot.lane.b32.xlu0 %v3437, 96
    %v3544 = vpop.permute.xlu0 %3543
    %v3545 = vsel %vm302, %v3544, 0
    %3547 = vmatprep.subr.mxu0 0.0
    %3548 = vmatpush1.msra.mxu0 %v2189
    %3549 = vmatprep.subr.mxu0 0.0
    %3550 = vmatpush1.msra.mxu0 %v2190
    %3551 = vmatprep.subr.mxu0 0.0
    %3552 = vmatpush1.msra.mxu0 %v2191
    %3553 = vmatprep.subr.mxu0 0.0
    %3554 = vmatpush1.msra.mxu0 %v2192
    %3555 = vmatprep.subr.mxu0 0.0
    %3556 = vmatpush1.msra.mxu0 0.0
    %3557 = vmatprep.subr.mxu0 0.0
    %3558 = vmatpush1.msra.mxu0 0.0
    %3559 = vmatprep.subr.mxu0 0.0
    %3560 = vmatpush1.msra.mxu0 0.0
    %3561 = vmatprep.subr.mxu0 0.0
    %3562 = vmatpush1.msra.mxu0 0.0
    %3563 = vmatprep.subr.mxu0 0.0
    %3564 = vmatpush1.msra.mxu0 0.0
    %3565 = vmatprep.subr.mxu0 0.0
    %3566 = vmatpush1.msra.mxu0 0.0
    %3567 = vmatprep.subr.mxu0 0.0
    %3568 = vmatpush1.msra.mxu0 0.0
    %3569 = vmatprep.subr.mxu0 0.0
    %3570 = vmatpush1.msra.mxu0 0.0
    %3571 = vmatprep.subr.mxu0 0.0
    %3572 = vmatpush1.msra.mxu0 0.0
    %3573 = vmatprep.subr.mxu0 0.0
    %3574 = vmatpush1.msra.mxu0 0.0
    %3575 = vmatprep.subr.mxu0 0.0
    %3576 = vmatpush1.msra.mxu0 0.0
    %3577 = vmatprep.subr.mxu0 0.0
    %3578 = vmatpush1.msra.mxu0 0.0
    %3579 = vmatprep.subr.mxu0 0.0
    %3580 = vmatpush1.msra.mxu0 0.0
    %3581 = vmatprep.subr.mxu0 0.0
    %3582 = vmatpush1.msra.mxu0 0.0
    %3583 = vmatprep.subr.mxu0 0.0
    %3584 = vmatpush1.msra.mxu0 0.0
    %3585 = vmatprep.subr.mxu0 0.0
    %3586 = vmatpush1.msra.mxu0 0.0
    %3587 = vmatprep.subr.mxu0 0.0
    %3588 = vmatpush1.msra.mxu0 0.0
    %3589 = vmatprep.subr.mxu0 0.0
    %3590 = vmatpush1.msra.mxu0 0.0
    %3591 = vmatprep.subr.mxu0 0.0
    %3592 = vmatpush1.msra.mxu0 0.0
    %3593 = vmatprep.subr.mxu0 0.0
    %3594 = vmatpush1.msra.mxu0 0.0
    %3595 = vmatprep.subr.mxu0 0.0
    %3596 = vmatpush1.msra.mxu0 0.0
    %3597 = vmatprep.subr.mxu0 0.0
    %3598 = vmatpush1.msra.mxu0 0.0
    %3599 = vmatprep.subr.mxu0 0.0
    %3600 = vmatpush1.msra.mxu0 0.0
    %3601 = vmatprep.subr.mxu0 0.0
    %3602 = vmatpush1.msra.mxu0 0.0
    %3603 = vmatprep.subr.mxu0 0.0
    %3604 = vmatpush1.msra.mxu0 0.0
    %3605 = vmatprep.subr.mxu0 0.0
    %3606 = vmatpush1.msra.mxu0 0.0
    %3607 = vmatprep.subr.mxu0 0.0
    %3608 = vmatpush1.msra.mxu0 0.0
    %3609 = vmatprep.subr.mxu0 0.0
    %3610 = vmatpush1.msra.mxu0 0.0
    %3611 = vmatprep.mubr.f32.mxu0 0.0
    %3612 = vmatmul.mubr.f32.gmra.mrb[0].mxu0 %v3545
    %v3613 = vpop.f32.mrb[0].mxu0
    %v3614 = vadd.f32 0.0, %v3613
    %v3615 = vpop.f32.mrb[0].mxu0
    %3616 = vdwg.mxu0
    %v3617 = vadd.f32 %v3541, %v3614
    %v3618 = vxor.u32 %v3617, 2147483648
    %v3619 = vmul.f32 %v3618, 1.442695
    %v3620 = vpow.pop %v3619
    %v3621 = vadd.f32 %v3620, 1.0
    %v3622 = vrcp.pop %v3621
    %v3623 = vmul.f32 1.0, %v3622
    %v3624 = vadd.f32 %v3614, %v2386
    %3626 = vrot.lane.b32.xlu0 %v3624, 64
    %v3627 = vpop.permute.xlu0 %3626
    %v3629 = vmul.f32 %v3623, %v3627
    %3631 = vrot.lane.b32.xlu0 %v3629, 64
    %v3632 = vpop.permute.xlu0 %3631
    %v3634 = vadd.f32 %v3541, %v3632
    %v3635 = vtanh.pop %v3634
    %v3636 = vsub.f32 1.0, %v3623
    %3638 = vrot.lane.b32.xlu0 %v3635, 96
    %v3639 = vpop.permute.xlu0 %3638
    %v3641 = vmul.f32 %v3636, %v3639
    %v3642 = vmul.f32 %v3623, %v3437
    %v3643 = vadd.f32 %v3641, %v3642
    %v3644 = vld [vmem:[#allocation2 + $0xe] sm:$0x3]
    %3646 = vrot.lane.b32.xlu0 %v3540, 96
    %v3647 = vpop.permute.xlu0 %3646
    %v3648 = vsel %vm302, %v3647, 0
    %3650 = vmatprep.subr.mxu0 0.0
    %3651 = vmatpush1.msra.mxu0 %v2184
    %3652 = vmatprep.subr.mxu0 0.0
    %3653 = vmatpush1.msra.mxu0 %v2185
    %3654 = vmatprep.subr.mxu0 0.0
    %3655 = vmatpush1.msra.mxu0 %v2186
    %3656 = vmatprep.subr.mxu0 0.0
    %3657 = vmatpush1.msra.mxu0 %v2187
    %3658 = vmatprep.subr.mxu0 0.0
    %3659 = vmatpush1.msra.mxu0 0.0
    %3660 = vmatprep.subr.mxu0 0.0
    %3661 = vmatpush1.msra.mxu0 0.0
    %3662 = vmatprep.subr.mxu0 0.0
    %3663 = vmatpush1.msra.mxu0 0.0
    %3664 = vmatprep.subr.mxu0 0.0
    %3665 = vmatpush1.msra.mxu0 0.0
    %3666 = vmatprep.subr.mxu0 0.0
    %3667 = vmatpush1.msra.mxu0 0.0
    %3668 = vmatprep.subr.mxu0 0.0
    %3669 = vmatpush1.msra.mxu0 0.0
    %3670 = vmatprep.subr.mxu0 0.0
    %3671 = vmatpush1.msra.mxu0 0.0
    %3672 = vmatprep.subr.mxu0 0.0
    %3673 = vmatpush1.msra.mxu0 0.0
    %3674 = vmatprep.subr.mxu0 0.0
    %3675 = vmatpush1.msra.mxu0 0.0
    %3676 = vmatprep.subr.mxu0 0.0
    %3677 = vmatpush1.msra.mxu0 0.0
    %3678 = vmatprep.subr.mxu0 0.0
    %3679 = vmatpush1.msra.mxu0 0.0
    %3680 = vmatprep.subr.mxu0 0.0
    %3681 = vmatpush1.msra.mxu0 0.0
    %3682 = vmatprep.subr.mxu0 0.0
    %3683 = vmatpush1.msra.mxu0 0.0
    %3684 = vmatprep.subr.mxu0 0.0
    %3685 = vmatpush1.msra.mxu0 0.0
    %3686 = vmatprep.subr.mxu0 0.0
    %3687 = vmatpush1.msra.mxu0 0.0
    %3688 = vmatprep.subr.mxu0 0.0
    %3689 = vmatpush1.msra.mxu0 0.0
    %3690 = vmatprep.subr.mxu0 0.0
    %3691 = vmatpush1.msra.mxu0 0.0
    %3692 = vmatprep.subr.mxu0 0.0
    %3693 = vmatpush1.msra.mxu0 0.0
    %3694 = vmatprep.subr.mxu0 0.0
    %3695 = vmatpush1.msra.mxu0 0.0
    %3696 = vmatprep.subr.mxu0 0.0
    %3697 = vmatpush1.msra.mxu0 0.0
    %3698 = vmatprep.subr.mxu0 0.0
    %3699 = vmatpush1.msra.mxu0 0.0
    %3700 = vmatprep.subr.mxu0 0.0
    %3701 = vmatpush1.msra.mxu0 0.0
    %3702 = vmatprep.subr.mxu0 0.0
    %3703 = vmatpush1.msra.mxu0 0.0
    %3704 = vmatprep.subr.mxu0 0.0
    %3705 = vmatpush1.msra.mxu0 0.0
    %3706 = vmatprep.subr.mxu0 0.0
    %3707 = vmatpush1.msra.mxu0 0.0
    %3708 = vmatprep.subr.mxu0 0.0
    %3709 = vmatpush1.msra.mxu0 0.0
    %3710 = vmatprep.subr.mxu0 0.0
    %3711 = vmatpush1.msra.mxu0 0.0
    %3712 = vmatprep.subr.mxu0 0.0
    %3713 = vmatpush1.msra.mxu0 0.0
    %3714 = vmatprep.mubr.f32.mxu0 0.0
    %3715 = vmatmul.mubr.f32.gmra.mrb[0].mxu0 %v3648
    %v3716 = vpop.f32.mrb[0].mxu0
    %v3717 = vadd.f32 0.0, %v3716
    %v3718 = vpop.f32.mrb[0].mxu0
    %3719 = vdwg.mxu0
    %v3720 = vadd.f32 %v3644, %v3717
    %v3721 = vxor.u32 %v3720, 2147483648
    %v3722 = vmul.f32 %v3721, 1.442695
    %v3723 = vpow.pop %v3722
    %v3724 = vadd.f32 %v3723, 1.0
    %v3725 = vrcp.pop %v3724
    %v3726 = vmul.f32 1.0, %v3725
    %v3727 = vadd.f32 %v3717, %v2280
    %3729 = vrot.lane.b32.xlu0 %v3727, 64
    %v3730 = vpop.permute.xlu0 %3729
    %v3732 = vmul.f32 %v3726, %v3730
    %3734 = vrot.lane.b32.xlu0 %v3732, 64
    %v3735 = vpop.permute.xlu0 %3734
    %v3737 = vadd.f32 %v3644, %v3735
    %v3738 = vtanh.pop %v3737
    %v3739 = vsub.f32 1.0, %v3726
    %3741 = vrot.lane.b32.xlu0 %v3738, 96
    %v3742 = vpop.permute.xlu0 %3741
    %v3744 = vmul.f32 %v3739, %v3742
    %v3745 = vmul.f32 %v3726, %v3540
    %v3746 = vadd.f32 %v3744, %v3745
    %v3747 = vld [vmem:[#allocation3] sm:$0x3]
    %3749 = vrot.lane.b32.xlu0 %v3643, 96
    %v3750 = vpop.permute.xlu0 %3749
    %v3751 = vsel %vm302, %v3750, 0
    %3753 = vmatprep.subr.mxu0 0.0
    %3754 = vmatpush1.msra.mxu0 %v2189
    %3755 = vmatprep.subr.mxu0 0.0
    %3756 = vmatpush1.msra.mxu0 %v2190
    %3757 = vmatprep.subr.mxu0 0.0
    %3758 = vmatpush1.msra.mxu0 %v2191
    %3759 = vmatprep.subr.mxu0 0.0
    %3760 = vmatpush1.msra.mxu0 %v2192
    %3761 = vmatprep.subr.mxu0 0.0
    %3762 = vmatpush1.msra.mxu0 0.0
    %3763 = vmatprep.subr.mxu0 0.0
    %3764 = vmatpush1.msra.mxu0 0.0
    %3765 = vmatprep.subr.mxu0 0.0
    %3766 = vmatpush1.msra.mxu0 0.0
    %3767 = vmatprep.subr.mxu0 0.0
    %3768 = vmatpush1.msra.mxu0 0.0
    %3769 = vmatprep.subr.mxu0 0.0
    %3770 = vmatpush1.msra.mxu0 0.0
    %3771 = vmatprep.subr.mxu0 0.0
    %3772 = vmatpush1.msra.mxu0 0.0
    %3773 = vmatprep.subr.mxu0 0.0
    %3774 = vmatpush1.msra.mxu0 0.0
    %3775 = vmatprep.subr.mxu0 0.0
    %3776 = vmatpush1.msra.mxu0 0.0
    %3777 = vmatprep.subr.mxu0 0.0
    %3778 = vmatpush1.msra.mxu0 0.0
    %3779 = vmatprep.subr.mxu0 0.0
    %3780 = vmatpush1.msra.mxu0 0.0
    %3781 = vmatprep.subr.mxu0 0.0
    %3782 = vmatpush1.msra.mxu0 0.0
    %3783 = vmatprep.subr.mxu0 0.0
    %3784 = vmatpush1.msra.mxu0 0.0
    %3785 = vmatprep.subr.mxu0 0.0
    %3786 = vmatpush1.msra.mxu0 0.0
    %3787 = vmatprep.subr.mxu0 0.0
    %3788 = vmatpush1.msra.mxu0 0.0
    %3789 = vmatprep.subr.mxu0 0.0
    %3790 = vmatpush1.msra.mxu0 0.0
    %3791 = vmatprep.subr.mxu0 0.0
    %3792 = vmatpush1.msra.mxu0 0.0
    %3793 = vmatprep.subr.mxu0 0.0
    %3794 = vmatpush1.msra.mxu0 0.0
    %3795 = vmatprep.subr.mxu0 0.0
    %3796 = vmatpush1.msra.mxu0 0.0
    %3797 = vmatprep.subr.mxu0 0.0
    %3798 = vmatpush1.msra.mxu0 0.0
    %3799 = vmatprep.subr.mxu0 0.0
    %3800 = vmatpush1.msra.mxu0 0.0
    %3801 = vmatprep.subr.mxu0 0.0
    %3802 = vmatpush1.msra.mxu0 0.0
    %3803 = vmatprep.subr.mxu0 0.0
    %3804 = vmatpush1.msra.mxu0 0.0
    %3805 = vmatprep.subr.mxu0 0.0
    %3806 = vmatpush1.msra.mxu0 0.0
    %3807 = vmatprep.subr.mxu0 0.0
    %3808 = vmatpush1.msra.mxu0 0.0
    %3809 = vmatprep.subr.mxu0 0.0
    %3810 = vmatpush1.msra.mxu0 0.0
    %3811 = vmatprep.subr.mxu0 0.0
    %3812 = vmatpush1.msra.mxu0 0.0
    %3813 = vmatprep.subr.mxu0 0.0
    %3814 = vmatpush1.msra.mxu0 0.0
    %3815 = vmatprep.subr.mxu0 0.0
    %3816 = vmatpush1.msra.mxu0 0.0
    %3817 = vmatprep.mubr.f32.mxu0 0.0
    %3818 = vmatmul.mubr.f32.gmra.mrb[0].mxu0 %v3751
    %v3819 = vpop.f32.mrb[0].mxu0
    %v3820 = vadd.f32 0.0, %v3819
    %v3821 = vpop.f32.mrb[0].mxu0
    %3822 = vdwg.mxu0
    %v3823 = vadd.f32 %v3747, %v3820
    %v3824 = vxor.u32 %v3823, 2147483648
    %v3825 = vmul.f32 %v3824, 1.442695
    %v3826 = vpow.pop %v3825
    %v3827 = vadd.f32 %v3826, 1.0
    %v3828 = vrcp.pop %v3827
    %v3829 = vmul.f32 1.0, %v3828
    %v3830 = vadd.f32 %v3820, %v2386
    %3832 = vrot.lane.b32.xlu0 %v3830, 64
    %v3833 = vpop.permute.xlu0 %3832
    %v3835 = vmul.f32 %v3829, %v3833
    %3837 = vrot.lane.b32.xlu0 %v3835, 64
    %v3838 = vpop.permute.xlu0 %3837
    %v3840 = vadd.f32 %v3747, %v3838
    %v3841 = vtanh.pop %v3840
    %v3842 = vsub.f32 1.0, %v3829
    %3844 = vrot.lane.b32.xlu0 %v3841, 96
    %v3845 = vpop.permute.xlu0 %3844
    %v3847 = vmul.f32 %v3842, %v3845
    %v3848 = vmul.f32 %v3829, %v3643
    %v3849 = vadd.f32 %v3847, %v3848
    %3851 = vrot.lane.b32.xlu0 %v3746, 96
    %v3852 = vpop.permute.xlu0 %3851
    %v3854 = vsel %vm302, %v3852, %v3849
    %v3855 = vld [vmem:[%s1] sm:$0x3]
    %3857 = vrot.lane.b32.xlu0 %v1988, 16
    %v3858 = vpop.permute.xlu0 %3857
    %v3860 = vsel %vm116, %v3855, %v3858
    %v3861 = vld [vmem:[%s10] sm:$0xff]
    %v3862 = vld [vmem:[%s10 + $0x8] sm:$0xff]
    %v3863 = vld [vmem:[%s10 + $0x10] sm:$0xff]
    %v3864 = vld [vmem:[%s10 + $0x18] sm:$0xff]
    %v3865 = vld [vmem:[%s10 + $0x20] sm:$0xff]
    %v3866 = vld [vmem:[%s10 + $0x28] sm:$0xff]
    %v3867 = vld [vmem:[%s10 + $0x30] sm:$0xff]
    %v3868 = vld [vmem:[%s10 + $0x38] sm:$0xff]
    %v3869 = vld [vmem:[%s10 + $0x40] sm:$0xff]
    %v3870 = vld [vmem:[%s10 + $0x48] sm:$0xff]
    %v3871 = vld [vmem:[%s10 + $0x50] sm:$0xff]
    %v3872 = vld [vmem:[%s10 + $0x58] sm:$0xff]
    %v3873 = vld [vmem:[%s10 + $0x60] sm:$0xff]
    %v3874 = vld [vmem:[%s10 + $0x68] sm:$0xff]
    %v3875 = vld [vmem:[%s10 + $0x70] sm:$0xff]
    %v3876 = vld [vmem:[%s10 + $0x78] sm:$0xff]
    %v3877 = vld [vmem:[%s10 + $0x80] sm:$0xff]
    %v3878 = vld [vmem:[%s10 + $0x88] sm:$0xff]
    %v3879 = vld [vmem:[%s10 + $0x90] sm:$0xff]
    %v3880 = vld [vmem:[%s10 + $0x98] sm:$0xff]
    %v3881 = vld [vmem:[#allocation5] sm:$0x3]
    %v3883 = vlaneseq
    %v3884 = vshrl.u32 %v3883, 7
    %v3885 = vsub.s32 0, %v3884
    %v3886 = vrot.slane %v3881, %v3885
    %v3887 = vlaneseq
    %v3888 = vshrl.u32 %v3887, 7
    %v3889 = vsub.s32 1, %v3888
    %v3890 = vrot.slane %v3881, %v3889
    %vm3893 = vcmask 654336
    %v3895 = vsel %vm3893, %v3860, 0
    %3897 = vmatprep.subr.mxu0 %v3862
    %3898 = vmatpush1.msra.mxu0 %v3861
    %3899 = vmatprep.subr.mxu0 %v3864
    %3900 = vmatpush1.msra.mxu0 %v3863
    %3901 = vmatprep.subr.mxu0 %v3866
    %3902 = vmatpush1.msra.mxu0 %v3865
    %3903 = vmatprep.subr.mxu0 %v3868
    %3904 = vmatpush1.msra.mxu0 %v3867
    %3905 = vmatprep.subr.mxu0 %v3870
    %3906 = vmatpush1.msra.mxu0 %v3869
    %3907 = vmatprep.subr.mxu0 %v3872
    %3908 = vmatpush1.msra.mxu0 %v3871
    %3909 = vmatprep.subr.mxu0 %v3874
    %3910 = vmatpush1.msra.mxu0 %v3873
    %3911 = vmatprep.subr.mxu0 %v3876
    %3912 = vmatpush1.msra.mxu0 %v3875
    %3913 = vmatprep.subr.mxu0 %v3878
    %3914 = vmatpush1.msra.mxu0 %v3877
    %3915 = vmatprep.subr.mxu0 %v3880
    %3916 = vmatpush1.msra.mxu0 %v3879
    %3917 = vmatprep.subr.mxu0 0.0
    %3918 = vmatpush1.msra.mxu0 0.0
    %3919 = vmatprep.subr.mxu0 0.0
    %3920 = vmatpush1.msra.mxu0 0.0
    %3921 = vmatprep.subr.mxu0 0.0
    %3922 = vmatpush1.msra.mxu0 0.0
    %3923 = vmatprep.subr.mxu0 0.0
    %3924 = vmatpush1.msra.mxu0 0.0
    %3925 = vmatprep.subr.mxu0 0.0
    %3926 = vmatpush1.msra.mxu0 0.0
    %3927 = vmatprep.subr.mxu0 0.0
    %3928 = vmatpush1.msra.mxu0 0.0
    %3929 = vmatprep.subr.mxu0 0.0
    %3930 = vmatpush1.msra.mxu0 0.0
    %3931 = vmatprep.subr.mxu0 0.0
    %3932 = vmatpush1.msra.mxu0 0.0
    %3933 = vmatprep.subr.mxu0 0.0
    %3934 = vmatpush1.msra.mxu0 0.0
    %3935 = vmatprep.subr.mxu0 0.0
    %3936 = vmatpush1.msra.mxu0 0.0
    %3937 = vmatprep.subr.mxu0 0.0
    %3938 = vmatpush1.msra.mxu0 0.0
    %3939 = vmatprep.subr.mxu0 0.0
    %3940 = vmatpush1.msra.mxu0 0.0
    %3941 = vmatprep.subr.mxu0 0.0
    %3942 = vmatpush1.msra.mxu0 0.0
    %3943 = vmatprep.subr.mxu0 0.0
    %3944 = vmatpush1.msra.mxu0 0.0
    %3945 = vmatprep.subr.mxu0 0.0
    %3946 = vmatpush1.msra.mxu0 0.0
    %3947 = vmatprep.subr.mxu0 0.0
    %3948 = vmatpush1.msra.mxu0 0.0
    %3949 = vmatprep.subr.mxu0 0.0
    %3950 = vmatpush1.msra.mxu0 0.0
    %3951 = vmatprep.subr.mxu0 0.0
    %3952 = vmatpush1.msra.mxu0 0.0
    %3953 = vmatprep.subr.mxu0 0.0
    %3954 = vmatpush1.msra.mxu0 0.0
    %3955 = vmatprep.subr.mxu0 0.0
    %3956 = vmatpush1.msra.mxu0 0.0
    %3957 = vmatprep.subr.mxu0 0.0
    %3958 = vmatpush1.msra.mxu0 0.0
    %3959 = vmatprep.subr.mxu0 0.0
    %3960 = vmatpush1.msra.mxu0 0.0
    %3961 = vmatprep.mubr.f32.mxu0 0.0
    %3962 = vmatmul.mubr.f32.gmra.mrb[0].mxu0 %v3895
    %v3963 = vpop.f32.mrb[0].mxu0
    %v3964 = vadd.f32 %v3886, %v3963
    %v3965 = vpop.f32.mrb[0].mxu0
    %v3966 = vadd.f32 %v3890, %v3965
    %3967 = vdwg.mxu0
    %v3968 = vxor.u32 %v3964, 2147483648
    %v3969 = vmul.f32 %v3968, 1.442695
    %v3970 = vpow.pop %v3969
    %v3971 = vadd.f32 %v3970, 1.0
    %v3972 = vrcp.pop %v3971
    %v3973 = vmul.f32 1.0, %v3972
    %3975 = vrot.lane.b32.xlu0 %v3966, 64
    %v3976 = vpop.permute.xlu0 %3975
    %v3978 = vmul.f32 %v3973, %v3976
    %v3979 = vadd.f32 %v3966, %v3978
    %v3980 = vtanh.pop %v3979
    %v3981 = vsub.f32 1.0, %v3973
    %3983 = vrot.lane.b32.xlu0 %v3980, 64
    %v3984 = vpop.permute.xlu0 %3983
    %v3986 = vmul.f32 %v3981, %v3984
    %3987 = vrot.lane.b32.xlu0 %v1988, 64
    %v3988 = vpop.permute.xlu0 %3987
    %v3990 = vmul.f32 %v3973, %v3988
    %v3991 = vadd.f32 %v3986, %v3990
    %3993 = vrot.lane.b32.xlu0 %v3991, 64
    %v3994 = vpop.permute.xlu0 %3993
    %3997 = vrot.lane.b32.xlu0 %v3854, 64
    %v3998 = vpop.permute.xlu0 %3997
    %v4000 = vsel %vm2006, %v3994, %v3998
    %v4001 = vld [vmem:[%s12] sm:$0xff]
    %v4002 = vld [vmem:[%s12 + $0x8] sm:$0xff]
    %v4003 = vld [vmem:[%s12 + $0x10] sm:$0xff]
    %v4004 = vld [vmem:[%s12 + $0x18] sm:$0xff]
    %v4005 = vld [vmem:[%s12 + $0x20] sm:$0xff]
    %v4006 = vld [vmem:[%s12 + $0x28] sm:$0xff]
    %v4007 = vld [vmem:[%s12 + $0x30] sm:$0xff]
    %v4008 = vld [vmem:[%s12 + $0x38] sm:$0xff]
    %v4009 = vld [vmem:[%s12 + $0x40] sm:$0xff]
    %v4010 = vld [vmem:[%s12 + $0x48] sm:$0xff]
    %v4011 = vld [vmem:[%s12 + $0x50] sm:$0xff]
    %v4012 = vld [vmem:[%s12 + $0x58] sm:$0xff]
    %v4013 = vld [vmem:[%s12 + $0x60] sm:$0xff]
    %v4014 = vld [vmem:[%s12 + $0x68] sm:$0xff]
    %v4015 = vld [vmem:[%s12 + $0x70] sm:$0xff]
    %v4016 = vld [vmem:[%s12 + $0x78] sm:$0xff]
    %v4017 = vld [vmem:[%s12 + $0x80] sm:$0xff]
    %v4018 = vld [vmem:[%s12 + $0x88] sm:$0xff]
    %v4019 = vld [vmem:[%s12 + $0x90] sm:$0xff]
    %v4020 = vld [vmem:[%s12 + $0x98] sm:$0xff]
    %v4021 = vld [vmem:[%s12 + $0xa0] sm:$0xff]
    %v4022 = vld [vmem:[%s12 + $0xa8] sm:$0xff]
    %v4023 = vld [vmem:[%s12 + $0xb0] sm:$0xff]
    %v4024 = vld [vmem:[%s12 + $0xb8] sm:$0xff]
    %v4025 = vld [vmem:[%s12 + $0xc0] sm:$0xff]
    %v4026 = vld [vmem:[%s12 + $0xc8] sm:$0xff]
    %v4027 = vld [vmem:[%s12 + $0xd0] sm:$0xff]
    %v4028 = vld [vmem:[%s12 + $0xd8] sm:$0xff]
    %v4029 = vld [vmem:[%s12 + $0xe0] sm:$0xff]
    %v4030 = vld [vmem:[%s12 + $0xe8] sm:$0xff]
    %v4031 = vld [vmem:[%s12 + $0xf0] sm:$0xff]
    %v4032 = vld [vmem:[%s12 + $0xf8] sm:$0xff]
    %v4033 = vld [vmem:[#allocation7] sm:$0x3]
    %v4035 = vlaneseq
    %v4036 = vshrl.u32 %v4035, 7
    %v4037 = vsub.s32 0, %v4036
    %v4038 = vrot.slane %v4033, %v4037
    %v4039 = vlaneseq
    %v4040 = vshrl.u32 %v4039, 7
    %v4041 = vsub.s32 1, %v4040
    %v4042 = vrot.slane %v4033, %v4041
    %4045 = vmatprep.subr.mxu0 %v4002
    %4046 = vmatpush1.msra.mxu0 %v4001
    %4047 = vmatprep.subr.mxu0 %v4004
    %4048 = vmatpush1.msra.mxu0 %v4003
    %4049 = vmatprep.subr.mxu0 %v4006
    %4050 = vmatpush1.msra.mxu0 %v4005
    %4051 = vmatprep.subr.mxu0 %v4008
    %4052 = vmatpush1.msra.mxu0 %v4007
    %4053 = vmatprep.subr.mxu0 %v4010
    %4054 = vmatpush1.msra.mxu0 %v4009
    %4055 = vmatprep.subr.mxu0 %v4012
    %4056 = vmatpush1.msra.mxu0 %v4011
    %4057 = vmatprep.subr.mxu0 %v4014
    %4058 = vmatpush1.msra.mxu0 %v4013
    %4059 = vmatprep.subr.mxu0 %v4016
    %4060 = vmatpush1.msra.mxu0 %v4015
    %4061 = vmatprep.subr.mxu0 %v4018
    %4062 = vmatpush1.msra.mxu0 %v4017
    %4063 = vmatprep.subr.mxu0 %v4020
    %4064 = vmatpush1.msra.mxu0 %v4019
    %4065 = vmatprep.subr.mxu0 %v4022
    %4066 = vmatpush1.msra.mxu0 %v4021
    %4067 = vmatprep.subr.mxu0 %v4024
    %4068 = vmatpush1.msra.mxu0 %v4023
    %4069 = vmatprep.subr.mxu0 %v4026
    %4070 = vmatpush1.msra.mxu0 %v4025
    %4071 = vmatprep.subr.mxu0 %v4028
    %4072 = vmatpush1.msra.mxu0 %v4027
    %4073 = vmatprep.subr.mxu0 %v4030
    %4074 = vmatpush1.msra.mxu0 %v4029
    %4075 = vmatprep.subr.mxu0 %v4032
    %4076 = vmatpush1.msra.mxu0 %v4031
    %4077 = vmatprep.subr.mxu0 0.0
    %4078 = vmatpush1.msra.mxu0 0.0
    %4079 = vmatprep.subr.mxu0 0.0
    %4080 = vmatpush1.msra.mxu0 0.0
    %4081 = vmatprep.subr.mxu0 0.0
    %4082 = vmatpush1.msra.mxu0 0.0
    %4083 = vmatprep.subr.mxu0 0.0
    %4084 = vmatpush1.msra.mxu0 0.0
    %4085 = vmatprep.subr.mxu0 0.0
    %4086 = vmatpush1.msra.mxu0 0.0
    %4087 = vmatprep.subr.mxu0 0.0
    %4088 = vmatpush1.msra.mxu0 0.0
    %4089 = vmatprep.subr.mxu0 0.0
    %4090 = vmatpush1.msra.mxu0 0.0
    %4091 = vmatprep.subr.mxu0 0.0
    %4092 = vmatpush1.msra.mxu0 0.0
    %4093 = vmatprep.subr.mxu0 0.0
    %4094 = vmatpush1.msra.mxu0 0.0
    %4095 = vmatprep.subr.mxu0 0.0
    %4096 = vmatpush1.msra.mxu0 0.0
    %4097 = vmatprep.subr.mxu0 0.0
    %4098 = vmatpush1.msra.mxu0 0.0
    %4099 = vmatprep.subr.mxu0 0.0
    %4100 = vmatpush1.msra.mxu0 0.0
    %4101 = vmatprep.subr.mxu0 0.0
    %4102 = vmatpush1.msra.mxu0 0.0
    %4103 = vmatprep.subr.mxu0 0.0
    %4104 = vmatpush1.msra.mxu0 0.0
    %4105 = vmatprep.subr.mxu0 0.0
    %4106 = vmatpush1.msra.mxu0 0.0
    %4107 = vmatprep.subr.mxu0 0.0
    %4108 = vmatpush1.msra.mxu0 0.0
    %4109 = vmatprep.mubr.f32.mxu0 0.0
    %4110 = vmatmul.mubr.f32.gmra.mrb[0].mxu0 %v4000
    %v4111 = vpop.f32.mrb[0].mxu0
    %v4112 = vadd.f32 %v4038, %v4111
    %v4113 = vpop.f32.mrb[0].mxu0
    %v4114 = vadd.f32 %v4042, %v4113
    %4115 = vdwg.mxu0
    %v4116 = vxor.u32 %v4112, 2147483648
    %v4117 = vmul.f32 %v4116, 1.442695
    %v4118 = vpow.pop %v4117
    %v4119 = vadd.f32 %v4118, 1.0
    %v4120 = vrcp.pop %v4119
    %v4121 = vmul.f32 1.0, %v4120
    %4123 = vrot.lane.b32.xlu0 %v4114, 64
    %v4124 = vpop.permute.xlu0 %4123
    %v4126 = vmul.f32 %v4121, %v4124
    %v4127 = vadd.f32 %v4114, %v4126
    %v4128 = vtanh.pop %v4127
    %v4129 = vsub.f32 1.0, %v4121
    %4131 = vrot.lane.b32.xlu0 %v4128, 64
    %v4132 = vpop.permute.xlu0 %4131
    %v4134 = vmul.f32 %v4129, %v4132
    %v4135 = vmul.f32 %v4121, %v3998
    %v4136 = vadd.f32 %v4134, %v4135
    %v4137 = vld [vmem:[#allocation9] sm:$0xff]
    %v4138 = vld [vmem:[#allocation9 + $0x8] sm:$0xff]
    %v4139 = vld [vmem:[#allocation9 + $0x10] sm:$0xff]
    %v4140 = vld [vmem:[#allocation9 + $0x18] sm:$0xff]
    %v4141 = vld [vmem:[#allocation9 + $0x20] sm:$0xff]
    %v4142 = vld [vmem:[#allocation9 + $0x28] sm:$0xff]
    %v4143 = vld [vmem:[#allocation9 + $0x30] sm:$0xff]
    %v4144 = vld [vmem:[#allocation9 + $0x38] sm:$0xff]
    %v4145 = vld [vmem:[#allocation10] sm:$0x1]
    %v4147 = vlaneseq
    %v4148 = vshrl.u32 %v4147, 7
    %v4149 = vsub.s32 0, %v4148
    %v4150 = vrot.slane %v4145, %v4149
    %4153 = vrot.lane.b32.xlu0 %v4136, 64
    %v4154 = vpop.permute.xlu0 %4153
    %v4155 = vsel %vm2006, %v4154, 0
    %4157 = vmatprep.subr.mxu0 0.0
    %4158 = vmatpush1.msra.mxu0 %v4137
    %4159 = vmatprep.subr.mxu0 0.0
    %4160 = vmatpush1.msra.mxu0 %v4138
    %4161 = vmatprep.subr.mxu0 0.0
    %4162 = vmatpush1.msra.mxu0 %v4139
    %4163 = vmatprep.subr.mxu0 0.0
    %4164 = vmatpush1.msra.mxu0 %v4140
    %4165 = vmatprep.subr.mxu0 0.0
    %4166 = vmatpush1.msra.mxu0 %v4141
    %4167 = vmatprep.subr.mxu0 0.0
    %4168 = vmatpush1.msra.mxu0 %v4142
    %4169 = vmatprep.subr.mxu0 0.0
    %4170 = vmatpush1.msra.mxu0 %v4143
    %4171 = vmatprep.subr.mxu0 0.0
    %4172 = vmatpush1.msra.mxu0 %v4144
    %4173 = vmatprep.subr.mxu0 0.0
    %4174 = vmatpush1.msra.mxu0 0.0
    %4175 = vmatprep.subr.mxu0 0.0
    %4176 = vmatpush1.msra.mxu0 0.0
    %4177 = vmatprep.subr.mxu0 0.0
    %4178 = vmatpush1.msra.mxu0 0.0
    %4179 = vmatprep.subr.mxu0 0.0
    %4180 = vmatpush1.msra.mxu0 0.0
    %4181 = vmatprep.subr.mxu0 0.0
    %4182 = vmatpush1.msra.mxu0 0.0
    %4183 = vmatprep.subr.mxu0 0.0
    %4184 = vmatpush1.msra.mxu0 0.0
    %4185 = vmatprep.subr.mxu0 0.0
    %4186 = vmatpush1.msra.mxu0 0.0
    %4187 = vmatprep.subr.mxu0 0.0
    %4188 = vmatpush1.msra.mxu0 0.0
    %4189 = vmatprep.subr.mxu0 0.0
    %4190 = vmatpush1.msra.mxu0 0.0
    %4191 = vmatprep.subr.mxu0 0.0
    %4192 = vmatpush1.msra.mxu0 0.0
    %4193 = vmatprep.subr.mxu0 0.0
    %4194 = vmatpush1.msra.mxu0 0.0
    %4195 = vmatprep.subr.mxu0 0.0
    %4196 = vmatpush1.msra.mxu0 0.0
    %4197 = vmatprep.subr.mxu0 0.0
    %4198 = vmatpush1.msra.mxu0 0.0
    %4199 = vmatprep.subr.mxu0 0.0
    %4200 = vmatpush1.msra.mxu0 0.0
    %4201 = vmatprep.subr.mxu0 0.0
    %4202 = vmatpush1.msra.mxu0 0.0
    %4203 = vmatprep.subr.mxu0 0.0
    %4204 = vmatpush1.msra.mxu0 0.0
    %4205 = vmatprep.subr.mxu0 0.0
    %4206 = vmatpush1.msra.mxu0 0.0
    %4207 = vmatprep.subr.mxu0 0.0
    %4208 = vmatpush1.msra.mxu0 0.0
    %4209 = vmatprep.subr.mxu0 0.0
    %4210 = vmatpush1.msra.mxu0 0.0
    %4211 = vmatprep.subr.mxu0 0.0
    %4212 = vmatpush1.msra.mxu0 0.0
    %4213 = vmatprep.subr.mxu0 0.0
    %4214 = vmatpush1.msra.mxu0 0.0
    %4215 = vmatprep.subr.mxu0 0.0
    %4216 = vmatpush1.msra.mxu0 0.0
    %4217 = vmatprep.subr.mxu0 0.0
    %4218 = vmatpush1.msra.mxu0 0.0
    %4219 = vmatprep.subr.mxu0 0.0
    %4220 = vmatpush1.msra.mxu0 0.0
    %4221 = vmatprep.mubr.f32.mxu0 0.0
    %4222 = vmatmul.mubr.f32.gmra.mrb[0].mxu0 %v4155
    %v4223 = vpop.f32.mrb[0].mxu0
    %v4224 = vadd.f32 %v4150, %v4223
    %v4225 = vpop.f32.mrb[0].mxu0
    %4226 = vdwg.mxu0
    %4227 = vst [vmem:[%s17] sm:$0x3] %v4224
    %s4228 = scalar_lea.vmem %s1, 2
    %v4229 = vld [vmem:[%s4228] sm:$0x3]
    %4230 = vrot.lane.b32.xlu0 %v3991, 80
    %v4231 = vpop.permute.xlu0 %4230
    %v4233 = vsel %vm116, %v4229, %v4231
    %v4234 = vld [vmem:[%s10] sm:$0xff]
    %v4235 = vld [vmem:[%s10 + $0x8] sm:$0xff]
    %v4236 = vld [vmem:[%s10 + $0x10] sm:$0xff]
    %v4237 = vld [vmem:[%s10 + $0x18] sm:$0xff]
    %v4238 = vld [vmem:[%s10 + $0x20] sm:$0xff]
    %v4239 = vld [vmem:[%s10 + $0x28] sm:$0xff]
    %v4240 = vld [vmem:[%s10 + $0x30] sm:$0xff]
    %v4241 = vld [vmem:[%s10 + $0x38] sm:$0xff]
    %v4242 = vld [vmem:[%s10 + $0x40] sm:$0xff]
    %v4243 = vld [vmem:[%s10 + $0x48] sm:$0xff]
    %v4244 = vld [vmem:[%s10 + $0x50] sm:$0xff]
    %v4245 = vld [vmem:[%s10 + $0x58] sm:$0xff]
    %v4246 = vld [vmem:[%s10 + $0x60] sm:$0xff]
    %v4247 = vld [vmem:[%s10 + $0x68] sm:$0xff]
    %v4248 = vld [vmem:[%s10 + $0x70] sm:$0xff]
    %v4249 = vld [vmem:[%s10 + $0x78] sm:$0xff]
    %v4250 = vld [vmem:[%s10 + $0x80] sm:$0xff]
    %v4251 = vld [vmem:[%s10 + $0x88] sm:$0xff]
    %v4252 = vld [vmem:[%s10 + $0x90] sm:$0xff]
    %v4253 = vld [vmem:[%s10 + $0x98] sm:$0xff]
    %v4254 = vld [vmem:[#allocation5] sm:$0x3]
    %v4256 = vlaneseq
    %v4257 = vshrl.u32 %v4256, 7
    %v4258 = vsub.s32 0, %v4257
    %v4259 = vrot.slane %v4254, %v4258
    %v4260 = vlaneseq
    %v4261 = vshrl.u32 %v4260, 7
    %v4262 = vsub.s32 1, %v4261
    %v4263 = vrot.slane %v4254, %v4262
    %v4267 = vsel %vm3893, %v4233, 0
    %4269 = vmatprep.subr.mxu0 %v4235
    %4270 = vmatpush1.msra.mxu0 %v4234
    %4271 = vmatprep.subr.mxu0 %v4237
    %4272 = vmatpush1.msra.mxu0 %v4236
    %4273 = vmatprep.subr.mxu0 %v4239
    %4274 = vmatpush1.msra.mxu0 %v4238
    %4275 = vmatprep.subr.mxu0 %v4241
    %4276 = vmatpush1.msra.mxu0 %v4240
    %4277 = vmatprep.subr.mxu0 %v4243
    %4278 = vmatpush1.msra.mxu0 %v4242
    %4279 = vmatprep.subr.mxu0 %v4245
    %4280 = vmatpush1.msra.mxu0 %v4244
    %4281 = vmatprep.subr.mxu0 %v4247
    %4282 = vmatpush1.msra.mxu0 %v4246
    %4283 = vmatprep.subr.mxu0 %v4249
    %4284 = vmatpush1.msra.mxu0 %v4248
    %4285 = vmatprep.subr.mxu0 %v4251
    %4286 = vmatpush1.msra.mxu0 %v4250
    %4287 = vmatprep.subr.mxu0 %v4253
    %4288 = vmatpush1.msra.mxu0 %v4252
    %4289 = vmatprep.subr.mxu0 0.0
    %4290 = vmatpush1.msra.mxu0 0.0
    %4291 = vmatprep.subr.mxu0 0.0
    %4292 = vmatpush1.msra.mxu0 0.0
    %4293 = vmatprep.subr.mxu0 0.0
    %4294 = vmatpush1.msra.mxu0 0.0
    %4295 = vmatprep.subr.mxu0 0.0
    %4296 = vmatpush1.msra.mxu0 0.0
    %4297 = vmatprep.subr.mxu0 0.0
    %4298 = vmatpush1.msra.mxu0 0.0
    %4299 = vmatprep.subr.mxu0 0.0
    %4300 = vmatpush1.msra.mxu0 0.0
    %4301 = vmatprep.subr.mxu0 0.0
    %4302 = vmatpush1.msra.mxu0 0.0
    %4303 = vmatprep.subr.mxu0 0.0
    %4304 = vmatpush1.msra.mxu0 0.0
    %4305 = vmatprep.subr.mxu0 0.0
    %4306 = vmatpush1.msra.mxu0 0.0
    %4307 = vmatprep.subr.mxu0 0.0
    %4308 = vmatpush1.msra.mxu0 0.0
    %4309 = vmatprep.subr.mxu0 0.0
    %4310 = vmatpush1.msra.mxu0 0.0
    %4311 = vmatprep.subr.mxu0 0.0
    %4312 = vmatpush1.msra.mxu0 0.0
    %4313 = vmatprep.subr.mxu0 0.0
    %4314 = vmatpush1.msra.mxu0 0.0
    %4315 = vmatprep.subr.mxu0 0.0
    %4316 = vmatpush1.msra.mxu0 0.0
    %4317 = vmatprep.subr.mxu0 0.0
    %4318 = vmatpush1.msra.mxu0 0.0
    %4319 = vmatprep.subr.mxu0 0.0
    %4320 = vmatpush1.msra.mxu0 0.0
    %4321 = vmatprep.subr.mxu0 0.0
    %4322 = vmatpush1.msra.mxu0 0.0
    %4323 = vmatprep.subr.mxu0 0.0
    %4324 = vmatpush1.msra.mxu0 0.0
    %4325 = vmatprep.subr.mxu0 0.0
    %4326 = vmatpush1.msra.mxu0 0.0
    %4327 = vmatprep.subr.mxu0 0.0
    %4328 = vmatpush1.msra.mxu0 0.0
    %4329 = vmatprep.subr.mxu0 0.0
    %4330 = vmatpush1.msra.mxu0 0.0
    %4331 = vmatprep.subr.mxu0 0.0
    %4332 = vmatpush1.msra.mxu0 0.0
    %4333 = vmatprep.mubr.f32.mxu0 0.0
    %4334 = vmatmul.mubr.f32.gmra.mrb[0].mxu0 %v4267
    %v4335 = vpop.f32.mrb[0].mxu0
    %v4336 = vadd.f32 %v4259, %v4335
    %v4337 = vpop.f32.mrb[0].mxu0
    %v4338 = vadd.f32 %v4263, %v4337
    %4339 = vdwg.mxu0
    %v4340 = vxor.u32 %v4336, 2147483648
    %v4341 = vmul.f32 %v4340, 1.442695
    %v4342 = vpow.pop %v4341
    %v4343 = vadd.f32 %v4342, 1.0
    %v4344 = vrcp.pop %v4343
    %v4345 = vmul.f32 1.0, %v4344
    %4347 = vrot.lane.b32.xlu0 %v4338, 64
    %v4348 = vpop.permute.xlu0 %4347
    %v4350 = vmul.f32 %v4345, %v4348
    %v4351 = vadd.f32 %v4338, %v4350
    %v4352 = vtanh.pop %v4351
    %v4353 = vsub.f32 1.0, %v4345
    %4355 = vrot.lane.b32.xlu0 %v4352, 64
    %v4356 = vpop.permute.xlu0 %4355
    %v4358 = vmul.f32 %v4353, %v4356
    %v4359 = vmul.f32 %v4345, %v3991
    %v4360 = vadd.f32 %v4358, %v4359
    %4362 = vrot.lane.b32.xlu0 %v4360, 64
    %v4363 = vpop.permute.xlu0 %4362
    %v4365 = vsel %vm2006, %v4363, %v4136
    %v4366 = vld [vmem:[%s12] sm:$0xff]
    %v4367 = vld [vmem:[%s12 + $0x8] sm:$0xff]
    %v4368 = vld [vmem:[%s12 + $0x10] sm:$0xff]
    %v4369 = vld [vmem:[%s12 + $0x18] sm:$0xff]
    %v4370 = vld [vmem:[%s12 + $0x20] sm:$0xff]
    %v4371 = vld [vmem:[%s12 + $0x28] sm:$0xff]
    %v4372 = vld [vmem:[%s12 + $0x30] sm:$0xff]
    %v4373 = vld [vmem:[%s12 + $0x38] sm:$0xff]
    %v4374 = vld [vmem:[%s12 + $0x40] sm:$0xff]
    %v4375 = vld [vmem:[%s12 + $0x48] sm:$0xff]
    %v4376 = vld [vmem:[%s12 + $0x50] sm:$0xff]
    %v4377 = vld [vmem:[%s12 + $0x58] sm:$0xff]
    %v4378 = vld [vmem:[%s12 + $0x60] sm:$0xff]
    %v4379 = vld [vmem:[%s12 + $0x68] sm:$0xff]
    %v4380 = vld [vmem:[%s12 + $0x70] sm:$0xff]
    %v4381 = vld [vmem:[%s12 + $0x78] sm:$0xff]
    %v4382 = vld [vmem:[%s12 + $0x80] sm:$0xff]
    %v4383 = vld [vmem:[%s12 + $0x88] sm:$0xff]
    %v4384 = vld [vmem:[%s12 + $0x90] sm:$0xff]
    %v4385 = vld [vmem:[%s12 + $0x98] sm:$0xff]
    %v4386 = vld [vmem:[%s12 + $0xa0] sm:$0xff]
    %v4387 = vld [vmem:[%s12 + $0xa8] sm:$0xff]
    %v4388 = vld [vmem:[%s12 + $0xb0] sm:$0xff]
    %v4389 = vld [vmem:[%s12 + $0xb8] sm:$0xff]
    %v4390 = vld [vmem:[%s12 + $0xc0] sm:$0xff]
    %v4391 = vld [vmem:[%s12 + $0xc8] sm:$0xff]
    %v4392 = vld [vmem:[%s12 + $0xd0] sm:$0xff]
    %v4393 = vld [vmem:[%s12 + $0xd8] sm:$0xff]
    %v4394 = vld [vmem:[%s12 + $0xe0] sm:$0xff]
    %v4395 = vld [vmem:[%s12 + $0xe8] sm:$0xff]
    %v4396 = vld [vmem:[%s12 + $0xf0] sm:$0xff]
    %v4397 = vld [vmem:[%s12 + $0xf8] sm:$0xff]
    %v4398 = vld [vmem:[#allocation7] sm:$0x3]
    %v4400 = vlaneseq
    %v4401 = vshrl.u32 %v4400, 7
    %v4402 = vsub.s32 0, %v4401
    %v4403 = vrot.slane %v4398, %v4402
    %v4404 = vlaneseq
    %v4405 = vshrl.u32 %v4404, 7
    %v4406 = vsub.s32 1, %v4405
    %v4407 = vrot.slane %v4398, %v4406
    %4410 = vmatprep.subr.mxu0 %v4367
    %4411 = vmatpush1.msra.mxu0 %v4366
    %4412 = vmatprep.subr.mxu0 %v4369
    %4413 = vmatpush1.msra.mxu0 %v4368
    %4414 = vmatprep.subr.mxu0 %v4371
    %4415 = vmatpush1.msra.mxu0 %v4370
    %4416 = vmatprep.subr.mxu0 %v4373
    %4417 = vmatpush1.msra.mxu0 %v4372
    %4418 = vmatprep.subr.mxu0 %v4375
    %4419 = vmatpush1.msra.mxu0 %v4374
    %4420 = vmatprep.subr.mxu0 %v4377
    %4421 = vmatpush1.msra.mxu0 %v4376
    %4422 = vmatprep.subr.mxu0 %v4379
    %4423 = vmatpush1.msra.mxu0 %v4378
    %4424 = vmatprep.subr.mxu0 %v4381
    %4425 = vmatpush1.msra.mxu0 %v4380
    %4426 = vmatprep.subr.mxu0 %v4383
    %4427 = vmatpush1.msra.mxu0 %v4382
    %4428 = vmatprep.subr.mxu0 %v4385
    %4429 = vmatpush1.msra.mxu0 %v4384
    %4430 = vmatprep.subr.mxu0 %v4387
    %4431 = vmatpush1.msra.mxu0 %v4386
    %4432 = vmatprep.subr.mxu0 %v4389
    %4433 = vmatpush1.msra.mxu0 %v4388
    %4434 = vmatprep.subr.mxu0 %v4391
    %4435 = vmatpush1.msra.mxu0 %v4390
    %4436 = vmatprep.subr.mxu0 %v4393
    %4437 = vmatpush1.msra.mxu0 %v4392
    %4438 = vmatprep.subr.mxu0 %v4395
    %4439 = vmatpush1.msra.mxu0 %v4394
    %4440 = vmatprep.subr.mxu0 %v4397
    %4441 = vmatpush1.msra.mxu0 %v4396
    %4442 = vmatprep.subr.mxu0 0.0
    %4443 = vmatpush1.msra.mxu0 0.0
    %4444 = vmatprep.subr.mxu0 0.0
    %4445 = vmatpush1.msra.mxu0 0.0
    %4446 = vmatprep.subr.mxu0 0.0
    %4447 = vmatpush1.msra.mxu0 0.0
    %4448 = vmatprep.subr.mxu0 0.0
    %4449 = vmatpush1.msra.mxu0 0.0
    %4450 = vmatprep.subr.mxu0 0.0
    %4451 = vmatpush1.msra.mxu0 0.0
    %4452 = vmatprep.subr.mxu0 0.0
    %4453 = vmatpush1.msra.mxu0 0.0
    %4454 = vmatprep.subr.mxu0 0.0
    %4455 = vmatpush1.msra.mxu0 0.0
    %4456 = vmatprep.subr.mxu0 0.0
    %4457 = vmatpush1.msra.mxu0 0.0
    %4458 = vmatprep.subr.mxu0 0.0
    %4459 = vmatpush1.msra.mxu0 0.0
    %4460 = vmatprep.subr.mxu0 0.0
    %4461 = vmatpush1.msra.mxu0 0.0
    %4462 = vmatprep.subr.mxu0 0.0
    %4463 = vmatpush1.msra.mxu0 0.0
    %4464 = vmatprep.subr.mxu0 0.0
    %4465 = vmatpush1.msra.mxu0 0.0
    %4466 = vmatprep.subr.mxu0 0.0
    %4467 = vmatpush1.msra.mxu0 0.0
    %4468 = vmatprep.subr.mxu0 0.0
    %4469 = vmatpush1.msra.mxu0 0.0
    %4470 = vmatprep.subr.mxu0 0.0
    %4471 = vmatpush1.msra.mxu0 0.0
    %4472 = vmatprep.subr.mxu0 0.0
    %4473 = vmatpush1.msra.mxu0 0.0
    %4474 = vmatprep.mubr.f32.mxu0 0.0
    %4475 = vmatmul.mubr.f32.gmra.mrb[0].mxu0 %v4365
    %v4476 = vpop.f32.mrb[0].mxu0
    %v4477 = vadd.f32 %v4403, %v4476
    %v4478 = vpop.f32.mrb[0].mxu0
    %v4479 = vadd.f32 %v4407, %v4478
    %4480 = vdwg.mxu0
    %v4481 = vxor.u32 %v4477, 2147483648
    %v4482 = vmul.f32 %v4481, 1.442695
    %v4483 = vpow.pop %v4482
    %v4484 = vadd.f32 %v4483, 1.0
    %v4485 = vrcp.pop %v4484
    %v4486 = vmul.f32 1.0, %v4485
    %4488 = vrot.lane.b32.xlu0 %v4479, 64
    %v4489 = vpop.permute.xlu0 %4488
    %v4491 = vmul.f32 %v4486, %v4489
    %v4492 = vadd.f32 %v4479, %v4491
    %v4493 = vtanh.pop %v4492
    %v4494 = vsub.f32 1.0, %v4486
    %4496 = vrot.lane.b32.xlu0 %v4493, 64
    %v4497 = vpop.permute.xlu0 %4496
    %v4499 = vmul.f32 %v4494, %v4497
    %v4500 = vmul.f32 %v4486, %v4136
    %v4501 = vadd.f32 %v4499, %v4500
    %v4502 = vld [vmem:[#allocation9] sm:$0xff]
    %v4503 = vld [vmem:[#allocation9 + $0x8] sm:$0xff]
    %v4504 = vld [vmem:[#allocation9 + $0x10] sm:$0xff]
    %v4505 = vld [vmem:[#allocation9 + $0x18] sm:$0xff]
    %v4506 = vld [vmem:[#allocation9 + $0x20] sm:$0xff]
    %v4507 = vld [vmem:[#allocation9 + $0x28] sm:$0xff]
    %v4508 = vld [vmem:[#allocation9 + $0x30] sm:$0xff]
    %v4509 = vld [vmem:[#allocation9 + $0x38] sm:$0xff]
    %v4510 = vld [vmem:[#allocation10] sm:$0x1]
    %v4512 = vlaneseq
    %v4513 = vshrl.u32 %v4512, 7
    %v4514 = vsub.s32 0, %v4513
    %v4515 = vrot.slane %v4510, %v4514
    %4518 = vrot.lane.b32.xlu0 %v4501, 64
    %v4519 = vpop.permute.xlu0 %4518
    %v4520 = vsel %vm2006, %v4519, 0
    %4522 = vmatprep.subr.mxu0 0.0
    %4523 = vmatpush1.msra.mxu0 %v4502
    %4524 = vmatprep.subr.mxu0 0.0
    %4525 = vmatpush1.msra.mxu0 %v4503
    %4526 = vmatprep.subr.mxu0 0.0
    %4527 = vmatpush1.msra.mxu0 %v4504
    %4528 = vmatprep.subr.mxu0 0.0
    %4529 = vmatpush1.msra.mxu0 %v4505
    %4530 = vmatprep.subr.mxu0 0.0
    %4531 = vmatpush1.msra.mxu0 %v4506
    %4532 = vmatprep.subr.mxu0 0.0
    %4533 = vmatpush1.msra.mxu0 %v4507
    %4534 = vmatprep.subr.mxu0 0.0
    %4535 = vmatpush1.msra.mxu0 %v4508
    %4536 = vmatprep.subr.mxu0 0.0
    %4537 = vmatpush1.msra.mxu0 %v4509
    %4538 = vmatprep.subr.mxu0 0.0
    %4539 = vmatpush1.msra.mxu0 0.0
    %4540 = vmatprep.subr.mxu0 0.0
    %4541 = vmatpush1.msra.mxu0 0.0
    %4542 = vmatprep.subr.mxu0 0.0
    %4543 = vmatpush1.msra.mxu0 0.0
    %4544 = vmatprep.subr.mxu0 0.0
    %4545 = vmatpush1.msra.mxu0 0.0
    %4546 = vmatprep.subr.mxu0 0.0
    %4547 = vmatpush1.msra.mxu0 0.0
    %4548 = vmatprep.subr.mxu0 0.0
    %4549 = vmatpush1.msra.mxu0 0.0
    %4550 = vmatprep.subr.mxu0 0.0
    %4551 = vmatpush1.msra.mxu0 0.0
    %4552 = vmatprep.subr.mxu0 0.0
    %4553 = vmatpush1.msra.mxu0 0.0
    %4554 = vmatprep.subr.mxu0 0.0
    %4555 = vmatpush1.msra.mxu0 0.0
    %4556 = vmatprep.subr.mxu0 0.0
    %4557 = vmatpush1.msra.mxu0 0.0
    %4558 = vmatprep.subr.mxu0 0.0
    %4559 = vmatpush1.msra.mxu0 0.0
    %4560 = vmatprep.subr.mxu0 0.0
    %4561 = vmatpush1.msra.mxu0 0.0
    %4562 = vmatprep.subr.mxu0 0.0
    %4563 = vmatpush1.msra.mxu0 0.0
    %4564 = vmatprep.subr.mxu0 0.0
    %4565 = vmatpush1.msra.mxu0 0.0
    %4566 = vmatprep.subr.mxu0 0.0
    %4567 = vmatpush1.msra.mxu0 0.0
    %4568 = vmatprep.subr.mxu0 0.0
    %4569 = vmatpush1.msra.mxu0 0.0
    %4570 = vmatprep.subr.mxu0 0.0
    %4571 = vmatpush1.msra.mxu0 0.0
    %4572 = vmatprep.subr.mxu0 0.0
    %4573 = vmatpush1.msra.mxu0 0.0
    %4574 = vmatprep.subr.mxu0 0.0
    %4575 = vmatpush1.msra.mxu0 0.0
    %4576 = vmatprep.subr.mxu0 0.0
    %4577 = vmatpush1.msra.mxu0 0.0
    %4578 = vmatprep.subr.mxu0 0.0
    %4579 = vmatpush1.msra.mxu0 0.0
    %4580 = vmatprep.subr.mxu0 0.0
    %4581 = vmatpush1.msra.mxu0 0.0
    %4582 = vmatprep.subr.mxu0 0.0
    %4583 = vmatpush1.msra.mxu0 0.0
    %4584 = vmatprep.subr.mxu0 0.0
    %4585 = vmatpush1.msra.mxu0 0.0
    %4586 = vmatprep.mubr.f32.mxu0 0.0
    %4587 = vmatmul.mubr.f32.gmra.mrb[0].mxu0 %v4520
    %v4588 = vpop.f32.mrb[0].mxu0
    %v4589 = vadd.f32 %v4515, %v4588
    %v4590 = vpop.f32.mrb[0].mxu0
    %4591 = vdwg.mxu0
    %s4592 = scalar_lea.vmem %s17, 2
    %4593 = vst [vmem:[%s4592] sm:$0x3] %v4589
    %s4594 = scalar_lea.vmem %s1, 4
    %v4595 = vld [vmem:[%s4594] sm:$0x3]
    %4596 = vrot.lane.b32.xlu0 %v4360, 80
    %v4597 = vpop.permute.xlu0 %4596
    %v4599 = vsel %vm116, %v4595, %v4597
    %v4600 = vld [vmem:[%s10] sm:$0xff]
    %v4601 = vld [vmem:[%s10 + $0x8] sm:$0xff]
    %v4602 = vld [vmem:[%s10 + $0x10] sm:$0xff]
    %v4603 = vld [vmem:[%s10 + $0x18] sm:$0xff]
    %v4604 = vld [vmem:[%s10 + $0x20] sm:$0xff]
    %v4605 = vld [vmem:[%s10 + $0x28] sm:$0xff]
    %v4606 = vld [vmem:[%s10 + $0x30] sm:$0xff]
    %v4607 = vld [vmem:[%s10 + $0x38] sm:$0xff]
    %v4608 = vld [vmem:[%s10 + $0x40] sm:$0xff]
    %v4609 = vld [vmem:[%s10 + $0x48] sm:$0xff]
    %v4610 = vld [vmem:[%s10 + $0x50] sm:$0xff]
    %v4611 = vld [vmem:[%s10 + $0x58] sm:$0xff]
    %v4612 = vld [vmem:[%s10 + $0x60] sm:$0xff]
    %v4613 = vld [vmem:[%s10 + $0x68] sm:$0xff]
    %v4614 = vld [vmem:[%s10 + $0x70] sm:$0xff]
    %v4615 = vld [vmem:[%s10 + $0x78] sm:$0xff]
    %v4616 = vld [vmem:[%s10 + $0x80] sm:$0xff]
    %v4617 = vld [vmem:[%s10 + $0x88] sm:$0xff]
    %v4618 = vld [vmem:[%s10 + $0x90] sm:$0xff]
    %v4619 = vld [vmem:[%s10 + $0x98] sm:$0xff]
    %v4620 = vld [vmem:[#allocation5] sm:$0x3]
    %v4622 = vlaneseq
    %v4623 = vshrl.u32 %v4622, 7
    %v4624 = vsub.s32 0, %v4623
    %v4625 = vrot.slane %v4620, %v4624
    %v4626 = vlaneseq
    %v4627 = vshrl.u32 %v4626, 7
    %v4628 = vsub.s32 1, %v4627
    %v4629 = vrot.slane %v4620, %v4628
    %v4633 = vsel %vm3893, %v4599, 0
    %4635 = vmatprep.subr.mxu0 %v4601
    %4636 = vmatpush1.msra.mxu0 %v4600
    %4637 = vmatprep.subr.mxu0 %v4603
    %4638 = vmatpush1.msra.mxu0 %v4602
    %4639 = vmatprep.subr.mxu0 %v4605
    %4640 = vmatpush1.msra.mxu0 %v4604
    %4641 = vmatprep.subr.mxu0 %v4607
    %4642 = vmatpush1.msra.mxu0 %v4606
    %4643 = vmatprep.subr.mxu0 %v4609
    %4644 = vmatpush1.msra.mxu0 %v4608
    %4645 = vmatprep.subr.mxu0 %v4611
    %4646 = vmatpush1.msra.mxu0 %v4610
    %4647 = vmatprep.subr.mxu0 %v4613
    %4648 = vmatpush1.msra.mxu0 %v4612
    %4649 = vmatprep.subr.mxu0 %v4615
    %4650 = vmatpush1.msra.mxu0 %v4614
    %4651 = vmatprep.subr.mxu0 %v4617
    %4652 = vmatpush1.msra.mxu0 %v4616
    %4653 = vmatprep.subr.mxu0 %v4619
    %4654 = vmatpush1.msra.mxu0 %v4618
    %4655 = vmatprep.subr.mxu0 0.0
    %4656 = vmatpush1.msra.mxu0 0.0
    %4657 = vmatprep.subr.mxu0 0.0
    %4658 = vmatpush1.msra.mxu0 0.0
    %4659 = vmatprep.subr.mxu0 0.0
    %4660 = vmatpush1.msra.mxu0 0.0
    %4661 = vmatprep.subr.mxu0 0.0
    %4662 = vmatpush1.msra.mxu0 0.0
    %4663 = vmatprep.subr.mxu0 0.0
    %4664 = vmatpush1.msra.mxu0 0.0
    %4665 = vmatprep.subr.mxu0 0.0
    %4666 = vmatpush1.msra.mxu0 0.0
    %4667 = vmatprep.subr.mxu0 0.0
    %4668 = vmatpush1.msra.mxu0 0.0
    %4669 = vmatprep.subr.mxu0 0.0
    %4670 = vmatpush1.msra.mxu0 0.0
    %4671 = vmatprep.subr.mxu0 0.0
    %4672 = vmatpush1.msra.mxu0 0.0
    %4673 = vmatprep.subr.mxu0 0.0
    %4674 = vmatpush1.msra.mxu0 0.0
    %4675 = vmatprep.subr.mxu0 0.0
    %4676 = vmatpush1.msra.mxu0 0.0
    %4677 = vmatprep.subr.mxu0 0.0
    %4678 = vmatpush1.msra.mxu0 0.0
    %4679 = vmatprep.subr.mxu0 0.0
    %4680 = vmatpush1.msra.mxu0 0.0
    %4681 = vmatprep.subr.mxu0 0.0
    %4682 = vmatpush1.msra.mxu0 0.0
    %4683 = vmatprep.subr.mxu0 0.0
    %4684 = vmatpush1.msra.mxu0 0.0
    %4685 = vmatprep.subr.mxu0 0.0
    %4686 = vmatpush1.msra.mxu0 0.0
    %4687 = vmatprep.subr.mxu0 0.0
    %4688 = vmatpush1.msra.mxu0 0.0
    %4689 = vmatprep.subr.mxu0 0.0
    %4690 = vmatpush1.msra.mxu0 0.0
    %4691 = vmatprep.subr.mxu0 0.0
    %4692 = vmatpush1.msra.mxu0 0.0
    %4693 = vmatprep.subr.mxu0 0.0
    %4694 = vmatpush1.msra.mxu0 0.0
    %4695 = vmatprep.subr.mxu0 0.0
    %4696 = vmatpush1.msra.mxu0 0.0
    %4697 = vmatprep.subr.mxu0 0.0
    %4698 = vmatpush1.msra.mxu0 0.0
    %4699 = vmatprep.mubr.f32.mxu0 0.0
    %4700 = vmatmul.mubr.f32.gmra.mrb[0].mxu0 %v4633
    %v4701 = vpop.f32.mrb[0].mxu0
    %v4702 = vadd.f32 %v4625, %v4701
    %v4703 = vpop.f32.mrb[0].mxu0
    %v4704 = vadd.f32 %v4629, %v4703
    %4705 = vdwg.mxu0
    %v4706 = vxor.u32 %v4702, 2147483648
    %v4707 = vmul.f32 %v4706, 1.442695
    %v4708 = vpow.pop %v4707
    %v4709 = vadd.f32 %v4708, 1.0
    %v4710 = vrcp.pop %v4709
    %v4711 = vmul.f32 1.0, %v4710
    %4713 = vrot.lane.b32.xlu0 %v4704, 64
    %v4714 = vpop.permute.xlu0 %4713
    %v4716 = vmul.f32 %v4711, %v4714
    %v4717 = vadd.f32 %v4704, %v4716
    %v4718 = vtanh.pop %v4717
    %v4719 = vsub.f32 1.0, %v4711
    %4721 = vrot.lane.b32.xlu0 %v4718, 64
    %v4722 = vpop.permute.xlu0 %4721
    %v4724 = vmul.f32 %v4719, %v4722
    %v4725 = vmul.f32 %v4711, %v4360
    %v4726 = vadd.f32 %v4724, %v4725
    %4728 = vrot.lane.b32.xlu0 %v4726, 64
    %v4729 = vpop.permute.xlu0 %4728
    %v4731 = vsel %vm2006, %v4729, %v4501
    %v4732 = vld [vmem:[%s12] sm:$0xff]
    %v4733 = vld [vmem:[%s12 + $0x8] sm:$0xff]
    %v4734 = vld [vmem:[%s12 + $0x10] sm:$0xff]
    %v4735 = vld [vmem:[%s12 + $0x18] sm:$0xff]
    %v4736 = vld [vmem:[%s12 + $0x20] sm:$0xff]
    %v4737 = vld [vmem:[%s12 + $0x28] sm:$0xff]
    %v4738 = vld [vmem:[%s12 + $0x30] sm:$0xff]
    %v4739 = vld [vmem:[%s12 + $0x38] sm:$0xff]
    %v4740 = vld [vmem:[%s12 + $0x40] sm:$0xff]
    %v4741 = vld [vmem:[%s12 + $0x48] sm:$0xff]
    %v4742 = vld [vmem:[%s12 + $0x50] sm:$0xff]
    %v4743 = vld [vmem:[%s12 + $0x58] sm:$0xff]
    %v4744 = vld [vmem:[%s12 + $0x60] sm:$0xff]
    %v4745 = vld [vmem:[%s12 + $0x68] sm:$0xff]
    %v4746 = vld [vmem:[%s12 + $0x70] sm:$0xff]
    %v4747 = vld [vmem:[%s12 + $0x78] sm:$0xff]
    %v4748 = vld [vmem:[%s12 + $0x80] sm:$0xff]
    %v4749 = vld [vmem:[%s12 + $0x88] sm:$0xff]
    %v4750 = vld [vmem:[%s12 + $0x90] sm:$0xff]
    %v4751 = vld [vmem:[%s12 + $0x98] sm:$0xff]
    %v4752 = vld [vmem:[%s12 + $0xa0] sm:$0xff]
    %v4753 = vld [vmem:[%s12 + $0xa8] sm:$0xff]
    %v4754 = vld [vmem:[%s12 + $0xb0] sm:$0xff]
    %v4755 = vld [vmem:[%s12 + $0xb8] sm:$0xff]
    %v4756 = vld [vmem:[%s12 + $0xc0] sm:$0xff]
    %v4757 = vld [vmem:[%s12 + $0xc8] sm:$0xff]
    %v4758 = vld [vmem:[%s12 + $0xd0] sm:$0xff]
    %v4759 = vld [vmem:[%s12 + $0xd8] sm:$0xff]
    %v4760 = vld [vmem:[%s12 + $0xe0] sm:$0xff]
    %v4761 = vld [vmem:[%s12 + $0xe8] sm:$0xff]
    %v4762 = vld [vmem:[%s12 + $0xf0] sm:$0xff]
    %v4763 = vld [vmem:[%s12 + $0xf8] sm:$0xff]
    %v4764 = vld [vmem:[#allocation7] sm:$0x3]
    %v4766 = vlaneseq
    %v4767 = vshrl.u32 %v4766, 7
    %v4768 = vsub.s32 0, %v4767
    %v4769 = vrot.slane %v4764, %v4768
    %v4770 = vlaneseq
    %v4771 = vshrl.u32 %v4770, 7
    %v4772 = vsub.s32 1, %v4771
    %v4773 = vrot.slane %v4764, %v4772
    %4776 = vmatprep.subr.mxu0 %v4733
    %4777 = vmatpush1.msra.mxu0 %v4732
    %4778 = vmatprep.subr.mxu0 %v4735
    %4779 = vmatpush1.msra.mxu0 %v4734
    %4780 = vmatprep.subr.mxu0 %v4737
    %4781 = vmatpush1.msra.mxu0 %v4736
    %4782 = vmatprep.subr.mxu0 %v4739
    %4783 = vmatpush1.msra.mxu0 %v4738
    %4784 = vmatprep.subr.mxu0 %v4741
    %4785 = vmatpush1.msra.mxu0 %v4740
    %4786 = vmatprep.subr.mxu0 %v4743
    %4787 = vmatpush1.msra.mxu0 %v4742
    %4788 = vmatprep.subr.mxu0 %v4745
    %4789 = vmatpush1.msra.mxu0 %v4744
    %4790 = vmatprep.subr.mxu0 %v4747
    %4791 = vmatpush1.msra.mxu0 %v4746
    %4792 = vmatprep.subr.mxu0 %v4749
    %4793 = vmatpush1.msra.mxu0 %v4748
    %4794 = vmatprep.subr.mxu0 %v4751
    %4795 = vmatpush1.msra.mxu0 %v4750
    %4796 = vmatprep.subr.mxu0 %v4753
    %4797 = vmatpush1.msra.mxu0 %v4752
    %4798 = vmatprep.subr.mxu0 %v4755
    %4799 = vmatpush1.msra.mxu0 %v4754
    %4800 = vmatprep.subr.mxu0 %v4757
    %4801 = vmatpush1.msra.mxu0 %v4756
    %4802 = vmatprep.subr.mxu0 %v4759
    %4803 = vmatpush1.msra.mxu0 %v4758
    %4804 = vmatprep.subr.mxu0 %v4761
    %4805 = vmatpush1.msra.mxu0 %v4760
    %4806 = vmatprep.subr.mxu0 %v4763
    %4807 = vmatpush1.msra.mxu0 %v4762
    %4808 = vmatprep.subr.mxu0 0.0
    %4809 = vmatpush1.msra.mxu0 0.0
    %4810 = vmatprep.subr.mxu0 0.0
    %4811 = vmatpush1.msra.mxu0 0.0
    %4812 = vmatprep.subr.mxu0 0.0
    %4813 = vmatpush1.msra.mxu0 0.0
    %4814 = vmatprep.subr.mxu0 0.0
    %4815 = vmatpush1.msra.mxu0 0.0
    %4816 = vmatprep.subr.mxu0 0.0
    %4817 = vmatpush1.msra.mxu0 0.0
    %4818 = vmatprep.subr.mxu0 0.0
    %4819 = vmatpush1.msra.mxu0 0.0
    %4820 = vmatprep.subr.mxu0 0.0
    %4821 = vmatpush1.msra.mxu0 0.0
    %4822 = vmatprep.subr.mxu0 0.0
    %4823 = vmatpush1.msra.mxu0 0.0
    %4824 = vmatprep.subr.mxu0 0.0
    %4825 = vmatpush1.msra.mxu0 0.0
    %4826 = vmatprep.subr.mxu0 0.0
    %4827 = vmatpush1.msra.mxu0 0.0
    %4828 = vmatprep.subr.mxu0 0.0
    %4829 = vmatpush1.msra.mxu0 0.0
    %4830 = vmatprep.subr.mxu0 0.0
    %4831 = vmatpush1.msra.mxu0 0.0
    %4832 = vmatprep.subr.mxu0 0.0
    %4833 = vmatpush1.msra.mxu0 0.0
    %4834 = vmatprep.subr.mxu0 0.0
    %4835 = vmatpush1.msra.mxu0 0.0
    %4836 = vmatprep.subr.mxu0 0.0
    %4837 = vmatpush1.msra.mxu0 0.0
    %4838 = vmatprep.subr.mxu0 0.0
    %4839 = vmatpush1.msra.mxu0 0.0
    %4840 = vmatprep.mubr.f32.mxu0 0.0
    %4841 = vmatmul.mubr.f32.gmra.mrb[0].mxu0 %v4731
    %v4842 = vpop.f32.mrb[0].mxu0
    %v4843 = vadd.f32 %v4769, %v4842
    %v4844 = vpop.f32.mrb[0].mxu0
    %v4845 = vadd.f32 %v4773, %v4844
    %4846 = vdwg.mxu0
    %v4847 = vxor.u32 %v4843, 2147483648
    %v4848 = vmul.f32 %v4847, 1.442695
    %v4849 = vpow.pop %v4848
    %v4850 = vadd.f32 %v4849, 1.0
    %v4851 = vrcp.pop %v4850
    %v4852 = vmul.f32 1.0, %v4851
    %4854 = vrot.lane.b32.xlu0 %v4845, 64
    %v4855 = vpop.permute.xlu0 %4854
    %v4857 = vmul.f32 %v4852, %v4855
    %v4858 = vadd.f32 %v4845, %v4857
    %v4859 = vtanh.pop %v4858
    %v4860 = vsub.f32 1.0, %v4852
    %4862 = vrot.lane.b32.xlu0 %v4859, 64
    %v4863 = vpop.permute.xlu0 %4862
    %v4865 = vmul.f32 %v4860, %v4863
    %v4866 = vmul.f32 %v4852, %v4501
    %v4867 = vadd.f32 %v4865, %v4866
    %v4868 = vld [vmem:[#allocation9] sm:$0xff]
    %v4869 = vld [vmem:[#allocation9 + $0x8] sm:$0xff]
    %v4870 = vld [vmem:[#allocation9 + $0x10] sm:$0xff]
    %v4871 = vld [vmem:[#allocation9 + $0x18] sm:$0xff]
    %v4872 = vld [vmem:[#allocation9 + $0x20] sm:$0xff]
    %v4873 = vld [vmem:[#allocation9 + $0x28] sm:$0xff]
    %v4874 = vld [vmem:[#allocation9 + $0x30] sm:$0xff]
    %v4875 = vld [vmem:[#allocation9 + $0x38] sm:$0xff]
    %v4876 = vld [vmem:[#allocation10] sm:$0x1]
    %v4878 = vlaneseq
    %v4879 = vshrl.u32 %v4878, 7
    %v4880 = vsub.s32 0, %v4879
    %v4881 = vrot.slane %v4876, %v4880
    %4884 = vrot.lane.b32.xlu0 %v4867, 64
    %v4885 = vpop.permute.xlu0 %4884
    %v4886 = vsel %vm2006, %v4885, 0
    %4888 = vmatprep.subr.mxu0 0.0
    %4889 = vmatpush1.msra.mxu0 %v4868
    %4890 = vmatprep.subr.mxu0 0.0
    %4891 = vmatpush1.msra.mxu0 %v4869
    %4892 = vmatprep.subr.mxu0 0.0
    %4893 = vmatpush1.msra.mxu0 %v4870
    %4894 = vmatprep.subr.mxu0 0.0
    %4895 = vmatpush1.msra.mxu0 %v4871
    %4896 = vmatprep.subr.mxu0 0.0
    %4897 = vmatpush1.msra.mxu0 %v4872
    %4898 = vmatprep.subr.mxu0 0.0
    %4899 = vmatpush1.msra.mxu0 %v4873
    %4900 = vmatprep.subr.mxu0 0.0
    %4901 = vmatpush1.msra.mxu0 %v4874
    %4902 = vmatprep.subr.mxu0 0.0
    %4903 = vmatpush1.msra.mxu0 %v4875
    %4904 = vmatprep.subr.mxu0 0.0
    %4905 = vmatpush1.msra.mxu0 0.0
    %4906 = vmatprep.subr.mxu0 0.0
    %4907 = vmatpush1.msra.mxu0 0.0
    %4908 = vmatprep.subr.mxu0 0.0
    %4909 = vmatpush1.msra.mxu0 0.0
    %4910 = vmatprep.subr.mxu0 0.0
    %4911 = vmatpush1.msra.mxu0 0.0
    %4912 = vmatprep.subr.mxu0 0.0
    %4913 = vmatpush1.msra.mxu0 0.0
    %4914 = vmatprep.subr.mxu0 0.0
    %4915 = vmatpush1.msra.mxu0 0.0
    %4916 = vmatprep.subr.mxu0 0.0
    %4917 = vmatpush1.msra.mxu0 0.0
    %4918 = vmatprep.subr.mxu0 0.0
    %4919 = vmatpush1.msra.mxu0 0.0
    %4920 = vmatprep.subr.mxu0 0.0
    %4921 = vmatpush1.msra.mxu0 0.0
    %4922 = vmatprep.subr.mxu0 0.0
    %4923 = vmatpush1.msra.mxu0 0.0
    %4924 = vmatprep.subr.mxu0 0.0
    %4925 = vmatpush1.msra.mxu0 0.0
    %4926 = vmatprep.subr.mxu0 0.0
    %4927 = vmatpush1.msra.mxu0 0.0
    %4928 = vmatprep.subr.mxu0 0.0
    %4929 = vmatpush1.msra.mxu0 0.0
    %4930 = vmatprep.subr.mxu0 0.0
    %4931 = vmatpush1.msra.mxu0 0.0
    %4932 = vmatprep.subr.mxu0 0.0
    %4933 = vmatpush1.msra.mxu0 0.0
    %4934 = vmatprep.subr.mxu0 0.0
    %4935 = vmatpush1.msra.mxu0 0.0
    %4936 = vmatprep.subr.mxu0 0.0
    %4937 = vmatpush1.msra.mxu0 0.0
    %4938 = vmatprep.subr.mxu0 0.0
    %4939 = vmatpush1.msra.mxu0 0.0
    %4940 = vmatprep.subr.mxu0 0.0
    %4941 = vmatpush1.msra.mxu0 0.0
    %4942 = vmatprep.subr.mxu0 0.0
    %4943 = vmatpush1.msra.mxu0 0.0
    %4944 = vmatprep.subr.mxu0 0.0
    %4945 = vmatpush1.msra.mxu0 0.0
    %4946 = vmatprep.subr.mxu0 0.0
    %4947 = vmatpush1.msra.mxu0 0.0
    %4948 = vmatprep.subr.mxu0 0.0
    %4949 = vmatpush1.msra.mxu0 0.0
    %4950 = vmatprep.subr.mxu0 0.0
    %4951 = vmatpush1.msra.mxu0 0.0
    %4952 = vmatprep.mubr.f32.mxu0 0.0
    %4953 = vmatmul.mubr.f32.gmra.mrb[0].mxu0 %v4886
    %v4954 = vpop.f32.mrb[0].mxu0
    %v4955 = vadd.f32 %v4881, %v4954
    %v4956 = vpop.f32.mrb[0].mxu0
    %4957 = vdwg.mxu0
    %s4958 = scalar_lea.vmem %s17, 4
    %4959 = vst [vmem:[%s4958] sm:$0x3] %v4955
    %s4960 = scalar_lea.vmem %s1, 6
    %v4961 = vld [vmem:[%s4960] sm:$0x3]
    %4962 = vrot.lane.b32.xlu0 %v4726, 80
    %v4963 = vpop.permute.xlu0 %4962
    %v4965 = vsel %vm116, %v4961, %v4963
    %v4966 = vld [vmem:[%s10] sm:$0xff]
    %v4967 = vld [vmem:[%s10 + $0x8] sm:$0xff]
    %v4968 = vld [vmem:[%s10 + $0x10] sm:$0xff]
    %v4969 = vld [vmem:[%s10 + $0x18] sm:$0xff]
    %v4970 = vld [vmem:[%s10 + $0x20] sm:$0xff]
    %v4971 = vld [vmem:[%s10 + $0x28] sm:$0xff]
    %v4972 = vld [vmem:[%s10 + $0x30] sm:$0xff]
    %v4973 = vld [vmem:[%s10 + $0x38] sm:$0xff]
    %v4974 = vld [vmem:[%s10 + $0x40] sm:$0xff]
    %v4975 = vld [vmem:[%s10 + $0x48] sm:$0xff]
    %v4976 = vld [vmem:[%s10 + $0x50] sm:$0xff]
    %v4977 = vld [vmem:[%s10 + $0x58] sm:$0xff]
    %v4978 = vld [vmem:[%s10 + $0x60] sm:$0xff]
    %v4979 = vld [vmem:[%s10 + $0x68] sm:$0xff]
    %v4980 = vld [vmem:[%s10 + $0x70] sm:$0xff]
    %v4981 = vld [vmem:[%s10 + $0x78] sm:$0xff]
    %v4982 = vld [vmem:[%s10 + $0x80] sm:$0xff]
    %v4983 = vld [vmem:[%s10 + $0x88] sm:$0xff]
    %v4984 = vld [vmem:[%s10 + $0x90] sm:$0xff]
    %v4985 = vld [vmem:[%s10 + $0x98] sm:$0xff]
    %v4986 = vld [vmem:[#allocation5] sm:$0x3]
    %v4988 = vlaneseq
    %v4989 = vshrl.u32 %v4988, 7
    %v4990 = vsub.s32 0, %v4989
    %v4991 = vrot.slane %v4986, %v4990
    %v4992 = vlaneseq
    %v4993 = vshrl.u32 %v4992, 7
    %v4994 = vsub.s32 1, %v4993
    %v4995 = vrot.slane %v4986, %v4994
    %v4999 = vsel %vm3893, %v4965, 0
    %5001 = vmatprep.subr.mxu0 %v4967
    %5002 = vmatpush1.msra.mxu0 %v4966
    %5003 = vmatprep.subr.mxu0 %v4969
    %5004 = vmatpush1.msra.mxu0 %v4968
    %5005 = vmatprep.subr.mxu0 %v4971
    %5006 = vmatpush1.msra.mxu0 %v4970
    %5007 = vmatprep.subr.mxu0 %v4973
    %5008 = vmatpush1.msra.mxu0 %v4972
    %5009 = vmatprep.subr.mxu0 %v4975
    %5010 = vmatpush1.msra.mxu0 %v4974
    %5011 = vmatprep.subr.mxu0 %v4977
    %5012 = vmatpush1.msra.mxu0 %v4976
    %5013 = vmatprep.subr.mxu0 %v4979
    %5014 = vmatpush1.msra.mxu0 %v4978
    %5015 = vmatprep.subr.mxu0 %v4981
    %5016 = vmatpush1.msra.mxu0 %v4980
    %5017 = vmatprep.subr.mxu0 %v4983
    %5018 = vmatpush1.msra.mxu0 %v4982
    %5019 = vmatprep.subr.mxu0 %v4985
    %5020 = vmatpush1.msra.mxu0 %v4984
    %5021 = vmatprep.subr.mxu0 0.0
    %5022 = vmatpush1.msra.mxu0 0.0
    %5023 = vmatprep.subr.mxu0 0.0
    %5024 = vmatpush1.msra.mxu0 0.0
    %5025 = vmatprep.subr.mxu0 0.0
    %5026 = vmatpush1.msra.mxu0 0.0
    %5027 = vmatprep.subr.mxu0 0.0
    %5028 = vmatpush1.msra.mxu0 0.0
    %5029 = vmatprep.subr.mxu0 0.0
    %5030 = vmatpush1.msra.mxu0 0.0
    %5031 = vmatprep.subr.mxu0 0.0
    %5032 = vmatpush1.msra.mxu0 0.0
    %5033 = vmatprep.subr.mxu0 0.0
    %5034 = vmatpush1.msra.mxu0 0.0
    %5035 = vmatprep.subr.mxu0 0.0
    %5036 = vmatpush1.msra.mxu0 0.0
    %5037 = vmatprep.subr.mxu0 0.0
    %5038 = vmatpush1.msra.mxu0 0.0
    %5039 = vmatprep.subr.mxu0 0.0
    %5040 = vmatpush1.msra.mxu0 0.0
    %5041 = vmatprep.subr.mxu0 0.0
    %5042 = vmatpush1.msra.mxu0 0.0
    %5043 = vmatprep.subr.mxu0 0.0
    %5044 = vmatpush1.msra.mxu0 0.0
    %5045 = vmatprep.subr.mxu0 0.0
    %5046 = vmatpush1.msra.mxu0 0.0
    %5047 = vmatprep.subr.mxu0 0.0
    %5048 = vmatpush1.msra.mxu0 0.0
    %5049 = vmatprep.subr.mxu0 0.0
    %5050 = vmatpush1.msra.mxu0 0.0
    %5051 = vmatprep.subr.mxu0 0.0
    %5052 = vmatpush1.msra.mxu0 0.0
    %5053 = vmatprep.subr.mxu0 0.0
    %5054 = vmatpush1.msra.mxu0 0.0
    %5055 = vmatprep.subr.mxu0 0.0
    %5056 = vmatpush1.msra.mxu0 0.0
    %5057 = vmatprep.subr.mxu0 0.0
    %5058 = vmatpush1.msra.mxu0 0.0
    %5059 = vmatprep.subr.mxu0 0.0
    %5060 = vmatpush1.msra.mxu0 0.0
    %5061 = vmatprep.subr.mxu0 0.0
    %5062 = vmatpush1.msra.mxu0 0.0
    %5063 = vmatprep.subr.mxu0 0.0
    %5064 = vmatpush1.msra.mxu0 0.0
    %5065 = vmatprep.mubr.f32.mxu0 0.0
    %5066 = vmatmul.mubr.f32.gmra.mrb[0].mxu0 %v4999
    %v5067 = vpop.f32.mrb[0].mxu0
    %v5068 = vadd.f32 %v4991, %v5067
    %v5069 = vpop.f32.mrb[0].mxu0
    %v5070 = vadd.f32 %v4995, %v5069
    %5071 = vdwg.mxu0
    %v5072 = vxor.u32 %v5068, 2147483648
    %v5073 = vmul.f32 %v5072, 1.442695
    %v5074 = vpow.pop %v5073
    %v5075 = vadd.f32 %v5074, 1.0
    %v5076 = vrcp.pop %v5075
    %v5077 = vmul.f32 1.0, %v5076
    %5079 = vrot.lane.b32.xlu0 %v5070, 64
    %v5080 = vpop.permute.xlu0 %5079
    %v5082 = vmul.f32 %v5077, %v5080
    %v5083 = vadd.f32 %v5070, %v5082
    %v5084 = vtanh.pop %v5083
    %v5085 = vsub.f32 1.0, %v5077
    %5087 = vrot.lane.b32.xlu0 %v5084, 64
    %v5088 = vpop.permute.xlu0 %5087
    %v5090 = vmul.f32 %v5085, %v5088
    %v5091 = vmul.f32 %v5077, %v4726
    %v5092 = vadd.f32 %v5090, %v5091
    %5094 = vrot.lane.b32.xlu0 %v5092, 64
    %v5095 = vpop.permute.xlu0 %5094
    %v5097 = vsel %vm2006, %v5095, %v4867
    %v5098 = vld [vmem:[%s12] sm:$0xff]
    %v5099 = vld [vmem:[%s12 + $0x8] sm:$0xff]
    %v5100 = vld [vmem:[%s12 + $0x10] sm:$0xff]
    %v5101 = vld [vmem:[%s12 + $0x18] sm:$0xff]
    %v5102 = vld [vmem:[%s12 + $0x20] sm:$0xff]
    %v5103 = vld [vmem:[%s12 + $0x28] sm:$0xff]
    %v5104 = vld [vmem:[%s12 + $0x30] sm:$0xff]
    %v5105 = vld [vmem:[%s12 + $0x38] sm:$0xff]
    %v5106 = vld [vmem:[%s12 + $0x40] sm:$0xff]
    %v5107 = vld [vmem:[%s12 + $0x48] sm:$0xff]
    %v5108 = vld [vmem:[%s12 + $0x50] sm:$0xff]
    %v5109 = vld [vmem:[%s12 + $0x58] sm:$0xff]
    %v5110 = vld [vmem:[%s12 + $0x60] sm:$0xff]
    %v5111 = vld [vmem:[%s12 + $0x68] sm:$0xff]
    %v5112 = vld [vmem:[%s12 + $0x70] sm:$0xff]
    %v5113 = vld [vmem:[%s12 + $0x78] sm:$0xff]
    %v5114 = vld [vmem:[%s12 + $0x80] sm:$0xff]
    %v5115 = vld [vmem:[%s12 + $0x88] sm:$0xff]
    %v5116 = vld [vmem:[%s12 + $0x90] sm:$0xff]
    %v5117 = vld [vmem:[%s12 + $0x98] sm:$0xff]
    %v5118 = vld [vmem:[%s12 + $0xa0] sm:$0xff]
    %v5119 = vld [vmem:[%s12 + $0xa8] sm:$0xff]
    %v5120 = vld [vmem:[%s12 + $0xb0] sm:$0xff]
    %v5121 = vld [vmem:[%s12 + $0xb8] sm:$0xff]
    %v5122 = vld [vmem:[%s12 + $0xc0] sm:$0xff]
    %v5123 = vld [vmem:[%s12 + $0xc8] sm:$0xff]
    %v5124 = vld [vmem:[%s12 + $0xd0] sm:$0xff]
    %v5125 = vld [vmem:[%s12 + $0xd8] sm:$0xff]
    %v5126 = vld [vmem:[%s12 + $0xe0] sm:$0xff]
    %v5127 = vld [vmem:[%s12 + $0xe8] sm:$0xff]
    %v5128 = vld [vmem:[%s12 + $0xf0] sm:$0xff]
    %v5129 = vld [vmem:[%s12 + $0xf8] sm:$0xff]
    %v5130 = vld [vmem:[#allocation7] sm:$0x3]
    %v5132 = vlaneseq
    %v5133 = vshrl.u32 %v5132, 7
    %v5134 = vsub.s32 0, %v5133
    %v5135 = vrot.slane %v5130, %v5134
    %v5136 = vlaneseq
    %v5137 = vshrl.u32 %v5136, 7
    %v5138 = vsub.s32 1, %v5137
    %v5139 = vrot.slane %v5130, %v5138
    %5142 = vmatprep.subr.mxu0 %v5099
    %5143 = vmatpush1.msra.mxu0 %v5098
    %5144 = vmatprep.subr.mxu0 %v5101
    %5145 = vmatpush1.msra.mxu0 %v5100
    %5146 = vmatprep.subr.mxu0 %v5103
    %5147 = vmatpush1.msra.mxu0 %v5102
    %5148 = vmatprep.subr.mxu0 %v5105
    %5149 = vmatpush1.msra.mxu0 %v5104
    %5150 = vmatprep.subr.mxu0 %v5107
    %5151 = vmatpush1.msra.mxu0 %v5106
    %5152 = vmatprep.subr.mxu0 %v5109
    %5153 = vmatpush1.msra.mxu0 %v5108
    %5154 = vmatprep.subr.mxu0 %v5111
    %5155 = vmatpush1.msra.mxu0 %v5110
    %5156 = vmatprep.subr.mxu0 %v5113
    %5157 = vmatpush1.msra.mxu0 %v5112
    %5158 = vmatprep.subr.mxu0 %v5115
    %5159 = vmatpush1.msra.mxu0 %v5114
    %5160 = vmatprep.subr.mxu0 %v5117
    %5161 = vmatpush1.msra.mxu0 %v5116
    %5162 = vmatprep.subr.mxu0 %v5119
    %5163 = vmatpush1.msra.mxu0 %v5118
    %5164 = vmatprep.subr.mxu0 %v5121
    %5165 = vmatpush1.msra.mxu0 %v5120
    %5166 = vmatprep.subr.mxu0 %v5123
    %5167 = vmatpush1.msra.mxu0 %v5122
    %5168 = vmatprep.subr.mxu0 %v5125
    %5169 = vmatpush1.msra.mxu0 %v5124
    %5170 = vmatprep.subr.mxu0 %v5127
    %5171 = vmatpush1.msra.mxu0 %v5126
    %5172 = vmatprep.subr.mxu0 %v5129
    %5173 = vmatpush1.msra.mxu0 %v5128
    %5174 = vmatprep.subr.mxu0 0.0
    %5175 = vmatpush1.msra.mxu0 0.0
    %5176 = vmatprep.subr.mxu0 0.0
    %5177 = vmatpush1.msra.mxu0 0.0
    %5178 = vmatprep.subr.mxu0 0.0
    %5179 = vmatpush1.msra.mxu0 0.0
    %5180 = vmatprep.subr.mxu0 0.0
    %5181 = vmatpush1.msra.mxu0 0.0
    %5182 = vmatprep.subr.mxu0 0.0
    %5183 = vmatpush1.msra.mxu0 0.0
    %5184 = vmatprep.subr.mxu0 0.0
    %5185 = vmatpush1.msra.mxu0 0.0
    %5186 = vmatprep.subr.mxu0 0.0
    %5187 = vmatpush1.msra.mxu0 0.0
    %5188 = vmatprep.subr.mxu0 0.0
    %5189 = vmatpush1.msra.mxu0 0.0
    %5190 = vmatprep.subr.mxu0 0.0
    %5191 = vmatpush1.msra.mxu0 0.0
    %5192 = vmatprep.subr.mxu0 0.0
    %5193 = vmatpush1.msra.mxu0 0.0
    %5194 = vmatprep.subr.mxu0 0.0
    %5195 = vmatpush1.msra.mxu0 0.0
    %5196 = vmatprep.subr.mxu0 0.0
    %5197 = vmatpush1.msra.mxu0 0.0
    %5198 = vmatprep.subr.mxu0 0.0
    %5199 = vmatpush1.msra.mxu0 0.0
    %5200 = vmatprep.subr.mxu0 0.0
    %5201 = vmatpush1.msra.mxu0 0.0
    %5202 = vmatprep.subr.mxu0 0.0
    %5203 = vmatpush1.msra.mxu0 0.0
    %5204 = vmatprep.subr.mxu0 0.0
    %5205 = vmatpush1.msra.mxu0 0.0
    %5206 = vmatprep.mubr.f32.mxu0 0.0
    %5207 = vmatmul.mubr.f32.gmra.mrb[0].mxu0 %v5097
    %v5208 = vpop.f32.mrb[0].mxu0
    %v5209 = vadd.f32 %v5135, %v5208
    %v5210 = vpop.f32.mrb[0].mxu0
    %v5211 = vadd.f32 %v5139, %v5210
    %5212 = vdwg.mxu0
    %v5213 = vxor.u32 %v5209, 2147483648
    %v5214 = vmul.f32 %v5213, 1.442695
    %v5215 = vpow.pop %v5214
    %v5216 = vadd.f32 %v5215, 1.0
    %v5217 = vrcp.pop %v5216
    %v5218 = vmul.f32 1.0, %v5217
    %5220 = vrot.lane.b32.xlu0 %v5211, 64
    %v5221 = vpop.permute.xlu0 %5220
    %v5223 = vmul.f32 %v5218, %v5221
    %v5224 = vadd.f32 %v5211, %v5223
    %v5225 = vtanh.pop %v5224
    %v5226 = vsub.f32 1.0, %v5218
    %5228 = vrot.lane.b32.xlu0 %v5225, 64
    %v5229 = vpop.permute.xlu0 %5228
    %v5231 = vmul.f32 %v5226, %v5229
    %v5232 = vmul.f32 %v5218, %v4867
    %v5233 = vadd.f32 %v5231, %v5232
    %v5234 = vld [vmem:[#allocation9] sm:$0xff]
    %v5235 = vld [vmem:[#allocation9 + $0x8] sm:$0xff]
    %v5236 = vld [vmem:[#allocation9 + $0x10] sm:$0xff]
    %v5237 = vld [vmem:[#allocation9 + $0x18] sm:$0xff]
    %v5238 = vld [vmem:[#allocation9 + $0x20] sm:$0xff]
    %v5239 = vld [vmem:[#allocation9 + $0x28] sm:$0xff]
    %v5240 = vld [vmem:[#allocation9 + $0x30] sm:$0xff]
    %v5241 = vld [vmem:[#allocation9 + $0x38] sm:$0xff]
    %v5242 = vld [vmem:[#allocation10] sm:$0x1]
    %v5244 = vlaneseq
    %v5245 = vshrl.u32 %v5244, 7
    %v5246 = vsub.s32 0, %v5245
    %v5247 = vrot.slane %v5242, %v5246
    %5250 = vrot.lane.b32.xlu0 %v5233, 64
    %v5251 = vpop.permute.xlu0 %5250
    %v5252 = vsel %vm2006, %v5251, 0
    %5254 = vmatprep.subr.mxu0 0.0
    %5255 = vmatpush1.msra.mxu0 %v5234
    %5256 = vmatprep.subr.mxu0 0.0
    %5257 = vmatpush1.msra.mxu0 %v5235
    %5258 = vmatprep.subr.mxu0 0.0
    %5259 = vmatpush1.msra.mxu0 %v5236
    %5260 = vmatprep.subr.mxu0 0.0
    %5261 = vmatpush1.msra.mxu0 %v5237
    %5262 = vmatprep.subr.mxu0 0.0
    %5263 = vmatpush1.msra.mxu0 %v5238
    %5264 = vmatprep.subr.mxu0 0.0
    %5265 = vmatpush1.msra.mxu0 %v5239
    %5266 = vmatprep.subr.mxu0 0.0
    %5267 = vmatpush1.msra.mxu0 %v5240
    %5268 = vmatprep.subr.mxu0 0.0
    %5269 = vmatpush1.msra.mxu0 %v5241
    %5270 = vmatprep.subr.mxu0 0.0
    %5271 = vmatpush1.msra.mxu0 0.0
    %5272 = vmatprep.subr.mxu0 0.0
    %5273 = vmatpush1.msra.mxu0 0.0
    %5274 = vmatprep.subr.mxu0 0.0
    %5275 = vmatpush1.msra.mxu0 0.0
    %5276 = vmatprep.subr.mxu0 0.0
    %5277 = vmatpush1.msra.mxu0 0.0
    %5278 = vmatprep.subr.mxu0 0.0
    %5279 = vmatpush1.msra.mxu0 0.0
    %5280 = vmatprep.subr.mxu0 0.0
    %5281 = vmatpush1.msra.mxu0 0.0
    %5282 = vmatprep.subr.mxu0 0.0
    %5283 = vmatpush1.msra.mxu0 0.0
    %5284 = vmatprep.subr.mxu0 0.0
    %5285 = vmatpush1.msra.mxu0 0.0
    %5286 = vmatprep.subr.mxu0 0.0
    %5287 = vmatpush1.msra.mxu0 0.0
    %5288 = vmatprep.subr.mxu0 0.0
    %5289 = vmatpush1.msra.mxu0 0.0
    %5290 = vmatprep.subr.mxu0 0.0
    %5291 = vmatpush1.msra.mxu0 0.0
    %5292 = vmatprep.subr.mxu0 0.0
    %5293 = vmatpush1.msra.mxu0 0.0
    %5294 = vmatprep.subr.mxu0 0.0
    %5295 = vmatpush1.msra.mxu0 0.0
    %5296 = vmatprep.subr.mxu0 0.0
    %5297 = vmatpush1.msra.mxu0 0.0
    %5298 = vmatprep.subr.mxu0 0.0
    %5299 = vmatpush1.msra.mxu0 0.0
    %5300 = vmatprep.subr.mxu0 0.0
    %5301 = vmatpush1.msra.mxu0 0.0
    %5302 = vmatprep.subr.mxu0 0.0
    %5303 = vmatpush1.msra.mxu0 0.0
    %5304 = vmatprep.subr.mxu0 0.0
    %5305 = vmatpush1.msra.mxu0 0.0
    %5306 = vmatprep.subr.mxu0 0.0
    %5307 = vmatpush1.msra.mxu0 0.0
    %5308 = vmatprep.subr.mxu0 0.0
    %5309 = vmatpush1.msra.mxu0 0.0
    %5310 = vmatprep.subr.mxu0 0.0
    %5311 = vmatpush1.msra.mxu0 0.0
    %5312 = vmatprep.subr.mxu0 0.0
    %5313 = vmatpush1.msra.mxu0 0.0
    %5314 = vmatprep.subr.mxu0 0.0
    %5315 = vmatpush1.msra.mxu0 0.0
    %5316 = vmatprep.subr.mxu0 0.0
    %5317 = vmatpush1.msra.mxu0 0.0
    %5318 = vmatprep.mubr.f32.mxu0 0.0
    %5319 = vmatmul.mubr.f32.gmra.mrb[0].mxu0 %v5252
    %v5320 = vpop.f32.mrb[0].mxu0
    %v5321 = vadd.f32 %v5247, %v5320
    %v5322 = vpop.f32.mrb[0].mxu0
    %5323 = vdwg.mxu0
    %s5324 = scalar_lea.vmem %s17, 6
    %5325 = vst [vmem:[%s5324] sm:$0x3] %v5321
    %s5326 = scalar_lea.vmem %s1, 8
    %v5327 = vld [vmem:[%s5326] sm:$0x3]
    %5328 = vrot.lane.b32.xlu0 %v5092, 80
    %v5329 = vpop.permute.xlu0 %5328
    %v5331 = vsel %vm116, %v5327, %v5329
    %v5332 = vld [vmem:[%s10] sm:$0xff]
    %v5333 = vld [vmem:[%s10 + $0x8] sm:$0xff]
    %v5334 = vld [vmem:[%s10 + $0x10] sm:$0xff]
    %v5335 = vld [vmem:[%s10 + $0x18] sm:$0xff]
    %v5336 = vld [vmem:[%s10 + $0x20] sm:$0xff]
    %v5337 = vld [vmem:[%s10 + $0x28] sm:$0xff]
    %v5338 = vld [vmem:[%s10 + $0x30] sm:$0xff]
    %v5339 = vld [vmem:[%s10 + $0x38] sm:$0xff]
    %v5340 = vld [vmem:[%s10 + $0x40] sm:$0xff]
    %v5341 = vld [vmem:[%s10 + $0x48] sm:$0xff]
    %v5342 = vld [vmem:[%s10 + $0x50] sm:$0xff]
    %v5343 = vld [vmem:[%s10 + $0x58] sm:$0xff]
    %v5344 = vld [vmem:[%s10 + $0x60] sm:$0xff]
    %v5345 = vld [vmem:[%s10 + $0x68] sm:$0xff]
    %v5346 = vld [vmem:[%s10 + $0x70] sm:$0xff]
    %v5347 = vld [vmem:[%s10 + $0x78] sm:$0xff]
    %v5348 = vld [vmem:[%s10 + $0x80] sm:$0xff]
    %v5349 = vld [vmem:[%s10 + $0x88] sm:$0xff]
    %v5350 = vld [vmem:[%s10 + $0x90] sm:$0xff]
    %v5351 = vld [vmem:[%s10 + $0x98] sm:$0xff]
    %v5352 = vld [vmem:[#allocation5] sm:$0x3]
    %v5354 = vlaneseq
    %v5355 = vshrl.u32 %v5354, 7
    %v5356 = vsub.s32 0, %v5355
    %v5357 = vrot.slane %v5352, %v5356
    %v5358 = vlaneseq
    %v5359 = vshrl.u32 %v5358, 7
    %v5360 = vsub.s32 1, %v5359
    %v5361 = vrot.slane %v5352, %v5360
    %v5365 = vsel %vm3893, %v5331, 0
    %5367 = vmatprep.subr.mxu0 %v5333
    %5368 = vmatpush1.msra.mxu0 %v5332
    %5369 = vmatprep.subr.mxu0 %v5335
    %5370 = vmatpush1.msra.mxu0 %v5334
    %5371 = vmatprep.subr.mxu0 %v5337
    %5372 = vmatpush1.msra.mxu0 %v5336
    %5373 = vmatprep.subr.mxu0 %v5339
    %5374 = vmatpush1.msra.mxu0 %v5338
    %5375 = vmatprep.subr.mxu0 %v5341
    %5376 = vmatpush1.msra.mxu0 %v5340
    %5377 = vmatprep.subr.mxu0 %v5343
    %5378 = vmatpush1.msra.mxu0 %v5342
    %5379 = vmatprep.subr.mxu0 %v5345
    %5380 = vmatpush1.msra.mxu0 %v5344
    %5381 = vmatprep.subr.mxu0 %v5347
    %5382 = vmatpush1.msra.mxu0 %v5346
    %5383 = vmatprep.subr.mxu0 %v5349
    %5384 = vmatpush1.msra.mxu0 %v5348
    %5385 = vmatprep.subr.mxu0 %v5351
    %5386 = vmatpush1.msra.mxu0 %v5350
    %5387 = vmatprep.subr.mxu0 0.0
    %5388 = vmatpush1.msra.mxu0 0.0
    %5389 = vmatprep.subr.mxu0 0.0
    %5390 = vmatpush1.msra.mxu0 0.0
    %5391 = vmatprep.subr.mxu0 0.0
    %5392 = vmatpush1.msra.mxu0 0.0
    %5393 = vmatprep.subr.mxu0 0.0
    %5394 = vmatpush1.msra.mxu0 0.0
    %5395 = vmatprep.subr.mxu0 0.0
    %5396 = vmatpush1.msra.mxu0 0.0
    %5397 = vmatprep.subr.mxu0 0.0
    %5398 = vmatpush1.msra.mxu0 0.0
    %5399 = vmatprep.subr.mxu0 0.0
    %5400 = vmatpush1.msra.mxu0 0.0
    %5401 = vmatprep.subr.mxu0 0.0
    %5402 = vmatpush1.msra.mxu0 0.0
    %5403 = vmatprep.subr.mxu0 0.0
    %5404 = vmatpush1.msra.mxu0 0.0
    %5405 = vmatprep.subr.mxu0 0.0
    %5406 = vmatpush1.msra.mxu0 0.0
    %5407 = vmatprep.subr.mxu0 0.0
    %5408 = vmatpush1.msra.mxu0 0.0
    %5409 = vmatprep.subr.mxu0 0.0
    %5410 = vmatpush1.msra.mxu0 0.0
    %5411 = vmatprep.subr.mxu0 0.0
    %5412 = vmatpush1.msra.mxu0 0.0
    %5413 = vmatprep.subr.mxu0 0.0
    %5414 = vmatpush1.msra.mxu0 0.0
    %5415 = vmatprep.subr.mxu0 0.0
    %5416 = vmatpush1.msra.mxu0 0.0
    %5417 = vmatprep.subr.mxu0 0.0
    %5418 = vmatpush1.msra.mxu0 0.0
    %5419 = vmatprep.subr.mxu0 0.0
    %5420 = vmatpush1.msra.mxu0 0.0
    %5421 = vmatprep.subr.mxu0 0.0
    %5422 = vmatpush1.msra.mxu0 0.0
    %5423 = vmatprep.subr.mxu0 0.0
    %5424 = vmatpush1.msra.mxu0 0.0
    %5425 = vmatprep.subr.mxu0 0.0
    %5426 = vmatpush1.msra.mxu0 0.0
    %5427 = vmatprep.subr.mxu0 0.0
    %5428 = vmatpush1.msra.mxu0 0.0
    %5429 = vmatprep.subr.mxu0 0.0
    %5430 = vmatpush1.msra.mxu0 0.0
    %5431 = vmatprep.mubr.f32.mxu0 0.0
    %5432 = vmatmul.mubr.f32.gmra.mrb[0].mxu0 %v5365
    %v5433 = vpop.f32.mrb[0].mxu0
    %v5434 = vadd.f32 %v5357, %v5433
    %v5435 = vpop.f32.mrb[0].mxu0
    %v5436 = vadd.f32 %v5361, %v5435
    %5437 = vdwg.mxu0
    %v5438 = vxor.u32 %v5434, 2147483648
    %v5439 = vmul.f32 %v5438, 1.442695
    %v5440 = vpow.pop %v5439
    %v5441 = vadd.f32 %v5440, 1.0
    %v5442 = vrcp.pop %v5441
    %v5443 = vmul.f32 1.0, %v5442
    %5445 = vrot.lane.b32.xlu0 %v5436, 64
    %v5446 = vpop.permute.xlu0 %5445
    %v5448 = vmul.f32 %v5443, %v5446
    %v5449 = vadd.f32 %v5436, %v5448
    %v5450 = vtanh.pop %v5449
    %v5451 = vsub.f32 1.0, %v5443
    %5453 = vrot.lane.b32.xlu0 %v5450, 64
    %v5454 = vpop.permute.xlu0 %5453
    %v5456 = vmul.f32 %v5451, %v5454
    %v5457 = vmul.f32 %v5443, %v5092
    %v5458 = vadd.f32 %v5456, %v5457
    %5460 = vrot.lane.b32.xlu0 %v5458, 64
    %v5461 = vpop.permute.xlu0 %5460
    %v5463 = vsel %vm2006, %v5461, %v5233
    %v5464 = vld [vmem:[%s12] sm:$0xff]
    %v5465 = vld [vmem:[%s12 + $0x8] sm:$0xff]
    %v5466 = vld [vmem:[%s12 + $0x10] sm:$0xff]
    %v5467 = vld [vmem:[%s12 + $0x18] sm:$0xff]
    %v5468 = vld [vmem:[%s12 + $0x20] sm:$0xff]
    %v5469 = vld [vmem:[%s12 + $0x28] sm:$0xff]
    %v5470 = vld [vmem:[%s12 + $0x30] sm:$0xff]
    %v5471 = vld [vmem:[%s12 + $0x38] sm:$0xff]
    %v5472 = vld [vmem:[%s12 + $0x40] sm:$0xff]
    %v5473 = vld [vmem:[%s12 + $0x48] sm:$0xff]
    %v5474 = vld [vmem:[%s12 + $0x50] sm:$0xff]
    %v5475 = vld [vmem:[%s12 + $0x58] sm:$0xff]
    %v5476 = vld [vmem:[%s12 + $0x60] sm:$0xff]
    %v5477 = vld [vmem:[%s12 + $0x68] sm:$0xff]
    %v5478 = vld [vmem:[%s12 + $0x70] sm:$0xff]
    %v5479 = vld [vmem:[%s12 + $0x78] sm:$0xff]
    %v5480 = vld [vmem:[%s12 + $0x80] sm:$0xff]
    %v5481 = vld [vmem:[%s12 + $0x88] sm:$0xff]
    %v5482 = vld [vmem:[%s12 + $0x90] sm:$0xff]
    %v5483 = vld [vmem:[%s12 + $0x98] sm:$0xff]
    %v5484 = vld [vmem:[%s12 + $0xa0] sm:$0xff]
    %v5485 = vld [vmem:[%s12 + $0xa8] sm:$0xff]
    %v5486 = vld [vmem:[%s12 + $0xb0] sm:$0xff]
    %v5487 = vld [vmem:[%s12 + $0xb8] sm:$0xff]
    %v5488 = vld [vmem:[%s12 + $0xc0] sm:$0xff]
    %v5489 = vld [vmem:[%s12 + $0xc8] sm:$0xff]
    %v5490 = vld [vmem:[%s12 + $0xd0] sm:$0xff]
    %v5491 = vld [vmem:[%s12 + $0xd8] sm:$0xff]
    %v5492 = vld [vmem:[%s12 + $0xe0] sm:$0xff]
    %v5493 = vld [vmem:[%s12 + $0xe8] sm:$0xff]
    %v5494 = vld [vmem:[%s12 + $0xf0] sm:$0xff]
    %v5495 = vld [vmem:[%s12 + $0xf8] sm:$0xff]
    %v5496 = vld [vmem:[#allocation7] sm:$0x3]
    %v5498 = vlaneseq
    %v5499 = vshrl.u32 %v5498, 7
    %v5500 = vsub.s32 0, %v5499
    %v5501 = vrot.slane %v5496, %v5500
    %v5502 = vlaneseq
    %v5503 = vshrl.u32 %v5502, 7
    %v5504 = vsub.s32 1, %v5503
    %v5505 = vrot.slane %v5496, %v5504
    %5508 = vmatprep.subr.mxu0 %v5465
    %5509 = vmatpush1.msra.mxu0 %v5464
    %5510 = vmatprep.subr.mxu0 %v5467
    %5511 = vmatpush1.msra.mxu0 %v5466
    %5512 = vmatprep.subr.mxu0 %v5469
    %5513 = vmatpush1.msra.mxu0 %v5468
    %5514 = vmatprep.subr.mxu0 %v5471
    %5515 = vmatpush1.msra.mxu0 %v5470
    %5516 = vmatprep.subr.mxu0 %v5473
    %5517 = vmatpush1.msra.mxu0 %v5472
    %5518 = vmatprep.subr.mxu0 %v5475
    %5519 = vmatpush1.msra.mxu0 %v5474
    %5520 = vmatprep.subr.mxu0 %v5477
    %5521 = vmatpush1.msra.mxu0 %v5476
    %5522 = vmatprep.subr.mxu0 %v5479
    %5523 = vmatpush1.msra.mxu0 %v5478
    %5524 = vmatprep.subr.mxu0 %v5481
    %5525 = vmatpush1.msra.mxu0 %v5480
    %5526 = vmatprep.subr.mxu0 %v5483
    %5527 = vmatpush1.msra.mxu0 %v5482
    %5528 = vmatprep.subr.mxu0 %v5485
    %5529 = vmatpush1.msra.mxu0 %v5484
    %5530 = vmatprep.subr.mxu0 %v5487
    %5531 = vmatpush1.msra.mxu0 %v5486
    %5532 = vmatprep.subr.mxu0 %v5489
    %5533 = vmatpush1.msra.mxu0 %v5488
    %5534 = vmatprep.subr.mxu0 %v5491
    %5535 = vmatpush1.msra.mxu0 %v5490
    %5536 = vmatprep.subr.mxu0 %v5493
    %5537 = vmatpush1.msra.mxu0 %v5492
    %5538 = vmatprep.subr.mxu0 %v5495
    %5539 = vmatpush1.msra.mxu0 %v5494
    %5540 = vmatprep.subr.mxu0 0.0
    %5541 = vmatpush1.msra.mxu0 0.0
    %5542 = vmatprep.subr.mxu0 0.0
    %5543 = vmatpush1.msra.mxu0 0.0
    %5544 = vmatprep.subr.mxu0 0.0
    %5545 = vmatpush1.msra.mxu0 0.0
    %5546 = vmatprep.subr.mxu0 0.0
    %5547 = vmatpush1.msra.mxu0 0.0
    %5548 = vmatprep.subr.mxu0 0.0
    %5549 = vmatpush1.msra.mxu0 0.0
    %5550 = vmatprep.subr.mxu0 0.0
    %5551 = vmatpush1.msra.mxu0 0.0
    %5552 = vmatprep.subr.mxu0 0.0
    %5553 = vmatpush1.msra.mxu0 0.0
    %5554 = vmatprep.subr.mxu0 0.0
    %5555 = vmatpush1.msra.mxu0 0.0
    %5556 = vmatprep.subr.mxu0 0.0
    %5557 = vmatpush1.msra.mxu0 0.0
    %5558 = vmatprep.subr.mxu0 0.0
    %5559 = vmatpush1.msra.mxu0 0.0
    %5560 = vmatprep.subr.mxu0 0.0
    %5561 = vmatpush1.msra.mxu0 0.0
    %5562 = vmatprep.subr.mxu0 0.0
    %5563 = vmatpush1.msra.mxu0 0.0
    %5564 = vmatprep.subr.mxu0 0.0
    %5565 = vmatpush1.msra.mxu0 0.0
    %5566 = vmatprep.subr.mxu0 0.0
    %5567 = vmatpush1.msra.mxu0 0.0
    %5568 = vmatprep.subr.mxu0 0.0
    %5569 = vmatpush1.msra.mxu0 0.0
    %5570 = vmatprep.subr.mxu0 0.0
    %5571 = vmatpush1.msra.mxu0 0.0
    %5572 = vmatprep.mubr.f32.mxu0 0.0
    %5573 = vmatmul.mubr.f32.gmra.mrb[0].mxu0 %v5463
    %v5574 = vpop.f32.mrb[0].mxu0
    %v5575 = vadd.f32 %v5501, %v5574
    %v5576 = vpop.f32.mrb[0].mxu0
    %v5577 = vadd.f32 %v5505, %v5576
    %5578 = vdwg.mxu0
    %v5579 = vxor.u32 %v5575, 2147483648
    %v5580 = vmul.f32 %v5579, 1.442695
    %v5581 = vpow.pop %v5580
    %v5582 = vadd.f32 %v5581, 1.0
    %v5583 = vrcp.pop %v5582
    %v5584 = vmul.f32 1.0, %v5583
    %5586 = vrot.lane.b32.xlu0 %v5577, 64
    %v5587 = vpop.permute.xlu0 %5586
    %v5589 = vmul.f32 %v5584, %v5587
    %v5590 = vadd.f32 %v5577, %v5589
    %v5591 = vtanh.pop %v5590
    %v5592 = vsub.f32 1.0, %v5584
    %5594 = vrot.lane.b32.xlu0 %v5591, 64
    %v5595 = vpop.permute.xlu0 %5594
    %v5597 = vmul.f32 %v5592, %v5595
    %v5598 = vmul.f32 %v5584, %v5233
    %v5599 = vadd.f32 %v5597, %v5598
    %v5600 = vld [vmem:[#allocation9] sm:$0xff]
    %v5601 = vld [vmem:[#allocation9 + $0x8] sm:$0xff]
    %v5602 = vld [vmem:[#allocation9 + $0x10] sm:$0xff]
    %v5603 = vld [vmem:[#allocation9 + $0x18] sm:$0xff]
    %v5604 = vld [vmem:[#allocation9 + $0x20] sm:$0xff]
    %v5605 = vld [vmem:[#allocation9 + $0x28] sm:$0xff]
    %v5606 = vld [vmem:[#allocation9 + $0x30] sm:$0xff]
    %v5607 = vld [vmem:[#allocation9 + $0x38] sm:$0xff]
    %v5608 = vld [vmem:[#allocation10] sm:$0x1]
    %v5610 = vlaneseq
    %v5611 = vshrl.u32 %v5610, 7
    %v5612 = vsub.s32 0, %v5611
    %v5613 = vrot.slane %v5608, %v5612
    %5616 = vrot.lane.b32.xlu0 %v5599, 64
    %v5617 = vpop.permute.xlu0 %5616
    %v5618 = vsel %vm2006, %v5617, 0
    %5620 = vmatprep.subr.mxu0 0.0
    %5621 = vmatpush1.msra.mxu0 %v5600
    %5622 = vmatprep.subr.mxu0 0.0
    %5623 = vmatpush1.msra.mxu0 %v5601
    %5624 = vmatprep.subr.mxu0 0.0
    %5625 = vmatpush1.msra.mxu0 %v5602
    %5626 = vmatprep.subr.mxu0 0.0
    %5627 = vmatpush1.msra.mxu0 %v5603
    %5628 = vmatprep.subr.mxu0 0.0
    %5629 = vmatpush1.msra.mxu0 %v5604
    %5630 = vmatprep.subr.mxu0 0.0
    %5631 = vmatpush1.msra.mxu0 %v5605
    %5632 = vmatprep.subr.mxu0 0.0
    %5633 = vmatpush1.msra.mxu0 %v5606
    %5634 = vmatprep.subr.mxu0 0.0
    %5635 = vmatpush1.msra.mxu0 %v5607
    %5636 = vmatprep.subr.mxu0 0.0
    %5637 = vmatpush1.msra.mxu0 0.0
    %5638 = vmatprep.subr.mxu0 0.0
    %5639 = vmatpush1.msra.mxu0 0.0
    %5640 = vmatprep.subr.mxu0 0.0
    %5641 = vmatpush1.msra.mxu0 0.0
    %5642 = vmatprep.subr.mxu0 0.0
    %5643 = vmatpush1.msra.mxu0 0.0
    %5644 = vmatprep.subr.mxu0 0.0
    %5645 = vmatpush1.msra.mxu0 0.0
    %5646 = vmatprep.subr.mxu0 0.0
    %5647 = vmatpush1.msra.mxu0 0.0
    %5648 = vmatprep.subr.mxu0 0.0
    %5649 = vmatpush1.msra.mxu0 0.0
    %5650 = vmatprep.subr.mxu0 0.0
    %5651 = vmatpush1.msra.mxu0 0.0
    %5652 = vmatprep.subr.mxu0 0.0
    %5653 = vmatpush1.msra.mxu0 0.0
    %5654 = vmatprep.subr.mxu0 0.0
    %5655 = vmatpush1.msra.mxu0 0.0
    %5656 = vmatprep.subr.mxu0 0.0
    %5657 = vmatpush1.msra.mxu0 0.0
    %5658 = vmatprep.subr.mxu0 0.0
    %5659 = vmatpush1.msra.mxu0 0.0
    %5660 = vmatprep.subr.mxu0 0.0
    %5661 = vmatpush1.msra.mxu0 0.0
    %5662 = vmatprep.subr.mxu0 0.0
    %5663 = vmatpush1.msra.mxu0 0.0
    %5664 = vmatprep.subr.mxu0 0.0
    %5665 = vmatpush1.msra.mxu0 0.0
    %5666 = vmatprep.subr.mxu0 0.0
    %5667 = vmatpush1.msra.mxu0 0.0
    %5668 = vmatprep.subr.mxu0 0.0
    %5669 = vmatpush1.msra.mxu0 0.0
    %5670 = vmatprep.subr.mxu0 0.0
    %5671 = vmatpush1.msra.mxu0 0.0
    %5672 = vmatprep.subr.mxu0 0.0
    %5673 = vmatpush1.msra.mxu0 0.0
    %5674 = vmatprep.subr.mxu0 0.0
    %5675 = vmatpush1.msra.mxu0 0.0
    %5676 = vmatprep.subr.mxu0 0.0
    %5677 = vmatpush1.msra.mxu0 0.0
    %5678 = vmatprep.subr.mxu0 0.0
    %5679 = vmatpush1.msra.mxu0 0.0
    %5680 = vmatprep.subr.mxu0 0.0
    %5681 = vmatpush1.msra.mxu0 0.0
    %5682 = vmatprep.subr.mxu0 0.0
    %5683 = vmatpush1.msra.mxu0 0.0
    %5684 = vmatprep.mubr.f32.mxu0 0.0
    %5685 = vmatmul.mubr.f32.gmra.mrb[0].mxu0 %v5618
    %v5686 = vpop.f32.mrb[0].mxu0
    %v5687 = vadd.f32 %v5613, %v5686
    %v5688 = vpop.f32.mrb[0].mxu0
    %5689 = vdwg.mxu0
    %s5690 = scalar_lea.vmem %s17, 8
    %5691 = vst [vmem:[%s5690] sm:$0x3] %v5687
    %s5692 = scalar_lea.vmem %s1, 10
    %v5693 = vld [vmem:[%s5692] sm:$0x3]
    %5694 = vrot.lane.b32.xlu0 %v5458, 80
    %v5695 = vpop.permute.xlu0 %5694
    %v5697 = vsel %vm116, %v5693, %v5695
    %v5698 = vld [vmem:[%s10] sm:$0xff]
    %v5699 = vld [vmem:[%s10 + $0x8] sm:$0xff]
    %v5700 = vld [vmem:[%s10 + $0x10] sm:$0xff]
    %v5701 = vld [vmem:[%s10 + $0x18] sm:$0xff]
    %v5702 = vld [vmem:[%s10 + $0x20] sm:$0xff]
    %v5703 = vld [vmem:[%s10 + $0x28] sm:$0xff]
    %v5704 = vld [vmem:[%s10 + $0x30] sm:$0xff]
    %v5705 = vld [vmem:[%s10 + $0x38] sm:$0xff]
    %v5706 = vld [vmem:[%s10 + $0x40] sm:$0xff]
    %v5707 = vld [vmem:[%s10 + $0x48] sm:$0xff]
    %v5708 = vld [vmem:[%s10 + $0x50] sm:$0xff]
    %v5709 = vld [vmem:[%s10 + $0x58] sm:$0xff]
    %v5710 = vld [vmem:[%s10 + $0x60] sm:$0xff]
    %v5711 = vld [vmem:[%s10 + $0x68] sm:$0xff]
    %v5712 = vld [vmem:[%s10 + $0x70] sm:$0xff]
    %v5713 = vld [vmem:[%s10 + $0x78] sm:$0xff]
    %v5714 = vld [vmem:[%s10 + $0x80] sm:$0xff]
    %v5715 = vld [vmem:[%s10 + $0x88] sm:$0xff]
    %v5716 = vld [vmem:[%s10 + $0x90] sm:$0xff]
    %v5717 = vld [vmem:[%s10 + $0x98] sm:$0xff]
    %v5718 = vld [vmem:[#allocation5] sm:$0x3]
    %v5720 = vlaneseq
    %v5721 = vshrl.u32 %v5720, 7
    %v5722 = vsub.s32 0, %v5721
    %v5723 = vrot.slane %v5718, %v5722
    %v5724 = vlaneseq
    %v5725 = vshrl.u32 %v5724, 7
    %v5726 = vsub.s32 1, %v5725
    %v5727 = vrot.slane %v5718, %v5726
    %v5731 = vsel %vm3893, %v5697, 0
    %5733 = vmatprep.subr.mxu0 %v5699
    %5734 = vmatpush1.msra.mxu0 %v5698
    %5735 = vmatprep.subr.mxu0 %v5701
    %5736 = vmatpush1.msra.mxu0 %v5700
    %5737 = vmatprep.subr.mxu0 %v5703
    %5738 = vmatpush1.msra.mxu0 %v5702
    %5739 = vmatprep.subr.mxu0 %v5705
    %5740 = vmatpush1.msra.mxu0 %v5704
    %5741 = vmatprep.subr.mxu0 %v5707
    %5742 = vmatpush1.msra.mxu0 %v5706
    %5743 = vmatprep.subr.mxu0 %v5709
    %5744 = vmatpush1.msra.mxu0 %v5708
    %5745 = vmatprep.subr.mxu0 %v5711
    %5746 = vmatpush1.msra.mxu0 %v5710
    %5747 = vmatprep.subr.mxu0 %v5713
    %5748 = vmatpush1.msra.mxu0 %v5712
    %5749 = vmatprep.subr.mxu0 %v5715
    %5750 = vmatpush1.msra.mxu0 %v5714
    %5751 = vmatprep.subr.mxu0 %v5717
    %5752 = vmatpush1.msra.mxu0 %v5716
    %5753 = vmatprep.subr.mxu0 0.0
    %5754 = vmatpush1.msra.mxu0 0.0
    %5755 = vmatprep.subr.mxu0 0.0
    %5756 = vmatpush1.msra.mxu0 0.0
    %5757 = vmatprep.subr.mxu0 0.0
    %5758 = vmatpush1.msra.mxu0 0.0
    %5759 = vmatprep.subr.mxu0 0.0
    %5760 = vmatpush1.msra.mxu0 0.0
    %5761 = vmatprep.subr.mxu0 0.0
    %5762 = vmatpush1.msra.mxu0 0.0
    %5763 = vmatprep.subr.mxu0 0.0
    %5764 = vmatpush1.msra.mxu0 0.0
    %5765 = vmatprep.subr.mxu0 0.0
    %5766 = vmatpush1.msra.mxu0 0.0
    %5767 = vmatprep.subr.mxu0 0.0
    %5768 = vmatpush1.msra.mxu0 0.0
    %5769 = vmatprep.subr.mxu0 0.0
    %5770 = vmatpush1.msra.mxu0 0.0
    %5771 = vmatprep.subr.mxu0 0.0
    %5772 = vmatpush1.msra.mxu0 0.0
    %5773 = vmatprep.subr.mxu0 0.0
    %5774 = vmatpush1.msra.mxu0 0.0
    %5775 = vmatprep.subr.mxu0 0.0
    %5776 = vmatpush1.msra.mxu0 0.0
    %5777 = vmatprep.subr.mxu0 0.0
    %5778 = vmatpush1.msra.mxu0 0.0
    %5779 = vmatprep.subr.mxu0 0.0
    %5780 = vmatpush1.msra.mxu0 0.0
    %5781 = vmatprep.subr.mxu0 0.0
    %5782 = vmatpush1.msra.mxu0 0.0
    %5783 = vmatprep.subr.mxu0 0.0
    %5784 = vmatpush1.msra.mxu0 0.0
    %5785 = vmatprep.subr.mxu0 0.0
    %5786 = vmatpush1.msra.mxu0 0.0
    %5787 = vmatprep.subr.mxu0 0.0
    %5788 = vmatpush1.msra.mxu0 0.0
    %5789 = vmatprep.subr.mxu0 0.0
    %5790 = vmatpush1.msra.mxu0 0.0
    %5791 = vmatprep.subr.mxu0 0.0
    %5792 = vmatpush1.msra.mxu0 0.0
    %5793 = vmatprep.subr.mxu0 0.0
    %5794 = vmatpush1.msra.mxu0 0.0
    %5795 = vmatprep.subr.mxu0 0.0
    %5796 = vmatpush1.msra.mxu0 0.0
    %5797 = vmatprep.mubr.f32.mxu0 0.0
    %5798 = vmatmul.mubr.f32.gmra.mrb[0].mxu0 %v5731
    %v5799 = vpop.f32.mrb[0].mxu0
    %v5800 = vadd.f32 %v5723, %v5799
    %v5801 = vpop.f32.mrb[0].mxu0
    %v5802 = vadd.f32 %v5727, %v5801
    %5803 = vdwg.mxu0
    %v5804 = vxor.u32 %v5800, 2147483648
    %v5805 = vmul.f32 %v5804, 1.442695
    %v5806 = vpow.pop %v5805
    %v5807 = vadd.f32 %v5806, 1.0
    %v5808 = vrcp.pop %v5807
    %v5809 = vmul.f32 1.0, %v5808
    %5811 = vrot.lane.b32.xlu0 %v5802, 64
    %v5812 = vpop.permute.xlu0 %5811
    %v5814 = vmul.f32 %v5809, %v5812
    %v5815 = vadd.f32 %v5802, %v5814
    %v5816 = vtanh.pop %v5815
    %v5817 = vsub.f32 1.0, %v5809
    %5819 = vrot.lane.b32.xlu0 %v5816, 64
    %v5820 = vpop.permute.xlu0 %5819
    %v5822 = vmul.f32 %v5817, %v5820
    %v5823 = vmul.f32 %v5809, %v5458
    %v5824 = vadd.f32 %v5822, %v5823
    %5826 = vrot.lane.b32.xlu0 %v5824, 64
    %v5827 = vpop.permute.xlu0 %5826
    %v5829 = vsel %vm2006, %v5827, %v5599
    %v5830 = vld [vmem:[%s12] sm:$0xff]
    %v5831 = vld [vmem:[%s12 + $0x8] sm:$0xff]
    %v5832 = vld [vmem:[%s12 + $0x10] sm:$0xff]
    %v5833 = vld [vmem:[%s12 + $0x18] sm:$0xff]
    %v5834 = vld [vmem:[%s12 + $0x20] sm:$0xff]
    %v5835 = vld [vmem:[%s12 + $0x28] sm:$0xff]
    %v5836 = vld [vmem:[%s12 + $0x30] sm:$0xff]
    %v5837 = vld [vmem:[%s12 + $0x38] sm:$0xff]
    %v5838 = vld [vmem:[%s12 + $0x40] sm:$0xff]
    %v5839 = vld [vmem:[%s12 + $0x48] sm:$0xff]
    %v5840 = vld [vmem:[%s12 + $0x50] sm:$0xff]
    %v5841 = vld [vmem:[%s12 + $0x58] sm:$0xff]
    %v5842 = vld [vmem:[%s12 + $0x60] sm:$0xff]
    %v5843 = vld [vmem:[%s12 + $0x68] sm:$0xff]
    %v5844 = vld [vmem:[%s12 + $0x70] sm:$0xff]
    %v5845 = vld [vmem:[%s12 + $0x78] sm:$0xff]
    %v5846 = vld [vmem:[%s12 + $0x80] sm:$0xff]
    %v5847 = vld [vmem:[%s12 + $0x88] sm:$0xff]
    %v5848 = vld [vmem:[%s12 + $0x90] sm:$0xff]
    %v5849 = vld [vmem:[%s12 + $0x98] sm:$0xff]
    %v5850 = vld [vmem:[%s12 + $0xa0] sm:$0xff]
    %v5851 = vld [vmem:[%s12 + $0xa8] sm:$0xff]
    %v5852 = vld [vmem:[%s12 + $0xb0] sm:$0xff]
    %v5853 = vld [vmem:[%s12 + $0xb8] sm:$0xff]
    %v5854 = vld [vmem:[%s12 + $0xc0] sm:$0xff]
    %v5855 = vld [vmem:[%s12 + $0xc8] sm:$0xff]
    %v5856 = vld [vmem:[%s12 + $0xd0] sm:$0xff]
    %v5857 = vld [vmem:[%s12 + $0xd8] sm:$0xff]
    %v5858 = vld [vmem:[%s12 + $0xe0] sm:$0xff]
    %v5859 = vld [vmem:[%s12 + $0xe8] sm:$0xff]
    %v5860 = vld [vmem:[%s12 + $0xf0] sm:$0xff]
    %v5861 = vld [vmem:[%s12 + $0xf8] sm:$0xff]
    %v5862 = vld [vmem:[#allocation7] sm:$0x3]
    %v5864 = vlaneseq
    %v5865 = vshrl.u32 %v5864, 7
    %v5866 = vsub.s32 0, %v5865
    %v5867 = vrot.slane %v5862, %v5866
    %v5868 = vlaneseq
    %v5869 = vshrl.u32 %v5868, 7
    %v5870 = vsub.s32 1, %v5869
    %v5871 = vrot.slane %v5862, %v5870
    %5874 = vmatprep.subr.mxu0 %v5831
    %5875 = vmatpush1.msra.mxu0 %v5830
    %5876 = vmatprep.subr.mxu0 %v5833
    %5877 = vmatpush1.msra.mxu0 %v5832
    %5878 = vmatprep.subr.mxu0 %v5835
    %5879 = vmatpush1.msra.mxu0 %v5834
    %5880 = vmatprep.subr.mxu0 %v5837
    %5881 = vmatpush1.msra.mxu0 %v5836
    %5882 = vmatprep.subr.mxu0 %v5839
    %5883 = vmatpush1.msra.mxu0 %v5838
    %5884 = vmatprep.subr.mxu0 %v5841
    %5885 = vmatpush1.msra.mxu0 %v5840
    %5886 = vmatprep.subr.mxu0 %v5843
    %5887 = vmatpush1.msra.mxu0 %v5842
    %5888 = vmatprep.subr.mxu0 %v5845
    %5889 = vmatpush1.msra.mxu0 %v5844
    %5890 = vmatprep.subr.mxu0 %v5847
    %5891 = vmatpush1.msra.mxu0 %v5846
    %5892 = vmatprep.subr.mxu0 %v5849
    %5893 = vmatpush1.msra.mxu0 %v5848
    %5894 = vmatprep.subr.mxu0 %v5851
    %5895 = vmatpush1.msra.mxu0 %v5850
    %5896 = vmatprep.subr.mxu0 %v5853
    %5897 = vmatpush1.msra.mxu0 %v5852
    %5898 = vmatprep.subr.mxu0 %v5855
    %5899 = vmatpush1.msra.mxu0 %v5854
    %5900 = vmatprep.subr.mxu0 %v5857
    %5901 = vmatpush1.msra.mxu0 %v5856
    %5902 = vmatprep.subr.mxu0 %v5859
    %5903 = vmatpush1.msra.mxu0 %v5858
    %5904 = vmatprep.subr.mxu0 %v5861
    %5905 = vmatpush1.msra.mxu0 %v5860
    %5906 = vmatprep.subr.mxu0 0.0
    %5907 = vmatpush1.msra.mxu0 0.0
    %5908 = vmatprep.subr.mxu0 0.0
    %5909 = vmatpush1.msra.mxu0 0.0
    %5910 = vmatprep.subr.mxu0 0.0
    %5911 = vmatpush1.msra.mxu0 0.0
    %5912 = vmatprep.subr.mxu0 0.0
    %5913 = vmatpush1.msra.mxu0 0.0
    %5914 = vmatprep.subr.mxu0 0.0
    %5915 = vmatpush1.msra.mxu0 0.0
    %5916 = vmatprep.subr.mxu0 0.0
    %5917 = vmatpush1.msra.mxu0 0.0
    %5918 = vmatprep.subr.mxu0 0.0
    %5919 = vmatpush1.msra.mxu0 0.0
    %5920 = vmatprep.subr.mxu0 0.0
    %5921 = vmatpush1.msra.mxu0 0.0
    %5922 = vmatprep.subr.mxu0 0.0
    %5923 = vmatpush1.msra.mxu0 0.0
    %5924 = vmatprep.subr.mxu0 0.0
    %5925 = vmatpush1.msra.mxu0 0.0
    %5926 = vmatprep.subr.mxu0 0.0
    %5927 = vmatpush1.msra.mxu0 0.0
    %5928 = vmatprep.subr.mxu0 0.0
    %5929 = vmatpush1.msra.mxu0 0.0
    %5930 = vmatprep.subr.mxu0 0.0
    %5931 = vmatpush1.msra.mxu0 0.0
    %5932 = vmatprep.subr.mxu0 0.0
    %5933 = vmatpush1.msra.mxu0 0.0
    %5934 = vmatprep.subr.mxu0 0.0
    %5935 = vmatpush1.msra.mxu0 0.0
    %5936 = vmatprep.subr.mxu0 0.0
    %5937 = vmatpush1.msra.mxu0 0.0
    %5938 = vmatprep.mubr.f32.mxu0 0.0
    %5939 = vmatmul.mubr.f32.gmra.mrb[0].mxu0 %v5829
    %v5940 = vpop.f32.mrb[0].mxu0
    %v5941 = vadd.f32 %v5867, %v5940
    %v5942 = vpop.f32.mrb[0].mxu0
    %v5943 = vadd.f32 %v5871, %v5942
    %5944 = vdwg.mxu0
    %v5945 = vxor.u32 %v5941, 2147483648
    %v5946 = vmul.f32 %v5945, 1.442695
    %v5947 = vpow.pop %v5946
    %v5948 = vadd.f32 %v5947, 1.0
    %v5949 = vrcp.pop %v5948
    %v5950 = vmul.f32 1.0, %v5949
    %5952 = vrot.lane.b32.xlu0 %v5943, 64
    %v5953 = vpop.permute.xlu0 %5952
    %v5955 = vmul.f32 %v5950, %v5953
    %v5956 = vadd.f32 %v5943, %v5955
    %v5957 = vtanh.pop %v5956
    %v5958 = vsub.f32 1.0, %v5950
    %5960 = vrot.lane.b32.xlu0 %v5957, 64
    %v5961 = vpop.permute.xlu0 %5960
    %v5963 = vmul.f32 %v5958, %v5961
    %v5964 = vmul.f32 %v5950, %v5599
    %v5965 = vadd.f32 %v5963, %v5964
    %v5966 = vld [vmem:[#allocation9] sm:$0xff]
    %v5967 = vld [vmem:[#allocation9 + $0x8] sm:$0xff]
    %v5968 = vld [vmem:[#allocation9 + $0x10] sm:$0xff]
    %v5969 = vld [vmem:[#allocation9 + $0x18] sm:$0xff]
    %v5970 = vld [vmem:[#allocation9 + $0x20] sm:$0xff]
    %v5971 = vld [vmem:[#allocation9 + $0x28] sm:$0xff]
    %v5972 = vld [vmem:[#allocation9 + $0x30] sm:$0xff]
    %v5973 = vld [vmem:[#allocation9 + $0x38] sm:$0xff]
    %v5974 = vld [vmem:[#allocation10] sm:$0x1]
    %v5976 = vlaneseq
    %v5977 = vshrl.u32 %v5976, 7
    %v5978 = vsub.s32 0, %v5977
    %v5979 = vrot.slane %v5974, %v5978
    %5982 = vrot.lane.b32.xlu0 %v5965, 64
    %v5983 = vpop.permute.xlu0 %5982
    %v5984 = vsel %vm2006, %v5983, 0
    %5986 = vmatprep.subr.mxu0 0.0
    %5987 = vmatpush1.msra.mxu0 %v5966
    %5988 = vmatprep.subr.mxu0 0.0
    %5989 = vmatpush1.msra.mxu0 %v5967
    %5990 = vmatprep.subr.mxu0 0.0
    %5991 = vmatpush1.msra.mxu0 %v5968
    %5992 = vmatprep.subr.mxu0 0.0
    %5993 = vmatpush1.msra.mxu0 %v5969
    %5994 = vmatprep.subr.mxu0 0.0
    %5995 = vmatpush1.msra.mxu0 %v5970
    %5996 = vmatprep.subr.mxu0 0.0
    %5997 = vmatpush1.msra.mxu0 %v5971
    %5998 = vmatprep.subr.mxu0 0.0
    %5999 = vmatpush1.msra.mxu0 %v5972
    %6000 = vmatprep.subr.mxu0 0.0
    %6001 = vmatpush1.msra.mxu0 %v5973
    %6002 = vmatprep.subr.mxu0 0.0
    %6003 = vmatpush1.msra.mxu0 0.0
    %6004 = vmatprep.subr.mxu0 0.0
    %6005 = vmatpush1.msra.mxu0 0.0
    %6006 = vmatprep.subr.mxu0 0.0
    %6007 = vmatpush1.msra.mxu0 0.0
    %6008 = vmatprep.subr.mxu0 0.0
    %6009 = vmatpush1.msra.mxu0 0.0
    %6010 = vmatprep.subr.mxu0 0.0
    %6011 = vmatpush1.msra.mxu0 0.0
    %6012 = vmatprep.subr.mxu0 0.0
    %6013 = vmatpush1.msra.mxu0 0.0
    %6014 = vmatprep.subr.mxu0 0.0
    %6015 = vmatpush1.msra.mxu0 0.0
    %6016 = vmatprep.subr.mxu0 0.0
    %6017 = vmatpush1.msra.mxu0 0.0
    %6018 = vmatprep.subr.mxu0 0.0
    %6019 = vmatpush1.msra.mxu0 0.0
    %6020 = vmatprep.subr.mxu0 0.0
    %6021 = vmatpush1.msra.mxu0 0.0
    %6022 = vmatprep.subr.mxu0 0.0
    %6023 = vmatpush1.msra.mxu0 0.0
    %6024 = vmatprep.subr.mxu0 0.0
    %6025 = vmatpush1.msra.mxu0 0.0
    %6026 = vmatprep.subr.mxu0 0.0
    %6027 = vmatpush1.msra.mxu0 0.0
    %6028 = vmatprep.subr.mxu0 0.0
    %6029 = vmatpush1.msra.mxu0 0.0
    %6030 = vmatprep.subr.mxu0 0.0
    %6031 = vmatpush1.msra.mxu0 0.0
    %6032 = vmatprep.subr.mxu0 0.0
    %6033 = vmatpush1.msra.mxu0 0.0
    %6034 = vmatprep.subr.mxu0 0.0
    %6035 = vmatpush1.msra.mxu0 0.0
    %6036 = vmatprep.subr.mxu0 0.0
    %6037 = vmatpush1.msra.mxu0 0.0
    %6038 = vmatprep.subr.mxu0 0.0
    %6039 = vmatpush1.msra.mxu0 0.0
    %6040 = vmatprep.subr.mxu0 0.0
    %6041 = vmatpush1.msra.mxu0 0.0
    %6042 = vmatprep.subr.mxu0 0.0
    %6043 = vmatpush1.msra.mxu0 0.0
    %6044 = vmatprep.subr.mxu0 0.0
    %6045 = vmatpush1.msra.mxu0 0.0
    %6046 = vmatprep.subr.mxu0 0.0
    %6047 = vmatpush1.msra.mxu0 0.0
    %6048 = vmatprep.subr.mxu0 0.0
    %6049 = vmatpush1.msra.mxu0 0.0
    %6050 = vmatprep.mubr.f32.mxu0 0.0
    %6051 = vmatmul.mubr.f32.gmra.mrb[0].mxu0 %v5984
    %v6052 = vpop.f32.mrb[0].mxu0
    %v6053 = vadd.f32 %v5979, %v6052
    %v6054 = vpop.f32.mrb[0].mxu0
    %6055 = vdwg.mxu0
    %s6056 = scalar_lea.vmem %s17, 10
    %6057 = vst [vmem:[%s6056] sm:$0x3] %v6053
    %s6058 = scalar_lea.vmem %s1, 12
    %v6059 = vld [vmem:[%s6058] sm:$0x3]
    %6060 = vrot.lane.b32.xlu0 %v5824, 80
    %v6061 = vpop.permute.xlu0 %6060
    %v6063 = vsel %vm116, %v6059, %v6061
    %v6064 = vld [vmem:[%s10] sm:$0xff]
    %v6065 = vld [vmem:[%s10 + $0x8] sm:$0xff]
    %v6066 = vld [vmem:[%s10 + $0x10] sm:$0xff]
    %v6067 = vld [vmem:[%s10 + $0x18] sm:$0xff]
    %v6068 = vld [vmem:[%s10 + $0x20] sm:$0xff]
    %v6069 = vld [vmem:[%s10 + $0x28] sm:$0xff]
    %v6070 = vld [vmem:[%s10 + $0x30] sm:$0xff]
    %v6071 = vld [vmem:[%s10 + $0x38] sm:$0xff]
    %v6072 = vld [vmem:[%s10 + $0x40] sm:$0xff]
    %v6073 = vld [vmem:[%s10 + $0x48] sm:$0xff]
    %v6074 = vld [vmem:[%s10 + $0x50] sm:$0xff]
    %v6075 = vld [vmem:[%s10 + $0x58] sm:$0xff]
    %v6076 = vld [vmem:[%s10 + $0x60] sm:$0xff]
    %v6077 = vld [vmem:[%s10 + $0x68] sm:$0xff]
    %v6078 = vld [vmem:[%s10 + $0x70] sm:$0xff]
    %v6079 = vld [vmem:[%s10 + $0x78] sm:$0xff]
    %v6080 = vld [vmem:[%s10 + $0x80] sm:$0xff]
    %v6081 = vld [vmem:[%s10 + $0x88] sm:$0xff]
    %v6082 = vld [vmem:[%s10 + $0x90] sm:$0xff]
    %v6083 = vld [vmem:[%s10 + $0x98] sm:$0xff]
    %v6084 = vld [vmem:[#allocation5] sm:$0x3]
    %v6086 = vlaneseq
    %v6087 = vshrl.u32 %v6086, 7
    %v6088 = vsub.s32 0, %v6087
    %v6089 = vrot.slane %v6084, %v6088
    %v6090 = vlaneseq
    %v6091 = vshrl.u32 %v6090, 7
    %v6092 = vsub.s32 1, %v6091
    %v6093 = vrot.slane %v6084, %v6092
    %v6097 = vsel %vm3893, %v6063, 0
    %6099 = vmatprep.subr.mxu0 %v6065
    %6100 = vmatpush1.msra.mxu0 %v6064
    %6101 = vmatprep.subr.mxu0 %v6067
    %6102 = vmatpush1.msra.mxu0 %v6066
    %6103 = vmatprep.subr.mxu0 %v6069
    %6104 = vmatpush1.msra.mxu0 %v6068
    %6105 = vmatprep.subr.mxu0 %v6071
    %6106 = vmatpush1.msra.mxu0 %v6070
    %6107 = vmatprep.subr.mxu0 %v6073
    %6108 = vmatpush1.msra.mxu0 %v6072
    %6109 = vmatprep.subr.mxu0 %v6075
    %6110 = vmatpush1.msra.mxu0 %v6074
    %6111 = vmatprep.subr.mxu0 %v6077
    %6112 = vmatpush1.msra.mxu0 %v6076
    %6113 = vmatprep.subr.mxu0 %v6079
    %6114 = vmatpush1.msra.mxu0 %v6078
    %6115 = vmatprep.subr.mxu0 %v6081
    %6116 = vmatpush1.msra.mxu0 %v6080
    %6117 = vmatprep.subr.mxu0 %v6083
    %6118 = vmatpush1.msra.mxu0 %v6082
    %6119 = vmatprep.subr.mxu0 0.0
    %6120 = vmatpush1.msra.mxu0 0.0
    %6121 = vmatprep.subr.mxu0 0.0
    %6122 = vmatpush1.msra.mxu0 0.0
    %6123 = vmatprep.subr.mxu0 0.0
    %6124 = vmatpush1.msra.mxu0 0.0
    %6125 = vmatprep.subr.mxu0 0.0
    %6126 = vmatpush1.msra.mxu0 0.0
    %6127 = vmatprep.subr.mxu0 0.0
    %6128 = vmatpush1.msra.mxu0 0.0
    %6129 = vmatprep.subr.mxu0 0.0
    %6130 = vmatpush1.msra.mxu0 0.0
    %6131 = vmatprep.subr.mxu0 0.0
    %6132 = vmatpush1.msra.mxu0 0.0
    %6133 = vmatprep.subr.mxu0 0.0
    %6134 = vmatpush1.msra.mxu0 0.0
    %6135 = vmatprep.subr.mxu0 0.0
    %6136 = vmatpush1.msra.mxu0 0.0
    %6137 = vmatprep.subr.mxu0 0.0
    %6138 = vmatpush1.msra.mxu0 0.0
    %6139 = vmatprep.subr.mxu0 0.0
    %6140 = vmatpush1.msra.mxu0 0.0
    %6141 = vmatprep.subr.mxu0 0.0
    %6142 = vmatpush1.msra.mxu0 0.0
    %6143 = vmatprep.subr.mxu0 0.0
    %6144 = vmatpush1.msra.mxu0 0.0
    %6145 = vmatprep.subr.mxu0 0.0
    %6146 = vmatpush1.msra.mxu0 0.0
    %6147 = vmatprep.subr.mxu0 0.0
    %6148 = vmatpush1.msra.mxu0 0.0
    %6149 = vmatprep.subr.mxu0 0.0
    %6150 = vmatpush1.msra.mxu0 0.0
    %6151 = vmatprep.subr.mxu0 0.0
    %6152 = vmatpush1.msra.mxu0 0.0
    %6153 = vmatprep.subr.mxu0 0.0
    %6154 = vmatpush1.msra.mxu0 0.0
    %6155 = vmatprep.subr.mxu0 0.0
    %6156 = vmatpush1.msra.mxu0 0.0
    %6157 = vmatprep.subr.mxu0 0.0
    %6158 = vmatpush1.msra.mxu0 0.0
    %6159 = vmatprep.subr.mxu0 0.0
    %6160 = vmatpush1.msra.mxu0 0.0
    %6161 = vmatprep.subr.mxu0 0.0
    %6162 = vmatpush1.msra.mxu0 0.0
    %6163 = vmatprep.mubr.f32.mxu0 0.0
    %6164 = vmatmul.mubr.f32.gmra.mrb[0].mxu0 %v6097
    %v6165 = vpop.f32.mrb[0].mxu0
    %v6166 = vadd.f32 %v6089, %v6165
    %v6167 = vpop.f32.mrb[0].mxu0
    %v6168 = vadd.f32 %v6093, %v6167
    %6169 = vdwg.mxu0
    %v6170 = vxor.u32 %v6166, 2147483648
    %v6171 = vmul.f32 %v6170, 1.442695
    %v6172 = vpow.pop %v6171
    %v6173 = vadd.f32 %v6172, 1.0
    %v6174 = vrcp.pop %v6173
    %v6175 = vmul.f32 1.0, %v6174
    %6177 = vrot.lane.b32.xlu0 %v6168, 64
    %v6178 = vpop.permute.xlu0 %6177
    %v6180 = vmul.f32 %v6175, %v6178
    %v6181 = vadd.f32 %v6168, %v6180
    %v6182 = vtanh.pop %v6181
    %v6183 = vsub.f32 1.0, %v6175
    %6185 = vrot.lane.b32.xlu0 %v6182, 64
    %v6186 = vpop.permute.xlu0 %6185
    %v6188 = vmul.f32 %v6183, %v6186
    %v6189 = vmul.f32 %v6175, %v5824
    %v6190 = vadd.f32 %v6188, %v6189
    %6192 = vrot.lane.b32.xlu0 %v6190, 64
    %v6193 = vpop.permute.xlu0 %6192
    %v6195 = vsel %vm2006, %v6193, %v5965
    %v6196 = vld [vmem:[%s12] sm:$0xff]
    %v6197 = vld [vmem:[%s12 + $0x8] sm:$0xff]
    %v6198 = vld [vmem:[%s12 + $0x10] sm:$0xff]
    %v6199 = vld [vmem:[%s12 + $0x18] sm:$0xff]
    %v6200 = vld [vmem:[%s12 + $0x20] sm:$0xff]
    %v6201 = vld [vmem:[%s12 + $0x28] sm:$0xff]
    %v6202 = vld [vmem:[%s12 + $0x30] sm:$0xff]
    %v6203 = vld [vmem:[%s12 + $0x38] sm:$0xff]
    %v6204 = vld [vmem:[%s12 + $0x40] sm:$0xff]
    %v6205 = vld [vmem:[%s12 + $0x48] sm:$0xff]
    %v6206 = vld [vmem:[%s12 + $0x50] sm:$0xff]
    %v6207 = vld [vmem:[%s12 + $0x58] sm:$0xff]
    %v6208 = vld [vmem:[%s12 + $0x60] sm:$0xff]
    %v6209 = vld [vmem:[%s12 + $0x68] sm:$0xff]
    %v6210 = vld [vmem:[%s12 + $0x70] sm:$0xff]
    %v6211 = vld [vmem:[%s12 + $0x78] sm:$0xff]
    %v6212 = vld [vmem:[%s12 + $0x80] sm:$0xff]
    %v6213 = vld [vmem:[%s12 + $0x88] sm:$0xff]
    %v6214 = vld [vmem:[%s12 + $0x90] sm:$0xff]
    %v6215 = vld [vmem:[%s12 + $0x98] sm:$0xff]
    %v6216 = vld [vmem:[%s12 + $0xa0] sm:$0xff]
    %v6217 = vld [vmem:[%s12 + $0xa8] sm:$0xff]
    %v6218 = vld [vmem:[%s12 + $0xb0] sm:$0xff]
    %v6219 = vld [vmem:[%s12 + $0xb8] sm:$0xff]
    %v6220 = vld [vmem:[%s12 + $0xc0] sm:$0xff]
    %v6221 = vld [vmem:[%s12 + $0xc8] sm:$0xff]
    %v6222 = vld [vmem:[%s12 + $0xd0] sm:$0xff]
    %v6223 = vld [vmem:[%s12 + $0xd8] sm:$0xff]
    %v6224 = vld [vmem:[%s12 + $0xe0] sm:$0xff]
    %v6225 = vld [vmem:[%s12 + $0xe8] sm:$0xff]
    %v6226 = vld [vmem:[%s12 + $0xf0] sm:$0xff]
    %v6227 = vld [vmem:[%s12 + $0xf8] sm:$0xff]
    %v6228 = vld [vmem:[#allocation7] sm:$0x3]
    %v6230 = vlaneseq
    %v6231 = vshrl.u32 %v6230, 7
    %v6232 = vsub.s32 0, %v6231
    %v6233 = vrot.slane %v6228, %v6232
    %v6234 = vlaneseq
    %v6235 = vshrl.u32 %v6234, 7
    %v6236 = vsub.s32 1, %v6235
    %v6237 = vrot.slane %v6228, %v6236
    %6240 = vmatprep.subr.mxu0 %v6197
    %6241 = vmatpush1.msra.mxu0 %v6196
    %6242 = vmatprep.subr.mxu0 %v6199
    %6243 = vmatpush1.msra.mxu0 %v6198
    %6244 = vmatprep.subr.mxu0 %v6201
    %6245 = vmatpush1.msra.mxu0 %v6200
    %6246 = vmatprep.subr.mxu0 %v6203
    %6247 = vmatpush1.msra.mxu0 %v6202
    %6248 = vmatprep.subr.mxu0 %v6205
    %6249 = vmatpush1.msra.mxu0 %v6204
    %6250 = vmatprep.subr.mxu0 %v6207
    %6251 = vmatpush1.msra.mxu0 %v6206
    %6252 = vmatprep.subr.mxu0 %v6209
    %6253 = vmatpush1.msra.mxu0 %v6208
    %6254 = vmatprep.subr.mxu0 %v6211
    %6255 = vmatpush1.msra.mxu0 %v6210
    %6256 = vmatprep.subr.mxu0 %v6213
    %6257 = vmatpush1.msra.mxu0 %v6212
    %6258 = vmatprep.subr.mxu0 %v6215
    %6259 = vmatpush1.msra.mxu0 %v6214
    %6260 = vmatprep.subr.mxu0 %v6217
    %6261 = vmatpush1.msra.mxu0 %v6216
    %6262 = vmatprep.subr.mxu0 %v6219
    %6263 = vmatpush1.msra.mxu0 %v6218
    %6264 = vmatprep.subr.mxu0 %v6221
    %6265 = vmatpush1.msra.mxu0 %v6220
    %6266 = vmatprep.subr.mxu0 %v6223
    %6267 = vmatpush1.msra.mxu0 %v6222
    %6268 = vmatprep.subr.mxu0 %v6225
    %6269 = vmatpush1.msra.mxu0 %v6224
    %6270 = vmatprep.subr.mxu0 %v6227
    %6271 = vmatpush1.msra.mxu0 %v6226
    %6272 = vmatprep.subr.mxu0 0.0
    %6273 = vmatpush1.msra.mxu0 0.0
    %6274 = vmatprep.subr.mxu0 0.0
    %6275 = vmatpush1.msra.mxu0 0.0
    %6276 = vmatprep.subr.mxu0 0.0
    %6277 = vmatpush1.msra.mxu0 0.0
    %6278 = vmatprep.subr.mxu0 0.0
    %6279 = vmatpush1.msra.mxu0 0.0
    %6280 = vmatprep.subr.mxu0 0.0
    %6281 = vmatpush1.msra.mxu0 0.0
    %6282 = vmatprep.subr.mxu0 0.0
    %6283 = vmatpush1.msra.mxu0 0.0
    %6284 = vmatprep.subr.mxu0 0.0
    %6285 = vmatpush1.msra.mxu0 0.0
    %6286 = vmatprep.subr.mxu0 0.0
    %6287 = vmatpush1.msra.mxu0 0.0
    %6288 = vmatprep.subr.mxu0 0.0
    %6289 = vmatpush1.msra.mxu0 0.0
    %6290 = vmatprep.subr.mxu0 0.0
    %6291 = vmatpush1.msra.mxu0 0.0
    %6292 = vmatprep.subr.mxu0 0.0
    %6293 = vmatpush1.msra.mxu0 0.0
    %6294 = vmatprep.subr.mxu0 0.0
    %6295 = vmatpush1.msra.mxu0 0.0
    %6296 = vmatprep.subr.mxu0 0.0
    %6297 = vmatpush1.msra.mxu0 0.0
    %6298 = vmatprep.subr.mxu0 0.0
    %6299 = vmatpush1.msra.mxu0 0.0
    %6300 = vmatprep.subr.mxu0 0.0
    %6301 = vmatpush1.msra.mxu0 0.0
    %6302 = vmatprep.subr.mxu0 0.0
    %6303 = vmatpush1.msra.mxu0 0.0
    %6304 = vmatprep.mubr.f32.mxu0 0.0
    %6305 = vmatmul.mubr.f32.gmra.mrb[0].mxu0 %v6195
    %v6306 = vpop.f32.mrb[0].mxu0
    %v6307 = vadd.f32 %v6233, %v6306
    %v6308 = vpop.f32.mrb[0].mxu0
    %v6309 = vadd.f32 %v6237, %v6308
    %6310 = vdwg.mxu0
    %v6311 = vxor.u32 %v6307, 2147483648
    %v6312 = vmul.f32 %v6311, 1.442695
    %v6313 = vpow.pop %v6312
    %v6314 = vadd.f32 %v6313, 1.0
    %v6315 = vrcp.pop %v6314
    %v6316 = vmul.f32 1.0, %v6315
    %6318 = vrot.lane.b32.xlu0 %v6309, 64
    %v6319 = vpop.permute.xlu0 %6318
    %v6321 = vmul.f32 %v6316, %v6319
    %v6322 = vadd.f32 %v6309, %v6321
    %v6323 = vtanh.pop %v6322
    %v6324 = vsub.f32 1.0, %v6316
    %6326 = vrot.lane.b32.xlu0 %v6323, 64
    %v6327 = vpop.permute.xlu0 %6326
    %v6329 = vmul.f32 %v6324, %v6327
    %v6330 = vmul.f32 %v6316, %v5965
    %v6331 = vadd.f32 %v6329, %v6330
    %v6332 = vld [vmem:[#allocation9] sm:$0xff]
    %v6333 = vld [vmem:[#allocation9 + $0x8] sm:$0xff]
    %v6334 = vld [vmem:[#allocation9 + $0x10] sm:$0xff]
    %v6335 = vld [vmem:[#allocation9 + $0x18] sm:$0xff]
    %v6336 = vld [vmem:[#allocation9 + $0x20] sm:$0xff]
    %v6337 = vld [vmem:[#allocation9 + $0x28] sm:$0xff]
    %v6338 = vld [vmem:[#allocation9 + $0x30] sm:$0xff]
    %v6339 = vld [vmem:[#allocation9 + $0x38] sm:$0xff]
    %v6340 = vld [vmem:[#allocation10] sm:$0x1]
    %v6342 = vlaneseq
    %v6343 = vshrl.u32 %v6342, 7
    %v6344 = vsub.s32 0, %v6343
    %v6345 = vrot.slane %v6340, %v6344
    %6348 = vrot.lane.b32.xlu0 %v6331, 64
    %v6349 = vpop.permute.xlu0 %6348
    %v6350 = vsel %vm2006, %v6349, 0
    %6352 = vmatprep.subr.mxu0 0.0
    %6353 = vmatpush1.msra.mxu0 %v6332
    %6354 = vmatprep.subr.mxu0 0.0
    %6355 = vmatpush1.msra.mxu0 %v6333
    %6356 = vmatprep.subr.mxu0 0.0
    %6357 = vmatpush1.msra.mxu0 %v6334
    %6358 = vmatprep.subr.mxu0 0.0
    %6359 = vmatpush1.msra.mxu0 %v6335
    %6360 = vmatprep.subr.mxu0 0.0
    %6361 = vmatpush1.msra.mxu0 %v6336
    %6362 = vmatprep.subr.mxu0 0.0
    %6363 = vmatpush1.msra.mxu0 %v6337
    %6364 = vmatprep.subr.mxu0 0.0
    %6365 = vmatpush1.msra.mxu0 %v6338
    %6366 = vmatprep.subr.mxu0 0.0
    %6367 = vmatpush1.msra.mxu0 %v6339
    %6368 = vmatprep.subr.mxu0 0.0
    %6369 = vmatpush1.msra.mxu0 0.0
    %6370 = vmatprep.subr.mxu0 0.0
    %6371 = vmatpush1.msra.mxu0 0.0
    %6372 = vmatprep.subr.mxu0 0.0
    %6373 = vmatpush1.msra.mxu0 0.0
    %6374 = vmatprep.subr.mxu0 0.0
    %6375 = vmatpush1.msra.mxu0 0.0
    %6376 = vmatprep.subr.mxu0 0.0
    %6377 = vmatpush1.msra.mxu0 0.0
    %6378 = vmatprep.subr.mxu0 0.0
    %6379 = vmatpush1.msra.mxu0 0.0
    %6380 = vmatprep.subr.mxu0 0.0
    %6381 = vmatpush1.msra.mxu0 0.0
    %6382 = vmatprep.subr.mxu0 0.0
    %6383 = vmatpush1.msra.mxu0 0.0
    %6384 = vmatprep.subr.mxu0 0.0
    %6385 = vmatpush1.msra.mxu0 0.0
    %6386 = vmatprep.subr.mxu0 0.0
    %6387 = vmatpush1.msra.mxu0 0.0
    %6388 = vmatprep.subr.mxu0 0.0
    %6389 = vmatpush1.msra.mxu0 0.0
    %6390 = vmatprep.subr.mxu0 0.0
    %6391 = vmatpush1.msra.mxu0 0.0
    %6392 = vmatprep.subr.mxu0 0.0
    %6393 = vmatpush1.msra.mxu0 0.0
    %6394 = vmatprep.subr.mxu0 0.0
    %6395 = vmatpush1.msra.mxu0 0.0
    %6396 = vmatprep.subr.mxu0 0.0
    %6397 = vmatpush1.msra.mxu0 0.0
    %6398 = vmatprep.subr.mxu0 0.0
    %6399 = vmatpush1.msra.mxu0 0.0
    %6400 = vmatprep.subr.mxu0 0.0
    %6401 = vmatpush1.msra.mxu0 0.0
    %6402 = vmatprep.subr.mxu0 0.0
    %6403 = vmatpush1.msra.mxu0 0.0
    %6404 = vmatprep.subr.mxu0 0.0
    %6405 = vmatpush1.msra.mxu0 0.0
    %6406 = vmatprep.subr.mxu0 0.0
    %6407 = vmatpush1.msra.mxu0 0.0
    %6408 = vmatprep.subr.mxu0 0.0
    %6409 = vmatpush1.msra.mxu0 0.0
    %6410 = vmatprep.subr.mxu0 0.0
    %6411 = vmatpush1.msra.mxu0 0.0
    %6412 = vmatprep.subr.mxu0 0.0
    %6413 = vmatpush1.msra.mxu0 0.0
    %6414 = vmatprep.subr.mxu0 0.0
    %6415 = vmatpush1.msra.mxu0 0.0
    %6416 = vmatprep.mubr.f32.mxu0 0.0
    %6417 = vmatmul.mubr.f32.gmra.mrb[0].mxu0 %v6350
    %v6418 = vpop.f32.mrb[0].mxu0
    %v6419 = vadd.f32 %v6345, %v6418
    %v6420 = vpop.f32.mrb[0].mxu0
    %6421 = vdwg.mxu0
    %s6422 = scalar_lea.vmem %s17, 12
    %6423 = vst [vmem:[%s6422] sm:$0x3] %v6419
    // Predicated region
    $region86: #{seq2seq_forward_jit.1} parent=1 // pred_check
      _
    $region87: #{seq2seq_forward_jit.1} parent=1 // pred_check_branch
      %6425 = sbr.rel (0) target = $region89
    $region88: #{seq2seq_forward_jit.1} parent=1 // pred_region
      _
    $region89: #{seq2seq_forward_jit.1} parent=1 // pred_fallthru
      _
    // Predicated region
    $region90: #{seq2seq_forward_jit.1} parent=1 // pred_check
      _
    $region91: #{seq2seq_forward_jit.1} parent=1 // pred_check_branch
      %6427 = sbr.rel (0) target = $region93
    $region92: #{seq2seq_forward_jit.1} parent=1 // pred_region
      _
    $region93: #{seq2seq_forward_jit.1} parent=1 // pred_fallthru
      _
    %6428 = vsyncpa [#allocation6], 1
    %6429 = vsyncpa [#allocation8], 1
    %6430 = vsyncpa [#allocation11], 1

</llo_original>
